<compile_context>
chip_gen: v7x
topology: tpu7x:2x2x1
jax: 0.10.0
libtpu: 0.0.40
codegen_flags: <defaults>
</compile_context>

<pallas_src>
import functools

import jax
import jax.numpy as jnp
from jax.experimental import pallas as pl
from jax.experimental.pallas import tpu as pltpu

# Keep the f32 matmuls (Pallas MXU mixing matmuls and the XLA reference conv)
# at full f32 precision so the numerical check below is meaningful.
jax.config.update("jax_default_matmul_precision", "highest")


def resblock_kernel(x_ref, m1_ref, b1_ref, m2_ref, b2_ref, out_ref, *, H, W):
    # x_ref / out_ref: (N*C, H*W) f32, row r = n*C + c, spatial flattened on lanes.
    # m*_ref: (9, N*C, N*C) block-diagonal per-tap channel-mixing matrices.
    # b*_ref: (N*C, 1) per-row bias columns.
    NC, HW = out_ref.shape

    # Lane coordinates, computed once and shared by both convs.
    lane = jax.lax.broadcasted_iota(jnp.int32, (NC, HW), 1)
    if W & (W - 1) == 0:  # power-of-two width -> cheap bit ops instead of div/mod
        row = lane >> (W.bit_length() - 1)
        col = lane & (W - 1)
    else:
        row = lane // W
        col = lane % W

    # 9 taps, t = (dh+1)*3 + (dw+1) == kh*3 + kw of the OIHW weights.
    tap_off, tap_mask = [], []
    for dh in (-1, 0, 1):
        for dw in (-1, 0, 1):
            tap_off.append(dh * W + dw)
            conds = []
            if dh == -1:
                conds.append(row >= 1)
            elif dh == 1:
                conds.append(row <= H - 2)
            if dw == -1:
                conds.append(col >= 1)
            elif dw == 1:
                conds.append(col <= W - 2)
            mask = None
            for c in conds:
                mask = c if mask is None else (mask & c)
            tap_mask.append(mask)

    def conv3x3(slab, m_ref, b_ref):
        # acc[n*C+co, :] = b[co] + sum_t sum_ci w[co,ci,t] * shifted_t[n*C+ci, :]
        acc = jnp.broadcast_to(b_ref[...], (NC, HW))
        for t in range(9):
            off, mask = tap_off[t], tap_mask[t]
            # Build one tap and consume it immediately (only one live at a time).
            shifted = slab if off == 0 else pltpu.roll(slab, shift=(-off) % HW, axis=1)
            if mask is not None:
                shifted = jnp.where(mask, shifted, 0.0)
            acc = acc + jnp.dot(m_ref[t], shifted,
                                preferred_element_type=jnp.float32,
                                precision=jax.lax.Precision.HIGHEST)
        return acc

    x = x_ref[...]                                   # aligned, lane-dense load
    h1 = jnp.maximum(conv3x3(x, m1_ref, b1_ref), 0.0)   # conv1 + ReLU (in regs)
    h2 = conv3x3(h1, m2_ref, b2_ref)                     # conv2
    out_ref[...] = jnp.maximum(h2 + x, 0.0)              # + residual, ReLU


@jax.jit
def resblock_forward(x, w1, b1, w2, b2):
    """x: (N, C, H, W) f32. w*: (C, C, 3, 3) f32 (OIHW). b*: (C,) f32."""
    N, C, H, W = x.shape
    HW, NC = H * W, N * C

    # Free reshape of the contiguous NCHW input: no transpose, no extra HBM copy.
    xk = x.astype(jnp.float32).reshape(NC, HW)

    def pack(w, b):
        # Block-diagonal per-tap mixing matrices:
        #   M[t, n*C+co, m*C+ci] = delta(n, m) * w[co, ci, kh, kw],  t = kh*3 + kw
        wt = jnp.transpose(w.astype(jnp.float32).reshape(C, C, 9), (2, 0, 1))  # (9,co,ci)
        eye_n = jnp.eye(N, dtype=jnp.float32)
        m = jnp.einsum("nm,tij->tnimj", eye_n, wt).reshape(9, NC, NC)
        bcol = jnp.tile(b.astype(jnp.float32), N).reshape(NC, 1)
        return m, bcol

    m1, b1c = pack(w1, b1)
    m2, b2c = pack(w2, b2)

    kern = functools.partial(resblock_kernel, H=H, W=W)

    grid_spec = pltpu.PrefetchScalarGridSpec(
        num_scalar_prefetch=0,
        grid=(1,),                       # whole ~10 KB problem in one step
        in_specs=[
            pl.BlockSpec((NC, HW), lambda i: (0, 0)),        # x slab
            pl.BlockSpec((9, NC, NC), lambda i: (0, 0, 0)),  # conv1 mixing mats
            pl.BlockSpec((NC, 1), lambda i: (0, 0)),         # conv1 bias column
            pl.BlockSpec((9, NC, NC), lambda i: (0, 0, 0)),  # conv2 mixing mats
            pl.BlockSpec((NC, 1), lambda i: (0, 0)),         # conv2 bias column
        ],
        out_specs=pl.BlockSpec((NC, HW), lambda i: (0, 0)),
    )

    out = pl.pallas_call(
        kern,
        out_shape=jax.ShapeDtypeStruct((NC, HW), jnp.float32),
        grid_spec=grid_spec,
        compiler_params=pltpu.CompilerParams(
            dimension_semantics=("arbitrary",)),
    )(xk, m1, b1c, m2, b2c)

    # Free reshape back to NCHW.
    return out.reshape(N, C, H, W)


def resblock_reference(x, w1, b1, w2, b2):
    dn = ("NCHW", "OIHW", "NCHW")

    def conv(v, w, b):
        y = jax.lax.conv_general_dilated(
            v, w, window_strides=(1, 1), padding=((1, 1), (1, 1)),
            dimension_numbers=dn)
        return y + b[None, :, None, None]

    h = jax.nn.relu(conv(x, w1, b1))
    h = conv(h, w2, b2)
    return jax.nn.relu(h + x)


if __name__ == "__main__":
    N, C, H, W = 2, 4, 16, 16
    key = jax.random.PRNGKey(0)
    kx, kw1, kb1, kw2, kb2 = jax.random.split(key, 5)

    # Deterministic init mimicking PyTorch Conv2d default (uniform +-1/sqrt(fan_in)).
    fan_in = C * 3 * 3
    bound = 1.0 / jnp.sqrt(float(fan_in))
    x = jax.random.normal(kx, (N, C, H, W), dtype=jnp.float32)
    w1 = jax.random.uniform(kw1, (C, C, 3, 3), jnp.float32, -bound, bound)
    b1 = jax.random.uniform(kb1, (C,), jnp.float32, -bound, bound)
    w2 = jax.random.uniform(kw2, (C, C, 3, 3), jnp.float32, -bound, bound)
    b2 = jax.random.uniform(kb2, (C,), jnp.float32, -bound, bound)

    out = resblock_forward(x, w1, b1, w2, b2)
    out = jax.block_until_ready(out)

    ref = resblock_reference(x, w1, b1, w2, b2)
    if not jnp.allclose(out, ref, atol=2e-3, rtol=2e-3):
        max_err = float(jnp.max(jnp.abs(out - ref)))
        raise AssertionError(f"Pallas ResBlock mismatch, max abs err = {max_err}")

    print("KERNEL_OK")
</pallas_src>

<mosaic_0001>
module attributes {stable_mosaic.version = 11 : i64} {
  func.func @resblock_kernel(%arg0: i32, %arg1: memref<8x256xf32, #tpu.memory_space<vmem>>, %arg2: memref<9x8x8xf32, #tpu.memory_space<vmem>>, %arg3: memref<8x1xf32, #tpu.memory_space<vmem>>, %arg4: memref<9x8x8xf32, #tpu.memory_space<vmem>>, %arg5: memref<8x1xf32, #tpu.memory_space<vmem>>, %arg6: memref<8x256xf32, #tpu.memory_space<vmem>>) attributes {dimension_semantics = [#tpu.dimension_semantics<arbitrary>], iteration_bounds = array<i64: 1>, scalar_prefetch = 0 : i64, scratch_operands = 0 : i64, tpu.core_type = #tpu.core_type<tc>, window_params = [{pipeline_mode = #tpu.pipeline_mode<synchronous>, transform_indices = @transform_0, window_bounds = array<i64: 8, 256>}, {pipeline_mode = #tpu.pipeline_mode<synchronous>, transform_indices = @transform_1, window_bounds = array<i64: 9, 8, 8>}, {pipeline_mode = #tpu.pipeline_mode<synchronous>, transform_indices = @transform_2, window_bounds = array<i64: 8, 1>}, {pipeline_mode = #tpu.pipeline_mode<synchronous>, transform_indices = @transform_3, window_bounds = array<i64: 9, 8, 8>}, {pipeline_mode = #tpu.pipeline_mode<synchronous>, transform_indices = @transform_4, window_bounds = array<i64: 8, 1>}, {pipeline_mode = #tpu.pipeline_mode<synchronous>, transform_indices = @transform_5, window_bounds = array<i64: 8, 256>}]} {
    %0 = tpu.iota {dimensions = array<i32: 1>} : vector<8x256xi32>
    %c4_i32 = arith.constant 4 : i32
    %1 = vector.broadcast %c4_i32 : i32 to vector<8x256xi32>
    %2 = arith.shrsi %0, %1 : vector<8x256xi32>
    %c15_i32 = arith.constant 15 : i32
    %3 = vector.broadcast %c15_i32 : i32 to vector<8x256xi32>
    %4 = arith.andi %0, %3 : vector<8x256xi32>
    %c1_i32 = arith.constant 1 : i32
    %5 = vector.broadcast %c1_i32 : i32 to vector<8x256xi32>
    %6 = arith.cmpi sge, %2, %5 : vector<8x256xi32>
    %c1_i32_0 = arith.constant 1 : i32
    %7 = vector.broadcast %c1_i32_0 : i32 to vector<8x256xi32>
    %8 = arith.cmpi sge, %4, %7 : vector<8x256xi32>
    %9 = arith.andi %6, %8 : vector<8x256xi1>
    %c1_i32_1 = arith.constant 1 : i32
    %10 = vector.broadcast %c1_i32_1 : i32 to vector<8x256xi32>
    %11 = arith.cmpi sge, %2, %10 : vector<8x256xi32>
    %c1_i32_2 = arith.constant 1 : i32
    %12 = vector.broadcast %c1_i32_2 : i32 to vector<8x256xi32>
    %13 = arith.cmpi sge, %2, %12 : vector<8x256xi32>
    %c14_i32 = arith.constant 14 : i32
    %14 = vector.broadcast %c14_i32 : i32 to vector<8x256xi32>
    %15 = arith.cmpi sle, %4, %14 : vector<8x256xi32>
    %16 = arith.andi %13, %15 : vector<8x256xi1>
    %c1_i32_3 = arith.constant 1 : i32
    %17 = vector.broadcast %c1_i32_3 : i32 to vector<8x256xi32>
    %18 = arith.cmpi sge, %4, %17 : vector<8x256xi32>
    %c14_i32_4 = arith.constant 14 : i32
    %19 = vector.broadcast %c14_i32_4 : i32 to vector<8x256xi32>
    %20 = arith.cmpi sle, %4, %19 : vector<8x256xi32>
    %c14_i32_5 = arith.constant 14 : i32
    %21 = vector.broadcast %c14_i32_5 : i32 to vector<8x256xi32>
    %22 = arith.cmpi sle, %2, %21 : vector<8x256xi32>
    %c1_i32_6 = arith.constant 1 : i32
    %23 = vector.broadcast %c1_i32_6 : i32 to vector<8x256xi32>
    %24 = arith.cmpi sge, %4, %23 : vector<8x256xi32>
    %25 = arith.andi %22, %24 : vector<8x256xi1>
    %c14_i32_7 = arith.constant 14 : i32
    %26 = vector.broadcast %c14_i32_7 : i32 to vector<8x256xi32>
    %27 = arith.cmpi sle, %2, %26 : vector<8x256xi32>
    %c14_i32_8 = arith.constant 14 : i32
    %28 = vector.broadcast %c14_i32_8 : i32 to vector<8x256xi32>
    %29 = arith.cmpi sle, %2, %28 : vector<8x256xi32>
    %c14_i32_9 = arith.constant 14 : i32
    %30 = vector.broadcast %c14_i32_9 : i32 to vector<8x256xi32>
    %31 = arith.cmpi sle, %4, %30 : vector<8x256xi32>
    %32 = arith.andi %29, %31 : vector<8x256xi1>
    %c0 = arith.constant 0 : index
    %c0_10 = arith.constant 0 : index
    %33 = vector.load %arg1[%c0, %c0_10] : memref<8x256xf32, #tpu.memory_space<vmem>>, vector<8x256xf32>
    %c0_11 = arith.constant 0 : index
    %c0_12 = arith.constant 0 : index
    %34 = vector.load %arg3[%c0_11, %c0_12] : memref<8x1xf32, #tpu.memory_space<vmem>>, vector<8x1xf32>
    %35 = vector.shape_cast %34 : vector<8x1xf32> to vector<8x1xf32>
    %36 = vector.broadcast %35 : vector<8x1xf32> to vector<8x256xf32>
    %c17_i32 = arith.constant 17 : i32
    %37 = tpu.dynamic_rotate %33 by %c17_i32 dim 1 : vector<8x256xf32>, i32 -> vector<8x256xf32>
    %cst = arith.constant 0.000000e+00 : f32
    %38 = vector.broadcast %cst : f32 to vector<8x256xf32>
    %39 = arith.select %9, %37, %38 : vector<8x256xi1>, vector<8x256xf32>
    %c0_13 = arith.constant 0 : index
    %c0_14 = arith.constant 0 : index
    %c0_15 = arith.constant 0 : index
    %40 = vector.load %arg2[%c0_13, %c0_14, %c0_15] : memref<9x8x8xf32, #tpu.memory_space<vmem>>, vector<1x8x8xf32>
    %41 = vector.shape_cast %40 : vector<1x8x8xf32> to vector<8x8xf32>
    %cst_16 = arith.constant dense<0.000000e+00> : vector<8x256xf32>
    %42 = tpu.matmul %41, %39, %cst_16 {dimension_numbers = #tpu.dot_dimension_numbers<[1], [0], [0], [1], [0, 0, 1, 1], [], []>, precision = #tpu.contract_precision<fp32>} : vector<8x8xf32>, vector<8x256xf32>, vector<8x256xf32> -> vector<8x256xf32>
    %43 = arith.addf %36, %42 : vector<8x256xf32>
    %c16_i32 = arith.constant 16 : i32
    %44 = tpu.dynamic_rotate %33 by %c16_i32 dim 1 : vector<8x256xf32>, i32 -> vector<8x256xf32>
    %cst_17 = arith.constant 0.000000e+00 : f32
    %45 = vector.broadcast %cst_17 : f32 to vector<8x256xf32>
    %46 = arith.select %11, %44, %45 : vector<8x256xi1>, vector<8x256xf32>
    %c1 = arith.constant 1 : index
    %c0_18 = arith.constant 0 : index
    %c0_19 = arith.constant 0 : index
    %47 = vector.load %arg2[%c1, %c0_18, %c0_19] : memref<9x8x8xf32, #tpu.memory_space<vmem>>, vector<1x8x8xf32>
    %48 = vector.shape_cast %47 : vector<1x8x8xf32> to vector<8x8xf32>
    %cst_20 = arith.constant dense<0.000000e+00> : vector<8x256xf32>
    %49 = tpu.matmul %48, %46, %cst_20 {dimension_numbers = #tpu.dot_dimension_numbers<[1], [0], [0], [1], [0, 0, 1, 1], [], []>, precision = #tpu.contract_precision<fp32>} : vector<8x8xf32>, vector<8x256xf32>, vector<8x256xf32> -> vector<8x256xf32>
    %50 = arith.addf %43, %49 : vector<8x256xf32>
    %c15_i32_21 = arith.constant 15 : i32
    %51 = tpu.dynamic_rotate %33 by %c15_i32_21 dim 1 : vector<8x256xf32>, i32 -> vector<8x256xf32>
    %cst_22 = arith.constant 0.000000e+00 : f32
    %52 = vector.broadcast %cst_22 : f32 to vector<8x256xf32>
    %53 = arith.select %16, %51, %52 : vector<8x256xi1>, vector<8x256xf32>
    %c2 = arith.constant 2 : index
    %c0_23 = arith.constant 0 : index
    %c0_24 = arith.constant 0 : index
    %54 = vector.load %arg2[%c2, %c0_23, %c0_24] : memref<9x8x8xf32, #tpu.memory_space<vmem>>, vector<1x8x8xf32>
    %55 = vector.shape_cast %54 : vector<1x8x8xf32> to vector<8x8xf32>
    %cst_25 = arith.constant dense<0.000000e+00> : vector<8x256xf32>
    %56 = tpu.matmul %55, %53, %cst_25 {dimension_numbers = #tpu.dot_dimension_numbers<[1], [0], [0], [1], [0, 0, 1, 1], [], []>, precision = #tpu.contract_precision<fp32>} : vector<8x8xf32>, vector<8x256xf32>, vector<8x256xf32> -> vector<8x256xf32>
    %57 = arith.addf %50, %56 : vector<8x256xf32>
    %c1_i32_26 = arith.constant 1 : i32
    %58 = tpu.dynamic_rotate %33 by %c1_i32_26 dim 1 : vector<8x256xf32>, i32 -> vector<8x256xf32>
    %cst_27 = arith.constant 0.000000e+00 : f32
    %59 = vector.broadcast %cst_27 : f32 to vector<8x256xf32>
    %60 = arith.select %18, %58, %59 : vector<8x256xi1>, vector<8x256xf32>
    %c3 = arith.constant 3 : index
    %c0_28 = arith.constant 0 : index
    %c0_29 = arith.constant 0 : index
    %61 = vector.load %arg2[%c3, %c0_28, %c0_29] : memref<9x8x8xf32, #tpu.memory_space<vmem>>, vector<1x8x8xf32>
    %62 = vector.shape_cast %61 : vector<1x8x8xf32> to vector<8x8xf32>
    %cst_30 = arith.constant dense<0.000000e+00> : vector<8x256xf32>
    %63 = tpu.matmul %62, %60, %cst_30 {dimension_numbers = #tpu.dot_dimension_numbers<[1], [0], [0], [1], [0, 0, 1, 1], [], []>, precision = #tpu.contract_precision<fp32>} : vector<8x8xf32>, vector<8x256xf32>, vector<8x256xf32> -> vector<8x256xf32>
    %64 = arith.addf %57, %63 : vector<8x256xf32>
    %c4 = arith.constant 4 : index
    %c0_31 = arith.constant 0 : index
    %c0_32 = arith.constant 0 : index
    %65 = vector.load %arg2[%c4, %c0_31, %c0_32] : memref<9x8x8xf32, #tpu.memory_space<vmem>>, vector<1x8x8xf32>
    %66 = vector.shape_cast %65 : vector<1x8x8xf32> to vector<8x8xf32>
    %cst_33 = arith.constant dense<0.000000e+00> : vector<8x256xf32>
    %67 = tpu.matmul %66, %33, %cst_33 {dimension_numbers = #tpu.dot_dimension_numbers<[1], [0], [0], [1], [0, 0, 1, 1], [], []>, precision = #tpu.contract_precision<fp32>} : vector<8x8xf32>, vector<8x256xf32>, vector<8x256xf32> -> vector<8x256xf32>
    %68 = arith.addf %64, %67 : vector<8x256xf32>
    %c255_i32 = arith.constant 255 : i32
    %69 = tpu.dynamic_rotate %33 by %c255_i32 dim 1 : vector<8x256xf32>, i32 -> vector<8x256xf32>
    %cst_34 = arith.constant 0.000000e+00 : f32
    %70 = vector.broadcast %cst_34 : f32 to vector<8x256xf32>
    %71 = arith.select %20, %69, %70 : vector<8x256xi1>, vector<8x256xf32>
    %c5 = arith.constant 5 : index
    %c0_35 = arith.constant 0 : index
    %c0_36 = arith.constant 0 : index
    %72 = vector.load %arg2[%c5, %c0_35, %c0_36] : memref<9x8x8xf32, #tpu.memory_space<vmem>>, vector<1x8x8xf32>
    %73 = vector.shape_cast %72 : vector<1x8x8xf32> to vector<8x8xf32>
    %cst_37 = arith.constant dense<0.000000e+00> : vector<8x256xf32>
    %74 = tpu.matmul %73, %71, %cst_37 {dimension_numbers = #tpu.dot_dimension_numbers<[1], [0], [0], [1], [0, 0, 1, 1], [], []>, precision = #tpu.contract_precision<fp32>} : vector<8x8xf32>, vector<8x256xf32>, vector<8x256xf32> -> vector<8x256xf32>
    %75 = arith.addf %68, %74 : vector<8x256xf32>
    %c241_i32 = arith.constant 241 : i32
    %76 = tpu.dynamic_rotate %33 by %c241_i32 dim 1 : vector<8x256xf32>, i32 -> vector<8x256xf32>
    %cst_38 = arith.constant 0.000000e+00 : f32
    %77 = vector.broadcast %cst_38 : f32 to vector<8x256xf32>
    %78 = arith.select %25, %76, %77 : vector<8x256xi1>, vector<8x256xf32>
    %c6 = arith.constant 6 : index
    %c0_39 = arith.constant 0 : index
    %c0_40 = arith.constant 0 : index
    %79 = vector.load %arg2[%c6, %c0_39, %c0_40] : memref<9x8x8xf32, #tpu.memory_space<vmem>>, vector<1x8x8xf32>
    %80 = vector.shape_cast %79 : vector<1x8x8xf32> to vector<8x8xf32>
    %cst_41 = arith.constant dense<0.000000e+00> : vector<8x256xf32>
    %81 = tpu.matmul %80, %78, %cst_41 {dimension_numbers = #tpu.dot_dimension_numbers<[1], [0], [0], [1], [0, 0, 1, 1], [], []>, precision = #tpu.contract_precision<fp32>} : vector<8x8xf32>, vector<8x256xf32>, vector<8x256xf32> -> vector<8x256xf32>
    %82 = arith.addf %75, %81 : vector<8x256xf32>
    %c240_i32 = arith.constant 240 : i32
    %83 = tpu.dynamic_rotate %33 by %c240_i32 dim 1 : vector<8x256xf32>, i32 -> vector<8x256xf32>
    %cst_42 = arith.constant 0.000000e+00 : f32
    %84 = vector.broadcast %cst_42 : f32 to vector<8x256xf32>
    %85 = arith.select %27, %83, %84 : vector<8x256xi1>, vector<8x256xf32>
    %c7 = arith.constant 7 : index
    %c0_43 = arith.constant 0 : index
    %c0_44 = arith.constant 0 : index
    %86 = vector.load %arg2[%c7, %c0_43, %c0_44] : memref<9x8x8xf32, #tpu.memory_space<vmem>>, vector<1x8x8xf32>
    %87 = vector.shape_cast %86 : vector<1x8x8xf32> to vector<8x8xf32>
    %cst_45 = arith.constant dense<0.000000e+00> : vector<8x256xf32>
    %88 = tpu.matmul %87, %85, %cst_45 {dimension_numbers = #tpu.dot_dimension_numbers<[1], [0], [0], [1], [0, 0, 1, 1], [], []>, precision = #tpu.contract_precision<fp32>} : vector<8x8xf32>, vector<8x256xf32>, vector<8x256xf32> -> vector<8x256xf32>
    %89 = arith.addf %82, %88 : vector<8x256xf32>
    %c239_i32 = arith.constant 239 : i32
    %90 = tpu.dynamic_rotate %33 by %c239_i32 dim 1 : vector<8x256xf32>, i32 -> vector<8x256xf32>
    %cst_46 = arith.constant 0.000000e+00 : f32
    %91 = vector.broadcast %cst_46 : f32 to vector<8x256xf32>
    %92 = arith.select %32, %90, %91 : vector<8x256xi1>, vector<8x256xf32>
    %c8 = arith.constant 8 : index
    %c0_47 = arith.constant 0 : index
    %c0_48 = arith.constant 0 : index
    %93 = vector.load %arg2[%c8, %c0_47, %c0_48] : memref<9x8x8xf32, #tpu.memory_space<vmem>>, vector<1x8x8xf32>
    %94 = vector.shape_cast %93 : vector<1x8x8xf32> to vector<8x8xf32>
    %cst_49 = arith.constant dense<0.000000e+00> : vector<8x256xf32>
    %95 = tpu.matmul %94, %92, %cst_49 {dimension_numbers = #tpu.dot_dimension_numbers<[1], [0], [0], [1], [0, 0, 1, 1], [], []>, precision = #tpu.contract_precision<fp32>} : vector<8x8xf32>, vector<8x256xf32>, vector<8x256xf32> -> vector<8x256xf32>
    %96 = arith.addf %89, %95 : vector<8x256xf32>
    %cst_50 = arith.constant 0.000000e+00 : f32
    %97 = vector.broadcast %cst_50 : f32 to vector<8x256xf32>
    %98 = arith.maximumf %96, %97 : vector<8x256xf32>
    %c0_51 = arith.constant 0 : index
    %c0_52 = arith.constant 0 : index
    %99 = vector.load %arg5[%c0_51, %c0_52] : memref<8x1xf32, #tpu.memory_space<vmem>>, vector<8x1xf32>
    %100 = vector.shape_cast %99 : vector<8x1xf32> to vector<8x1xf32>
    %101 = vector.broadcast %100 : vector<8x1xf32> to vector<8x256xf32>
    %c17_i32_53 = arith.constant 17 : i32
    %102 = tpu.dynamic_rotate %98 by %c17_i32_53 dim 1 : vector<8x256xf32>, i32 -> vector<8x256xf32>
    %cst_54 = arith.constant 0.000000e+00 : f32
    %103 = vector.broadcast %cst_54 : f32 to vector<8x256xf32>
    %104 = arith.select %9, %102, %103 : vector<8x256xi1>, vector<8x256xf32>
    %c0_55 = arith.constant 0 : index
    %c0_56 = arith.constant 0 : index
    %c0_57 = arith.constant 0 : index
    %105 = vector.load %arg4[%c0_55, %c0_56, %c0_57] : memref<9x8x8xf32, #tpu.memory_space<vmem>>, vector<1x8x8xf32>
    %106 = vector.shape_cast %105 : vector<1x8x8xf32> to vector<8x8xf32>
    %cst_58 = arith.constant dense<0.000000e+00> : vector<8x256xf32>
    %107 = tpu.matmul %106, %104, %cst_58 {dimension_numbers = #tpu.dot_dimension_numbers<[1], [0], [0], [1], [0, 0, 1, 1], [], []>, precision = #tpu.contract_precision<fp32>} : vector<8x8xf32>, vector<8x256xf32>, vector<8x256xf32> -> vector<8x256xf32>
    %108 = arith.addf %101, %107 : vector<8x256xf32>
    %c16_i32_59 = arith.constant 16 : i32
    %109 = tpu.dynamic_rotate %98 by %c16_i32_59 dim 1 : vector<8x256xf32>, i32 -> vector<8x256xf32>
    %cst_60 = arith.constant 0.000000e+00 : f32
    %110 = vector.broadcast %cst_60 : f32 to vector<8x256xf32>
    %111 = arith.select %11, %109, %110 : vector<8x256xi1>, vector<8x256xf32>
    %c1_61 = arith.constant 1 : index
    %c0_62 = arith.constant 0 : index
    %c0_63 = arith.constant 0 : index
    %112 = vector.load %arg4[%c1_61, %c0_62, %c0_63] : memref<9x8x8xf32, #tpu.memory_space<vmem>>, vector<1x8x8xf32>
    %113 = vector.shape_cast %112 : vector<1x8x8xf32> to vector<8x8xf32>
    %cst_64 = arith.constant dense<0.000000e+00> : vector<8x256xf32>
    %114 = tpu.matmul %113, %111, %cst_64 {dimension_numbers = #tpu.dot_dimension_numbers<[1], [0], [0], [1], [0, 0, 1, 1], [], []>, precision = #tpu.contract_precision<fp32>} : vector<8x8xf32>, vector<8x256xf32>, vector<8x256xf32> -> vector<8x256xf32>
    %115 = arith.addf %108, %114 : vector<8x256xf32>
    %c15_i32_65 = arith.constant 15 : i32
    %116 = tpu.dynamic_rotate %98 by %c15_i32_65 dim 1 : vector<8x256xf32>, i32 -> vector<8x256xf32>
    %cst_66 = arith.constant 0.000000e+00 : f32
    %117 = vector.broadcast %cst_66 : f32 to vector<8x256xf32>
    %118 = arith.select %16, %116, %117 : vector<8x256xi1>, vector<8x256xf32>
    %c2_67 = arith.constant 2 : index
    %c0_68 = arith.constant 0 : index
    %c0_69 = arith.constant 0 : index
    %119 = vector.load %arg4[%c2_67, %c0_68, %c0_69] : memref<9x8x8xf32, #tpu.memory_space<vmem>>, vector<1x8x8xf32>
    %120 = vector.shape_cast %119 : vector<1x8x8xf32> to vector<8x8xf32>
    %cst_70 = arith.constant dense<0.000000e+00> : vector<8x256xf32>
    %121 = tpu.matmul %120, %118, %cst_70 {dimension_numbers = #tpu.dot_dimension_numbers<[1], [0], [0], [1], [0, 0, 1, 1], [], []>, precision = #tpu.contract_precision<fp32>} : vector<8x8xf32>, vector<8x256xf32>, vector<8x256xf32> -> vector<8x256xf32>
    %122 = arith.addf %115, %121 : vector<8x256xf32>
    %c1_i32_71 = arith.constant 1 : i32
    %123 = tpu.dynamic_rotate %98 by %c1_i32_71 dim 1 : vector<8x256xf32>, i32 -> vector<8x256xf32>
    %cst_72 = arith.constant 0.000000e+00 : f32
    %124 = vector.broadcast %cst_72 : f32 to vector<8x256xf32>
    %125 = arith.select %18, %123, %124 : vector<8x256xi1>, vector<8x256xf32>
    %c3_73 = arith.constant 3 : index
    %c0_74 = arith.constant 0 : index
    %c0_75 = arith.constant 0 : index
    %126 = vector.load %arg4[%c3_73, %c0_74, %c0_75] : memref<9x8x8xf32, #tpu.memory_space<vmem>>, vector<1x8x8xf32>
    %127 = vector.shape_cast %126 : vector<1x8x8xf32> to vector<8x8xf32>
    %cst_76 = arith.constant dense<0.000000e+00> : vector<8x256xf32>
    %128 = tpu.matmul %127, %125, %cst_76 {dimension_numbers = #tpu.dot_dimension_numbers<[1], [0], [0], [1], [0, 0, 1, 1], [], []>, precision = #tpu.contract_precision<fp32>} : vector<8x8xf32>, vector<8x256xf32>, vector<8x256xf32> -> vector<8x256xf32>
    %129 = arith.addf %122, %128 : vector<8x256xf32>
    %c4_77 = arith.constant 4 : index
    %c0_78 = arith.constant 0 : index
    %c0_79 = arith.constant 0 : index
    %130 = vector.load %arg4[%c4_77, %c0_78, %c0_79] : memref<9x8x8xf32, #tpu.memory_space<vmem>>, vector<1x8x8xf32>
    %131 = vector.shape_cast %130 : vector<1x8x8xf32> to vector<8x8xf32>
    %cst_80 = arith.constant dense<0.000000e+00> : vector<8x256xf32>
    %132 = tpu.matmul %131, %98, %cst_80 {dimension_numbers = #tpu.dot_dimension_numbers<[1], [0], [0], [1], [0, 0, 1, 1], [], []>, precision = #tpu.contract_precision<fp32>} : vector<8x8xf32>, vector<8x256xf32>, vector<8x256xf32> -> vector<8x256xf32>
    %133 = arith.addf %129, %132 : vector<8x256xf32>
    %c255_i32_81 = arith.constant 255 : i32
    %134 = tpu.dynamic_rotate %98 by %c255_i32_81 dim 1 : vector<8x256xf32>, i32 -> vector<8x256xf32>
    %cst_82 = arith.constant 0.000000e+00 : f32
    %135 = vector.broadcast %cst_82 : f32 to vector<8x256xf32>
    %136 = arith.select %20, %134, %135 : vector<8x256xi1>, vector<8x256xf32>
    %c5_83 = arith.constant 5 : index
    %c0_84 = arith.constant 0 : index
    %c0_85 = arith.constant 0 : index
    %137 = vector.load %arg4[%c5_83, %c0_84, %c0_85] : memref<9x8x8xf32, #tpu.memory_space<vmem>>, vector<1x8x8xf32>
    %138 = vector.shape_cast %137 : vector<1x8x8xf32> to vector<8x8xf32>
    %cst_86 = arith.constant dense<0.000000e+00> : vector<8x256xf32>
    %139 = tpu.matmul %138, %136, %cst_86 {dimension_numbers = #tpu.dot_dimension_numbers<[1], [0], [0], [1], [0, 0, 1, 1], [], []>, precision = #tpu.contract_precision<fp32>} : vector<8x8xf32>, vector<8x256xf32>, vector<8x256xf32> -> vector<8x256xf32>
    %140 = arith.addf %133, %139 : vector<8x256xf32>
    %c241_i32_87 = arith.constant 241 : i32
    %141 = tpu.dynamic_rotate %98 by %c241_i32_87 dim 1 : vector<8x256xf32>, i32 -> vector<8x256xf32>
    %cst_88 = arith.constant 0.000000e+00 : f32
    %142 = vector.broadcast %cst_88 : f32 to vector<8x256xf32>
    %143 = arith.select %25, %141, %142 : vector<8x256xi1>, vector<8x256xf32>
    %c6_89 = arith.constant 6 : index
    %c0_90 = arith.constant 0 : index
    %c0_91 = arith.constant 0 : index
    %144 = vector.load %arg4[%c6_89, %c0_90, %c0_91] : memref<9x8x8xf32, #tpu.memory_space<vmem>>, vector<1x8x8xf32>
    %145 = vector.shape_cast %144 : vector<1x8x8xf32> to vector<8x8xf32>
    %cst_92 = arith.constant dense<0.000000e+00> : vector<8x256xf32>
    %146 = tpu.matmul %145, %143, %cst_92 {dimension_numbers = #tpu.dot_dimension_numbers<[1], [0], [0], [1], [0, 0, 1, 1], [], []>, precision = #tpu.contract_precision<fp32>} : vector<8x8xf32>, vector<8x256xf32>, vector<8x256xf32> -> vector<8x256xf32>
    %147 = arith.addf %140, %146 : vector<8x256xf32>
    %c240_i32_93 = arith.constant 240 : i32
    %148 = tpu.dynamic_rotate %98 by %c240_i32_93 dim 1 : vector<8x256xf32>, i32 -> vector<8x256xf32>
    %cst_94 = arith.constant 0.000000e+00 : f32
    %149 = vector.broadcast %cst_94 : f32 to vector<8x256xf32>
    %150 = arith.select %27, %148, %149 : vector<8x256xi1>, vector<8x256xf32>
    %c7_95 = arith.constant 7 : index
    %c0_96 = arith.constant 0 : index
    %c0_97 = arith.constant 0 : index
    %151 = vector.load %arg4[%c7_95, %c0_96, %c0_97] : memref<9x8x8xf32, #tpu.memory_space<vmem>>, vector<1x8x8xf32>
    %152 = vector.shape_cast %151 : vector<1x8x8xf32> to vector<8x8xf32>
    %cst_98 = arith.constant dense<0.000000e+00> : vector<8x256xf32>
    %153 = tpu.matmul %152, %150, %cst_98 {dimension_numbers = #tpu.dot_dimension_numbers<[1], [0], [0], [1], [0, 0, 1, 1], [], []>, precision = #tpu.contract_precision<fp32>} : vector<8x8xf32>, vector<8x256xf32>, vector<8x256xf32> -> vector<8x256xf32>
    %154 = arith.addf %147, %153 : vector<8x256xf32>
    %c239_i32_99 = arith.constant 239 : i32
    %155 = tpu.dynamic_rotate %98 by %c239_i32_99 dim 1 : vector<8x256xf32>, i32 -> vector<8x256xf32>
    %cst_100 = arith.constant 0.000000e+00 : f32
    %156 = vector.broadcast %cst_100 : f32 to vector<8x256xf32>
    %157 = arith.select %32, %155, %156 : vector<8x256xi1>, vector<8x256xf32>
    %c8_101 = arith.constant 8 : index
    %c0_102 = arith.constant 0 : index
    %c0_103 = arith.constant 0 : index
    %158 = vector.load %arg4[%c8_101, %c0_102, %c0_103] : memref<9x8x8xf32, #tpu.memory_space<vmem>>, vector<1x8x8xf32>
    %159 = vector.shape_cast %158 : vector<1x8x8xf32> to vector<8x8xf32>
    %cst_104 = arith.constant dense<0.000000e+00> : vector<8x256xf32>
    %160 = tpu.matmul %159, %157, %cst_104 {dimension_numbers = #tpu.dot_dimension_numbers<[1], [0], [0], [1], [0, 0, 1, 1], [], []>, precision = #tpu.contract_precision<fp32>} : vector<8x8xf32>, vector<8x256xf32>, vector<8x256xf32> -> vector<8x256xf32>
    %161 = arith.addf %154, %160 : vector<8x256xf32>
    %162 = arith.addf %161, %33 : vector<8x256xf32>
    %cst_105 = arith.constant 0.000000e+00 : f32
    %163 = vector.broadcast %cst_105 : f32 to vector<8x256xf32>
    %164 = arith.maximumf %162, %163 : vector<8x256xf32>
    %c0_106 = arith.constant 0 : index
    %c0_107 = arith.constant 0 : index
    %165 = vector.load %arg6[%c0_106, %c0_107] : memref<8x256xf32, #tpu.memory_space<vmem>>, vector<8x256xf32>
    tpu.vector_store %arg6[%c0_106, %c0_107], %164 {strides = array<i32>} : memref<8x256xf32, #tpu.memory_space<vmem>>, vector<8x256xf32>,
    return
  }
  func.func @transform_0(%arg0: i32) -> (i32, i32) {
    %c0_i32 = arith.constant 0 : i32
    %c0_i32_0 = arith.constant 0 : i32
    %c0_i32_1 = arith.constant 0 : i32
    return %c0_i32, %c0_i32_0 : i32, i32
  }
  func.func @transform_1(%arg0: i32) -> (i32, i32, i32) {
    %c0_i32 = arith.constant 0 : i32
    %c0_i32_0 = arith.constant 0 : i32
    %c0_i32_1 = arith.constant 0 : i32
    %c0_i32_2 = arith.constant 0 : i32
    return %c0_i32, %c0_i32_0, %c0_i32_1 : i32, i32, i32
  }
  func.func @transform_2(%arg0: i32) -> (i32, i32) {
    %c0_i32 = arith.constant 0 : i32
    %c0_i32_0 = arith.constant 0 : i32
    %c0_i32_1 = arith.constant 0 : i32
    return %c0_i32, %c0_i32_0 : i32, i32
  }
  func.func @transform_3(%arg0: i32) -> (i32, i32, i32) {
    %c0_i32 = arith.constant 0 : i32
    %c0_i32_0 = arith.constant 0 : i32
    %c0_i32_1 = arith.constant 0 : i32
    %c0_i32_2 = arith.constant 0 : i32
    return %c0_i32, %c0_i32_0, %c0_i32_1 : i32, i32, i32
  }
  func.func @transform_4(%arg0: i32) -> (i32, i32) {
    %c0_i32 = arith.constant 0 : i32
    %c0_i32_0 = arith.constant 0 : i32
    %c0_i32_1 = arith.constant 0 : i32
    return %c0_i32, %c0_i32_0 : i32, i32
  }
  func.func @transform_5(%arg0: i32) -> (i32, i32) {
    %c0_i32 = arith.constant 0 : i32
    %c0_i32_0 = arith.constant 0 : i32
    %c0_i32_1 = arith.constant 0 : i32
    return %c0_i32, %c0_i32_0 : i32, i32
  }
}

</mosaic_0001>

<llo_original>
// kernel: tile.13
$region0: #{tile.13}
  #allocation0 [shape = 's32[1]{0}', space=sflag, size = 0x4, scoped, tag = 'scoped memory for tile.13']
  %s0 = inlined_call_operand.vmem [shape: f32[4], index: 0, kind: input, shape index: {}]
  %s1 = inlined_call_operand.vmem [shape: f32[2,4], index: 1, kind: output, shape index: {}]
  // Predicated region
  $region2: #{tile.13} parent=0 // pred_check
    _
  $region3: #{tile.13} parent=0 // pred_check_branch
    %3 = sbr.rel (0) target = $region5
  $region4: #{tile.13} parent=0 // pred_region
    _
  $region5: #{tile.13} parent=0 // pred_fallthru
    _
  %v4 = vld [vmem:[%s0] ss:$0 sm:$0xff]
  %5 = vst [vmem:[%s1] sm:$0x3] %v4

// kernel: tile.0
$region0: #{tile.0}
  %s0 = inlined_call_operand.vmem [shape: f32[2,4], index: 0, kind: input, shape index: {}]
  %s1 = inlined_call_operand.vmem [shape: f32[8,1], index: 1, kind: output, shape index: {}]
  $region1: #{tile.0} parent=0
    #allocation0 [shape = 'u8[4096]{0}', space=vmem, size = 0x1000, scoped, tag = 'scoped mem for input reshape']
    %s3 = sshllo.u32 0, 2
    %v4 = vld [vmem:[%s0] sm:%s3]
    %5 = vst [vmem:[#allocation0] sm:%s3] %v4
    %v6 = vld [vmem:[#allocation0] sm:$0x3]
    %vm7 = vcmask 7168
    %8 = vst.msk [vmem:[%s1] ss:$4 sm:$0x3] %vm7, %v6
    %v9 = vld [vmem:[#allocation0] sm:$0x3]
    %10 = vrot.lane.b32.xlu0 %v9, 127
    %v11 = vpop.permute.xlu0 %10
    %vm12 = vcmask 7168
    %s13 = scalar_lea.vmem %s1, 1
    %14 = vst.msk [vmem:[%s13] ss:$4 sm:$0x3] %vm12, %v11
    %v15 = vld [vmem:[#allocation0] sm:$0x3]
    %16 = vrot.lane.b32.xlu0 %v15, 126
    %v17 = vpop.permute.xlu0 %16
    %vm18 = vcmask 7168
    %s19 = scalar_lea.vmem %s1, 2
    %20 = vst.msk [vmem:[%s19] ss:$4 sm:$0x3] %vm18, %v17
    %v21 = vld [vmem:[#allocation0] sm:$0x3]
    %22 = vrot.lane.b32.xlu0 %v21, 125
    %v23 = vpop.permute.xlu0 %22
    %vm24 = vcmask 7168
    %s25 = scalar_lea.vmem %s1, 3
    %26 = vst.msk [vmem:[%s25] ss:$4 sm:$0x3] %vm24, %v23

// kernel: resblock_forward.1
$region0: #{resblock_forward.1}
  #allocation0 [shape = 'u32[]', space=smem, size = 0x4, offset = 0x4, fixed_abs, tag = 'smem constant byte address 0x4 - core index']
  #allocation1 [shape = 'u32[144,128]{1,0:T(1,128)}', space=vmem, size = 0x12000, scoped, tag = 'internal scratch']
  %s0 = inlined_call_operand.vmem [shape: f32[8,256], index: 0, kind: input, shape index: {}]
  %s1 = inlined_call_operand.vmem [shape: f32[9,8,8], index: 1, kind: input, shape index: {}]
  %s2 = inlined_call_operand.vmem [shape: f32[8,1], index: 2, kind: input, shape index: {}]
  %s3 = inlined_call_operand.vmem [shape: f32[9,8,8], index: 3, kind: input, shape index: {}]
  %s4 = inlined_call_operand.vmem [shape: f32[8,1], index: 4, kind: input, shape index: {}]
  %s5 = inlined_call_operand.vmem [shape: f32[8,256], index: 5, kind: output, shape index: {}]
  %s6 = sld [smem:[#allocation0]]
  $region30: #{resblock_forward.1} parent=0
    _
  %s8 = ssub.s32 1, %s6
  %s9 = scalar_select 0, %s8, %s6
  // Predicated region
  $region2: #{resblock_forward.1} parent=0 // pred_check
    _
  $region3: #{resblock_forward.1} parent=0 // pred_check_branch
    %11 = sbr.rel (0) target = $region5
  $region4: #{resblock_forward.1} parent=0 // pred_region
    _
  $region5: #{resblock_forward.1} parent=0 // pred_fallthru
    _
  // Predicated region
  $region6: #{resblock_forward.1} parent=0 // pred_check
    _
  $region7: #{resblock_forward.1} parent=0 // pred_check_branch
    %13 = sbr.rel (0) target = $region9
  $region8: #{resblock_forward.1} parent=0 // pred_region
    _
  $region9: #{resblock_forward.1} parent=0 // pred_fallthru
    _
  // Predicated region
  $region10: #{resblock_forward.1} parent=0 // pred_check
    _
  $region11: #{resblock_forward.1} parent=0 // pred_check_branch
    %15 = sbr.rel (0) target = $region13
  $region12: #{resblock_forward.1} parent=0 // pred_region
    _
  $region13: #{resblock_forward.1} parent=0 // pred_fallthru
    _
  // Predicated region
  $region14: #{resblock_forward.1} parent=0 // pred_check
    _
  $region15: #{resblock_forward.1} parent=0 // pred_check_branch
    %17 = sbr.rel (0) target = $region17
  $region16: #{resblock_forward.1} parent=0 // pred_region
    _
  $region17: #{resblock_forward.1} parent=0 // pred_fallthru
    _
  // Predicated region
  $region18: #{resblock_forward.1} parent=0 // pred_check
    _
  $region19: #{resblock_forward.1} parent=0 // pred_check_branch
    %19 = sbr.rel (0) target = $region21
  $region20: #{resblock_forward.1} parent=0 // pred_region
    _
  $region21: #{resblock_forward.1} parent=0 // pred_fallthru
    _
  %v20 = vlaneseq
  %v21 = vand.u32 %v20, 127
  %v22 = vadd.s32 %v21, 128
  %v23 = vshra.s32 %v21, 4
  %v24 = vshra.s32 %v22, 4
  %v25 = vand.u32 %v21, 15
  %v26 = vand.u32 %v22, 15
  %vm27 = vcmp.ge.s32.totalorder %v23, 1
  %vm28 = vcmp.ge.s32.totalorder %v24, 1
  %vm29 = vcmp.ge.s32.totalorder %v25, 1
  %vm30 = vcmp.ge.s32.totalorder %v26, 1
  %vm31 = vmand %vm27, %vm29
  %vm32 = vmand %vm28, %vm30
  %vm33 = vcmp.le.s32.totalorder %v25, 14
  %vm34 = vcmp.le.s32.totalorder %v26, 14
  %vm35 = vmand %vm27, %vm33
  %vm36 = vmand %vm28, %vm34
  %vm37 = vcmp.le.s32.totalorder %v23, 14
  %vm38 = vcmp.le.s32.totalorder %v24, 14
  %vm39 = vmand %vm37, %vm29
  %vm40 = vmand %vm38, %vm30
  %vm41 = vmand %vm37, %vm33
  %vm42 = vmand %vm38, %vm34
  %v43 = vld [vmem:[%s0] sm:$0xff]
  %v44 = vld [vmem:[%s0 + $0x8] sm:$0xff]
  %v45 = vld [vmem:[%s2] sm:$0xff]
  %47 = vset.pattern.permute.xlu0 0
  %48 = vperm.xlu0 %47, %v45
  %v49 = vpop.permute.xlu0 %48
  %51 = vrot.lane.b32.xlu0 %v43, 17
  %v52 = vpop.permute.xlu0 %51
  %53 = vrot.lane.b32.xlu0 %v44, 17
  %v54 = vpop.permute.xlu0 %53
  %vm55 = vcmp.lt.s32.totalorder %v21, 17
  %v56 = vsel %vm55, %v52, %v54
  %v57 = vsel %vm55, %v54, %v52
  %v58 = vsel %vm31, %v57, 0.0
  %v59 = vsel %vm32, %v56, 0.0
  %v60 = vld [vmem:[%s1] sm:$0xff]
  %vm61 = vcmask 64512
  %v63 = vsel %vm61, %v60, 0
  %v65 = vand.u32 %v59, 4294901760
  %66 = vmatprep.subr.mxu0 %v65
  %v67 = vand.u32 %v58, 4294901760
  %68 = vmatpush1.msra.mxu0 %v67
  %69 = vmatprep.subr.mxu0 0.0
  %70 = vmatpush1.msra.mxu0 0.0
  %71 = vmatprep.subr.mxu0 0.0
  %72 = vmatpush1.msra.mxu0 0.0
  %73 = vmatprep.subr.mxu0 0.0
  %74 = vmatpush1.msra.mxu0 0.0
  %75 = vmatprep.subr.mxu0 0.0
  %76 = vmatpush1.msra.mxu0 0.0
  %77 = vmatprep.subr.mxu0 0.0
  %78 = vmatpush1.msra.mxu0 0.0
  %79 = vmatprep.subr.mxu0 0.0
  %80 = vmatpush1.msra.mxu0 0.0
  %81 = vmatprep.subr.mxu0 0.0
  %82 = vmatpush1.msra.mxu0 0.0
  %83 = vmatprep.subr.mxu0 0.0
  %84 = vmatpush1.msra.mxu0 0.0
  %85 = vmatprep.subr.mxu0 0.0
  %86 = vmatpush1.msra.mxu0 0.0
  %87 = vmatprep.subr.mxu0 0.0
  %88 = vmatpush1.msra.mxu0 0.0
  %89 = vmatprep.subr.mxu0 0.0
  %90 = vmatpush1.msra.mxu0 0.0
  %91 = vmatprep.subr.mxu0 0.0
  %92 = vmatpush1.msra.mxu0 0.0
  %93 = vmatprep.subr.mxu0 0.0
  %94 = vmatpush1.msra.mxu0 0.0
  %95 = vmatprep.subr.mxu0 0.0
  %96 = vmatpush1.msra.mxu0 0.0
  %97 = vmatprep.subr.mxu0 0.0
  %98 = vmatpush1.msra.mxu0 0.0
  %99 = vmatprep.subr.mxu0 0.0
  %100 = vmatpush1.msra.mxu0 0.0
  %101 = vmatprep.subr.mxu0 0.0
  %102 = vmatpush1.msra.mxu0 0.0
  %103 = vmatprep.subr.mxu0 0.0
  %104 = vmatpush1.msra.mxu0 0.0
  %105 = vmatprep.subr.mxu0 0.0
  %106 = vmatpush1.msra.mxu0 0.0
  %107 = vmatprep.subr.mxu0 0.0
  %108 = vmatpush1.msra.mxu0 0.0
  %109 = vmatprep.subr.mxu0 0.0
  %110 = vmatpush1.msra.mxu0 0.0
  %111 = vmatprep.subr.mxu0 0.0
  %112 = vmatpush1.msra.mxu0 0.0
  %113 = vmatprep.subr.mxu0 0.0
  %114 = vmatpush1.msra.mxu0 0.0
  %115 = vmatprep.subr.mxu0 0.0
  %116 = vmatpush1.msra.mxu0 0.0
  %117 = vmatprep.subr.mxu0 0.0
  %118 = vmatpush1.msra.mxu0 0.0
  %119 = vmatprep.subr.mxu0 0.0
  %120 = vmatpush1.msra.mxu0 0.0
  %121 = vmatprep.subr.mxu0 0.0
  %122 = vmatpush1.msra.mxu0 0.0
  %123 = vmatprep.subr.mxu0 0.0
  %124 = vmatpush1.msra.mxu0 0.0
  %125 = vmatprep.subr.mxu0 0.0
  %126 = vmatpush1.msra.mxu0 0.0
  %127 = vmatprep.subr.mxu0 0.0
  %128 = vmatpush1.msra.mxu0 0.0
  %129 = vmatprep.subr.mxu0 0.0
  %130 = vmatpush1.msra.mxu0 0.0
  %131 = vmatprep.mubr.f32.mxu0 0.0
  %v132 = vand.u32 %v63, 4294901760
  %v133 = vsub.f32 %v63, %v132
  %v134 = vand.u32 %v133, 4294901760
  %v135 = vsub.f32 %v133, %v134
  %v136 = vand.u32 %v135, 4294901760
  %137 = vmatmul.mubr.f32.gmra.mrb[0].mxu0 %v136
  %v138 = vpop.f32.mrb[0].mxu0
  %v139 = vadd.f32 0.0, %v138
  %v140 = vpop.f32.mrb[0].mxu0
  %v141 = vadd.f32 0.0, %v140
  %142 = vdwg.mxu0
  %v143 = vand.u32 %v59, 4294901760
  %v144 = vsub.f32 %v59, %v143
  %v145 = vand.u32 %v144, 4294901760
  %v146 = vsub.f32 %v144, %v145
  %v147 = vand.u32 %v146, 4294901760
  %148 = vmatprep.subr.mxu0 %v147
  %v149 = vand.u32 %v58, 4294901760
  %v150 = vsub.f32 %v58, %v149
  %v151 = vand.u32 %v150, 4294901760
  %v152 = vsub.f32 %v150, %v151
  %v153 = vand.u32 %v152, 4294901760
  %154 = vmatpush1.msra.mxu0 %v153
  %155 = vmatprep.subr.mxu0 0.0
  %156 = vmatpush1.msra.mxu0 0.0
  %157 = vmatprep.subr.mxu0 0.0
  %158 = vmatpush1.msra.mxu0 0.0
  %159 = vmatprep.subr.mxu0 0.0
  %160 = vmatpush1.msra.mxu0 0.0
  %161 = vmatprep.subr.mxu0 0.0
  %162 = vmatpush1.msra.mxu0 0.0
  %163 = vmatprep.subr.mxu0 0.0
  %164 = vmatpush1.msra.mxu0 0.0
  %165 = vmatprep.subr.mxu0 0.0
  %166 = vmatpush1.msra.mxu0 0.0
  %167 = vmatprep.subr.mxu0 0.0
  %168 = vmatpush1.msra.mxu0 0.0
  %169 = vmatprep.subr.mxu0 0.0
  %170 = vmatpush1.msra.mxu0 0.0
  %171 = vmatprep.subr.mxu0 0.0
  %172 = vmatpush1.msra.mxu0 0.0
  %173 = vmatprep.subr.mxu0 0.0
  %174 = vmatpush1.msra.mxu0 0.0
  %175 = vmatprep.subr.mxu0 0.0
  %176 = vmatpush1.msra.mxu0 0.0
  %177 = vmatprep.subr.mxu0 0.0
  %178 = vmatpush1.msra.mxu0 0.0
  %179 = vmatprep.subr.mxu0 0.0
  %180 = vmatpush1.msra.mxu0 0.0
  %181 = vmatprep.subr.mxu0 0.0
  %182 = vmatpush1.msra.mxu0 0.0
  %183 = vmatprep.subr.mxu0 0.0
  %184 = vmatpush1.msra.mxu0 0.0
  %185 = vmatprep.subr.mxu0 0.0
  %186 = vmatpush1.msra.mxu0 0.0
  %187 = vmatprep.subr.mxu0 0.0
  %188 = vmatpush1.msra.mxu0 0.0
  %189 = vmatprep.subr.mxu0 0.0
  %190 = vmatpush1.msra.mxu0 0.0
  %191 = vmatprep.subr.mxu0 0.0
  %192 = vmatpush1.msra.mxu0 0.0
  %193 = vmatprep.subr.mxu0 0.0
  %194 = vmatpush1.msra.mxu0 0.0
  %195 = vmatprep.subr.mxu0 0.0
  %196 = vmatpush1.msra.mxu0 0.0
  %197 = vmatprep.subr.mxu0 0.0
  %198 = vmatpush1.msra.mxu0 0.0
  %199 = vmatprep.subr.mxu0 0.0
  %200 = vmatpush1.msra.mxu0 0.0
  %201 = vmatprep.subr.mxu0 0.0
  %202 = vmatpush1.msra.mxu0 0.0
  %203 = vmatprep.subr.mxu0 0.0
  %204 = vmatpush1.msra.mxu0 0.0
  %205 = vmatprep.subr.mxu0 0.0
  %206 = vmatpush1.msra.mxu0 0.0
  %207 = vmatprep.subr.mxu0 0.0
  %208 = vmatpush1.msra.mxu0 0.0
  %209 = vmatprep.subr.mxu0 0.0
  %210 = vmatpush1.msra.mxu0 0.0
  %211 = vmatprep.subr.mxu0 0.0
  %212 = vmatpush1.msra.mxu0 0.0
  %213 = vmatprep.subr.mxu0 0.0
  %214 = vmatpush1.msra.mxu0 0.0
  %215 = vmatprep.subr.mxu0 0.0
  %216 = vmatpush1.msra.mxu0 0.0
  %217 = vmatprep.mubr.f32.mxu0 0.0
  %v218 = vand.u32 %v63, 4294901760
  %219 = vmatmul.mubr.f32.gmra.mrb[0].mxu0 %v218
  %v220 = vpop.f32.mrb[0].mxu0
  %v221 = vadd.f32 %v139, %v220
  %v222 = vpop.f32.mrb[0].mxu0
  %v223 = vadd.f32 %v141, %v222
  %224 = vdwg.mxu0
  %v225 = vand.u32 %v59, 4294901760
  %v226 = vsub.f32 %v59, %v225
  %227 = vmatprep.subr.mxu0 %v226
  %v228 = vand.u32 %v58, 4294901760
  %v229 = vsub.f32 %v58, %v228
  %230 = vmatpush1.msra.mxu0 %v229
  %231 = vmatprep.subr.mxu0 0.0
  %232 = vmatpush1.msra.mxu0 0.0
  %233 = vmatprep.subr.mxu0 0.0
  %234 = vmatpush1.msra.mxu0 0.0
  %235 = vmatprep.subr.mxu0 0.0
  %236 = vmatpush1.msra.mxu0 0.0
  %237 = vmatprep.subr.mxu0 0.0
  %238 = vmatpush1.msra.mxu0 0.0
  %239 = vmatprep.subr.mxu0 0.0
  %240 = vmatpush1.msra.mxu0 0.0
  %241 = vmatprep.subr.mxu0 0.0
  %242 = vmatpush1.msra.mxu0 0.0
  %243 = vmatprep.subr.mxu0 0.0
  %244 = vmatpush1.msra.mxu0 0.0
  %245 = vmatprep.subr.mxu0 0.0
  %246 = vmatpush1.msra.mxu0 0.0
  %247 = vmatprep.subr.mxu0 0.0
  %248 = vmatpush1.msra.mxu0 0.0
  %249 = vmatprep.subr.mxu0 0.0
  %250 = vmatpush1.msra.mxu0 0.0
  %251 = vmatprep.subr.mxu0 0.0
  %252 = vmatpush1.msra.mxu0 0.0
  %253 = vmatprep.subr.mxu0 0.0
  %254 = vmatpush1.msra.mxu0 0.0
  %255 = vmatprep.subr.mxu0 0.0
  %256 = vmatpush1.msra.mxu0 0.0
  %257 = vmatprep.subr.mxu0 0.0
  %258 = vmatpush1.msra.mxu0 0.0
  %259 = vmatprep.subr.mxu0 0.0
  %260 = vmatpush1.msra.mxu0 0.0
  %261 = vmatprep.subr.mxu0 0.0
  %262 = vmatpush1.msra.mxu0 0.0
  %263 = vmatprep.subr.mxu0 0.0
  %264 = vmatpush1.msra.mxu0 0.0
  %265 = vmatprep.subr.mxu0 0.0
  %266 = vmatpush1.msra.mxu0 0.0
  %267 = vmatprep.subr.mxu0 0.0
  %268 = vmatpush1.msra.mxu0 0.0
  %269 = vmatprep.subr.mxu0 0.0
  %270 = vmatpush1.msra.mxu0 0.0
  %271 = vmatprep.subr.mxu0 0.0
  %272 = vmatpush1.msra.mxu0 0.0
  %273 = vmatprep.subr.mxu0 0.0
  %274 = vmatpush1.msra.mxu0 0.0
  %275 = vmatprep.subr.mxu0 0.0
  %276 = vmatpush1.msra.mxu0 0.0
  %277 = vmatprep.subr.mxu0 0.0
  %278 = vmatpush1.msra.mxu0 0.0
  %279 = vmatprep.subr.mxu0 0.0
  %280 = vmatpush1.msra.mxu0 0.0
  %281 = vmatprep.subr.mxu0 0.0
  %282 = vmatpush1.msra.mxu0 0.0
  %283 = vmatprep.subr.mxu0 0.0
  %284 = vmatpush1.msra.mxu0 0.0
  %285 = vmatprep.subr.mxu0 0.0
  %286 = vmatpush1.msra.mxu0 0.0
  %287 = vmatprep.subr.mxu0 0.0
  %288 = vmatpush1.msra.mxu0 0.0
  %289 = vmatprep.subr.mxu0 0.0
  %290 = vmatpush1.msra.mxu0 0.0
  %291 = vmatprep.subr.mxu0 0.0
  %292 = vmatpush1.msra.mxu0 0.0
  %293 = vmatprep.mubr.f32.mxu0 0.0
  %v294 = vand.u32 %v63, 4294901760
  %v295 = vsub.f32 %v63, %v294
  %296 = vmatmul.mubr.f32.gmra.mrb[0].mxu0 %v295
  %v297 = vpop.f32.mrb[0].mxu0
  %v298 = vadd.f32 %v221, %v297
  %v299 = vpop.f32.mrb[0].mxu0
  %v300 = vadd.f32 %v223, %v299
  %301 = vdwg.mxu0
  %v302 = vand.u32 %v59, 4294901760
  %303 = vmatprep.subr.mxu0 %v302
  %v304 = vand.u32 %v58, 4294901760
  %305 = vmatpush1.msra.mxu0 %v304
  %306 = vmatprep.subr.mxu0 0.0
  %307 = vmatpush1.msra.mxu0 0.0
  %308 = vmatprep.subr.mxu0 0.0
  %309 = vmatpush1.msra.mxu0 0.0
  %310 = vmatprep.subr.mxu0 0.0
  %311 = vmatpush1.msra.mxu0 0.0
  %312 = vmatprep.subr.mxu0 0.0
  %313 = vmatpush1.msra.mxu0 0.0
  %314 = vmatprep.subr.mxu0 0.0
  %315 = vmatpush1.msra.mxu0 0.0
  %316 = vmatprep.subr.mxu0 0.0
  %317 = vmatpush1.msra.mxu0 0.0
  %318 = vmatprep.subr.mxu0 0.0
  %319 = vmatpush1.msra.mxu0 0.0
  %320 = vmatprep.subr.mxu0 0.0
  %321 = vmatpush1.msra.mxu0 0.0
  %322 = vmatprep.subr.mxu0 0.0
  %323 = vmatpush1.msra.mxu0 0.0
  %324 = vmatprep.subr.mxu0 0.0
  %325 = vmatpush1.msra.mxu0 0.0
  %326 = vmatprep.subr.mxu0 0.0
  %327 = vmatpush1.msra.mxu0 0.0
  %328 = vmatprep.subr.mxu0 0.0
  %329 = vmatpush1.msra.mxu0 0.0
  %330 = vmatprep.subr.mxu0 0.0
  %331 = vmatpush1.msra.mxu0 0.0
  %332 = vmatprep.subr.mxu0 0.0
  %333 = vmatpush1.msra.mxu0 0.0
  %334 = vmatprep.subr.mxu0 0.0
  %335 = vmatpush1.msra.mxu0 0.0
  %336 = vmatprep.subr.mxu0 0.0
  %337 = vmatpush1.msra.mxu0 0.0
  %338 = vmatprep.subr.mxu0 0.0
  %339 = vmatpush1.msra.mxu0 0.0
  %340 = vmatprep.subr.mxu0 0.0
  %341 = vmatpush1.msra.mxu0 0.0
  %342 = vmatprep.subr.mxu0 0.0
  %343 = vmatpush1.msra.mxu0 0.0
  %344 = vmatprep.subr.mxu0 0.0
  %345 = vmatpush1.msra.mxu0 0.0
  %346 = vmatprep.subr.mxu0 0.0
  %347 = vmatpush1.msra.mxu0 0.0
  %348 = vmatprep.subr.mxu0 0.0
  %349 = vmatpush1.msra.mxu0 0.0
  %350 = vmatprep.subr.mxu0 0.0
  %351 = vmatpush1.msra.mxu0 0.0
  %352 = vmatprep.subr.mxu0 0.0
  %353 = vmatpush1.msra.mxu0 0.0
  %354 = vmatprep.subr.mxu0 0.0
  %355 = vmatpush1.msra.mxu0 0.0
  %356 = vmatprep.subr.mxu0 0.0
  %357 = vmatpush1.msra.mxu0 0.0
  %358 = vmatprep.subr.mxu0 0.0
  %359 = vmatpush1.msra.mxu0 0.0
  %360 = vmatprep.subr.mxu0 0.0
  %361 = vmatpush1.msra.mxu0 0.0
  %362 = vmatprep.subr.mxu0 0.0
  %363 = vmatpush1.msra.mxu0 0.0
  %364 = vmatprep.subr.mxu0 0.0
  %365 = vmatpush1.msra.mxu0 0.0
  %366 = vmatprep.subr.mxu0 0.0
  %367 = vmatpush1.msra.mxu0 0.0
  %368 = vmatprep.mubr.f32.mxu0 0.0
  %v369 = vand.u32 %v63, 4294901760
  %v370 = vsub.f32 %v63, %v369
  %v371 = vand.u32 %v370, 4294901760
  %372 = vmatmul.mubr.f32.gmra.mrb[0].mxu0 %v371
  %v373 = vpop.f32.mrb[0].mxu0
  %v374 = vadd.f32 %v298, %v373
  %v375 = vpop.f32.mrb[0].mxu0
  %v376 = vadd.f32 %v300, %v375
  %377 = vdwg.mxu0
  %v378 = vand.u32 %v59, 4294901760
  %v379 = vsub.f32 %v59, %v378
  %v380 = vand.u32 %v379, 4294901760
  %381 = vmatprep.subr.mxu0 %v380
  %v382 = vand.u32 %v58, 4294901760
  %v383 = vsub.f32 %v58, %v382
  %v384 = vand.u32 %v383, 4294901760
  %385 = vmatpush1.msra.mxu0 %v384
  %386 = vmatprep.subr.mxu0 0.0
  %387 = vmatpush1.msra.mxu0 0.0
  %388 = vmatprep.subr.mxu0 0.0
  %389 = vmatpush1.msra.mxu0 0.0
  %390 = vmatprep.subr.mxu0 0.0
  %391 = vmatpush1.msra.mxu0 0.0
  %392 = vmatprep.subr.mxu0 0.0
  %393 = vmatpush1.msra.mxu0 0.0
  %394 = vmatprep.subr.mxu0 0.0
  %395 = vmatpush1.msra.mxu0 0.0
  %396 = vmatprep.subr.mxu0 0.0
  %397 = vmatpush1.msra.mxu0 0.0
  %398 = vmatprep.subr.mxu0 0.0
  %399 = vmatpush1.msra.mxu0 0.0
  %400 = vmatprep.subr.mxu0 0.0
  %401 = vmatpush1.msra.mxu0 0.0
  %402 = vmatprep.subr.mxu0 0.0
  %403 = vmatpush1.msra.mxu0 0.0
  %404 = vmatprep.subr.mxu0 0.0
  %405 = vmatpush1.msra.mxu0 0.0
  %406 = vmatprep.subr.mxu0 0.0
  %407 = vmatpush1.msra.mxu0 0.0
  %408 = vmatprep.subr.mxu0 0.0
  %409 = vmatpush1.msra.mxu0 0.0
  %410 = vmatprep.subr.mxu0 0.0
  %411 = vmatpush1.msra.mxu0 0.0
  %412 = vmatprep.subr.mxu0 0.0
  %413 = vmatpush1.msra.mxu0 0.0
  %414 = vmatprep.subr.mxu0 0.0
  %415 = vmatpush1.msra.mxu0 0.0
  %416 = vmatprep.subr.mxu0 0.0
  %417 = vmatpush1.msra.mxu0 0.0
  %418 = vmatprep.subr.mxu0 0.0
  %419 = vmatpush1.msra.mxu0 0.0
  %420 = vmatprep.subr.mxu0 0.0
  %421 = vmatpush1.msra.mxu0 0.0
  %422 = vmatprep.subr.mxu0 0.0
  %423 = vmatpush1.msra.mxu0 0.0
  %424 = vmatprep.subr.mxu0 0.0
  %425 = vmatpush1.msra.mxu0 0.0
  %426 = vmatprep.subr.mxu0 0.0
  %427 = vmatpush1.msra.mxu0 0.0
  %428 = vmatprep.subr.mxu0 0.0
  %429 = vmatpush1.msra.mxu0 0.0
  %430 = vmatprep.subr.mxu0 0.0
  %431 = vmatpush1.msra.mxu0 0.0
  %432 = vmatprep.subr.mxu0 0.0
  %433 = vmatpush1.msra.mxu0 0.0
  %434 = vmatprep.subr.mxu0 0.0
  %435 = vmatpush1.msra.mxu0 0.0
  %436 = vmatprep.subr.mxu0 0.0
  %437 = vmatpush1.msra.mxu0 0.0
  %438 = vmatprep.subr.mxu0 0.0
  %439 = vmatpush1.msra.mxu0 0.0
  %440 = vmatprep.subr.mxu0 0.0
  %441 = vmatpush1.msra.mxu0 0.0
  %442 = vmatprep.subr.mxu0 0.0
  %443 = vmatpush1.msra.mxu0 0.0
  %444 = vmatprep.subr.mxu0 0.0
  %445 = vmatpush1.msra.mxu0 0.0
  %446 = vmatprep.subr.mxu0 0.0
  %447 = vmatpush1.msra.mxu0 0.0
  %448 = vmatprep.mubr.f32.mxu0 0.0
  %v449 = vand.u32 %v63, 4294901760
  %450 = vmatmul.mubr.f32.gmra.mrb[0].mxu0 %v449
  %v451 = vpop.f32.mrb[0].mxu0
  %v452 = vadd.f32 %v374, %v451
  %v453 = vpop.f32.mrb[0].mxu0
  %v454 = vadd.f32 %v376, %v453
  %455 = vdwg.mxu0
  %v456 = vand.u32 %v59, 4294901760
  %457 = vmatprep.subr.mxu0 %v456
  %v458 = vand.u32 %v58, 4294901760
  %459 = vmatpush1.msra.mxu0 %v458
  %460 = vmatprep.subr.mxu0 0.0
  %461 = vmatpush1.msra.mxu0 0.0
  %462 = vmatprep.subr.mxu0 0.0
  %463 = vmatpush1.msra.mxu0 0.0
  %464 = vmatprep.subr.mxu0 0.0
  %465 = vmatpush1.msra.mxu0 0.0
  %466 = vmatprep.subr.mxu0 0.0
  %467 = vmatpush1.msra.mxu0 0.0
  %468 = vmatprep.subr.mxu0 0.0
  %469 = vmatpush1.msra.mxu0 0.0
  %470 = vmatprep.subr.mxu0 0.0
  %471 = vmatpush1.msra.mxu0 0.0
  %472 = vmatprep.subr.mxu0 0.0
  %473 = vmatpush1.msra.mxu0 0.0
  %474 = vmatprep.subr.mxu0 0.0
  %475 = vmatpush1.msra.mxu0 0.0
  %476 = vmatprep.subr.mxu0 0.0
  %477 = vmatpush1.msra.mxu0 0.0
  %478 = vmatprep.subr.mxu0 0.0
  %479 = vmatpush1.msra.mxu0 0.0
  %480 = vmatprep.subr.mxu0 0.0
  %481 = vmatpush1.msra.mxu0 0.0
  %482 = vmatprep.subr.mxu0 0.0
  %483 = vmatpush1.msra.mxu0 0.0
  %484 = vmatprep.subr.mxu0 0.0
  %485 = vmatpush1.msra.mxu0 0.0
  %486 = vmatprep.subr.mxu0 0.0
  %487 = vmatpush1.msra.mxu0 0.0
  %488 = vmatprep.subr.mxu0 0.0
  %489 = vmatpush1.msra.mxu0 0.0
  %490 = vmatprep.subr.mxu0 0.0
  %491 = vmatpush1.msra.mxu0 0.0
  %492 = vmatprep.subr.mxu0 0.0
  %493 = vmatpush1.msra.mxu0 0.0
  %494 = vmatprep.subr.mxu0 0.0
  %495 = vmatpush1.msra.mxu0 0.0
  %496 = vmatprep.subr.mxu0 0.0
  %497 = vmatpush1.msra.mxu0 0.0
  %498 = vmatprep.subr.mxu0 0.0
  %499 = vmatpush1.msra.mxu0 0.0
  %500 = vmatprep.subr.mxu0 0.0
  %501 = vmatpush1.msra.mxu0 0.0
  %502 = vmatprep.subr.mxu0 0.0
  %503 = vmatpush1.msra.mxu0 0.0
  %504 = vmatprep.subr.mxu0 0.0
  %505 = vmatpush1.msra.mxu0 0.0
  %506 = vmatprep.subr.mxu0 0.0
  %507 = vmatpush1.msra.mxu0 0.0
  %508 = vmatprep.subr.mxu0 0.0
  %509 = vmatpush1.msra.mxu0 0.0
  %510 = vmatprep.subr.mxu0 0.0
  %511 = vmatpush1.msra.mxu0 0.0
  %512 = vmatprep.subr.mxu0 0.0
  %513 = vmatpush1.msra.mxu0 0.0
  %514 = vmatprep.subr.mxu0 0.0
  %515 = vmatpush1.msra.mxu0 0.0
  %516 = vmatprep.subr.mxu0 0.0
  %517 = vmatpush1.msra.mxu0 0.0
  %518 = vmatprep.subr.mxu0 0.0
  %519 = vmatpush1.msra.mxu0 0.0
  %520 = vmatprep.subr.mxu0 0.0
  %521 = vmatpush1.msra.mxu0 0.0
  %522 = vmatprep.mubr.f32.mxu0 0.0
  %v523 = vand.u32 %v63, 4294901760
  %524 = vmatmul.mubr.f32.gmra.mrb[0].mxu0 %v523
  %v525 = vpop.f32.mrb[0].mxu0
  %v526 = vadd.f32 %v452, %v525
  %v527 = vpop.f32.mrb[0].mxu0
  %v528 = vadd.f32 %v454, %v527
  %529 = vdwg.mxu0
  %v530 = vadd.f32 %v49, %v526
  %v531 = vadd.f32 %v49, %v528
  %532 = vrot.lane.b32.xlu0 %v43, 16
  %v533 = vpop.permute.xlu0 %532
  %534 = vrot.lane.b32.xlu0 %v44, 16
  %v535 = vpop.permute.xlu0 %534
  %vm536 = vcmp.lt.s32.totalorder %v21, 16
  %v537 = vsel %vm536, %v533, %v535
  %v538 = vsel %vm536, %v535, %v533
  %v539 = vsel %vm27, %v538, 0.0
  %v540 = vsel %vm28, %v537, 0.0
  %s541 = scalar_lea.vmem %s1, 8
  %v542 = vld [vmem:[%s541] sm:$0xff]
  %v544 = vsel %vm61, %v542, 0
  %v546 = vand.u32 %v540, 4294901760
  %547 = vmatprep.subr.mxu0 %v546
  %v548 = vand.u32 %v539, 4294901760
  %549 = vmatpush1.msra.mxu0 %v548
  %550 = vmatprep.subr.mxu0 0.0
  %551 = vmatpush1.msra.mxu0 0.0
  %552 = vmatprep.subr.mxu0 0.0
  %553 = vmatpush1.msra.mxu0 0.0
  %554 = vmatprep.subr.mxu0 0.0
  %555 = vmatpush1.msra.mxu0 0.0
  %556 = vmatprep.subr.mxu0 0.0
  %557 = vmatpush1.msra.mxu0 0.0
  %558 = vmatprep.subr.mxu0 0.0
  %559 = vmatpush1.msra.mxu0 0.0
  %560 = vmatprep.subr.mxu0 0.0
  %561 = vmatpush1.msra.mxu0 0.0
  %562 = vmatprep.subr.mxu0 0.0
  %563 = vmatpush1.msra.mxu0 0.0
  %564 = vmatprep.subr.mxu0 0.0
  %565 = vmatpush1.msra.mxu0 0.0
  %566 = vmatprep.subr.mxu0 0.0
  %567 = vmatpush1.msra.mxu0 0.0
  %568 = vmatprep.subr.mxu0 0.0
  %569 = vmatpush1.msra.mxu0 0.0
  %570 = vmatprep.subr.mxu0 0.0
  %571 = vmatpush1.msra.mxu0 0.0
  %572 = vmatprep.subr.mxu0 0.0
  %573 = vmatpush1.msra.mxu0 0.0
  %574 = vmatprep.subr.mxu0 0.0
  %575 = vmatpush1.msra.mxu0 0.0
  %576 = vmatprep.subr.mxu0 0.0
  %577 = vmatpush1.msra.mxu0 0.0
  %578 = vmatprep.subr.mxu0 0.0
  %579 = vmatpush1.msra.mxu0 0.0
  %580 = vmatprep.subr.mxu0 0.0
  %581 = vmatpush1.msra.mxu0 0.0
  %582 = vmatprep.subr.mxu0 0.0
  %583 = vmatpush1.msra.mxu0 0.0
  %584 = vmatprep.subr.mxu0 0.0
  %585 = vmatpush1.msra.mxu0 0.0
  %586 = vmatprep.subr.mxu0 0.0
  %587 = vmatpush1.msra.mxu0 0.0
  %588 = vmatprep.subr.mxu0 0.0
  %589 = vmatpush1.msra.mxu0 0.0
  %590 = vmatprep.subr.mxu0 0.0
  %591 = vmatpush1.msra.mxu0 0.0
  %592 = vmatprep.subr.mxu0 0.0
  %593 = vmatpush1.msra.mxu0 0.0
  %594 = vmatprep.subr.mxu0 0.0
  %595 = vmatpush1.msra.mxu0 0.0
  %596 = vmatprep.subr.mxu0 0.0
  %597 = vmatpush1.msra.mxu0 0.0
  %598 = vmatprep.subr.mxu0 0.0
  %599 = vmatpush1.msra.mxu0 0.0
  %600 = vmatprep.subr.mxu0 0.0
  %601 = vmatpush1.msra.mxu0 0.0
  %602 = vmatprep.subr.mxu0 0.0
  %603 = vmatpush1.msra.mxu0 0.0
  %604 = vmatprep.subr.mxu0 0.0
  %605 = vmatpush1.msra.mxu0 0.0
  %606 = vmatprep.subr.mxu0 0.0
  %607 = vmatpush1.msra.mxu0 0.0
  %608 = vmatprep.subr.mxu0 0.0
  %609 = vmatpush1.msra.mxu0 0.0
  %610 = vmatprep.subr.mxu0 0.0
  %611 = vmatpush1.msra.mxu0 0.0
  %612 = vmatprep.mubr.f32.mxu0 0.0
  %v613 = vand.u32 %v544, 4294901760
  %v614 = vsub.f32 %v544, %v613
  %v615 = vand.u32 %v614, 4294901760
  %v616 = vsub.f32 %v614, %v615
  %v617 = vand.u32 %v616, 4294901760
  %618 = vmatmul.mubr.f32.gmra.mrb[0].mxu0 %v617
  %v619 = vpop.f32.mrb[0].mxu0
  %v620 = vadd.f32 0.0, %v619
  %v621 = vpop.f32.mrb[0].mxu0
  %v622 = vadd.f32 0.0, %v621
  %623 = vdwg.mxu0
  %v624 = vand.u32 %v540, 4294901760
  %v625 = vsub.f32 %v540, %v624
  %v626 = vand.u32 %v625, 4294901760
  %v627 = vsub.f32 %v625, %v626
  %v628 = vand.u32 %v627, 4294901760
  %629 = vmatprep.subr.mxu0 %v628
  %v630 = vand.u32 %v539, 4294901760
  %v631 = vsub.f32 %v539, %v630
  %v632 = vand.u32 %v631, 4294901760
  %v633 = vsub.f32 %v631, %v632
  %v634 = vand.u32 %v633, 4294901760
  %635 = vmatpush1.msra.mxu0 %v634
  %636 = vmatprep.subr.mxu0 0.0
  %637 = vmatpush1.msra.mxu0 0.0
  %638 = vmatprep.subr.mxu0 0.0
  %639 = vmatpush1.msra.mxu0 0.0
  %640 = vmatprep.subr.mxu0 0.0
  %641 = vmatpush1.msra.mxu0 0.0
  %642 = vmatprep.subr.mxu0 0.0
  %643 = vmatpush1.msra.mxu0 0.0
  %644 = vmatprep.subr.mxu0 0.0
  %645 = vmatpush1.msra.mxu0 0.0
  %646 = vmatprep.subr.mxu0 0.0
  %647 = vmatpush1.msra.mxu0 0.0
  %648 = vmatprep.subr.mxu0 0.0
  %649 = vmatpush1.msra.mxu0 0.0
  %650 = vmatprep.subr.mxu0 0.0
  %651 = vmatpush1.msra.mxu0 0.0
  %652 = vmatprep.subr.mxu0 0.0
  %653 = vmatpush1.msra.mxu0 0.0
  %654 = vmatprep.subr.mxu0 0.0
  %655 = vmatpush1.msra.mxu0 0.0
  %656 = vmatprep.subr.mxu0 0.0
  %657 = vmatpush1.msra.mxu0 0.0
  %658 = vmatprep.subr.mxu0 0.0
  %659 = vmatpush1.msra.mxu0 0.0
  %660 = vmatprep.subr.mxu0 0.0
  %661 = vmatpush1.msra.mxu0 0.0
  %662 = vmatprep.subr.mxu0 0.0
  %663 = vmatpush1.msra.mxu0 0.0
  %664 = vmatprep.subr.mxu0 0.0
  %665 = vmatpush1.msra.mxu0 0.0
  %666 = vmatprep.subr.mxu0 0.0
  %667 = vmatpush1.msra.mxu0 0.0
  %668 = vmatprep.subr.mxu0 0.0
  %669 = vmatpush1.msra.mxu0 0.0
  %670 = vmatprep.subr.mxu0 0.0
  %671 = vmatpush1.msra.mxu0 0.0
  %672 = vmatprep.subr.mxu0 0.0
  %673 = vmatpush1.msra.mxu0 0.0
  %674 = vmatprep.subr.mxu0 0.0
  %675 = vmatpush1.msra.mxu0 0.0
  %676 = vmatprep.subr.mxu0 0.0
  %677 = vmatpush1.msra.mxu0 0.0
  %678 = vmatprep.subr.mxu0 0.0
  %679 = vmatpush1.msra.mxu0 0.0
  %680 = vmatprep.subr.mxu0 0.0
  %681 = vmatpush1.msra.mxu0 0.0
  %682 = vmatprep.subr.mxu0 0.0
  %683 = vmatpush1.msra.mxu0 0.0
  %684 = vmatprep.subr.mxu0 0.0
  %685 = vmatpush1.msra.mxu0 0.0
  %686 = vmatprep.subr.mxu0 0.0
  %687 = vmatpush1.msra.mxu0 0.0
  %688 = vmatprep.subr.mxu0 0.0
  %689 = vmatpush1.msra.mxu0 0.0
  %690 = vmatprep.subr.mxu0 0.0
  %691 = vmatpush1.msra.mxu0 0.0
  %692 = vmatprep.subr.mxu0 0.0
  %693 = vmatpush1.msra.mxu0 0.0
  %694 = vmatprep.subr.mxu0 0.0
  %695 = vmatpush1.msra.mxu0 0.0
  %696 = vmatprep.subr.mxu0 0.0
  %697 = vmatpush1.msra.mxu0 0.0
  %698 = vmatprep.mubr.f32.mxu0 0.0
  %v699 = vand.u32 %v544, 4294901760
  %700 = vmatmul.mubr.f32.gmra.mrb[0].mxu0 %v699
  %v701 = vpop.f32.mrb[0].mxu0
  %v702 = vadd.f32 %v620, %v701
  %v703 = vpop.f32.mrb[0].mxu0
  %v704 = vadd.f32 %v622, %v703
  %705 = vdwg.mxu0
  %v706 = vand.u32 %v540, 4294901760
  %v707 = vsub.f32 %v540, %v706
  %708 = vmatprep.subr.mxu0 %v707
  %v709 = vand.u32 %v539, 4294901760
  %v710 = vsub.f32 %v539, %v709
  %711 = vmatpush1.msra.mxu0 %v710
  %712 = vmatprep.subr.mxu0 0.0
  %713 = vmatpush1.msra.mxu0 0.0
  %714 = vmatprep.subr.mxu0 0.0
  %715 = vmatpush1.msra.mxu0 0.0
  %716 = vmatprep.subr.mxu0 0.0
  %717 = vmatpush1.msra.mxu0 0.0
  %718 = vmatprep.subr.mxu0 0.0
  %719 = vmatpush1.msra.mxu0 0.0
  %720 = vmatprep.subr.mxu0 0.0
  %721 = vmatpush1.msra.mxu0 0.0
  %722 = vmatprep.subr.mxu0 0.0
  %723 = vmatpush1.msra.mxu0 0.0
  %724 = vmatprep.subr.mxu0 0.0
  %725 = vmatpush1.msra.mxu0 0.0
  %726 = vmatprep.subr.mxu0 0.0
  %727 = vmatpush1.msra.mxu0 0.0
  %728 = vmatprep.subr.mxu0 0.0
  %729 = vmatpush1.msra.mxu0 0.0
  %730 = vmatprep.subr.mxu0 0.0
  %731 = vmatpush1.msra.mxu0 0.0
  %732 = vmatprep.subr.mxu0 0.0
  %733 = vmatpush1.msra.mxu0 0.0
  %734 = vmatprep.subr.mxu0 0.0
  %735 = vmatpush1.msra.mxu0 0.0
  %736 = vmatprep.subr.mxu0 0.0
  %737 = vmatpush1.msra.mxu0 0.0
  %738 = vmatprep.subr.mxu0 0.0
  %739 = vmatpush1.msra.mxu0 0.0
  %740 = vmatprep.subr.mxu0 0.0
  %741 = vmatpush1.msra.mxu0 0.0
  %742 = vmatprep.subr.mxu0 0.0
  %743 = vmatpush1.msra.mxu0 0.0
  %744 = vmatprep.subr.mxu0 0.0
  %745 = vmatpush1.msra.mxu0 0.0
  %746 = vmatprep.subr.mxu0 0.0
  %747 = vmatpush1.msra.mxu0 0.0
  %748 = vmatprep.subr.mxu0 0.0
  %749 = vmatpush1.msra.mxu0 0.0
  %750 = vmatprep.subr.mxu0 0.0
  %751 = vmatpush1.msra.mxu0 0.0
  %752 = vmatprep.subr.mxu0 0.0
  %753 = vmatpush1.msra.mxu0 0.0
  %754 = vmatprep.subr.mxu0 0.0
  %755 = vmatpush1.msra.mxu0 0.0
  %756 = vmatprep.subr.mxu0 0.0
  %757 = vmatpush1.msra.mxu0 0.0
  %758 = vmatprep.subr.mxu0 0.0
  %759 = vmatpush1.msra.mxu0 0.0
  %760 = vmatprep.subr.mxu0 0.0
  %761 = vmatpush1.msra.mxu0 0.0
  %762 = vmatprep.subr.mxu0 0.0
  %763 = vmatpush1.msra.mxu0 0.0
  %764 = vmatprep.subr.mxu0 0.0
  %765 = vmatpush1.msra.mxu0 0.0
  %766 = vmatprep.subr.mxu0 0.0
  %767 = vmatpush1.msra.mxu0 0.0
  %768 = vmatprep.subr.mxu0 0.0
  %769 = vmatpush1.msra.mxu0 0.0
  %770 = vmatprep.subr.mxu0 0.0
  %771 = vmatpush1.msra.mxu0 0.0
  %772 = vmatprep.subr.mxu0 0.0
  %773 = vmatpush1.msra.mxu0 0.0
  %774 = vmatprep.mubr.f32.mxu0 0.0
  %v775 = vand.u32 %v544, 4294901760
  %v776 = vsub.f32 %v544, %v775
  %777 = vmatmul.mubr.f32.gmra.mrb[0].mxu0 %v776
  %v778 = vpop.f32.mrb[0].mxu0
  %v779 = vadd.f32 %v702, %v778
  %v780 = vpop.f32.mrb[0].mxu0
  %v781 = vadd.f32 %v704, %v780
  %782 = vdwg.mxu0
  %v783 = vand.u32 %v540, 4294901760
  %784 = vmatprep.subr.mxu0 %v783
  %v785 = vand.u32 %v539, 4294901760
  %786 = vmatpush1.msra.mxu0 %v785
  %787 = vmatprep.subr.mxu0 0.0
  %788 = vmatpush1.msra.mxu0 0.0
  %789 = vmatprep.subr.mxu0 0.0
  %790 = vmatpush1.msra.mxu0 0.0
  %791 = vmatprep.subr.mxu0 0.0
  %792 = vmatpush1.msra.mxu0 0.0
  %793 = vmatprep.subr.mxu0 0.0
  %794 = vmatpush1.msra.mxu0 0.0
  %795 = vmatprep.subr.mxu0 0.0
  %796 = vmatpush1.msra.mxu0 0.0
  %797 = vmatprep.subr.mxu0 0.0
  %798 = vmatpush1.msra.mxu0 0.0
  %799 = vmatprep.subr.mxu0 0.0
  %800 = vmatpush1.msra.mxu0 0.0
  %801 = vmatprep.subr.mxu0 0.0
  %802 = vmatpush1.msra.mxu0 0.0
  %803 = vmatprep.subr.mxu0 0.0
  %804 = vmatpush1.msra.mxu0 0.0
  %805 = vmatprep.subr.mxu0 0.0
  %806 = vmatpush1.msra.mxu0 0.0
  %807 = vmatprep.subr.mxu0 0.0
  %808 = vmatpush1.msra.mxu0 0.0
  %809 = vmatprep.subr.mxu0 0.0
  %810 = vmatpush1.msra.mxu0 0.0
  %811 = vmatprep.subr.mxu0 0.0
  %812 = vmatpush1.msra.mxu0 0.0
  %813 = vmatprep.subr.mxu0 0.0
  %814 = vmatpush1.msra.mxu0 0.0
  %815 = vmatprep.subr.mxu0 0.0
  %816 = vmatpush1.msra.mxu0 0.0
  %817 = vmatprep.subr.mxu0 0.0
  %818 = vmatpush1.msra.mxu0 0.0
  %819 = vmatprep.subr.mxu0 0.0
  %820 = vmatpush1.msra.mxu0 0.0
  %821 = vmatprep.subr.mxu0 0.0
  %822 = vmatpush1.msra.mxu0 0.0
  %823 = vmatprep.subr.mxu0 0.0
  %824 = vmatpush1.msra.mxu0 0.0
  %825 = vmatprep.subr.mxu0 0.0
  %826 = vmatpush1.msra.mxu0 0.0
  %827 = vmatprep.subr.mxu0 0.0
  %828 = vmatpush1.msra.mxu0 0.0
  %829 = vmatprep.subr.mxu0 0.0
  %830 = vmatpush1.msra.mxu0 0.0
  %831 = vmatprep.subr.mxu0 0.0
  %832 = vmatpush1.msra.mxu0 0.0
  %833 = vmatprep.subr.mxu0 0.0
  %834 = vmatpush1.msra.mxu0 0.0
  %835 = vmatprep.subr.mxu0 0.0
  %836 = vmatpush1.msra.mxu0 0.0
  %837 = vmatprep.subr.mxu0 0.0
  %838 = vmatpush1.msra.mxu0 0.0
  %839 = vmatprep.subr.mxu0 0.0
  %840 = vmatpush1.msra.mxu0 0.0
  %841 = vmatprep.subr.mxu0 0.0
  %842 = vmatpush1.msra.mxu0 0.0
  %843 = vmatprep.subr.mxu0 0.0
  %844 = vmatpush1.msra.mxu0 0.0
  %845 = vmatprep.subr.mxu0 0.0
  %846 = vmatpush1.msra.mxu0 0.0
  %847 = vmatprep.subr.mxu0 0.0
  %848 = vmatpush1.msra.mxu0 0.0
  %849 = vmatprep.mubr.f32.mxu0 0.0
  %v850 = vand.u32 %v544, 4294901760
  %v851 = vsub.f32 %v544, %v850
  %v852 = vand.u32 %v851, 4294901760
  %853 = vmatmul.mubr.f32.gmra.mrb[0].mxu0 %v852
  %v854 = vpop.f32.mrb[0].mxu0
  %v855 = vadd.f32 %v779, %v854
  %v856 = vpop.f32.mrb[0].mxu0
  %v857 = vadd.f32 %v781, %v856
  %858 = vdwg.mxu0
  %v859 = vand.u32 %v540, 4294901760
  %v860 = vsub.f32 %v540, %v859
  %v861 = vand.u32 %v860, 4294901760
  %862 = vmatprep.subr.mxu0 %v861
  %v863 = vand.u32 %v539, 4294901760
  %v864 = vsub.f32 %v539, %v863
  %v865 = vand.u32 %v864, 4294901760
  %866 = vmatpush1.msra.mxu0 %v865
  %867 = vmatprep.subr.mxu0 0.0
  %868 = vmatpush1.msra.mxu0 0.0
  %869 = vmatprep.subr.mxu0 0.0
  %870 = vmatpush1.msra.mxu0 0.0
  %871 = vmatprep.subr.mxu0 0.0
  %872 = vmatpush1.msra.mxu0 0.0
  %873 = vmatprep.subr.mxu0 0.0
  %874 = vmatpush1.msra.mxu0 0.0
  %875 = vmatprep.subr.mxu0 0.0
  %876 = vmatpush1.msra.mxu0 0.0
  %877 = vmatprep.subr.mxu0 0.0
  %878 = vmatpush1.msra.mxu0 0.0
  %879 = vmatprep.subr.mxu0 0.0
  %880 = vmatpush1.msra.mxu0 0.0
  %881 = vmatprep.subr.mxu0 0.0
  %882 = vmatpush1.msra.mxu0 0.0
  %883 = vmatprep.subr.mxu0 0.0
  %884 = vmatpush1.msra.mxu0 0.0
  %885 = vmatprep.subr.mxu0 0.0
  %886 = vmatpush1.msra.mxu0 0.0
  %887 = vmatprep.subr.mxu0 0.0
  %888 = vmatpush1.msra.mxu0 0.0
  %889 = vmatprep.subr.mxu0 0.0
  %890 = vmatpush1.msra.mxu0 0.0
  %891 = vmatprep.subr.mxu0 0.0
  %892 = vmatpush1.msra.mxu0 0.0
  %893 = vmatprep.subr.mxu0 0.0
  %894 = vmatpush1.msra.mxu0 0.0
  %895 = vmatprep.subr.mxu0 0.0
  %896 = vmatpush1.msra.mxu0 0.0
  %897 = vmatprep.subr.mxu0 0.0
  %898 = vmatpush1.msra.mxu0 0.0
  %899 = vmatprep.subr.mxu0 0.0
  %900 = vmatpush1.msra.mxu0 0.0
  %901 = vmatprep.subr.mxu0 0.0
  %902 = vmatpush1.msra.mxu0 0.0
  %903 = vmatprep.subr.mxu0 0.0
  %904 = vmatpush1.msra.mxu0 0.0
  %905 = vmatprep.subr.mxu0 0.0
  %906 = vmatpush1.msra.mxu0 0.0
  %907 = vmatprep.subr.mxu0 0.0
  %908 = vmatpush1.msra.mxu0 0.0
  %909 = vmatprep.subr.mxu0 0.0
  %910 = vmatpush1.msra.mxu0 0.0
  %911 = vmatprep.subr.mxu0 0.0
  %912 = vmatpush1.msra.mxu0 0.0
  %913 = vmatprep.subr.mxu0 0.0
  %914 = vmatpush1.msra.mxu0 0.0
  %915 = vmatprep.subr.mxu0 0.0
  %916 = vmatpush1.msra.mxu0 0.0
  %917 = vmatprep.subr.mxu0 0.0
  %918 = vmatpush1.msra.mxu0 0.0
  %919 = vmatprep.subr.mxu0 0.0
  %920 = vmatpush1.msra.mxu0 0.0
  %921 = vmatprep.subr.mxu0 0.0
  %922 = vmatpush1.msra.mxu0 0.0
  %923 = vmatprep.subr.mxu0 0.0
  %924 = vmatpush1.msra.mxu0 0.0
  %925 = vmatprep.subr.mxu0 0.0
  %926 = vmatpush1.msra.mxu0 0.0
  %927 = vmatprep.subr.mxu0 0.0
  %928 = vmatpush1.msra.mxu0 0.0
  %929 = vmatprep.mubr.f32.mxu0 0.0
  %v930 = vand.u32 %v544, 4294901760
  %931 = vmatmul.mubr.f32.gmra.mrb[0].mxu0 %v930
  %v932 = vpop.f32.mrb[0].mxu0
  %v933 = vadd.f32 %v855, %v932
  %v934 = vpop.f32.mrb[0].mxu0
  %v935 = vadd.f32 %v857, %v934
  %936 = vdwg.mxu0
  %v937 = vand.u32 %v540, 4294901760
  %938 = vmatprep.subr.mxu0 %v937
  %v939 = vand.u32 %v539, 4294901760
  %940 = vmatpush1.msra.mxu0 %v939
  %941 = vmatprep.subr.mxu0 0.0
  %942 = vmatpush1.msra.mxu0 0.0
  %943 = vmatprep.subr.mxu0 0.0
  %944 = vmatpush1.msra.mxu0 0.0
  %945 = vmatprep.subr.mxu0 0.0
  %946 = vmatpush1.msra.mxu0 0.0
  %947 = vmatprep.subr.mxu0 0.0
  %948 = vmatpush1.msra.mxu0 0.0
  %949 = vmatprep.subr.mxu0 0.0
  %950 = vmatpush1.msra.mxu0 0.0
  %951 = vmatprep.subr.mxu0 0.0
  %952 = vmatpush1.msra.mxu0 0.0
  %953 = vmatprep.subr.mxu0 0.0
  %954 = vmatpush1.msra.mxu0 0.0
  %955 = vmatprep.subr.mxu0 0.0
  %956 = vmatpush1.msra.mxu0 0.0
  %957 = vmatprep.subr.mxu0 0.0
  %958 = vmatpush1.msra.mxu0 0.0
  %959 = vmatprep.subr.mxu0 0.0
  %960 = vmatpush1.msra.mxu0 0.0
  %961 = vmatprep.subr.mxu0 0.0
  %962 = vmatpush1.msra.mxu0 0.0
  %963 = vmatprep.subr.mxu0 0.0
  %964 = vmatpush1.msra.mxu0 0.0
  %965 = vmatprep.subr.mxu0 0.0
  %966 = vmatpush1.msra.mxu0 0.0
  %967 = vmatprep.subr.mxu0 0.0
  %968 = vmatpush1.msra.mxu0 0.0
  %969 = vmatprep.subr.mxu0 0.0
  %970 = vmatpush1.msra.mxu0 0.0
  %971 = vmatprep.subr.mxu0 0.0
  %972 = vmatpush1.msra.mxu0 0.0
  %973 = vmatprep.subr.mxu0 0.0
  %974 = vmatpush1.msra.mxu0 0.0
  %975 = vmatprep.subr.mxu0 0.0
  %976 = vmatpush1.msra.mxu0 0.0
  %977 = vmatprep.subr.mxu0 0.0
  %978 = vmatpush1.msra.mxu0 0.0
  %979 = vmatprep.subr.mxu0 0.0
  %980 = vmatpush1.msra.mxu0 0.0
  %981 = vmatprep.subr.mxu0 0.0
  %982 = vmatpush1.msra.mxu0 0.0
  %983 = vmatprep.subr.mxu0 0.0
  %984 = vmatpush1.msra.mxu0 0.0
  %985 = vmatprep.subr.mxu0 0.0
  %986 = vmatpush1.msra.mxu0 0.0
  %987 = vmatprep.subr.mxu0 0.0
  %988 = vmatpush1.msra.mxu0 0.0
  %989 = vmatprep.subr.mxu0 0.0
  %990 = vmatpush1.msra.mxu0 0.0
  %991 = vmatprep.subr.mxu0 0.0
  %992 = vmatpush1.msra.mxu0 0.0
  %993 = vmatprep.subr.mxu0 0.0
  %994 = vmatpush1.msra.mxu0 0.0
  %995 = vmatprep.subr.mxu0 0.0
  %996 = vmatpush1.msra.mxu0 0.0
  %997 = vmatprep.subr.mxu0 0.0
  %998 = vmatpush1.msra.mxu0 0.0
  %999 = vmatprep.subr.mxu0 0.0
  %1000 = vmatpush1.msra.mxu0 0.0
  %1001 = vmatprep.subr.mxu0 0.0
  %1002 = vmatpush1.msra.mxu0 0.0
  %1003 = vmatprep.mubr.f32.mxu0 0.0
  %v1004 = vand.u32 %v544, 4294901760
  %1005 = vmatmul.mubr.f32.gmra.mrb[0].mxu0 %v1004
  %v1006 = vpop.f32.mrb[0].mxu0
  %v1007 = vadd.f32 %v933, %v1006
  %v1008 = vpop.f32.mrb[0].mxu0
  %v1009 = vadd.f32 %v935, %v1008
  %1010 = vdwg.mxu0
  %v1011 = vadd.f32 %v530, %v1007
  %v1012 = vadd.f32 %v531, %v1009
  %1013 = vrot.lane.b32.xlu0 %v43, 15
  %v1014 = vpop.permute.xlu0 %1013
  %1015 = vrot.lane.b32.xlu0 %v44, 15
  %v1016 = vpop.permute.xlu0 %1015
  %vm1017 = vcmp.lt.s32.totalorder %v21, 15
  %v1018 = vsel %vm1017, %v1014, %v1016
  %v1019 = vsel %vm1017, %v1016, %v1014
  %v1020 = vsel %vm35, %v1019, 0.0
  %v1021 = vsel %vm36, %v1018, 0.0
  %s1022 = scalar_lea.vmem %s1, 16
  %v1023 = vld [vmem:[%s1022] sm:$0xff]
  %v1025 = vsel %vm61, %v1023, 0
  %v1027 = vand.u32 %v1021, 4294901760
  %1028 = vmatprep.subr.mxu0 %v1027
  %v1029 = vand.u32 %v1020, 4294901760
  %1030 = vmatpush1.msra.mxu0 %v1029
  %1031 = vmatprep.subr.mxu0 0.0
  %1032 = vmatpush1.msra.mxu0 0.0
  %1033 = vmatprep.subr.mxu0 0.0
  %1034 = vmatpush1.msra.mxu0 0.0
  %1035 = vmatprep.subr.mxu0 0.0
  %1036 = vmatpush1.msra.mxu0 0.0
  %1037 = vmatprep.subr.mxu0 0.0
  %1038 = vmatpush1.msra.mxu0 0.0
  %1039 = vmatprep.subr.mxu0 0.0
  %1040 = vmatpush1.msra.mxu0 0.0
  %1041 = vmatprep.subr.mxu0 0.0
  %1042 = vmatpush1.msra.mxu0 0.0
  %1043 = vmatprep.subr.mxu0 0.0
  %1044 = vmatpush1.msra.mxu0 0.0
  %1045 = vmatprep.subr.mxu0 0.0
  %1046 = vmatpush1.msra.mxu0 0.0
  %1047 = vmatprep.subr.mxu0 0.0
  %1048 = vmatpush1.msra.mxu0 0.0
  %1049 = vmatprep.subr.mxu0 0.0
  %1050 = vmatpush1.msra.mxu0 0.0
  %1051 = vmatprep.subr.mxu0 0.0
  %1052 = vmatpush1.msra.mxu0 0.0
  %1053 = vmatprep.subr.mxu0 0.0
  %1054 = vmatpush1.msra.mxu0 0.0
  %1055 = vmatprep.subr.mxu0 0.0
  %1056 = vmatpush1.msra.mxu0 0.0
  %1057 = vmatprep.subr.mxu0 0.0
  %1058 = vmatpush1.msra.mxu0 0.0
  %1059 = vmatprep.subr.mxu0 0.0
  %1060 = vmatpush1.msra.mxu0 0.0
  %1061 = vmatprep.subr.mxu0 0.0
  %1062 = vmatpush1.msra.mxu0 0.0
  %1063 = vmatprep.subr.mxu0 0.0
  %1064 = vmatpush1.msra.mxu0 0.0
  %1065 = vmatprep.subr.mxu0 0.0
  %1066 = vmatpush1.msra.mxu0 0.0
  %1067 = vmatprep.subr.mxu0 0.0
  %1068 = vmatpush1.msra.mxu0 0.0
  %1069 = vmatprep.subr.mxu0 0.0
  %1070 = vmatpush1.msra.mxu0 0.0
  %1071 = vmatprep.subr.mxu0 0.0
  %1072 = vmatpush1.msra.mxu0 0.0
  %1073 = vmatprep.subr.mxu0 0.0
  %1074 = vmatpush1.msra.mxu0 0.0
  %1075 = vmatprep.subr.mxu0 0.0
  %1076 = vmatpush1.msra.mxu0 0.0
  %1077 = vmatprep.subr.mxu0 0.0
  %1078 = vmatpush1.msra.mxu0 0.0
  %1079 = vmatprep.subr.mxu0 0.0
  %1080 = vmatpush1.msra.mxu0 0.0
  %1081 = vmatprep.subr.mxu0 0.0
  %1082 = vmatpush1.msra.mxu0 0.0
  %1083 = vmatprep.subr.mxu0 0.0
  %1084 = vmatpush1.msra.mxu0 0.0
  %1085 = vmatprep.subr.mxu0 0.0
  %1086 = vmatpush1.msra.mxu0 0.0
  %1087 = vmatprep.subr.mxu0 0.0
  %1088 = vmatpush1.msra.mxu0 0.0
  %1089 = vmatprep.subr.mxu0 0.0
  %1090 = vmatpush1.msra.mxu0 0.0
  %1091 = vmatprep.subr.mxu0 0.0
  %1092 = vmatpush1.msra.mxu0 0.0
  %1093 = vmatprep.mubr.f32.mxu0 0.0
  %v1094 = vand.u32 %v1025, 4294901760
  %v1095 = vsub.f32 %v1025, %v1094
  %v1096 = vand.u32 %v1095, 4294901760
  %v1097 = vsub.f32 %v1095, %v1096
  %v1098 = vand.u32 %v1097, 4294901760
  %1099 = vmatmul.mubr.f32.gmra.mrb[0].mxu0 %v1098
  %v1100 = vpop.f32.mrb[0].mxu0
  %v1101 = vadd.f32 0.0, %v1100
  %v1102 = vpop.f32.mrb[0].mxu0
  %v1103 = vadd.f32 0.0, %v1102
  %1104 = vdwg.mxu0
  %v1105 = vand.u32 %v1021, 4294901760
  %v1106 = vsub.f32 %v1021, %v1105
  %v1107 = vand.u32 %v1106, 4294901760
  %v1108 = vsub.f32 %v1106, %v1107
  %v1109 = vand.u32 %v1108, 4294901760
  %1110 = vmatprep.subr.mxu0 %v1109
  %v1111 = vand.u32 %v1020, 4294901760
  %v1112 = vsub.f32 %v1020, %v1111
  %v1113 = vand.u32 %v1112, 4294901760
  %v1114 = vsub.f32 %v1112, %v1113
  %v1115 = vand.u32 %v1114, 4294901760
  %1116 = vmatpush1.msra.mxu0 %v1115
  %1117 = vmatprep.subr.mxu0 0.0
  %1118 = vmatpush1.msra.mxu0 0.0
  %1119 = vmatprep.subr.mxu0 0.0
  %1120 = vmatpush1.msra.mxu0 0.0
  %1121 = vmatprep.subr.mxu0 0.0
  %1122 = vmatpush1.msra.mxu0 0.0
  %1123 = vmatprep.subr.mxu0 0.0
  %1124 = vmatpush1.msra.mxu0 0.0
  %1125 = vmatprep.subr.mxu0 0.0
  %1126 = vmatpush1.msra.mxu0 0.0
  %1127 = vmatprep.subr.mxu0 0.0
  %1128 = vmatpush1.msra.mxu0 0.0
  %1129 = vmatprep.subr.mxu0 0.0
  %1130 = vmatpush1.msra.mxu0 0.0
  %1131 = vmatprep.subr.mxu0 0.0
  %1132 = vmatpush1.msra.mxu0 0.0
  %1133 = vmatprep.subr.mxu0 0.0
  %1134 = vmatpush1.msra.mxu0 0.0
  %1135 = vmatprep.subr.mxu0 0.0
  %1136 = vmatpush1.msra.mxu0 0.0
  %1137 = vmatprep.subr.mxu0 0.0
  %1138 = vmatpush1.msra.mxu0 0.0
  %1139 = vmatprep.subr.mxu0 0.0
  %1140 = vmatpush1.msra.mxu0 0.0
  %1141 = vmatprep.subr.mxu0 0.0
  %1142 = vmatpush1.msra.mxu0 0.0
  %1143 = vmatprep.subr.mxu0 0.0
  %1144 = vmatpush1.msra.mxu0 0.0
  %1145 = vmatprep.subr.mxu0 0.0
  %1146 = vmatpush1.msra.mxu0 0.0
  %1147 = vmatprep.subr.mxu0 0.0
  %1148 = vmatpush1.msra.mxu0 0.0
  %1149 = vmatprep.subr.mxu0 0.0
  %1150 = vmatpush1.msra.mxu0 0.0
  %1151 = vmatprep.subr.mxu0 0.0
  %1152 = vmatpush1.msra.mxu0 0.0
  %1153 = vmatprep.subr.mxu0 0.0
  %1154 = vmatpush1.msra.mxu0 0.0
  %1155 = vmatprep.subr.mxu0 0.0
  %1156 = vmatpush1.msra.mxu0 0.0
  %1157 = vmatprep.subr.mxu0 0.0
  %1158 = vmatpush1.msra.mxu0 0.0
  %1159 = vmatprep.subr.mxu0 0.0
  %1160 = vmatpush1.msra.mxu0 0.0
  %1161 = vmatprep.subr.mxu0 0.0
  %1162 = vmatpush1.msra.mxu0 0.0
  %1163 = vmatprep.subr.mxu0 0.0
  %1164 = vmatpush1.msra.mxu0 0.0
  %1165 = vmatprep.subr.mxu0 0.0
  %1166 = vmatpush1.msra.mxu0 0.0
  %1167 = vmatprep.subr.mxu0 0.0
  %1168 = vmatpush1.msra.mxu0 0.0
  %1169 = vmatprep.subr.mxu0 0.0
  %1170 = vmatpush1.msra.mxu0 0.0
  %1171 = vmatprep.subr.mxu0 0.0
  %1172 = vmatpush1.msra.mxu0 0.0
  %1173 = vmatprep.subr.mxu0 0.0
  %1174 = vmatpush1.msra.mxu0 0.0
  %1175 = vmatprep.subr.mxu0 0.0
  %1176 = vmatpush1.msra.mxu0 0.0
  %1177 = vmatprep.subr.mxu0 0.0
  %1178 = vmatpush1.msra.mxu0 0.0
  %1179 = vmatprep.mubr.f32.mxu0 0.0
  %v1180 = vand.u32 %v1025, 4294901760
  %1181 = vmatmul.mubr.f32.gmra.mrb[0].mxu0 %v1180
  %v1182 = vpop.f32.mrb[0].mxu0
  %v1183 = vadd.f32 %v1101, %v1182
  %v1184 = vpop.f32.mrb[0].mxu0
  %v1185 = vadd.f32 %v1103, %v1184
  %1186 = vdwg.mxu0
  %v1187 = vand.u32 %v1021, 4294901760
  %v1188 = vsub.f32 %v1021, %v1187
  %1189 = vmatprep.subr.mxu0 %v1188
  %v1190 = vand.u32 %v1020, 4294901760
  %v1191 = vsub.f32 %v1020, %v1190
  %1192 = vmatpush1.msra.mxu0 %v1191
  %1193 = vmatprep.subr.mxu0 0.0
  %1194 = vmatpush1.msra.mxu0 0.0
  %1195 = vmatprep.subr.mxu0 0.0
  %1196 = vmatpush1.msra.mxu0 0.0
  %1197 = vmatprep.subr.mxu0 0.0
  %1198 = vmatpush1.msra.mxu0 0.0
  %1199 = vmatprep.subr.mxu0 0.0
  %1200 = vmatpush1.msra.mxu0 0.0
  %1201 = vmatprep.subr.mxu0 0.0
  %1202 = vmatpush1.msra.mxu0 0.0
  %1203 = vmatprep.subr.mxu0 0.0
  %1204 = vmatpush1.msra.mxu0 0.0
  %1205 = vmatprep.subr.mxu0 0.0
  %1206 = vmatpush1.msra.mxu0 0.0
  %1207 = vmatprep.subr.mxu0 0.0
  %1208 = vmatpush1.msra.mxu0 0.0
  %1209 = vmatprep.subr.mxu0 0.0
  %1210 = vmatpush1.msra.mxu0 0.0
  %1211 = vmatprep.subr.mxu0 0.0
  %1212 = vmatpush1.msra.mxu0 0.0
  %1213 = vmatprep.subr.mxu0 0.0
  %1214 = vmatpush1.msra.mxu0 0.0
  %1215 = vmatprep.subr.mxu0 0.0
  %1216 = vmatpush1.msra.mxu0 0.0
  %1217 = vmatprep.subr.mxu0 0.0
  %1218 = vmatpush1.msra.mxu0 0.0
  %1219 = vmatprep.subr.mxu0 0.0
  %1220 = vmatpush1.msra.mxu0 0.0
  %1221 = vmatprep.subr.mxu0 0.0
  %1222 = vmatpush1.msra.mxu0 0.0
  %1223 = vmatprep.subr.mxu0 0.0
  %1224 = vmatpush1.msra.mxu0 0.0
  %1225 = vmatprep.subr.mxu0 0.0
  %1226 = vmatpush1.msra.mxu0 0.0
  %1227 = vmatprep.subr.mxu0 0.0
  %1228 = vmatpush1.msra.mxu0 0.0
  %1229 = vmatprep.subr.mxu0 0.0
  %1230 = vmatpush1.msra.mxu0 0.0
  %1231 = vmatprep.subr.mxu0 0.0
  %1232 = vmatpush1.msra.mxu0 0.0
  %1233 = vmatprep.subr.mxu0 0.0
  %1234 = vmatpush1.msra.mxu0 0.0
  %1235 = vmatprep.subr.mxu0 0.0
  %1236 = vmatpush1.msra.mxu0 0.0
  %1237 = vmatprep.subr.mxu0 0.0
  %1238 = vmatpush1.msra.mxu0 0.0
  %1239 = vmatprep.subr.mxu0 0.0
  %1240 = vmatpush1.msra.mxu0 0.0
  %1241 = vmatprep.subr.mxu0 0.0
  %1242 = vmatpush1.msra.mxu0 0.0
  %1243 = vmatprep.subr.mxu0 0.0
  %1244 = vmatpush1.msra.mxu0 0.0
  %1245 = vmatprep.subr.mxu0 0.0
  %1246 = vmatpush1.msra.mxu0 0.0
  %1247 = vmatprep.subr.mxu0 0.0
  %1248 = vmatpush1.msra.mxu0 0.0
  %1249 = vmatprep.subr.mxu0 0.0
  %1250 = vmatpush1.msra.mxu0 0.0
  %1251 = vmatprep.subr.mxu0 0.0
  %1252 = vmatpush1.msra.mxu0 0.0
  %1253 = vmatprep.subr.mxu0 0.0
  %1254 = vmatpush1.msra.mxu0 0.0
  %1255 = vmatprep.mubr.f32.mxu0 0.0
  %v1256 = vand.u32 %v1025, 4294901760
  %v1257 = vsub.f32 %v1025, %v1256
  %1258 = vmatmul.mubr.f32.gmra.mrb[0].mxu0 %v1257
  %v1259 = vpop.f32.mrb[0].mxu0
  %v1260 = vadd.f32 %v1183, %v1259
  %v1261 = vpop.f32.mrb[0].mxu0
  %v1262 = vadd.f32 %v1185, %v1261
  %1263 = vdwg.mxu0
  %v1264 = vand.u32 %v1021, 4294901760
  %1265 = vmatprep.subr.mxu0 %v1264
  %v1266 = vand.u32 %v1020, 4294901760
  %1267 = vmatpush1.msra.mxu0 %v1266
  %1268 = vmatprep.subr.mxu0 0.0
  %1269 = vmatpush1.msra.mxu0 0.0
  %1270 = vmatprep.subr.mxu0 0.0
  %1271 = vmatpush1.msra.mxu0 0.0
  %1272 = vmatprep.subr.mxu0 0.0
  %1273 = vmatpush1.msra.mxu0 0.0
  %1274 = vmatprep.subr.mxu0 0.0
  %1275 = vmatpush1.msra.mxu0 0.0
  %1276 = vmatprep.subr.mxu0 0.0
  %1277 = vmatpush1.msra.mxu0 0.0
  %1278 = vmatprep.subr.mxu0 0.0
  %1279 = vmatpush1.msra.mxu0 0.0
  %1280 = vmatprep.subr.mxu0 0.0
  %1281 = vmatpush1.msra.mxu0 0.0
  %1282 = vmatprep.subr.mxu0 0.0
  %1283 = vmatpush1.msra.mxu0 0.0
  %1284 = vmatprep.subr.mxu0 0.0
  %1285 = vmatpush1.msra.mxu0 0.0
  %1286 = vmatprep.subr.mxu0 0.0
  %1287 = vmatpush1.msra.mxu0 0.0
  %1288 = vmatprep.subr.mxu0 0.0
  %1289 = vmatpush1.msra.mxu0 0.0
  %1290 = vmatprep.subr.mxu0 0.0
  %1291 = vmatpush1.msra.mxu0 0.0
  %1292 = vmatprep.subr.mxu0 0.0
  %1293 = vmatpush1.msra.mxu0 0.0
  %1294 = vmatprep.subr.mxu0 0.0
  %1295 = vmatpush1.msra.mxu0 0.0
  %1296 = vmatprep.subr.mxu0 0.0
  %1297 = vmatpush1.msra.mxu0 0.0
  %1298 = vmatprep.subr.mxu0 0.0
  %1299 = vmatpush1.msra.mxu0 0.0
  %1300 = vmatprep.subr.mxu0 0.0
  %1301 = vmatpush1.msra.mxu0 0.0
  %1302 = vmatprep.subr.mxu0 0.0
  %1303 = vmatpush1.msra.mxu0 0.0
  %1304 = vmatprep.subr.mxu0 0.0
  %1305 = vmatpush1.msra.mxu0 0.0
  %1306 = vmatprep.subr.mxu0 0.0
  %1307 = vmatpush1.msra.mxu0 0.0
  %1308 = vmatprep.subr.mxu0 0.0
  %1309 = vmatpush1.msra.mxu0 0.0
  %1310 = vmatprep.subr.mxu0 0.0
  %1311 = vmatpush1.msra.mxu0 0.0
  %1312 = vmatprep.subr.mxu0 0.0
  %1313 = vmatpush1.msra.mxu0 0.0
  %1314 = vmatprep.subr.mxu0 0.0
  %1315 = vmatpush1.msra.mxu0 0.0
  %1316 = vmatprep.subr.mxu0 0.0
  %1317 = vmatpush1.msra.mxu0 0.0
  %1318 = vmatprep.subr.mxu0 0.0
  %1319 = vmatpush1.msra.mxu0 0.0
  %1320 = vmatprep.subr.mxu0 0.0
  %1321 = vmatpush1.msra.mxu0 0.0
  %1322 = vmatprep.subr.mxu0 0.0
  %1323 = vmatpush1.msra.mxu0 0.0
  %1324 = vmatprep.subr.mxu0 0.0
  %1325 = vmatpush1.msra.mxu0 0.0
  %1326 = vmatprep.subr.mxu0 0.0
  %1327 = vmatpush1.msra.mxu0 0.0
  %1328 = vmatprep.subr.mxu0 0.0
  %1329 = vmatpush1.msra.mxu0 0.0
  %1330 = vmatprep.mubr.f32.mxu0 0.0
  %v1331 = vand.u32 %v1025, 4294901760
  %v1332 = vsub.f32 %v1025, %v1331
  %v1333 = vand.u32 %v1332, 4294901760
  %1334 = vmatmul.mubr.f32.gmra.mrb[0].mxu0 %v1333
  %v1335 = vpop.f32.mrb[0].mxu0
  %v1336 = vadd.f32 %v1260, %v1335
  %v1337 = vpop.f32.mrb[0].mxu0
  %v1338 = vadd.f32 %v1262, %v1337
  %1339 = vdwg.mxu0
  %v1340 = vand.u32 %v1021, 4294901760
  %v1341 = vsub.f32 %v1021, %v1340
  %v1342 = vand.u32 %v1341, 4294901760
  %1343 = vmatprep.subr.mxu0 %v1342
  %v1344 = vand.u32 %v1020, 4294901760
  %v1345 = vsub.f32 %v1020, %v1344
  %v1346 = vand.u32 %v1345, 4294901760
  %1347 = vmatpush1.msra.mxu0 %v1346
  %1348 = vmatprep.subr.mxu0 0.0
  %1349 = vmatpush1.msra.mxu0 0.0
  %1350 = vmatprep.subr.mxu0 0.0
  %1351 = vmatpush1.msra.mxu0 0.0
  %1352 = vmatprep.subr.mxu0 0.0
  %1353 = vmatpush1.msra.mxu0 0.0
  %1354 = vmatprep.subr.mxu0 0.0
  %1355 = vmatpush1.msra.mxu0 0.0
  %1356 = vmatprep.subr.mxu0 0.0
  %1357 = vmatpush1.msra.mxu0 0.0
  %1358 = vmatprep.subr.mxu0 0.0
  %1359 = vmatpush1.msra.mxu0 0.0
  %1360 = vmatprep.subr.mxu0 0.0
  %1361 = vmatpush1.msra.mxu0 0.0
  %1362 = vmatprep.subr.mxu0 0.0
  %1363 = vmatpush1.msra.mxu0 0.0
  %1364 = vmatprep.subr.mxu0 0.0
  %1365 = vmatpush1.msra.mxu0 0.0
  %1366 = vmatprep.subr.mxu0 0.0
  %1367 = vmatpush1.msra.mxu0 0.0
  %1368 = vmatprep.subr.mxu0 0.0
  %1369 = vmatpush1.msra.mxu0 0.0
  %1370 = vmatprep.subr.mxu0 0.0
  %1371 = vmatpush1.msra.mxu0 0.0
  %1372 = vmatprep.subr.mxu0 0.0
  %1373 = vmatpush1.msra.mxu0 0.0
  %1374 = vmatprep.subr.mxu0 0.0
  %1375 = vmatpush1.msra.mxu0 0.0
  %1376 = vmatprep.subr.mxu0 0.0
  %1377 = vmatpush1.msra.mxu0 0.0
  %1378 = vmatprep.subr.mxu0 0.0
  %1379 = vmatpush1.msra.mxu0 0.0
  %1380 = vmatprep.subr.mxu0 0.0
  %1381 = vmatpush1.msra.mxu0 0.0
  %1382 = vmatprep.subr.mxu0 0.0
  %1383 = vmatpush1.msra.mxu0 0.0
  %1384 = vmatprep.subr.mxu0 0.0
  %1385 = vmatpush1.msra.mxu0 0.0
  %1386 = vmatprep.subr.mxu0 0.0
  %1387 = vmatpush1.msra.mxu0 0.0
  %1388 = vmatprep.subr.mxu0 0.0
  %1389 = vmatpush1.msra.mxu0 0.0
  %1390 = vmatprep.subr.mxu0 0.0
  %1391 = vmatpush1.msra.mxu0 0.0
  %1392 = vmatprep.subr.mxu0 0.0
  %1393 = vmatpush1.msra.mxu0 0.0
  %1394 = vmatprep.subr.mxu0 0.0
  %1395 = vmatpush1.msra.mxu0 0.0
  %1396 = vmatprep.subr.mxu0 0.0
  %1397 = vmatpush1.msra.mxu0 0.0
  %1398 = vmatprep.subr.mxu0 0.0
  %1399 = vmatpush1.msra.mxu0 0.0
  %1400 = vmatprep.subr.mxu0 0.0
  %1401 = vmatpush1.msra.mxu0 0.0
  %1402 = vmatprep.subr.mxu0 0.0
  %1403 = vmatpush1.msra.mxu0 0.0
  %1404 = vmatprep.subr.mxu0 0.0
  %1405 = vmatpush1.msra.mxu0 0.0
  %1406 = vmatprep.subr.mxu0 0.0
  %1407 = vmatpush1.msra.mxu0 0.0
  %1408 = vmatprep.subr.mxu0 0.0
  %1409 = vmatpush1.msra.mxu0 0.0
  %1410 = vmatprep.mubr.f32.mxu0 0.0
  %v1411 = vand.u32 %v1025, 4294901760
  %1412 = vmatmul.mubr.f32.gmra.mrb[0].mxu0 %v1411
  %v1413 = vpop.f32.mrb[0].mxu0
  %v1414 = vadd.f32 %v1336, %v1413
  %v1415 = vpop.f32.mrb[0].mxu0
  %v1416 = vadd.f32 %v1338, %v1415
  %1417 = vdwg.mxu0
  %v1418 = vand.u32 %v1021, 4294901760
  %1419 = vmatprep.subr.mxu0 %v1418
  %v1420 = vand.u32 %v1020, 4294901760
  %1421 = vmatpush1.msra.mxu0 %v1420
  %1422 = vmatprep.subr.mxu0 0.0
  %1423 = vmatpush1.msra.mxu0 0.0
  %1424 = vmatprep.subr.mxu0 0.0
  %1425 = vmatpush1.msra.mxu0 0.0
  %1426 = vmatprep.subr.mxu0 0.0
  %1427 = vmatpush1.msra.mxu0 0.0
  %1428 = vmatprep.subr.mxu0 0.0
  %1429 = vmatpush1.msra.mxu0 0.0
  %1430 = vmatprep.subr.mxu0 0.0
  %1431 = vmatpush1.msra.mxu0 0.0
  %1432 = vmatprep.subr.mxu0 0.0
  %1433 = vmatpush1.msra.mxu0 0.0
  %1434 = vmatprep.subr.mxu0 0.0
  %1435 = vmatpush1.msra.mxu0 0.0
  %1436 = vmatprep.subr.mxu0 0.0
  %1437 = vmatpush1.msra.mxu0 0.0
  %1438 = vmatprep.subr.mxu0 0.0
  %1439 = vmatpush1.msra.mxu0 0.0
  %1440 = vmatprep.subr.mxu0 0.0
  %1441 = vmatpush1.msra.mxu0 0.0
  %1442 = vmatprep.subr.mxu0 0.0
  %1443 = vmatpush1.msra.mxu0 0.0
  %1444 = vmatprep.subr.mxu0 0.0
  %1445 = vmatpush1.msra.mxu0 0.0
  %1446 = vmatprep.subr.mxu0 0.0
  %1447 = vmatpush1.msra.mxu0 0.0
  %1448 = vmatprep.subr.mxu0 0.0
  %1449 = vmatpush1.msra.mxu0 0.0
  %1450 = vmatprep.subr.mxu0 0.0
  %1451 = vmatpush1.msra.mxu0 0.0
  %1452 = vmatprep.subr.mxu0 0.0
  %1453 = vmatpush1.msra.mxu0 0.0
  %1454 = vmatprep.subr.mxu0 0.0
  %1455 = vmatpush1.msra.mxu0 0.0
  %1456 = vmatprep.subr.mxu0 0.0
  %1457 = vmatpush1.msra.mxu0 0.0
  %1458 = vmatprep.subr.mxu0 0.0
  %1459 = vmatpush1.msra.mxu0 0.0
  %1460 = vmatprep.subr.mxu0 0.0
  %1461 = vmatpush1.msra.mxu0 0.0
  %1462 = vmatprep.subr.mxu0 0.0
  %1463 = vmatpush1.msra.mxu0 0.0
  %1464 = vmatprep.subr.mxu0 0.0
  %1465 = vmatpush1.msra.mxu0 0.0
  %1466 = vmatprep.subr.mxu0 0.0
  %1467 = vmatpush1.msra.mxu0 0.0
  %1468 = vmatprep.subr.mxu0 0.0
  %1469 = vmatpush1.msra.mxu0 0.0
  %1470 = vmatprep.subr.mxu0 0.0
  %1471 = vmatpush1.msra.mxu0 0.0
  %1472 = vmatprep.subr.mxu0 0.0
  %1473 = vmatpush1.msra.mxu0 0.0
  %1474 = vmatprep.subr.mxu0 0.0
  %1475 = vmatpush1.msra.mxu0 0.0
  %1476 = vmatprep.subr.mxu0 0.0
  %1477 = vmatpush1.msra.mxu0 0.0
  %1478 = vmatprep.subr.mxu0 0.0
  %1479 = vmatpush1.msra.mxu0 0.0
  %1480 = vmatprep.subr.mxu0 0.0
  %1481 = vmatpush1.msra.mxu0 0.0
  %1482 = vmatprep.subr.mxu0 0.0
  %1483 = vmatpush1.msra.mxu0 0.0
  %1484 = vmatprep.mubr.f32.mxu0 0.0
  %v1485 = vand.u32 %v1025, 4294901760
  %1486 = vmatmul.mubr.f32.gmra.mrb[0].mxu0 %v1485
  %v1487 = vpop.f32.mrb[0].mxu0
  %v1488 = vadd.f32 %v1414, %v1487
  %v1489 = vpop.f32.mrb[0].mxu0
  %v1490 = vadd.f32 %v1416, %v1489
  %1491 = vdwg.mxu0
  %v1492 = vadd.f32 %v1011, %v1488
  %v1493 = vadd.f32 %v1012, %v1490
  %1494 = vrot.lane.b32.xlu0 %v43, 1
  %v1495 = vpop.permute.xlu0 %1494
  %1496 = vrot.lane.b32.xlu0 %v44, 1
  %v1497 = vpop.permute.xlu0 %1496
  %vm1498 = vcmp.lt.s32.totalorder %v21, 1
  %v1499 = vsel %vm1498, %v1495, %v1497
  %v1500 = vsel %vm1498, %v1497, %v1495
  %v1501 = vsel %vm29, %v1500, 0.0
  %v1502 = vsel %vm30, %v1499, 0.0
  %s1503 = scalar_lea.vmem %s1, 24
  %v1504 = vld [vmem:[%s1503] sm:$0xff]
  %v1506 = vsel %vm61, %v1504, 0
  %v1508 = vand.u32 %v1502, 4294901760
  %1509 = vmatprep.subr.mxu0 %v1508
  %v1510 = vand.u32 %v1501, 4294901760
  %1511 = vmatpush1.msra.mxu0 %v1510
  %1512 = vmatprep.subr.mxu0 0.0
  %1513 = vmatpush1.msra.mxu0 0.0
  %1514 = vmatprep.subr.mxu0 0.0
  %1515 = vmatpush1.msra.mxu0 0.0
  %1516 = vmatprep.subr.mxu0 0.0
  %1517 = vmatpush1.msra.mxu0 0.0
  %1518 = vmatprep.subr.mxu0 0.0
  %1519 = vmatpush1.msra.mxu0 0.0
  %1520 = vmatprep.subr.mxu0 0.0
  %1521 = vmatpush1.msra.mxu0 0.0
  %1522 = vmatprep.subr.mxu0 0.0
  %1523 = vmatpush1.msra.mxu0 0.0
  %1524 = vmatprep.subr.mxu0 0.0
  %1525 = vmatpush1.msra.mxu0 0.0
  %1526 = vmatprep.subr.mxu0 0.0
  %1527 = vmatpush1.msra.mxu0 0.0
  %1528 = vmatprep.subr.mxu0 0.0
  %1529 = vmatpush1.msra.mxu0 0.0
  %1530 = vmatprep.subr.mxu0 0.0
  %1531 = vmatpush1.msra.mxu0 0.0
  %1532 = vmatprep.subr.mxu0 0.0
  %1533 = vmatpush1.msra.mxu0 0.0
  %1534 = vmatprep.subr.mxu0 0.0
  %1535 = vmatpush1.msra.mxu0 0.0
  %1536 = vmatprep.subr.mxu0 0.0
  %1537 = vmatpush1.msra.mxu0 0.0
  %1538 = vmatprep.subr.mxu0 0.0
  %1539 = vmatpush1.msra.mxu0 0.0
  %1540 = vmatprep.subr.mxu0 0.0
  %1541 = vmatpush1.msra.mxu0 0.0
  %1542 = vmatprep.subr.mxu0 0.0
  %1543 = vmatpush1.msra.mxu0 0.0
  %1544 = vmatprep.subr.mxu0 0.0
  %1545 = vmatpush1.msra.mxu0 0.0
  %1546 = vmatprep.subr.mxu0 0.0
  %1547 = vmatpush1.msra.mxu0 0.0
  %1548 = vmatprep.subr.mxu0 0.0
  %1549 = vmatpush1.msra.mxu0 0.0
  %1550 = vmatprep.subr.mxu0 0.0
  %1551 = vmatpush1.msra.mxu0 0.0
  %1552 = vmatprep.subr.mxu0 0.0
  %1553 = vmatpush1.msra.mxu0 0.0
  %1554 = vmatprep.subr.mxu0 0.0
  %1555 = vmatpush1.msra.mxu0 0.0
  %1556 = vmatprep.subr.mxu0 0.0
  %1557 = vmatpush1.msra.mxu0 0.0
  %1558 = vmatprep.subr.mxu0 0.0
  %1559 = vmatpush1.msra.mxu0 0.0
  %1560 = vmatprep.subr.mxu0 0.0
  %1561 = vmatpush1.msra.mxu0 0.0
  %1562 = vmatprep.subr.mxu0 0.0
  %1563 = vmatpush1.msra.mxu0 0.0
  %1564 = vmatprep.subr.mxu0 0.0
  %1565 = vmatpush1.msra.mxu0 0.0
  %1566 = vmatprep.subr.mxu0 0.0
  %1567 = vmatpush1.msra.mxu0 0.0
  %1568 = vmatprep.subr.mxu0 0.0
  %1569 = vmatpush1.msra.mxu0 0.0
  %1570 = vmatprep.subr.mxu0 0.0
  %1571 = vmatpush1.msra.mxu0 0.0
  %1572 = vmatprep.subr.mxu0 0.0
  %1573 = vmatpush1.msra.mxu0 0.0
  %1574 = vmatprep.mubr.f32.mxu0 0.0
  %v1575 = vand.u32 %v1506, 4294901760
  %v1576 = vsub.f32 %v1506, %v1575
  %v1577 = vand.u32 %v1576, 4294901760
  %v1578 = vsub.f32 %v1576, %v1577
  %v1579 = vand.u32 %v1578, 4294901760
  %1580 = vmatmul.mubr.f32.gmra.mrb[0].mxu0 %v1579
  %v1581 = vpop.f32.mrb[0].mxu0
  %v1582 = vadd.f32 0.0, %v1581
  %v1583 = vpop.f32.mrb[0].mxu0
  %v1584 = vadd.f32 0.0, %v1583
  %1585 = vdwg.mxu0
  %v1586 = vand.u32 %v1502, 4294901760
  %v1587 = vsub.f32 %v1502, %v1586
  %v1588 = vand.u32 %v1587, 4294901760
  %v1589 = vsub.f32 %v1587, %v1588
  %v1590 = vand.u32 %v1589, 4294901760
  %1591 = vmatprep.subr.mxu0 %v1590
  %v1592 = vand.u32 %v1501, 4294901760
  %v1593 = vsub.f32 %v1501, %v1592
  %v1594 = vand.u32 %v1593, 4294901760
  %v1595 = vsub.f32 %v1593, %v1594
  %v1596 = vand.u32 %v1595, 4294901760
  %1597 = vmatpush1.msra.mxu0 %v1596
  %1598 = vmatprep.subr.mxu0 0.0
  %1599 = vmatpush1.msra.mxu0 0.0
  %1600 = vmatprep.subr.mxu0 0.0
  %1601 = vmatpush1.msra.mxu0 0.0
  %1602 = vmatprep.subr.mxu0 0.0
  %1603 = vmatpush1.msra.mxu0 0.0
  %1604 = vmatprep.subr.mxu0 0.0
  %1605 = vmatpush1.msra.mxu0 0.0
  %1606 = vmatprep.subr.mxu0 0.0
  %1607 = vmatpush1.msra.mxu0 0.0
  %1608 = vmatprep.subr.mxu0 0.0
  %1609 = vmatpush1.msra.mxu0 0.0
  %1610 = vmatprep.subr.mxu0 0.0
  %1611 = vmatpush1.msra.mxu0 0.0
  %1612 = vmatprep.subr.mxu0 0.0
  %1613 = vmatpush1.msra.mxu0 0.0
  %1614 = vmatprep.subr.mxu0 0.0
  %1615 = vmatpush1.msra.mxu0 0.0
  %1616 = vmatprep.subr.mxu0 0.0
  %1617 = vmatpush1.msra.mxu0 0.0
  %1618 = vmatprep.subr.mxu0 0.0
  %1619 = vmatpush1.msra.mxu0 0.0
  %1620 = vmatprep.subr.mxu0 0.0
  %1621 = vmatpush1.msra.mxu0 0.0
  %1622 = vmatprep.subr.mxu0 0.0
  %1623 = vmatpush1.msra.mxu0 0.0
  %1624 = vmatprep.subr.mxu0 0.0
  %1625 = vmatpush1.msra.mxu0 0.0
  %1626 = vmatprep.subr.mxu0 0.0
  %1627 = vmatpush1.msra.mxu0 0.0
  %1628 = vmatprep.subr.mxu0 0.0
  %1629 = vmatpush1.msra.mxu0 0.0
  %1630 = vmatprep.subr.mxu0 0.0
  %1631 = vmatpush1.msra.mxu0 0.0
  %1632 = vmatprep.subr.mxu0 0.0
  %1633 = vmatpush1.msra.mxu0 0.0
  %1634 = vmatprep.subr.mxu0 0.0
  %1635 = vmatpush1.msra.mxu0 0.0
  %1636 = vmatprep.subr.mxu0 0.0
  %1637 = vmatpush1.msra.mxu0 0.0
  %1638 = vmatprep.subr.mxu0 0.0
  %1639 = vmatpush1.msra.mxu0 0.0
  %1640 = vmatprep.subr.mxu0 0.0
  %1641 = vmatpush1.msra.mxu0 0.0
  %1642 = vmatprep.subr.mxu0 0.0
  %1643 = vmatpush1.msra.mxu0 0.0
  %1644 = vmatprep.subr.mxu0 0.0
  %1645 = vmatpush1.msra.mxu0 0.0
  %1646 = vmatprep.subr.mxu0 0.0
  %1647 = vmatpush1.msra.mxu0 0.0
  %1648 = vmatprep.subr.mxu0 0.0
  %1649 = vmatpush1.msra.mxu0 0.0
  %1650 = vmatprep.subr.mxu0 0.0
  %1651 = vmatpush1.msra.mxu0 0.0
  %1652 = vmatprep.subr.mxu0 0.0
  %1653 = vmatpush1.msra.mxu0 0.0
  %1654 = vmatprep.subr.mxu0 0.0
  %1655 = vmatpush1.msra.mxu0 0.0
  %1656 = vmatprep.subr.mxu0 0.0
  %1657 = vmatpush1.msra.mxu0 0.0
  %1658 = vmatprep.subr.mxu0 0.0
  %1659 = vmatpush1.msra.mxu0 0.0
  %1660 = vmatprep.mubr.f32.mxu0 0.0
  %v1661 = vand.u32 %v1506, 4294901760
  %1662 = vmatmul.mubr.f32.gmra.mrb[0].mxu0 %v1661
  %v1663 = vpop.f32.mrb[0].mxu0
  %v1664 = vadd.f32 %v1582, %v1663
  %v1665 = vpop.f32.mrb[0].mxu0
  %v1666 = vadd.f32 %v1584, %v1665
  %1667 = vdwg.mxu0
  %v1668 = vand.u32 %v1502, 4294901760
  %v1669 = vsub.f32 %v1502, %v1668
  %1670 = vmatprep.subr.mxu0 %v1669
  %v1671 = vand.u32 %v1501, 4294901760
  %v1672 = vsub.f32 %v1501, %v1671
  %1673 = vmatpush1.msra.mxu0 %v1672
  %1674 = vmatprep.subr.mxu0 0.0
  %1675 = vmatpush1.msra.mxu0 0.0
  %1676 = vmatprep.subr.mxu0 0.0
  %1677 = vmatpush1.msra.mxu0 0.0
  %1678 = vmatprep.subr.mxu0 0.0
  %1679 = vmatpush1.msra.mxu0 0.0
  %1680 = vmatprep.subr.mxu0 0.0
  %1681 = vmatpush1.msra.mxu0 0.0
  %1682 = vmatprep.subr.mxu0 0.0
  %1683 = vmatpush1.msra.mxu0 0.0
  %1684 = vmatprep.subr.mxu0 0.0
  %1685 = vmatpush1.msra.mxu0 0.0
  %1686 = vmatprep.subr.mxu0 0.0
  %1687 = vmatpush1.msra.mxu0 0.0
  %1688 = vmatprep.subr.mxu0 0.0
  %1689 = vmatpush1.msra.mxu0 0.0
  %1690 = vmatprep.subr.mxu0 0.0
  %1691 = vmatpush1.msra.mxu0 0.0
  %1692 = vmatprep.subr.mxu0 0.0
  %1693 = vmatpush1.msra.mxu0 0.0
  %1694 = vmatprep.subr.mxu0 0.0
  %1695 = vmatpush1.msra.mxu0 0.0
  %1696 = vmatprep.subr.mxu0 0.0
  %1697 = vmatpush1.msra.mxu0 0.0
  %1698 = vmatprep.subr.mxu0 0.0
  %1699 = vmatpush1.msra.mxu0 0.0
  %1700 = vmatprep.subr.mxu0 0.0
  %1701 = vmatpush1.msra.mxu0 0.0
  %1702 = vmatprep.subr.mxu0 0.0
  %1703 = vmatpush1.msra.mxu0 0.0
  %1704 = vmatprep.subr.mxu0 0.0
  %1705 = vmatpush1.msra.mxu0 0.0
  %1706 = vmatprep.subr.mxu0 0.0
  %1707 = vmatpush1.msra.mxu0 0.0
  %1708 = vmatprep.subr.mxu0 0.0
  %1709 = vmatpush1.msra.mxu0 0.0
  %1710 = vmatprep.subr.mxu0 0.0
  %1711 = vmatpush1.msra.mxu0 0.0
  %1712 = vmatprep.subr.mxu0 0.0
  %1713 = vmatpush1.msra.mxu0 0.0
  %1714 = vmatprep.subr.mxu0 0.0
  %1715 = vmatpush1.msra.mxu0 0.0
  %1716 = vmatprep.subr.mxu0 0.0
  %1717 = vmatpush1.msra.mxu0 0.0
  %1718 = vmatprep.subr.mxu0 0.0
  %1719 = vmatpush1.msra.mxu0 0.0
  %1720 = vmatprep.subr.mxu0 0.0
  %1721 = vmatpush1.msra.mxu0 0.0
  %1722 = vmatprep.subr.mxu0 0.0
  %1723 = vmatpush1.msra.mxu0 0.0
  %1724 = vmatprep.subr.mxu0 0.0
  %1725 = vmatpush1.msra.mxu0 0.0
  %1726 = vmatprep.subr.mxu0 0.0
  %1727 = vmatpush1.msra.mxu0 0.0
  %1728 = vmatprep.subr.mxu0 0.0
  %1729 = vmatpush1.msra.mxu0 0.0
  %1730 = vmatprep.subr.mxu0 0.0
  %1731 = vmatpush1.msra.mxu0 0.0
  %1732 = vmatprep.subr.mxu0 0.0
  %1733 = vmatpush1.msra.mxu0 0.0
  %1734 = vmatprep.subr.mxu0 0.0
  %1735 = vmatpush1.msra.mxu0 0.0
  %1736 = vmatprep.mubr.f32.mxu0 0.0
  %v1737 = vand.u32 %v1506, 4294901760
  %v1738 = vsub.f32 %v1506, %v1737
  %1739 = vmatmul.mubr.f32.gmra.mrb[0].mxu0 %v1738
  %v1740 = vpop.f32.mrb[0].mxu0
  %v1741 = vadd.f32 %v1664, %v1740
  %v1742 = vpop.f32.mrb[0].mxu0
  %v1743 = vadd.f32 %v1666, %v1742
  %1744 = vdwg.mxu0
  %v1745 = vand.u32 %v1502, 4294901760
  %1746 = vmatprep.subr.mxu0 %v1745
  %v1747 = vand.u32 %v1501, 4294901760
  %1748 = vmatpush1.msra.mxu0 %v1747
  %1749 = vmatprep.subr.mxu0 0.0
  %1750 = vmatpush1.msra.mxu0 0.0
  %1751 = vmatprep.subr.mxu0 0.0
  %1752 = vmatpush1.msra.mxu0 0.0
  %1753 = vmatprep.subr.mxu0 0.0
  %1754 = vmatpush1.msra.mxu0 0.0
  %1755 = vmatprep.subr.mxu0 0.0
  %1756 = vmatpush1.msra.mxu0 0.0
  %1757 = vmatprep.subr.mxu0 0.0
  %1758 = vmatpush1.msra.mxu0 0.0
  %1759 = vmatprep.subr.mxu0 0.0
  %1760 = vmatpush1.msra.mxu0 0.0
  %1761 = vmatprep.subr.mxu0 0.0
  %1762 = vmatpush1.msra.mxu0 0.0
  %1763 = vmatprep.subr.mxu0 0.0
  %1764 = vmatpush1.msra.mxu0 0.0
  %1765 = vmatprep.subr.mxu0 0.0
  %1766 = vmatpush1.msra.mxu0 0.0
  %1767 = vmatprep.subr.mxu0 0.0
  %1768 = vmatpush1.msra.mxu0 0.0
  %1769 = vmatprep.subr.mxu0 0.0
  %1770 = vmatpush1.msra.mxu0 0.0
  %1771 = vmatprep.subr.mxu0 0.0
  %1772 = vmatpush1.msra.mxu0 0.0
  %1773 = vmatprep.subr.mxu0 0.0
  %1774 = vmatpush1.msra.mxu0 0.0
  %1775 = vmatprep.subr.mxu0 0.0
  %1776 = vmatpush1.msra.mxu0 0.0
  %1777 = vmatprep.subr.mxu0 0.0
  %1778 = vmatpush1.msra.mxu0 0.0
  %1779 = vmatprep.subr.mxu0 0.0
  %1780 = vmatpush1.msra.mxu0 0.0
  %1781 = vmatprep.subr.mxu0 0.0
  %1782 = vmatpush1.msra.mxu0 0.0
  %1783 = vmatprep.subr.mxu0 0.0
  %1784 = vmatpush1.msra.mxu0 0.0
  %1785 = vmatprep.subr.mxu0 0.0
  %1786 = vmatpush1.msra.mxu0 0.0
  %1787 = vmatprep.subr.mxu0 0.0
  %1788 = vmatpush1.msra.mxu0 0.0
  %1789 = vmatprep.subr.mxu0 0.0
  %1790 = vmatpush1.msra.mxu0 0.0
  %1791 = vmatprep.subr.mxu0 0.0
  %1792 = vmatpush1.msra.mxu0 0.0
  %1793 = vmatprep.subr.mxu0 0.0
  %1794 = vmatpush1.msra.mxu0 0.0
  %1795 = vmatprep.subr.mxu0 0.0
  %1796 = vmatpush1.msra.mxu0 0.0
  %1797 = vmatprep.subr.mxu0 0.0
  %1798 = vmatpush1.msra.mxu0 0.0
  %1799 = vmatprep.subr.mxu0 0.0
  %1800 = vmatpush1.msra.mxu0 0.0
  %1801 = vmatprep.subr.mxu0 0.0
  %1802 = vmatpush1.msra.mxu0 0.0
  %1803 = vmatprep.subr.mxu0 0.0
  %1804 = vmatpush1.msra.mxu0 0.0
  %1805 = vmatprep.subr.mxu0 0.0
  %1806 = vmatpush1.msra.mxu0 0.0
  %1807 = vmatprep.subr.mxu0 0.0
  %1808 = vmatpush1.msra.mxu0 0.0
  %1809 = vmatprep.subr.mxu0 0.0
  %1810 = vmatpush1.msra.mxu0 0.0
  %1811 = vmatprep.mubr.f32.mxu0 0.0
  %v1812 = vand.u32 %v1506, 4294901760
  %v1813 = vsub.f32 %v1506, %v1812
  %v1814 = vand.u32 %v1813, 4294901760
  %1815 = vmatmul.mubr.f32.gmra.mrb[0].mxu0 %v1814
  %v1816 = vpop.f32.mrb[0].mxu0
  %v1817 = vadd.f32 %v1741, %v1816
  %v1818 = vpop.f32.mrb[0].mxu0
  %v1819 = vadd.f32 %v1743, %v1818
  %1820 = vdwg.mxu0
  %v1821 = vand.u32 %v1502, 4294901760
  %v1822 = vsub.f32 %v1502, %v1821
  %v1823 = vand.u32 %v1822, 4294901760
  %1824 = vmatprep.subr.mxu0 %v1823
  %v1825 = vand.u32 %v1501, 4294901760
  %v1826 = vsub.f32 %v1501, %v1825
  %v1827 = vand.u32 %v1826, 4294901760
  %1828 = vmatpush1.msra.mxu0 %v1827
  %1829 = vmatprep.subr.mxu0 0.0
  %1830 = vmatpush1.msra.mxu0 0.0
  %1831 = vmatprep.subr.mxu0 0.0
  %1832 = vmatpush1.msra.mxu0 0.0
  %1833 = vmatprep.subr.mxu0 0.0
  %1834 = vmatpush1.msra.mxu0 0.0
  %1835 = vmatprep.subr.mxu0 0.0
  %1836 = vmatpush1.msra.mxu0 0.0
  %1837 = vmatprep.subr.mxu0 0.0
  %1838 = vmatpush1.msra.mxu0 0.0
  %1839 = vmatprep.subr.mxu0 0.0
  %1840 = vmatpush1.msra.mxu0 0.0
  %1841 = vmatprep.subr.mxu0 0.0
  %1842 = vmatpush1.msra.mxu0 0.0
  %1843 = vmatprep.subr.mxu0 0.0
  %1844 = vmatpush1.msra.mxu0 0.0
  %1845 = vmatprep.subr.mxu0 0.0
  %1846 = vmatpush1.msra.mxu0 0.0
  %1847 = vmatprep.subr.mxu0 0.0
  %1848 = vmatpush1.msra.mxu0 0.0
  %1849 = vmatprep.subr.mxu0 0.0
  %1850 = vmatpush1.msra.mxu0 0.0
  %1851 = vmatprep.subr.mxu0 0.0
  %1852 = vmatpush1.msra.mxu0 0.0
  %1853 = vmatprep.subr.mxu0 0.0
  %1854 = vmatpush1.msra.mxu0 0.0
  %1855 = vmatprep.subr.mxu0 0.0
  %1856 = vmatpush1.msra.mxu0 0.0
  %1857 = vmatprep.subr.mxu0 0.0
  %1858 = vmatpush1.msra.mxu0 0.0
  %1859 = vmatprep.subr.mxu0 0.0
  %1860 = vmatpush1.msra.mxu0 0.0
  %1861 = vmatprep.subr.mxu0 0.0
  %1862 = vmatpush1.msra.mxu0 0.0
  %1863 = vmatprep.subr.mxu0 0.0
  %1864 = vmatpush1.msra.mxu0 0.0
  %1865 = vmatprep.subr.mxu0 0.0
  %1866 = vmatpush1.msra.mxu0 0.0
  %1867 = vmatprep.subr.mxu0 0.0
  %1868 = vmatpush1.msra.mxu0 0.0
  %1869 = vmatprep.subr.mxu0 0.0
  %1870 = vmatpush1.msra.mxu0 0.0
  %1871 = vmatprep.subr.mxu0 0.0
  %1872 = vmatpush1.msra.mxu0 0.0
  %1873 = vmatprep.subr.mxu0 0.0
  %1874 = vmatpush1.msra.mxu0 0.0
  %1875 = vmatprep.subr.mxu0 0.0
  %1876 = vmatpush1.msra.mxu0 0.0
  %1877 = vmatprep.subr.mxu0 0.0
  %1878 = vmatpush1.msra.mxu0 0.0
  %1879 = vmatprep.subr.mxu0 0.0
  %1880 = vmatpush1.msra.mxu0 0.0
  %1881 = vmatprep.subr.mxu0 0.0
  %1882 = vmatpush1.msra.mxu0 0.0
  %1883 = vmatprep.subr.mxu0 0.0
  %1884 = vmatpush1.msra.mxu0 0.0
  %1885 = vmatprep.subr.mxu0 0.0
  %1886 = vmatpush1.msra.mxu0 0.0
  %1887 = vmatprep.subr.mxu0 0.0
  %1888 = vmatpush1.msra.mxu0 0.0
  %1889 = vmatprep.subr.mxu0 0.0
  %1890 = vmatpush1.msra.mxu0 0.0
  %1891 = vmatprep.mubr.f32.mxu0 0.0
  %v1892 = vand.u32 %v1506, 4294901760
  %1893 = vmatmul.mubr.f32.gmra.mrb[0].mxu0 %v1892
  %v1894 = vpop.f32.mrb[0].mxu0
  %v1895 = vadd.f32 %v1817, %v1894
  %v1896 = vpop.f32.mrb[0].mxu0
  %v1897 = vadd.f32 %v1819, %v1896
  %1898 = vdwg.mxu0
  %v1899 = vand.u32 %v1502, 4294901760
  %1900 = vmatprep.subr.mxu0 %v1899
  %v1901 = vand.u32 %v1501, 4294901760
  %1902 = vmatpush1.msra.mxu0 %v1901
  %1903 = vmatprep.subr.mxu0 0.0
  %1904 = vmatpush1.msra.mxu0 0.0
  %1905 = vmatprep.subr.mxu0 0.0
  %1906 = vmatpush1.msra.mxu0 0.0
  %1907 = vmatprep.subr.mxu0 0.0
  %1908 = vmatpush1.msra.mxu0 0.0
  %1909 = vmatprep.subr.mxu0 0.0
  %1910 = vmatpush1.msra.mxu0 0.0
  %1911 = vmatprep.subr.mxu0 0.0
  %1912 = vmatpush1.msra.mxu0 0.0
  %1913 = vmatprep.subr.mxu0 0.0
  %1914 = vmatpush1.msra.mxu0 0.0
  %1915 = vmatprep.subr.mxu0 0.0
  %1916 = vmatpush1.msra.mxu0 0.0
  %1917 = vmatprep.subr.mxu0 0.0
  %1918 = vmatpush1.msra.mxu0 0.0
  %1919 = vmatprep.subr.mxu0 0.0
  %1920 = vmatpush1.msra.mxu0 0.0
  %1921 = vmatprep.subr.mxu0 0.0
  %1922 = vmatpush1.msra.mxu0 0.0
  %1923 = vmatprep.subr.mxu0 0.0
  %1924 = vmatpush1.msra.mxu0 0.0
  %1925 = vmatprep.subr.mxu0 0.0
  %1926 = vmatpush1.msra.mxu0 0.0
  %1927 = vmatprep.subr.mxu0 0.0
  %1928 = vmatpush1.msra.mxu0 0.0
  %1929 = vmatprep.subr.mxu0 0.0
  %1930 = vmatpush1.msra.mxu0 0.0
  %1931 = vmatprep.subr.mxu0 0.0
  %1932 = vmatpush1.msra.mxu0 0.0
  %1933 = vmatprep.subr.mxu0 0.0
  %1934 = vmatpush1.msra.mxu0 0.0
  %1935 = vmatprep.subr.mxu0 0.0
  %1936 = vmatpush1.msra.mxu0 0.0
  %1937 = vmatprep.subr.mxu0 0.0
  %1938 = vmatpush1.msra.mxu0 0.0
  %1939 = vmatprep.subr.mxu0 0.0
  %1940 = vmatpush1.msra.mxu0 0.0
  %1941 = vmatprep.subr.mxu0 0.0
  %1942 = vmatpush1.msra.mxu0 0.0
  %1943 = vmatprep.subr.mxu0 0.0
  %1944 = vmatpush1.msra.mxu0 0.0
  %1945 = vmatprep.subr.mxu0 0.0
  %1946 = vmatpush1.msra.mxu0 0.0
  %1947 = vmatprep.subr.mxu0 0.0
  %1948 = vmatpush1.msra.mxu0 0.0
  %1949 = vmatprep.subr.mxu0 0.0
  %1950 = vmatpush1.msra.mxu0 0.0
  %1951 = vmatprep.subr.mxu0 0.0
  %1952 = vmatpush1.msra.mxu0 0.0
  %1953 = vmatprep.subr.mxu0 0.0
  %1954 = vmatpush1.msra.mxu0 0.0
  %1955 = vmatprep.subr.mxu0 0.0
  %1956 = vmatpush1.msra.mxu0 0.0
  %1957 = vmatprep.subr.mxu0 0.0
  %1958 = vmatpush1.msra.mxu0 0.0
  %1959 = vmatprep.subr.mxu0 0.0
  %1960 = vmatpush1.msra.mxu0 0.0
  %1961 = vmatprep.subr.mxu0 0.0
  %1962 = vmatpush1.msra.mxu0 0.0
  %1963 = vmatprep.subr.mxu0 0.0
  %1964 = vmatpush1.msra.mxu0 0.0
  %1965 = vmatprep.mubr.f32.mxu0 0.0
  %v1966 = vand.u32 %v1506, 4294901760
  %1967 = vmatmul.mubr.f32.gmra.mrb[0].mxu0 %v1966
  %v1968 = vpop.f32.mrb[0].mxu0
  %v1969 = vadd.f32 %v1895, %v1968
  %v1970 = vpop.f32.mrb[0].mxu0
  %v1971 = vadd.f32 %v1897, %v1970
  %1972 = vdwg.mxu0
  %v1973 = vadd.f32 %v1492, %v1969
  %v1974 = vadd.f32 %v1493, %v1971
  %s1975 = scalar_lea.vmem %s1, 32
  %v1976 = vld [vmem:[%s1975] sm:$0xff]
  %v1978 = vsel %vm61, %v1976, 0
  %v1980 = vand.u32 %v44, 4294901760
  %1981 = vmatprep.subr.mxu0 %v1980
  %v1982 = vand.u32 %v43, 4294901760
  %1983 = vmatpush1.msra.mxu0 %v1982
  %1984 = vmatprep.subr.mxu0 0.0
  %1985 = vmatpush1.msra.mxu0 0.0
  %1986 = vmatprep.subr.mxu0 0.0
  %1987 = vmatpush1.msra.mxu0 0.0
  %1988 = vmatprep.subr.mxu0 0.0
  %1989 = vmatpush1.msra.mxu0 0.0
  %1990 = vmatprep.subr.mxu0 0.0
  %1991 = vmatpush1.msra.mxu0 0.0
  %1992 = vmatprep.subr.mxu0 0.0
  %1993 = vmatpush1.msra.mxu0 0.0
  %1994 = vmatprep.subr.mxu0 0.0
  %1995 = vmatpush1.msra.mxu0 0.0
  %1996 = vmatprep.subr.mxu0 0.0
  %1997 = vmatpush1.msra.mxu0 0.0
  %1998 = vmatprep.subr.mxu0 0.0
  %1999 = vmatpush1.msra.mxu0 0.0
  %2000 = vmatprep.subr.mxu0 0.0
  %2001 = vmatpush1.msra.mxu0 0.0
  %2002 = vmatprep.subr.mxu0 0.0
  %2003 = vmatpush1.msra.mxu0 0.0
  %2004 = vmatprep.subr.mxu0 0.0
  %2005 = vmatpush1.msra.mxu0 0.0
  %2006 = vmatprep.subr.mxu0 0.0
  %2007 = vmatpush1.msra.mxu0 0.0
  %2008 = vmatprep.subr.mxu0 0.0
  %2009 = vmatpush1.msra.mxu0 0.0
  %2010 = vmatprep.subr.mxu0 0.0
  %2011 = vmatpush1.msra.mxu0 0.0
  %2012 = vmatprep.subr.mxu0 0.0
  %2013 = vmatpush1.msra.mxu0 0.0
  %2014 = vmatprep.subr.mxu0 0.0
  %2015 = vmatpush1.msra.mxu0 0.0
  %2016 = vmatprep.subr.mxu0 0.0
  %2017 = vmatpush1.msra.mxu0 0.0
  %2018 = vmatprep.subr.mxu0 0.0
  %2019 = vmatpush1.msra.mxu0 0.0
  %2020 = vmatprep.subr.mxu0 0.0
  %2021 = vmatpush1.msra.mxu0 0.0
  %2022 = vmatprep.subr.mxu0 0.0
  %2023 = vmatpush1.msra.mxu0 0.0
  %2024 = vmatprep.subr.mxu0 0.0
  %2025 = vmatpush1.msra.mxu0 0.0
  %2026 = vmatprep.subr.mxu0 0.0
  %2027 = vmatpush1.msra.mxu0 0.0
  %2028 = vmatprep.subr.mxu0 0.0
  %2029 = vmatpush1.msra.mxu0 0.0
  %2030 = vmatprep.subr.mxu0 0.0
  %2031 = vmatpush1.msra.mxu0 0.0
  %2032 = vmatprep.subr.mxu0 0.0
  %2033 = vmatpush1.msra.mxu0 0.0
  %2034 = vmatprep.subr.mxu0 0.0
  %2035 = vmatpush1.msra.mxu0 0.0
  %2036 = vmatprep.subr.mxu0 0.0
  %2037 = vmatpush1.msra.mxu0 0.0
  %2038 = vmatprep.subr.mxu0 0.0
  %2039 = vmatpush1.msra.mxu0 0.0
  %2040 = vmatprep.subr.mxu0 0.0
  %2041 = vmatpush1.msra.mxu0 0.0
  %2042 = vmatprep.subr.mxu0 0.0
  %2043 = vmatpush1.msra.mxu0 0.0
  %2044 = vmatprep.subr.mxu0 0.0
  %2045 = vmatpush1.msra.mxu0 0.0
  %2046 = vmatprep.mubr.f32.mxu0 0.0
  %v2047 = vand.u32 %v1978, 4294901760
  %v2048 = vsub.f32 %v1978, %v2047
  %v2049 = vand.u32 %v2048, 4294901760
  %v2050 = vsub.f32 %v2048, %v2049
  %v2051 = vand.u32 %v2050, 4294901760
  %2052 = vmatmul.mubr.f32.gmra.mrb[0].mxu0 %v2051
  %v2053 = vpop.f32.mrb[0].mxu0
  %v2054 = vadd.f32 0.0, %v2053
  %v2055 = vpop.f32.mrb[0].mxu0
  %v2056 = vadd.f32 0.0, %v2055
  %2057 = vdwg.mxu0
  %v2058 = vand.u32 %v44, 4294901760
  %v2059 = vsub.f32 %v44, %v2058
  %v2060 = vand.u32 %v2059, 4294901760
  %v2061 = vsub.f32 %v2059, %v2060
  %v2062 = vand.u32 %v2061, 4294901760
  %2063 = vmatprep.subr.mxu0 %v2062
  %v2064 = vand.u32 %v43, 4294901760
  %v2065 = vsub.f32 %v43, %v2064
  %v2066 = vand.u32 %v2065, 4294901760
  %v2067 = vsub.f32 %v2065, %v2066
  %v2068 = vand.u32 %v2067, 4294901760
  %2069 = vmatpush1.msra.mxu0 %v2068
  %2070 = vmatprep.subr.mxu0 0.0
  %2071 = vmatpush1.msra.mxu0 0.0
  %2072 = vmatprep.subr.mxu0 0.0
  %2073 = vmatpush1.msra.mxu0 0.0
  %2074 = vmatprep.subr.mxu0 0.0
  %2075 = vmatpush1.msra.mxu0 0.0
  %2076 = vmatprep.subr.mxu0 0.0
  %2077 = vmatpush1.msra.mxu0 0.0
  %2078 = vmatprep.subr.mxu0 0.0
  %2079 = vmatpush1.msra.mxu0 0.0
  %2080 = vmatprep.subr.mxu0 0.0
  %2081 = vmatpush1.msra.mxu0 0.0
  %2082 = vmatprep.subr.mxu0 0.0
  %2083 = vmatpush1.msra.mxu0 0.0
  %2084 = vmatprep.subr.mxu0 0.0
  %2085 = vmatpush1.msra.mxu0 0.0
  %2086 = vmatprep.subr.mxu0 0.0
  %2087 = vmatpush1.msra.mxu0 0.0
  %2088 = vmatprep.subr.mxu0 0.0
  %2089 = vmatpush1.msra.mxu0 0.0
  %2090 = vmatprep.subr.mxu0 0.0
  %2091 = vmatpush1.msra.mxu0 0.0
  %2092 = vmatprep.subr.mxu0 0.0
  %2093 = vmatpush1.msra.mxu0 0.0
  %2094 = vmatprep.subr.mxu0 0.0
  %2095 = vmatpush1.msra.mxu0 0.0
  %2096 = vmatprep.subr.mxu0 0.0
  %2097 = vmatpush1.msra.mxu0 0.0
  %2098 = vmatprep.subr.mxu0 0.0
  %2099 = vmatpush1.msra.mxu0 0.0
  %2100 = vmatprep.subr.mxu0 0.0
  %2101 = vmatpush1.msra.mxu0 0.0
  %2102 = vmatprep.subr.mxu0 0.0
  %2103 = vmatpush1.msra.mxu0 0.0
  %2104 = vmatprep.subr.mxu0 0.0
  %2105 = vmatpush1.msra.mxu0 0.0
  %2106 = vmatprep.subr.mxu0 0.0
  %2107 = vmatpush1.msra.mxu0 0.0
  %2108 = vmatprep.subr.mxu0 0.0
  %2109 = vmatpush1.msra.mxu0 0.0
  %2110 = vmatprep.subr.mxu0 0.0
  %2111 = vmatpush1.msra.mxu0 0.0
  %2112 = vmatprep.subr.mxu0 0.0
  %2113 = vmatpush1.msra.mxu0 0.0
  %2114 = vmatprep.subr.mxu0 0.0
  %2115 = vmatpush1.msra.mxu0 0.0
  %2116 = vmatprep.subr.mxu0 0.0
  %2117 = vmatpush1.msra.mxu0 0.0
  %2118 = vmatprep.subr.mxu0 0.0
  %2119 = vmatpush1.msra.mxu0 0.0
  %2120 = vmatprep.subr.mxu0 0.0
  %2121 = vmatpush1.msra.mxu0 0.0
  %2122 = vmatprep.subr.mxu0 0.0
  %2123 = vmatpush1.msra.mxu0 0.0
  %2124 = vmatprep.subr.mxu0 0.0
  %2125 = vmatpush1.msra.mxu0 0.0
  %2126 = vmatprep.subr.mxu0 0.0
  %2127 = vmatpush1.msra.mxu0 0.0
  %2128 = vmatprep.subr.mxu0 0.0
  %2129 = vmatpush1.msra.mxu0 0.0
  %2130 = vmatprep.subr.mxu0 0.0
  %2131 = vmatpush1.msra.mxu0 0.0
  %2132 = vmatprep.mubr.f32.mxu0 0.0
  %v2133 = vand.u32 %v1978, 4294901760
  %2134 = vmatmul.mubr.f32.gmra.mrb[0].mxu0 %v2133
  %v2135 = vpop.f32.mrb[0].mxu0
  %v2136 = vadd.f32 %v2054, %v2135
  %v2137 = vpop.f32.mrb[0].mxu0
  %v2138 = vadd.f32 %v2056, %v2137
  %2139 = vdwg.mxu0
  %v2140 = vand.u32 %v44, 4294901760
  %v2141 = vsub.f32 %v44, %v2140
  %2142 = vmatprep.subr.mxu0 %v2141
  %v2143 = vand.u32 %v43, 4294901760
  %v2144 = vsub.f32 %v43, %v2143
  %2145 = vmatpush1.msra.mxu0 %v2144
  %2146 = vmatprep.subr.mxu0 0.0
  %2147 = vmatpush1.msra.mxu0 0.0
  %2148 = vmatprep.subr.mxu0 0.0
  %2149 = vmatpush1.msra.mxu0 0.0
  %2150 = vmatprep.subr.mxu0 0.0
  %2151 = vmatpush1.msra.mxu0 0.0
  %2152 = vmatprep.subr.mxu0 0.0
  %2153 = vmatpush1.msra.mxu0 0.0
  %2154 = vmatprep.subr.mxu0 0.0
  %2155 = vmatpush1.msra.mxu0 0.0
  %2156 = vmatprep.subr.mxu0 0.0
  %2157 = vmatpush1.msra.mxu0 0.0
  %2158 = vmatprep.subr.mxu0 0.0
  %2159 = vmatpush1.msra.mxu0 0.0
  %2160 = vmatprep.subr.mxu0 0.0
  %2161 = vmatpush1.msra.mxu0 0.0
  %2162 = vmatprep.subr.mxu0 0.0
  %2163 = vmatpush1.msra.mxu0 0.0
  %2164 = vmatprep.subr.mxu0 0.0
  %2165 = vmatpush1.msra.mxu0 0.0
  %2166 = vmatprep.subr.mxu0 0.0
  %2167 = vmatpush1.msra.mxu0 0.0
  %2168 = vmatprep.subr.mxu0 0.0
  %2169 = vmatpush1.msra.mxu0 0.0
  %2170 = vmatprep.subr.mxu0 0.0
  %2171 = vmatpush1.msra.mxu0 0.0
  %2172 = vmatprep.subr.mxu0 0.0
  %2173 = vmatpush1.msra.mxu0 0.0
  %2174 = vmatprep.subr.mxu0 0.0
  %2175 = vmatpush1.msra.mxu0 0.0
  %2176 = vmatprep.subr.mxu0 0.0
  %2177 = vmatpush1.msra.mxu0 0.0
  %2178 = vmatprep.subr.mxu0 0.0
  %2179 = vmatpush1.msra.mxu0 0.0
  %2180 = vmatprep.subr.mxu0 0.0
  %2181 = vmatpush1.msra.mxu0 0.0
  %2182 = vmatprep.subr.mxu0 0.0
  %2183 = vmatpush1.msra.mxu0 0.0
  %2184 = vmatprep.subr.mxu0 0.0
  %2185 = vmatpush1.msra.mxu0 0.0
  %2186 = vmatprep.subr.mxu0 0.0
  %2187 = vmatpush1.msra.mxu0 0.0
  %2188 = vmatprep.subr.mxu0 0.0
  %2189 = vmatpush1.msra.mxu0 0.0
  %2190 = vmatprep.subr.mxu0 0.0
  %2191 = vmatpush1.msra.mxu0 0.0
  %2192 = vmatprep.subr.mxu0 0.0
  %2193 = vmatpush1.msra.mxu0 0.0
  %2194 = vmatprep.subr.mxu0 0.0
  %2195 = vmatpush1.msra.mxu0 0.0
  %2196 = vmatprep.subr.mxu0 0.0
  %2197 = vmatpush1.msra.mxu0 0.0
  %2198 = vmatprep.subr.mxu0 0.0
  %2199 = vmatpush1.msra.mxu0 0.0
  %2200 = vmatprep.subr.mxu0 0.0
  %2201 = vmatpush1.msra.mxu0 0.0
  %2202 = vmatprep.subr.mxu0 0.0
  %2203 = vmatpush1.msra.mxu0 0.0
  %2204 = vmatprep.subr.mxu0 0.0
  %2205 = vmatpush1.msra.mxu0 0.0
  %2206 = vmatprep.subr.mxu0 0.0
  %2207 = vmatpush1.msra.mxu0 0.0
  %2208 = vmatprep.mubr.f32.mxu0 0.0
  %v2209 = vand.u32 %v1978, 4294901760
  %v2210 = vsub.f32 %v1978, %v2209
  %2211 = vmatmul.mubr.f32.gmra.mrb[0].mxu0 %v2210
  %v2212 = vpop.f32.mrb[0].mxu0
  %v2213 = vadd.f32 %v2136, %v2212
  %v2214 = vpop.f32.mrb[0].mxu0
  %v2215 = vadd.f32 %v2138, %v2214
  %2216 = vdwg.mxu0
  %v2217 = vand.u32 %v44, 4294901760
  %2218 = vmatprep.subr.mxu0 %v2217
  %v2219 = vand.u32 %v43, 4294901760
  %2220 = vmatpush1.msra.mxu0 %v2219
  %2221 = vmatprep.subr.mxu0 0.0
  %2222 = vmatpush1.msra.mxu0 0.0
  %2223 = vmatprep.subr.mxu0 0.0
  %2224 = vmatpush1.msra.mxu0 0.0
  %2225 = vmatprep.subr.mxu0 0.0
  %2226 = vmatpush1.msra.mxu0 0.0
  %2227 = vmatprep.subr.mxu0 0.0
  %2228 = vmatpush1.msra.mxu0 0.0
  %2229 = vmatprep.subr.mxu0 0.0
  %2230 = vmatpush1.msra.mxu0 0.0
  %2231 = vmatprep.subr.mxu0 0.0
  %2232 = vmatpush1.msra.mxu0 0.0
  %2233 = vmatprep.subr.mxu0 0.0
  %2234 = vmatpush1.msra.mxu0 0.0
  %2235 = vmatprep.subr.mxu0 0.0
  %2236 = vmatpush1.msra.mxu0 0.0
  %2237 = vmatprep.subr.mxu0 0.0
  %2238 = vmatpush1.msra.mxu0 0.0
  %2239 = vmatprep.subr.mxu0 0.0
  %2240 = vmatpush1.msra.mxu0 0.0
  %2241 = vmatprep.subr.mxu0 0.0
  %2242 = vmatpush1.msra.mxu0 0.0
  %2243 = vmatprep.subr.mxu0 0.0
  %2244 = vmatpush1.msra.mxu0 0.0
  %2245 = vmatprep.subr.mxu0 0.0
  %2246 = vmatpush1.msra.mxu0 0.0
  %2247 = vmatprep.subr.mxu0 0.0
  %2248 = vmatpush1.msra.mxu0 0.0
  %2249 = vmatprep.subr.mxu0 0.0
  %2250 = vmatpush1.msra.mxu0 0.0
  %2251 = vmatprep.subr.mxu0 0.0
  %2252 = vmatpush1.msra.mxu0 0.0
  %2253 = vmatprep.subr.mxu0 0.0
  %2254 = vmatpush1.msra.mxu0 0.0
  %2255 = vmatprep.subr.mxu0 0.0
  %2256 = vmatpush1.msra.mxu0 0.0
  %2257 = vmatprep.subr.mxu0 0.0
  %2258 = vmatpush1.msra.mxu0 0.0
  %2259 = vmatprep.subr.mxu0 0.0
  %2260 = vmatpush1.msra.mxu0 0.0
  %2261 = vmatprep.subr.mxu0 0.0
  %2262 = vmatpush1.msra.mxu0 0.0
  %2263 = vmatprep.subr.mxu0 0.0
  %2264 = vmatpush1.msra.mxu0 0.0
  %2265 = vmatprep.subr.mxu0 0.0
  %2266 = vmatpush1.msra.mxu0 0.0
  %2267 = vmatprep.subr.mxu0 0.0
  %2268 = vmatpush1.msra.mxu0 0.0
  %2269 = vmatprep.subr.mxu0 0.0
  %2270 = vmatpush1.msra.mxu0 0.0
  %2271 = vmatprep.subr.mxu0 0.0
  %2272 = vmatpush1.msra.mxu0 0.0
  %2273 = vmatprep.subr.mxu0 0.0
  %2274 = vmatpush1.msra.mxu0 0.0
  %2275 = vmatprep.subr.mxu0 0.0
  %2276 = vmatpush1.msra.mxu0 0.0
  %2277 = vmatprep.subr.mxu0 0.0
  %2278 = vmatpush1.msra.mxu0 0.0
  %2279 = vmatprep.subr.mxu0 0.0
  %2280 = vmatpush1.msra.mxu0 0.0
  %2281 = vmatprep.subr.mxu0 0.0
  %2282 = vmatpush1.msra.mxu0 0.0
  %2283 = vmatprep.mubr.f32.mxu0 0.0
  %v2284 = vand.u32 %v1978, 4294901760
  %v2285 = vsub.f32 %v1978, %v2284
  %v2286 = vand.u32 %v2285, 4294901760
  %2287 = vmatmul.mubr.f32.gmra.mrb[0].mxu0 %v2286
  %v2288 = vpop.f32.mrb[0].mxu0
  %v2289 = vadd.f32 %v2213, %v2288
  %v2290 = vpop.f32.mrb[0].mxu0
  %v2291 = vadd.f32 %v2215, %v2290
  %2292 = vdwg.mxu0
  %v2293 = vand.u32 %v44, 4294901760
  %v2294 = vsub.f32 %v44, %v2293
  %v2295 = vand.u32 %v2294, 4294901760
  %2296 = vmatprep.subr.mxu0 %v2295
  %v2297 = vand.u32 %v43, 4294901760
  %v2298 = vsub.f32 %v43, %v2297
  %v2299 = vand.u32 %v2298, 4294901760
  %2300 = vmatpush1.msra.mxu0 %v2299
  %2301 = vmatprep.subr.mxu0 0.0
  %2302 = vmatpush1.msra.mxu0 0.0
  %2303 = vmatprep.subr.mxu0 0.0
  %2304 = vmatpush1.msra.mxu0 0.0
  %2305 = vmatprep.subr.mxu0 0.0
  %2306 = vmatpush1.msra.mxu0 0.0
  %2307 = vmatprep.subr.mxu0 0.0
  %2308 = vmatpush1.msra.mxu0 0.0
  %2309 = vmatprep.subr.mxu0 0.0
  %2310 = vmatpush1.msra.mxu0 0.0
  %2311 = vmatprep.subr.mxu0 0.0
  %2312 = vmatpush1.msra.mxu0 0.0
  %2313 = vmatprep.subr.mxu0 0.0
  %2314 = vmatpush1.msra.mxu0 0.0
  %2315 = vmatprep.subr.mxu0 0.0
  %2316 = vmatpush1.msra.mxu0 0.0
  %2317 = vmatprep.subr.mxu0 0.0
  %2318 = vmatpush1.msra.mxu0 0.0
  %2319 = vmatprep.subr.mxu0 0.0
  %2320 = vmatpush1.msra.mxu0 0.0
  %2321 = vmatprep.subr.mxu0 0.0
  %2322 = vmatpush1.msra.mxu0 0.0
  %2323 = vmatprep.subr.mxu0 0.0
  %2324 = vmatpush1.msra.mxu0 0.0
  %2325 = vmatprep.subr.mxu0 0.0
  %2326 = vmatpush1.msra.mxu0 0.0
  %2327 = vmatprep.subr.mxu0 0.0
  %2328 = vmatpush1.msra.mxu0 0.0
  %2329 = vmatprep.subr.mxu0 0.0
  %2330 = vmatpush1.msra.mxu0 0.0
  %2331 = vmatprep.subr.mxu0 0.0
  %2332 = vmatpush1.msra.mxu0 0.0
  %2333 = vmatprep.subr.mxu0 0.0
  %2334 = vmatpush1.msra.mxu0 0.0
  %2335 = vmatprep.subr.mxu0 0.0
  %2336 = vmatpush1.msra.mxu0 0.0
  %2337 = vmatprep.subr.mxu0 0.0
  %2338 = vmatpush1.msra.mxu0 0.0
  %2339 = vmatprep.subr.mxu0 0.0
  %2340 = vmatpush1.msra.mxu0 0.0
  %2341 = vmatprep.subr.mxu0 0.0
  %2342 = vmatpush1.msra.mxu0 0.0
  %2343 = vmatprep.subr.mxu0 0.0
  %2344 = vmatpush1.msra.mxu0 0.0
  %2345 = vmatprep.subr.mxu0 0.0
  %2346 = vmatpush1.msra.mxu0 0.0
  %2347 = vmatprep.subr.mxu0 0.0
  %2348 = vmatpush1.msra.mxu0 0.0
  %2349 = vmatprep.subr.mxu0 0.0
  %2350 = vmatpush1.msra.mxu0 0.0
  %2351 = vmatprep.subr.mxu0 0.0
  %2352 = vmatpush1.msra.mxu0 0.0
  %2353 = vmatprep.subr.mxu0 0.0
  %2354 = vmatpush1.msra.mxu0 0.0
  %2355 = vmatprep.subr.mxu0 0.0
  %2356 = vmatpush1.msra.mxu0 0.0
  %2357 = vmatprep.subr.mxu0 0.0
  %2358 = vmatpush1.msra.mxu0 0.0
  %2359 = vmatprep.subr.mxu0 0.0
  %2360 = vmatpush1.msra.mxu0 0.0
  %2361 = vmatprep.subr.mxu0 0.0
  %2362 = vmatpush1.msra.mxu0 0.0
  %2363 = vmatprep.mubr.f32.mxu0 0.0
  %v2364 = vand.u32 %v1978, 4294901760
  %2365 = vmatmul.mubr.f32.gmra.mrb[0].mxu0 %v2364
  %v2366 = vpop.f32.mrb[0].mxu0
  %v2367 = vadd.f32 %v2289, %v2366
  %v2368 = vpop.f32.mrb[0].mxu0
  %v2369 = vadd.f32 %v2291, %v2368
  %2370 = vdwg.mxu0
  %v2371 = vand.u32 %v44, 4294901760
  %2372 = vmatprep.subr.mxu0 %v2371
  %v2373 = vand.u32 %v43, 4294901760
  %2374 = vmatpush1.msra.mxu0 %v2373
  %2375 = vmatprep.subr.mxu0 0.0
  %2376 = vmatpush1.msra.mxu0 0.0
  %2377 = vmatprep.subr.mxu0 0.0
  %2378 = vmatpush1.msra.mxu0 0.0
  %2379 = vmatprep.subr.mxu0 0.0
  %2380 = vmatpush1.msra.mxu0 0.0
  %2381 = vmatprep.subr.mxu0 0.0
  %2382 = vmatpush1.msra.mxu0 0.0
  %2383 = vmatprep.subr.mxu0 0.0
  %2384 = vmatpush1.msra.mxu0 0.0
  %2385 = vmatprep.subr.mxu0 0.0
  %2386 = vmatpush1.msra.mxu0 0.0
  %2387 = vmatprep.subr.mxu0 0.0
  %2388 = vmatpush1.msra.mxu0 0.0
  %2389 = vmatprep.subr.mxu0 0.0
  %2390 = vmatpush1.msra.mxu0 0.0
  %2391 = vmatprep.subr.mxu0 0.0
  %2392 = vmatpush1.msra.mxu0 0.0
  %2393 = vmatprep.subr.mxu0 0.0
  %2394 = vmatpush1.msra.mxu0 0.0
  %2395 = vmatprep.subr.mxu0 0.0
  %2396 = vmatpush1.msra.mxu0 0.0
  %2397 = vmatprep.subr.mxu0 0.0
  %2398 = vmatpush1.msra.mxu0 0.0
  %2399 = vmatprep.subr.mxu0 0.0
  %2400 = vmatpush1.msra.mxu0 0.0
  %2401 = vmatprep.subr.mxu0 0.0
  %2402 = vmatpush1.msra.mxu0 0.0
  %2403 = vmatprep.subr.mxu0 0.0
  %2404 = vmatpush1.msra.mxu0 0.0
  %2405 = vmatprep.subr.mxu0 0.0
  %2406 = vmatpush1.msra.mxu0 0.0
  %2407 = vmatprep.subr.mxu0 0.0
  %2408 = vmatpush1.msra.mxu0 0.0
  %2409 = vmatprep.subr.mxu0 0.0
  %2410 = vmatpush1.msra.mxu0 0.0
  %2411 = vmatprep.subr.mxu0 0.0
  %2412 = vmatpush1.msra.mxu0 0.0
  %2413 = vmatprep.subr.mxu0 0.0
  %2414 = vmatpush1.msra.mxu0 0.0
  %2415 = vmatprep.subr.mxu0 0.0
  %2416 = vmatpush1.msra.mxu0 0.0
  %2417 = vmatprep.subr.mxu0 0.0
  %2418 = vmatpush1.msra.mxu0 0.0
  %2419 = vmatprep.subr.mxu0 0.0
  %2420 = vmatpush1.msra.mxu0 0.0
  %2421 = vmatprep.subr.mxu0 0.0
  %2422 = vmatpush1.msra.mxu0 0.0
  %2423 = vmatprep.subr.mxu0 0.0
  %2424 = vmatpush1.msra.mxu0 0.0
  %2425 = vmatprep.subr.mxu0 0.0
  %2426 = vmatpush1.msra.mxu0 0.0
  %2427 = vmatprep.subr.mxu0 0.0
  %2428 = vmatpush1.msra.mxu0 0.0
  %2429 = vmatprep.subr.mxu0 0.0
  %2430 = vmatpush1.msra.mxu0 0.0
  %2431 = vmatprep.subr.mxu0 0.0
  %2432 = vmatpush1.msra.mxu0 0.0
  %2433 = vmatprep.subr.mxu0 0.0
  %2434 = vmatpush1.msra.mxu0 0.0
  %2435 = vmatprep.subr.mxu0 0.0
  %2436 = vmatpush1.msra.mxu0 0.0
  %2437 = vmatprep.mubr.f32.mxu0 0.0
  %v2438 = vand.u32 %v1978, 4294901760
  %2439 = vmatmul.mubr.f32.gmra.mrb[0].mxu0 %v2438
  %v2440 = vpop.f32.mrb[0].mxu0
  %v2441 = vadd.f32 %v2367, %v2440
  %v2442 = vpop.f32.mrb[0].mxu0
  %v2443 = vadd.f32 %v2369, %v2442
  %2444 = vdwg.mxu0
  %v2445 = vadd.f32 %v1973, %v2441
  %v2446 = vadd.f32 %v1974, %v2443
  %2447 = vrot.lane.b32.xlu0 %v43, 127
  %v2448 = vpop.permute.xlu0 %2447
  %2449 = vrot.lane.b32.xlu0 %v44, 127
  %v2450 = vpop.permute.xlu0 %2449
  %vm2451 = vcmp.lt.s32.totalorder %v21, 127
  %v2452 = vsel %vm2451, %v2448, %v2450
  %v2453 = vsel %vm2451, %v2450, %v2448
  %v2454 = vsel %vm33, %v2452, 0.0
  %v2455 = vsel %vm34, %v2453, 0.0
  %s2456 = scalar_lea.vmem %s1, 40
  %v2457 = vld [vmem:[%s2456] sm:$0xff]
  %v2459 = vsel %vm61, %v2457, 0
  %v2461 = vand.u32 %v2455, 4294901760
  %2462 = vmatprep.subr.mxu0 %v2461
  %v2463 = vand.u32 %v2454, 4294901760
  %2464 = vmatpush1.msra.mxu0 %v2463
  %2465 = vmatprep.subr.mxu0 0.0
  %2466 = vmatpush1.msra.mxu0 0.0
  %2467 = vmatprep.subr.mxu0 0.0
  %2468 = vmatpush1.msra.mxu0 0.0
  %2469 = vmatprep.subr.mxu0 0.0
  %2470 = vmatpush1.msra.mxu0 0.0
  %2471 = vmatprep.subr.mxu0 0.0
  %2472 = vmatpush1.msra.mxu0 0.0
  %2473 = vmatprep.subr.mxu0 0.0
  %2474 = vmatpush1.msra.mxu0 0.0
  %2475 = vmatprep.subr.mxu0 0.0
  %2476 = vmatpush1.msra.mxu0 0.0
  %2477 = vmatprep.subr.mxu0 0.0
  %2478 = vmatpush1.msra.mxu0 0.0
  %2479 = vmatprep.subr.mxu0 0.0
  %2480 = vmatpush1.msra.mxu0 0.0
  %2481 = vmatprep.subr.mxu0 0.0
  %2482 = vmatpush1.msra.mxu0 0.0
  %2483 = vmatprep.subr.mxu0 0.0
  %2484 = vmatpush1.msra.mxu0 0.0
  %2485 = vmatprep.subr.mxu0 0.0
  %2486 = vmatpush1.msra.mxu0 0.0
  %2487 = vmatprep.subr.mxu0 0.0
  %2488 = vmatpush1.msra.mxu0 0.0
  %2489 = vmatprep.subr.mxu0 0.0
  %2490 = vmatpush1.msra.mxu0 0.0
  %2491 = vmatprep.subr.mxu0 0.0
  %2492 = vmatpush1.msra.mxu0 0.0
  %2493 = vmatprep.subr.mxu0 0.0
  %2494 = vmatpush1.msra.mxu0 0.0
  %2495 = vmatprep.subr.mxu0 0.0
  %2496 = vmatpush1.msra.mxu0 0.0
  %2497 = vmatprep.subr.mxu0 0.0
  %2498 = vmatpush1.msra.mxu0 0.0
  %2499 = vmatprep.subr.mxu0 0.0
  %2500 = vmatpush1.msra.mxu0 0.0
  %2501 = vmatprep.subr.mxu0 0.0
  %2502 = vmatpush1.msra.mxu0 0.0
  %2503 = vmatprep.subr.mxu0 0.0
  %2504 = vmatpush1.msra.mxu0 0.0
  %2505 = vmatprep.subr.mxu0 0.0
  %2506 = vmatpush1.msra.mxu0 0.0
  %2507 = vmatprep.subr.mxu0 0.0
  %2508 = vmatpush1.msra.mxu0 0.0
  %2509 = vmatprep.subr.mxu0 0.0
  %2510 = vmatpush1.msra.mxu0 0.0
  %2511 = vmatprep.subr.mxu0 0.0
  %2512 = vmatpush1.msra.mxu0 0.0
  %2513 = vmatprep.subr.mxu0 0.0
  %2514 = vmatpush1.msra.mxu0 0.0
  %2515 = vmatprep.subr.mxu0 0.0
  %2516 = vmatpush1.msra.mxu0 0.0
  %2517 = vmatprep.subr.mxu0 0.0
  %2518 = vmatpush1.msra.mxu0 0.0
  %2519 = vmatprep.subr.mxu0 0.0
  %2520 = vmatpush1.msra.mxu0 0.0
  %2521 = vmatprep.subr.mxu0 0.0
  %2522 = vmatpush1.msra.mxu0 0.0
  %2523 = vmatprep.subr.mxu0 0.0
  %2524 = vmatpush1.msra.mxu0 0.0
  %2525 = vmatprep.subr.mxu0 0.0
  %2526 = vmatpush1.msra.mxu0 0.0
  %2527 = vmatprep.mubr.f32.mxu0 0.0
  %v2528 = vand.u32 %v2459, 4294901760
  %v2529 = vsub.f32 %v2459, %v2528
  %v2530 = vand.u32 %v2529, 4294901760
  %v2531 = vsub.f32 %v2529, %v2530
  %v2532 = vand.u32 %v2531, 4294901760
  %2533 = vmatmul.mubr.f32.gmra.mrb[0].mxu0 %v2532
  %v2534 = vpop.f32.mrb[0].mxu0
  %v2535 = vadd.f32 0.0, %v2534
  %v2536 = vpop.f32.mrb[0].mxu0
  %v2537 = vadd.f32 0.0, %v2536
  %2538 = vdwg.mxu0
  %v2539 = vand.u32 %v2455, 4294901760
  %v2540 = vsub.f32 %v2455, %v2539
  %v2541 = vand.u32 %v2540, 4294901760
  %v2542 = vsub.f32 %v2540, %v2541
  %v2543 = vand.u32 %v2542, 4294901760
  %2544 = vmatprep.subr.mxu0 %v2543
  %v2545 = vand.u32 %v2454, 4294901760
  %v2546 = vsub.f32 %v2454, %v2545
  %v2547 = vand.u32 %v2546, 4294901760
  %v2548 = vsub.f32 %v2546, %v2547
  %v2549 = vand.u32 %v2548, 4294901760
  %2550 = vmatpush1.msra.mxu0 %v2549
  %2551 = vmatprep.subr.mxu0 0.0
  %2552 = vmatpush1.msra.mxu0 0.0
  %2553 = vmatprep.subr.mxu0 0.0
  %2554 = vmatpush1.msra.mxu0 0.0
  %2555 = vmatprep.subr.mxu0 0.0
  %2556 = vmatpush1.msra.mxu0 0.0
  %2557 = vmatprep.subr.mxu0 0.0
  %2558 = vmatpush1.msra.mxu0 0.0
  %2559 = vmatprep.subr.mxu0 0.0
  %2560 = vmatpush1.msra.mxu0 0.0
  %2561 = vmatprep.subr.mxu0 0.0
  %2562 = vmatpush1.msra.mxu0 0.0
  %2563 = vmatprep.subr.mxu0 0.0
  %2564 = vmatpush1.msra.mxu0 0.0
  %2565 = vmatprep.subr.mxu0 0.0
  %2566 = vmatpush1.msra.mxu0 0.0
  %2567 = vmatprep.subr.mxu0 0.0
  %2568 = vmatpush1.msra.mxu0 0.0
  %2569 = vmatprep.subr.mxu0 0.0
  %2570 = vmatpush1.msra.mxu0 0.0
  %2571 = vmatprep.subr.mxu0 0.0
  %2572 = vmatpush1.msra.mxu0 0.0
  %2573 = vmatprep.subr.mxu0 0.0
  %2574 = vmatpush1.msra.mxu0 0.0
  %2575 = vmatprep.subr.mxu0 0.0
  %2576 = vmatpush1.msra.mxu0 0.0
  %2577 = vmatprep.subr.mxu0 0.0
  %2578 = vmatpush1.msra.mxu0 0.0
  %2579 = vmatprep.subr.mxu0 0.0
  %2580 = vmatpush1.msra.mxu0 0.0
  %2581 = vmatprep.subr.mxu0 0.0
  %2582 = vmatpush1.msra.mxu0 0.0
  %2583 = vmatprep.subr.mxu0 0.0
  %2584 = vmatpush1.msra.mxu0 0.0
  %2585 = vmatprep.subr.mxu0 0.0
  %2586 = vmatpush1.msra.mxu0 0.0
  %2587 = vmatprep.subr.mxu0 0.0
  %2588 = vmatpush1.msra.mxu0 0.0
  %2589 = vmatprep.subr.mxu0 0.0
  %2590 = vmatpush1.msra.mxu0 0.0
  %2591 = vmatprep.subr.mxu0 0.0
  %2592 = vmatpush1.msra.mxu0 0.0
  %2593 = vmatprep.subr.mxu0 0.0
  %2594 = vmatpush1.msra.mxu0 0.0
  %2595 = vmatprep.subr.mxu0 0.0
  %2596 = vmatpush1.msra.mxu0 0.0
  %2597 = vmatprep.subr.mxu0 0.0
  %2598 = vmatpush1.msra.mxu0 0.0
  %2599 = vmatprep.subr.mxu0 0.0
  %2600 = vmatpush1.msra.mxu0 0.0
  %2601 = vmatprep.subr.mxu0 0.0
  %2602 = vmatpush1.msra.mxu0 0.0
  %2603 = vmatprep.subr.mxu0 0.0
  %2604 = vmatpush1.msra.mxu0 0.0
  %2605 = vmatprep.subr.mxu0 0.0
  %2606 = vmatpush1.msra.mxu0 0.0
  %2607 = vmatprep.subr.mxu0 0.0
  %2608 = vmatpush1.msra.mxu0 0.0
  %2609 = vmatprep.subr.mxu0 0.0
  %2610 = vmatpush1.msra.mxu0 0.0
  %2611 = vmatprep.subr.mxu0 0.0
  %2612 = vmatpush1.msra.mxu0 0.0
  %2613 = vmatprep.mubr.f32.mxu0 0.0
  %v2614 = vand.u32 %v2459, 4294901760
  %2615 = vmatmul.mubr.f32.gmra.mrb[0].mxu0 %v2614
  %v2616 = vpop.f32.mrb[0].mxu0
  %v2617 = vadd.f32 %v2535, %v2616
  %v2618 = vpop.f32.mrb[0].mxu0
  %v2619 = vadd.f32 %v2537, %v2618
  %2620 = vdwg.mxu0
  %v2621 = vand.u32 %v2455, 4294901760
  %v2622 = vsub.f32 %v2455, %v2621
  %2623 = vmatprep.subr.mxu0 %v2622
  %v2624 = vand.u32 %v2454, 4294901760
  %v2625 = vsub.f32 %v2454, %v2624
  %2626 = vmatpush1.msra.mxu0 %v2625
  %2627 = vmatprep.subr.mxu0 0.0
  %2628 = vmatpush1.msra.mxu0 0.0
  %2629 = vmatprep.subr.mxu0 0.0
  %2630 = vmatpush1.msra.mxu0 0.0
  %2631 = vmatprep.subr.mxu0 0.0
  %2632 = vmatpush1.msra.mxu0 0.0
  %2633 = vmatprep.subr.mxu0 0.0
  %2634 = vmatpush1.msra.mxu0 0.0
  %2635 = vmatprep.subr.mxu0 0.0
  %2636 = vmatpush1.msra.mxu0 0.0
  %2637 = vmatprep.subr.mxu0 0.0
  %2638 = vmatpush1.msra.mxu0 0.0
  %2639 = vmatprep.subr.mxu0 0.0
  %2640 = vmatpush1.msra.mxu0 0.0
  %2641 = vmatprep.subr.mxu0 0.0
  %2642 = vmatpush1.msra.mxu0 0.0
  %2643 = vmatprep.subr.mxu0 0.0
  %2644 = vmatpush1.msra.mxu0 0.0
  %2645 = vmatprep.subr.mxu0 0.0
  %2646 = vmatpush1.msra.mxu0 0.0
  %2647 = vmatprep.subr.mxu0 0.0
  %2648 = vmatpush1.msra.mxu0 0.0
  %2649 = vmatprep.subr.mxu0 0.0
  %2650 = vmatpush1.msra.mxu0 0.0
  %2651 = vmatprep.subr.mxu0 0.0
  %2652 = vmatpush1.msra.mxu0 0.0
  %2653 = vmatprep.subr.mxu0 0.0
  %2654 = vmatpush1.msra.mxu0 0.0
  %2655 = vmatprep.subr.mxu0 0.0
  %2656 = vmatpush1.msra.mxu0 0.0
  %2657 = vmatprep.subr.mxu0 0.0
  %2658 = vmatpush1.msra.mxu0 0.0
  %2659 = vmatprep.subr.mxu0 0.0
  %2660 = vmatpush1.msra.mxu0 0.0
  %2661 = vmatprep.subr.mxu0 0.0
  %2662 = vmatpush1.msra.mxu0 0.0
  %2663 = vmatprep.subr.mxu0 0.0
  %2664 = vmatpush1.msra.mxu0 0.0
  %2665 = vmatprep.subr.mxu0 0.0
  %2666 = vmatpush1.msra.mxu0 0.0
  %2667 = vmatprep.subr.mxu0 0.0
  %2668 = vmatpush1.msra.mxu0 0.0
  %2669 = vmatprep.subr.mxu0 0.0
  %2670 = vmatpush1.msra.mxu0 0.0
  %2671 = vmatprep.subr.mxu0 0.0
  %2672 = vmatpush1.msra.mxu0 0.0
  %2673 = vmatprep.subr.mxu0 0.0
  %2674 = vmatpush1.msra.mxu0 0.0
  %2675 = vmatprep.subr.mxu0 0.0
  %2676 = vmatpush1.msra.mxu0 0.0
  %2677 = vmatprep.subr.mxu0 0.0
  %2678 = vmatpush1.msra.mxu0 0.0
  %2679 = vmatprep.subr.mxu0 0.0
  %2680 = vmatpush1.msra.mxu0 0.0
  %2681 = vmatprep.subr.mxu0 0.0
  %2682 = vmatpush1.msra.mxu0 0.0
  %2683 = vmatprep.subr.mxu0 0.0
  %2684 = vmatpush1.msra.mxu0 0.0
  %2685 = vmatprep.subr.mxu0 0.0
  %2686 = vmatpush1.msra.mxu0 0.0
  %2687 = vmatprep.subr.mxu0 0.0
  %2688 = vmatpush1.msra.mxu0 0.0
  %2689 = vmatprep.mubr.f32.mxu0 0.0
  %v2690 = vand.u32 %v2459, 4294901760
  %v2691 = vsub.f32 %v2459, %v2690
  %2692 = vmatmul.mubr.f32.gmra.mrb[0].mxu0 %v2691
  %v2693 = vpop.f32.mrb[0].mxu0
  %v2694 = vadd.f32 %v2617, %v2693
  %v2695 = vpop.f32.mrb[0].mxu0
  %v2696 = vadd.f32 %v2619, %v2695
  %2697 = vdwg.mxu0
  %v2698 = vand.u32 %v2455, 4294901760
  %2699 = vmatprep.subr.mxu0 %v2698
  %v2700 = vand.u32 %v2454, 4294901760
  %2701 = vmatpush1.msra.mxu0 %v2700
  %2702 = vmatprep.subr.mxu0 0.0
  %2703 = vmatpush1.msra.mxu0 0.0
  %2704 = vmatprep.subr.mxu0 0.0
  %2705 = vmatpush1.msra.mxu0 0.0
  %2706 = vmatprep.subr.mxu0 0.0
  %2707 = vmatpush1.msra.mxu0 0.0
  %2708 = vmatprep.subr.mxu0 0.0
  %2709 = vmatpush1.msra.mxu0 0.0
  %2710 = vmatprep.subr.mxu0 0.0
  %2711 = vmatpush1.msra.mxu0 0.0
  %2712 = vmatprep.subr.mxu0 0.0
  %2713 = vmatpush1.msra.mxu0 0.0
  %2714 = vmatprep.subr.mxu0 0.0
  %2715 = vmatpush1.msra.mxu0 0.0
  %2716 = vmatprep.subr.mxu0 0.0
  %2717 = vmatpush1.msra.mxu0 0.0
  %2718 = vmatprep.subr.mxu0 0.0
  %2719 = vmatpush1.msra.mxu0 0.0
  %2720 = vmatprep.subr.mxu0 0.0
  %2721 = vmatpush1.msra.mxu0 0.0
  %2722 = vmatprep.subr.mxu0 0.0
  %2723 = vmatpush1.msra.mxu0 0.0
  %2724 = vmatprep.subr.mxu0 0.0
  %2725 = vmatpush1.msra.mxu0 0.0
  %2726 = vmatprep.subr.mxu0 0.0
  %2727 = vmatpush1.msra.mxu0 0.0
  %2728 = vmatprep.subr.mxu0 0.0
  %2729 = vmatpush1.msra.mxu0 0.0
  %2730 = vmatprep.subr.mxu0 0.0
  %2731 = vmatpush1.msra.mxu0 0.0
  %2732 = vmatprep.subr.mxu0 0.0
  %2733 = vmatpush1.msra.mxu0 0.0
  %2734 = vmatprep.subr.mxu0 0.0
  %2735 = vmatpush1.msra.mxu0 0.0
  %2736 = vmatprep.subr.mxu0 0.0
  %2737 = vmatpush1.msra.mxu0 0.0
  %2738 = vmatprep.subr.mxu0 0.0
  %2739 = vmatpush1.msra.mxu0 0.0
  %2740 = vmatprep.subr.mxu0 0.0
  %2741 = vmatpush1.msra.mxu0 0.0
  %2742 = vmatprep.subr.mxu0 0.0
  %2743 = vmatpush1.msra.mxu0 0.0
  %2744 = vmatprep.subr.mxu0 0.0
  %2745 = vmatpush1.msra.mxu0 0.0
  %2746 = vmatprep.subr.mxu0 0.0
  %2747 = vmatpush1.msra.mxu0 0.0
  %2748 = vmatprep.subr.mxu0 0.0
  %2749 = vmatpush1.msra.mxu0 0.0
  %2750 = vmatprep.subr.mxu0 0.0
  %2751 = vmatpush1.msra.mxu0 0.0
  %2752 = vmatprep.subr.mxu0 0.0
  %2753 = vmatpush1.msra.mxu0 0.0
  %2754 = vmatprep.subr.mxu0 0.0
  %2755 = vmatpush1.msra.mxu0 0.0
  %2756 = vmatprep.subr.mxu0 0.0
  %2757 = vmatpush1.msra.mxu0 0.0
  %2758 = vmatprep.subr.mxu0 0.0
  %2759 = vmatpush1.msra.mxu0 0.0
  %2760 = vmatprep.subr.mxu0 0.0
  %2761 = vmatpush1.msra.mxu0 0.0
  %2762 = vmatprep.subr.mxu0 0.0
  %2763 = vmatpush1.msra.mxu0 0.0
  %2764 = vmatprep.mubr.f32.mxu0 0.0
  %v2765 = vand.u32 %v2459, 4294901760
  %v2766 = vsub.f32 %v2459, %v2765
  %v2767 = vand.u32 %v2766, 4294901760
  %2768 = vmatmul.mubr.f32.gmra.mrb[0].mxu0 %v2767
  %v2769 = vpop.f32.mrb[0].mxu0
  %v2770 = vadd.f32 %v2694, %v2769
  %v2771 = vpop.f32.mrb[0].mxu0
  %v2772 = vadd.f32 %v2696, %v2771
  %2773 = vdwg.mxu0
  %v2774 = vand.u32 %v2455, 4294901760
  %v2775 = vsub.f32 %v2455, %v2774
  %v2776 = vand.u32 %v2775, 4294901760
  %2777 = vmatprep.subr.mxu0 %v2776
  %v2778 = vand.u32 %v2454, 4294901760
  %v2779 = vsub.f32 %v2454, %v2778
  %v2780 = vand.u32 %v2779, 4294901760
  %2781 = vmatpush1.msra.mxu0 %v2780
  %2782 = vmatprep.subr.mxu0 0.0
  %2783 = vmatpush1.msra.mxu0 0.0
  %2784 = vmatprep.subr.mxu0 0.0
  %2785 = vmatpush1.msra.mxu0 0.0
  %2786 = vmatprep.subr.mxu0 0.0
  %2787 = vmatpush1.msra.mxu0 0.0
  %2788 = vmatprep.subr.mxu0 0.0
  %2789 = vmatpush1.msra.mxu0 0.0
  %2790 = vmatprep.subr.mxu0 0.0
  %2791 = vmatpush1.msra.mxu0 0.0
  %2792 = vmatprep.subr.mxu0 0.0
  %2793 = vmatpush1.msra.mxu0 0.0
  %2794 = vmatprep.subr.mxu0 0.0
  %2795 = vmatpush1.msra.mxu0 0.0
  %2796 = vmatprep.subr.mxu0 0.0
  %2797 = vmatpush1.msra.mxu0 0.0
  %2798 = vmatprep.subr.mxu0 0.0
  %2799 = vmatpush1.msra.mxu0 0.0
  %2800 = vmatprep.subr.mxu0 0.0
  %2801 = vmatpush1.msra.mxu0 0.0
  %2802 = vmatprep.subr.mxu0 0.0
  %2803 = vmatpush1.msra.mxu0 0.0
  %2804 = vmatprep.subr.mxu0 0.0
  %2805 = vmatpush1.msra.mxu0 0.0
  %2806 = vmatprep.subr.mxu0 0.0
  %2807 = vmatpush1.msra.mxu0 0.0
  %2808 = vmatprep.subr.mxu0 0.0
  %2809 = vmatpush1.msra.mxu0 0.0
  %2810 = vmatprep.subr.mxu0 0.0
  %2811 = vmatpush1.msra.mxu0 0.0
  %2812 = vmatprep.subr.mxu0 0.0
  %2813 = vmatpush1.msra.mxu0 0.0
  %2814 = vmatprep.subr.mxu0 0.0
  %2815 = vmatpush1.msra.mxu0 0.0
  %2816 = vmatprep.subr.mxu0 0.0
  %2817 = vmatpush1.msra.mxu0 0.0
  %2818 = vmatprep.subr.mxu0 0.0
  %2819 = vmatpush1.msra.mxu0 0.0
  %2820 = vmatprep.subr.mxu0 0.0
  %2821 = vmatpush1.msra.mxu0 0.0
  %2822 = vmatprep.subr.mxu0 0.0
  %2823 = vmatpush1.msra.mxu0 0.0
  %2824 = vmatprep.subr.mxu0 0.0
  %2825 = vmatpush1.msra.mxu0 0.0
  %2826 = vmatprep.subr.mxu0 0.0
  %2827 = vmatpush1.msra.mxu0 0.0
  %2828 = vmatprep.subr.mxu0 0.0
  %2829 = vmatpush1.msra.mxu0 0.0
  %2830 = vmatprep.subr.mxu0 0.0
  %2831 = vmatpush1.msra.mxu0 0.0
  %2832 = vmatprep.subr.mxu0 0.0
  %2833 = vmatpush1.msra.mxu0 0.0
  %2834 = vmatprep.subr.mxu0 0.0
  %2835 = vmatpush1.msra.mxu0 0.0
  %2836 = vmatprep.subr.mxu0 0.0
  %2837 = vmatpush1.msra.mxu0 0.0
  %2838 = vmatprep.subr.mxu0 0.0
  %2839 = vmatpush1.msra.mxu0 0.0
  %2840 = vmatprep.subr.mxu0 0.0
  %2841 = vmatpush1.msra.mxu0 0.0
  %2842 = vmatprep.subr.mxu0 0.0
  %2843 = vmatpush1.msra.mxu0 0.0
  %2844 = vmatprep.mubr.f32.mxu0 0.0
  %v2845 = vand.u32 %v2459, 4294901760
  %2846 = vmatmul.mubr.f32.gmra.mrb[0].mxu0 %v2845
  %v2847 = vpop.f32.mrb[0].mxu0
  %v2848 = vadd.f32 %v2770, %v2847
  %v2849 = vpop.f32.mrb[0].mxu0
  %v2850 = vadd.f32 %v2772, %v2849
  %2851 = vdwg.mxu0
  %v2852 = vand.u32 %v2455, 4294901760
  %2853 = vmatprep.subr.mxu0 %v2852
  %v2854 = vand.u32 %v2454, 4294901760
  %2855 = vmatpush1.msra.mxu0 %v2854
  %2856 = vmatprep.subr.mxu0 0.0
  %2857 = vmatpush1.msra.mxu0 0.0
  %2858 = vmatprep.subr.mxu0 0.0
  %2859 = vmatpush1.msra.mxu0 0.0
  %2860 = vmatprep.subr.mxu0 0.0
  %2861 = vmatpush1.msra.mxu0 0.0
  %2862 = vmatprep.subr.mxu0 0.0
  %2863 = vmatpush1.msra.mxu0 0.0
  %2864 = vmatprep.subr.mxu0 0.0
  %2865 = vmatpush1.msra.mxu0 0.0
  %2866 = vmatprep.subr.mxu0 0.0
  %2867 = vmatpush1.msra.mxu0 0.0
  %2868 = vmatprep.subr.mxu0 0.0
  %2869 = vmatpush1.msra.mxu0 0.0
  %2870 = vmatprep.subr.mxu0 0.0
  %2871 = vmatpush1.msra.mxu0 0.0
  %2872 = vmatprep.subr.mxu0 0.0
  %2873 = vmatpush1.msra.mxu0 0.0
  %2874 = vmatprep.subr.mxu0 0.0
  %2875 = vmatpush1.msra.mxu0 0.0
  %2876 = vmatprep.subr.mxu0 0.0
  %2877 = vmatpush1.msra.mxu0 0.0
  %2878 = vmatprep.subr.mxu0 0.0
  %2879 = vmatpush1.msra.mxu0 0.0
  %2880 = vmatprep.subr.mxu0 0.0
  %2881 = vmatpush1.msra.mxu0 0.0
  %2882 = vmatprep.subr.mxu0 0.0
  %2883 = vmatpush1.msra.mxu0 0.0
  %2884 = vmatprep.subr.mxu0 0.0
  %2885 = vmatpush1.msra.mxu0 0.0
  %2886 = vmatprep.subr.mxu0 0.0
  %2887 = vmatpush1.msra.mxu0 0.0
  %2888 = vmatprep.subr.mxu0 0.0
  %2889 = vmatpush1.msra.mxu0 0.0
  %2890 = vmatprep.subr.mxu0 0.0
  %2891 = vmatpush1.msra.mxu0 0.0
  %2892 = vmatprep.subr.mxu0 0.0
  %2893 = vmatpush1.msra.mxu0 0.0
  %2894 = vmatprep.subr.mxu0 0.0
  %2895 = vmatpush1.msra.mxu0 0.0
  %2896 = vmatprep.subr.mxu0 0.0
  %2897 = vmatpush1.msra.mxu0 0.0
  %2898 = vmatprep.subr.mxu0 0.0
  %2899 = vmatpush1.msra.mxu0 0.0
  %2900 = vmatprep.subr.mxu0 0.0
  %2901 = vmatpush1.msra.mxu0 0.0
  %2902 = vmatprep.subr.mxu0 0.0
  %2903 = vmatpush1.msra.mxu0 0.0
  %2904 = vmatprep.subr.mxu0 0.0
  %2905 = vmatpush1.msra.mxu0 0.0
  %2906 = vmatprep.subr.mxu0 0.0
  %2907 = vmatpush1.msra.mxu0 0.0
  %2908 = vmatprep.subr.mxu0 0.0
  %2909 = vmatpush1.msra.mxu0 0.0
  %2910 = vmatprep.subr.mxu0 0.0
  %2911 = vmatpush1.msra.mxu0 0.0
  %2912 = vmatprep.subr.mxu0 0.0
  %2913 = vmatpush1.msra.mxu0 0.0
  %2914 = vmatprep.subr.mxu0 0.0
  %2915 = vmatpush1.msra.mxu0 0.0
  %2916 = vmatprep.subr.mxu0 0.0
  %2917 = vmatpush1.msra.mxu0 0.0
  %2918 = vmatprep.mubr.f32.mxu0 0.0
  %v2919 = vand.u32 %v2459, 4294901760
  %2920 = vmatmul.mubr.f32.gmra.mrb[0].mxu0 %v2919
  %v2921 = vpop.f32.mrb[0].mxu0
  %v2922 = vadd.f32 %v2848, %v2921
  %v2923 = vpop.f32.mrb[0].mxu0
  %v2924 = vadd.f32 %v2850, %v2923
  %2925 = vdwg.mxu0
  %v2926 = vadd.f32 %v2445, %v2922
  %v2927 = vadd.f32 %v2446, %v2924
  %2928 = vrot.lane.b32.xlu0 %v43, 113
  %v2929 = vpop.permute.xlu0 %2928
  %2930 = vrot.lane.b32.xlu0 %v44, 113
  %v2931 = vpop.permute.xlu0 %2930
  %vm2932 = vcmp.lt.s32.totalorder %v21, 113
  %v2933 = vsel %vm2932, %v2929, %v2931
  %v2934 = vsel %vm2932, %v2931, %v2929
  %v2935 = vsel %vm39, %v2933, 0.0
  %v2936 = vsel %vm40, %v2934, 0.0
  %s2937 = scalar_lea.vmem %s1, 48
  %v2938 = vld [vmem:[%s2937] sm:$0xff]
  %v2940 = vsel %vm61, %v2938, 0
  %v2942 = vand.u32 %v2936, 4294901760
  %2943 = vmatprep.subr.mxu0 %v2942
  %v2944 = vand.u32 %v2935, 4294901760
  %2945 = vmatpush1.msra.mxu0 %v2944
  %2946 = vmatprep.subr.mxu0 0.0
  %2947 = vmatpush1.msra.mxu0 0.0
  %2948 = vmatprep.subr.mxu0 0.0
  %2949 = vmatpush1.msra.mxu0 0.0
  %2950 = vmatprep.subr.mxu0 0.0
  %2951 = vmatpush1.msra.mxu0 0.0
  %2952 = vmatprep.subr.mxu0 0.0
  %2953 = vmatpush1.msra.mxu0 0.0
  %2954 = vmatprep.subr.mxu0 0.0
  %2955 = vmatpush1.msra.mxu0 0.0
  %2956 = vmatprep.subr.mxu0 0.0
  %2957 = vmatpush1.msra.mxu0 0.0
  %2958 = vmatprep.subr.mxu0 0.0
  %2959 = vmatpush1.msra.mxu0 0.0
  %2960 = vmatprep.subr.mxu0 0.0
  %2961 = vmatpush1.msra.mxu0 0.0
  %2962 = vmatprep.subr.mxu0 0.0
  %2963 = vmatpush1.msra.mxu0 0.0
  %2964 = vmatprep.subr.mxu0 0.0
  %2965 = vmatpush1.msra.mxu0 0.0
  %2966 = vmatprep.subr.mxu0 0.0
  %2967 = vmatpush1.msra.mxu0 0.0
  %2968 = vmatprep.subr.mxu0 0.0
  %2969 = vmatpush1.msra.mxu0 0.0
  %2970 = vmatprep.subr.mxu0 0.0
  %2971 = vmatpush1.msra.mxu0 0.0
  %2972 = vmatprep.subr.mxu0 0.0
  %2973 = vmatpush1.msra.mxu0 0.0
  %2974 = vmatprep.subr.mxu0 0.0
  %2975 = vmatpush1.msra.mxu0 0.0
  %2976 = vmatprep.subr.mxu0 0.0
  %2977 = vmatpush1.msra.mxu0 0.0
  %2978 = vmatprep.subr.mxu0 0.0
  %2979 = vmatpush1.msra.mxu0 0.0
  %2980 = vmatprep.subr.mxu0 0.0
  %2981 = vmatpush1.msra.mxu0 0.0
  %2982 = vmatprep.subr.mxu0 0.0
  %2983 = vmatpush1.msra.mxu0 0.0
  %2984 = vmatprep.subr.mxu0 0.0
  %2985 = vmatpush1.msra.mxu0 0.0
  %2986 = vmatprep.subr.mxu0 0.0
  %2987 = vmatpush1.msra.mxu0 0.0
  %2988 = vmatprep.subr.mxu0 0.0
  %2989 = vmatpush1.msra.mxu0 0.0
  %2990 = vmatprep.subr.mxu0 0.0
  %2991 = vmatpush1.msra.mxu0 0.0
  %2992 = vmatprep.subr.mxu0 0.0
  %2993 = vmatpush1.msra.mxu0 0.0
  %2994 = vmatprep.subr.mxu0 0.0
  %2995 = vmatpush1.msra.mxu0 0.0
  %2996 = vmatprep.subr.mxu0 0.0
  %2997 = vmatpush1.msra.mxu0 0.0
  %2998 = vmatprep.subr.mxu0 0.0
  %2999 = vmatpush1.msra.mxu0 0.0
  %3000 = vmatprep.subr.mxu0 0.0
  %3001 = vmatpush1.msra.mxu0 0.0
  %3002 = vmatprep.subr.mxu0 0.0
  %3003 = vmatpush1.msra.mxu0 0.0
  %3004 = vmatprep.subr.mxu0 0.0
  %3005 = vmatpush1.msra.mxu0 0.0
  %3006 = vmatprep.subr.mxu0 0.0
  %3007 = vmatpush1.msra.mxu0 0.0
  %3008 = vmatprep.mubr.f32.mxu0 0.0
  %v3009 = vand.u32 %v2940, 4294901760
  %v3010 = vsub.f32 %v2940, %v3009
  %v3011 = vand.u32 %v3010, 4294901760
  %v3012 = vsub.f32 %v3010, %v3011
  %v3013 = vand.u32 %v3012, 4294901760
  %3014 = vmatmul.mubr.f32.gmra.mrb[0].mxu0 %v3013
  %v3015 = vpop.f32.mrb[0].mxu0
  %v3016 = vadd.f32 0.0, %v3015
  %v3017 = vpop.f32.mrb[0].mxu0
  %v3018 = vadd.f32 0.0, %v3017
  %3019 = vdwg.mxu0
  %v3020 = vand.u32 %v2936, 4294901760
  %v3021 = vsub.f32 %v2936, %v3020
  %v3022 = vand.u32 %v3021, 4294901760
  %v3023 = vsub.f32 %v3021, %v3022
  %v3024 = vand.u32 %v3023, 4294901760
  %3025 = vmatprep.subr.mxu0 %v3024
  %v3026 = vand.u32 %v2935, 4294901760
  %v3027 = vsub.f32 %v2935, %v3026
  %v3028 = vand.u32 %v3027, 4294901760
  %v3029 = vsub.f32 %v3027, %v3028
  %v3030 = vand.u32 %v3029, 4294901760
  %3031 = vmatpush1.msra.mxu0 %v3030
  %3032 = vmatprep.subr.mxu0 0.0
  %3033 = vmatpush1.msra.mxu0 0.0
  %3034 = vmatprep.subr.mxu0 0.0
  %3035 = vmatpush1.msra.mxu0 0.0
  %3036 = vmatprep.subr.mxu0 0.0
  %3037 = vmatpush1.msra.mxu0 0.0
  %3038 = vmatprep.subr.mxu0 0.0
  %3039 = vmatpush1.msra.mxu0 0.0
  %3040 = vmatprep.subr.mxu0 0.0
  %3041 = vmatpush1.msra.mxu0 0.0
  %3042 = vmatprep.subr.mxu0 0.0
  %3043 = vmatpush1.msra.mxu0 0.0
  %3044 = vmatprep.subr.mxu0 0.0
  %3045 = vmatpush1.msra.mxu0 0.0
  %3046 = vmatprep.subr.mxu0 0.0
  %3047 = vmatpush1.msra.mxu0 0.0
  %3048 = vmatprep.subr.mxu0 0.0
  %3049 = vmatpush1.msra.mxu0 0.0
  %3050 = vmatprep.subr.mxu0 0.0
  %3051 = vmatpush1.msra.mxu0 0.0
  %3052 = vmatprep.subr.mxu0 0.0
  %3053 = vmatpush1.msra.mxu0 0.0
  %3054 = vmatprep.subr.mxu0 0.0
  %3055 = vmatpush1.msra.mxu0 0.0
  %3056 = vmatprep.subr.mxu0 0.0
  %3057 = vmatpush1.msra.mxu0 0.0
  %3058 = vmatprep.subr.mxu0 0.0
  %3059 = vmatpush1.msra.mxu0 0.0
  %3060 = vmatprep.subr.mxu0 0.0
  %3061 = vmatpush1.msra.mxu0 0.0
  %3062 = vmatprep.subr.mxu0 0.0
  %3063 = vmatpush1.msra.mxu0 0.0
  %3064 = vmatprep.subr.mxu0 0.0
  %3065 = vmatpush1.msra.mxu0 0.0
  %3066 = vmatprep.subr.mxu0 0.0
  %3067 = vmatpush1.msra.mxu0 0.0
  %3068 = vmatprep.subr.mxu0 0.0
  %3069 = vmatpush1.msra.mxu0 0.0
  %3070 = vmatprep.subr.mxu0 0.0
  %3071 = vmatpush1.msra.mxu0 0.0
  %3072 = vmatprep.subr.mxu0 0.0
  %3073 = vmatpush1.msra.mxu0 0.0
  %3074 = vmatprep.subr.mxu0 0.0
  %3075 = vmatpush1.msra.mxu0 0.0
  %3076 = vmatprep.subr.mxu0 0.0
  %3077 = vmatpush1.msra.mxu0 0.0
  %3078 = vmatprep.subr.mxu0 0.0
  %3079 = vmatpush1.msra.mxu0 0.0
  %3080 = vmatprep.subr.mxu0 0.0
  %3081 = vmatpush1.msra.mxu0 0.0
  %3082 = vmatprep.subr.mxu0 0.0
  %3083 = vmatpush1.msra.mxu0 0.0
  %3084 = vmatprep.subr.mxu0 0.0
  %3085 = vmatpush1.msra.mxu0 0.0
  %3086 = vmatprep.subr.mxu0 0.0
  %3087 = vmatpush1.msra.mxu0 0.0
  %3088 = vmatprep.subr.mxu0 0.0
  %3089 = vmatpush1.msra.mxu0 0.0
  %3090 = vmatprep.subr.mxu0 0.0
  %3091 = vmatpush1.msra.mxu0 0.0
  %3092 = vmatprep.subr.mxu0 0.0
  %3093 = vmatpush1.msra.mxu0 0.0
  %3094 = vmatprep.mubr.f32.mxu0 0.0
  %v3095 = vand.u32 %v2940, 4294901760
  %3096 = vmatmul.mubr.f32.gmra.mrb[0].mxu0 %v3095
  %v3097 = vpop.f32.mrb[0].mxu0
  %v3098 = vadd.f32 %v3016, %v3097
  %v3099 = vpop.f32.mrb[0].mxu0
  %v3100 = vadd.f32 %v3018, %v3099
  %3101 = vdwg.mxu0
  %v3102 = vand.u32 %v2936, 4294901760
  %v3103 = vsub.f32 %v2936, %v3102
  %3104 = vmatprep.subr.mxu0 %v3103
  %v3105 = vand.u32 %v2935, 4294901760
  %v3106 = vsub.f32 %v2935, %v3105
  %3107 = vmatpush1.msra.mxu0 %v3106
  %3108 = vmatprep.subr.mxu0 0.0
  %3109 = vmatpush1.msra.mxu0 0.0
  %3110 = vmatprep.subr.mxu0 0.0
  %3111 = vmatpush1.msra.mxu0 0.0
  %3112 = vmatprep.subr.mxu0 0.0
  %3113 = vmatpush1.msra.mxu0 0.0
  %3114 = vmatprep.subr.mxu0 0.0
  %3115 = vmatpush1.msra.mxu0 0.0
  %3116 = vmatprep.subr.mxu0 0.0
  %3117 = vmatpush1.msra.mxu0 0.0
  %3118 = vmatprep.subr.mxu0 0.0
  %3119 = vmatpush1.msra.mxu0 0.0
  %3120 = vmatprep.subr.mxu0 0.0
  %3121 = vmatpush1.msra.mxu0 0.0
  %3122 = vmatprep.subr.mxu0 0.0
  %3123 = vmatpush1.msra.mxu0 0.0
  %3124 = vmatprep.subr.mxu0 0.0
  %3125 = vmatpush1.msra.mxu0 0.0
  %3126 = vmatprep.subr.mxu0 0.0
  %3127 = vmatpush1.msra.mxu0 0.0
  %3128 = vmatprep.subr.mxu0 0.0
  %3129 = vmatpush1.msra.mxu0 0.0
  %3130 = vmatprep.subr.mxu0 0.0
  %3131 = vmatpush1.msra.mxu0 0.0
  %3132 = vmatprep.subr.mxu0 0.0
  %3133 = vmatpush1.msra.mxu0 0.0
  %3134 = vmatprep.subr.mxu0 0.0
  %3135 = vmatpush1.msra.mxu0 0.0
  %3136 = vmatprep.subr.mxu0 0.0
  %3137 = vmatpush1.msra.mxu0 0.0
  %3138 = vmatprep.subr.mxu0 0.0
  %3139 = vmatpush1.msra.mxu0 0.0
  %3140 = vmatprep.subr.mxu0 0.0
  %3141 = vmatpush1.msra.mxu0 0.0
  %3142 = vmatprep.subr.mxu0 0.0
  %3143 = vmatpush1.msra.mxu0 0.0
  %3144 = vmatprep.subr.mxu0 0.0
  %3145 = vmatpush1.msra.mxu0 0.0
  %3146 = vmatprep.subr.mxu0 0.0
  %3147 = vmatpush1.msra.mxu0 0.0
  %3148 = vmatprep.subr.mxu0 0.0
  %3149 = vmatpush1.msra.mxu0 0.0
  %3150 = vmatprep.subr.mxu0 0.0
  %3151 = vmatpush1.msra.mxu0 0.0
  %3152 = vmatprep.subr.mxu0 0.0
  %3153 = vmatpush1.msra.mxu0 0.0
  %3154 = vmatprep.subr.mxu0 0.0
  %3155 = vmatpush1.msra.mxu0 0.0
  %3156 = vmatprep.subr.mxu0 0.0
  %3157 = vmatpush1.msra.mxu0 0.0
  %3158 = vmatprep.subr.mxu0 0.0
  %3159 = vmatpush1.msra.mxu0 0.0
  %3160 = vmatprep.subr.mxu0 0.0
  %3161 = vmatpush1.msra.mxu0 0.0
  %3162 = vmatprep.subr.mxu0 0.0
  %3163 = vmatpush1.msra.mxu0 0.0
  %3164 = vmatprep.subr.mxu0 0.0
  %3165 = vmatpush1.msra.mxu0 0.0
  %3166 = vmatprep.subr.mxu0 0.0
  %3167 = vmatpush1.msra.mxu0 0.0
  %3168 = vmatprep.subr.mxu0 0.0
  %3169 = vmatpush1.msra.mxu0 0.0
  %3170 = vmatprep.mubr.f32.mxu0 0.0
  %v3171 = vand.u32 %v2940, 4294901760
  %v3172 = vsub.f32 %v2940, %v3171
  %3173 = vmatmul.mubr.f32.gmra.mrb[0].mxu0 %v3172
  %v3174 = vpop.f32.mrb[0].mxu0
  %v3175 = vadd.f32 %v3098, %v3174
  %v3176 = vpop.f32.mrb[0].mxu0
  %v3177 = vadd.f32 %v3100, %v3176
  %3178 = vdwg.mxu0
  %v3179 = vand.u32 %v2936, 4294901760
  %3180 = vmatprep.subr.mxu0 %v3179
  %v3181 = vand.u32 %v2935, 4294901760
  %3182 = vmatpush1.msra.mxu0 %v3181
  %3183 = vmatprep.subr.mxu0 0.0
  %3184 = vmatpush1.msra.mxu0 0.0
  %3185 = vmatprep.subr.mxu0 0.0
  %3186 = vmatpush1.msra.mxu0 0.0
  %3187 = vmatprep.subr.mxu0 0.0
  %3188 = vmatpush1.msra.mxu0 0.0
  %3189 = vmatprep.subr.mxu0 0.0
  %3190 = vmatpush1.msra.mxu0 0.0
  %3191 = vmatprep.subr.mxu0 0.0
  %3192 = vmatpush1.msra.mxu0 0.0
  %3193 = vmatprep.subr.mxu0 0.0
  %3194 = vmatpush1.msra.mxu0 0.0
  %3195 = vmatprep.subr.mxu0 0.0
  %3196 = vmatpush1.msra.mxu0 0.0
  %3197 = vmatprep.subr.mxu0 0.0
  %3198 = vmatpush1.msra.mxu0 0.0
  %3199 = vmatprep.subr.mxu0 0.0
  %3200 = vmatpush1.msra.mxu0 0.0
  %3201 = vmatprep.subr.mxu0 0.0
  %3202 = vmatpush1.msra.mxu0 0.0
  %3203 = vmatprep.subr.mxu0 0.0
  %3204 = vmatpush1.msra.mxu0 0.0
  %3205 = vmatprep.subr.mxu0 0.0
  %3206 = vmatpush1.msra.mxu0 0.0
  %3207 = vmatprep.subr.mxu0 0.0
  %3208 = vmatpush1.msra.mxu0 0.0
  %3209 = vmatprep.subr.mxu0 0.0
  %3210 = vmatpush1.msra.mxu0 0.0
  %3211 = vmatprep.subr.mxu0 0.0
  %3212 = vmatpush1.msra.mxu0 0.0
  %3213 = vmatprep.subr.mxu0 0.0
  %3214 = vmatpush1.msra.mxu0 0.0
  %3215 = vmatprep.subr.mxu0 0.0
  %3216 = vmatpush1.msra.mxu0 0.0
  %3217 = vmatprep.subr.mxu0 0.0
  %3218 = vmatpush1.msra.mxu0 0.0
  %3219 = vmatprep.subr.mxu0 0.0
  %3220 = vmatpush1.msra.mxu0 0.0
  %3221 = vmatprep.subr.mxu0 0.0
  %3222 = vmatpush1.msra.mxu0 0.0
  %3223 = vmatprep.subr.mxu0 0.0
  %3224 = vmatpush1.msra.mxu0 0.0
  %3225 = vmatprep.subr.mxu0 0.0
  %3226 = vmatpush1.msra.mxu0 0.0
  %3227 = vmatprep.subr.mxu0 0.0
  %3228 = vmatpush1.msra.mxu0 0.0
  %3229 = vmatprep.subr.mxu0 0.0
  %3230 = vmatpush1.msra.mxu0 0.0
  %3231 = vmatprep.subr.mxu0 0.0
  %3232 = vmatpush1.msra.mxu0 0.0
  %3233 = vmatprep.subr.mxu0 0.0
  %3234 = vmatpush1.msra.mxu0 0.0
  %3235 = vmatprep.subr.mxu0 0.0
  %3236 = vmatpush1.msra.mxu0 0.0
  %3237 = vmatprep.subr.mxu0 0.0
  %3238 = vmatpush1.msra.mxu0 0.0
  %3239 = vmatprep.subr.mxu0 0.0
  %3240 = vmatpush1.msra.mxu0 0.0
  %3241 = vmatprep.subr.mxu0 0.0
  %3242 = vmatpush1.msra.mxu0 0.0
  %3243 = vmatprep.subr.mxu0 0.0
  %3244 = vmatpush1.msra.mxu0 0.0
  %3245 = vmatprep.mubr.f32.mxu0 0.0
  %v3246 = vand.u32 %v2940, 4294901760
  %v3247 = vsub.f32 %v2940, %v3246
  %v3248 = vand.u32 %v3247, 4294901760
  %3249 = vmatmul.mubr.f32.gmra.mrb[0].mxu0 %v3248
  %v3250 = vpop.f32.mrb[0].mxu0
  %v3251 = vadd.f32 %v3175, %v3250
  %v3252 = vpop.f32.mrb[0].mxu0
  %v3253 = vadd.f32 %v3177, %v3252
  %3254 = vdwg.mxu0
  %v3255 = vand.u32 %v2936, 4294901760
  %v3256 = vsub.f32 %v2936, %v3255
  %v3257 = vand.u32 %v3256, 4294901760
  %3258 = vmatprep.subr.mxu0 %v3257
  %v3259 = vand.u32 %v2935, 4294901760
  %v3260 = vsub.f32 %v2935, %v3259
  %v3261 = vand.u32 %v3260, 4294901760
  %3262 = vmatpush1.msra.mxu0 %v3261
  %3263 = vmatprep.subr.mxu0 0.0
  %3264 = vmatpush1.msra.mxu0 0.0
  %3265 = vmatprep.subr.mxu0 0.0
  %3266 = vmatpush1.msra.mxu0 0.0
  %3267 = vmatprep.subr.mxu0 0.0
  %3268 = vmatpush1.msra.mxu0 0.0
  %3269 = vmatprep.subr.mxu0 0.0
  %3270 = vmatpush1.msra.mxu0 0.0
  %3271 = vmatprep.subr.mxu0 0.0
  %3272 = vmatpush1.msra.mxu0 0.0
  %3273 = vmatprep.subr.mxu0 0.0
  %3274 = vmatpush1.msra.mxu0 0.0
  %3275 = vmatprep.subr.mxu0 0.0
  %3276 = vmatpush1.msra.mxu0 0.0
  %3277 = vmatprep.subr.mxu0 0.0
  %3278 = vmatpush1.msra.mxu0 0.0
  %3279 = vmatprep.subr.mxu0 0.0
  %3280 = vmatpush1.msra.mxu0 0.0
  %3281 = vmatprep.subr.mxu0 0.0
  %3282 = vmatpush1.msra.mxu0 0.0
  %3283 = vmatprep.subr.mxu0 0.0
  %3284 = vmatpush1.msra.mxu0 0.0
  %3285 = vmatprep.subr.mxu0 0.0
  %3286 = vmatpush1.msra.mxu0 0.0
  %3287 = vmatprep.subr.mxu0 0.0
  %3288 = vmatpush1.msra.mxu0 0.0
  %3289 = vmatprep.subr.mxu0 0.0
  %3290 = vmatpush1.msra.mxu0 0.0
  %3291 = vmatprep.subr.mxu0 0.0
  %3292 = vmatpush1.msra.mxu0 0.0
  %3293 = vmatprep.subr.mxu0 0.0
  %3294 = vmatpush1.msra.mxu0 0.0
  %3295 = vmatprep.subr.mxu0 0.0
  %3296 = vmatpush1.msra.mxu0 0.0
  %3297 = vmatprep.subr.mxu0 0.0
  %3298 = vmatpush1.msra.mxu0 0.0
  %3299 = vmatprep.subr.mxu0 0.0
  %3300 = vmatpush1.msra.mxu0 0.0
  %3301 = vmatprep.subr.mxu0 0.0
  %3302 = vmatpush1.msra.mxu0 0.0
  %3303 = vmatprep.subr.mxu0 0.0
  %3304 = vmatpush1.msra.mxu0 0.0
  %3305 = vmatprep.subr.mxu0 0.0
  %3306 = vmatpush1.msra.mxu0 0.0
  %3307 = vmatprep.subr.mxu0 0.0
  %3308 = vmatpush1.msra.mxu0 0.0
  %3309 = vmatprep.subr.mxu0 0.0
  %3310 = vmatpush1.msra.mxu0 0.0
  %3311 = vmatprep.subr.mxu0 0.0
  %3312 = vmatpush1.msra.mxu0 0.0
  %3313 = vmatprep.subr.mxu0 0.0
  %3314 = vmatpush1.msra.mxu0 0.0
  %3315 = vmatprep.subr.mxu0 0.0
  %3316 = vmatpush1.msra.mxu0 0.0
  %3317 = vmatprep.subr.mxu0 0.0
  %3318 = vmatpush1.msra.mxu0 0.0
  %3319 = vmatprep.subr.mxu0 0.0
  %3320 = vmatpush1.msra.mxu0 0.0
  %3321 = vmatprep.subr.mxu0 0.0
  %3322 = vmatpush1.msra.mxu0 0.0
  %3323 = vmatprep.subr.mxu0 0.0
  %3324 = vmatpush1.msra.mxu0 0.0
  %3325 = vmatprep.mubr.f32.mxu0 0.0
  %v3326 = vand.u32 %v2940, 4294901760
  %3327 = vmatmul.mubr.f32.gmra.mrb[0].mxu0 %v3326
  %v3328 = vpop.f32.mrb[0].mxu0
  %v3329 = vadd.f32 %v3251, %v3328
  %v3330 = vpop.f32.mrb[0].mxu0
  %v3331 = vadd.f32 %v3253, %v3330
  %3332 = vdwg.mxu0
  %v3333 = vand.u32 %v2936, 4294901760
  %3334 = vmatprep.subr.mxu0 %v3333
  %v3335 = vand.u32 %v2935, 4294901760
  %3336 = vmatpush1.msra.mxu0 %v3335
  %3337 = vmatprep.subr.mxu0 0.0
  %3338 = vmatpush1.msra.mxu0 0.0
  %3339 = vmatprep.subr.mxu0 0.0
  %3340 = vmatpush1.msra.mxu0 0.0
  %3341 = vmatprep.subr.mxu0 0.0
  %3342 = vmatpush1.msra.mxu0 0.0
  %3343 = vmatprep.subr.mxu0 0.0
  %3344 = vmatpush1.msra.mxu0 0.0
  %3345 = vmatprep.subr.mxu0 0.0
  %3346 = vmatpush1.msra.mxu0 0.0
  %3347 = vmatprep.subr.mxu0 0.0
  %3348 = vmatpush1.msra.mxu0 0.0
  %3349 = vmatprep.subr.mxu0 0.0
  %3350 = vmatpush1.msra.mxu0 0.0
  %3351 = vmatprep.subr.mxu0 0.0
  %3352 = vmatpush1.msra.mxu0 0.0
  %3353 = vmatprep.subr.mxu0 0.0
  %3354 = vmatpush1.msra.mxu0 0.0
  %3355 = vmatprep.subr.mxu0 0.0
  %3356 = vmatpush1.msra.mxu0 0.0
  %3357 = vmatprep.subr.mxu0 0.0
  %3358 = vmatpush1.msra.mxu0 0.0
  %3359 = vmatprep.subr.mxu0 0.0
  %3360 = vmatpush1.msra.mxu0 0.0
  %3361 = vmatprep.subr.mxu0 0.0
  %3362 = vmatpush1.msra.mxu0 0.0
  %3363 = vmatprep.subr.mxu0 0.0
  %3364 = vmatpush1.msra.mxu0 0.0
  %3365 = vmatprep.subr.mxu0 0.0
  %3366 = vmatpush1.msra.mxu0 0.0
  %3367 = vmatprep.subr.mxu0 0.0
  %3368 = vmatpush1.msra.mxu0 0.0
  %3369 = vmatprep.subr.mxu0 0.0
  %3370 = vmatpush1.msra.mxu0 0.0
  %3371 = vmatprep.subr.mxu0 0.0
  %3372 = vmatpush1.msra.mxu0 0.0
  %3373 = vmatprep.subr.mxu0 0.0
  %3374 = vmatpush1.msra.mxu0 0.0
  %3375 = vmatprep.subr.mxu0 0.0
  %3376 = vmatpush1.msra.mxu0 0.0
  %3377 = vmatprep.subr.mxu0 0.0
  %3378 = vmatpush1.msra.mxu0 0.0
  %3379 = vmatprep.subr.mxu0 0.0
  %3380 = vmatpush1.msra.mxu0 0.0
  %3381 = vmatprep.subr.mxu0 0.0
  %3382 = vmatpush1.msra.mxu0 0.0
  %3383 = vmatprep.subr.mxu0 0.0
  %3384 = vmatpush1.msra.mxu0 0.0
  %3385 = vmatprep.subr.mxu0 0.0
  %3386 = vmatpush1.msra.mxu0 0.0
  %3387 = vmatprep.subr.mxu0 0.0
  %3388 = vmatpush1.msra.mxu0 0.0
  %3389 = vmatprep.subr.mxu0 0.0
  %3390 = vmatpush1.msra.mxu0 0.0
  %3391 = vmatprep.subr.mxu0 0.0
  %3392 = vmatpush1.msra.mxu0 0.0
  %3393 = vmatprep.subr.mxu0 0.0
  %3394 = vmatpush1.msra.mxu0 0.0
  %3395 = vmatprep.subr.mxu0 0.0
  %3396 = vmatpush1.msra.mxu0 0.0
  %3397 = vmatprep.subr.mxu0 0.0
  %3398 = vmatpush1.msra.mxu0 0.0
  %3399 = vmatprep.mubr.f32.mxu0 0.0
  %v3400 = vand.u32 %v2940, 4294901760
  %3401 = vmatmul.mubr.f32.gmra.mrb[0].mxu0 %v3400
  %v3402 = vpop.f32.mrb[0].mxu0
  %v3403 = vadd.f32 %v3329, %v3402
  %v3404 = vpop.f32.mrb[0].mxu0
  %v3405 = vadd.f32 %v3331, %v3404
  %3406 = vdwg.mxu0
  %v3407 = vadd.f32 %v2926, %v3403
  %v3408 = vadd.f32 %v2927, %v3405
  %3409 = vrot.lane.b32.xlu0 %v43, 112
  %v3410 = vpop.permute.xlu0 %3409
  %3411 = vrot.lane.b32.xlu0 %v44, 112
  %v3412 = vpop.permute.xlu0 %3411
  %vm3413 = vcmp.lt.s32.totalorder %v21, 112
  %v3414 = vsel %vm3413, %v3410, %v3412
  %v3415 = vsel %vm3413, %v3412, %v3410
  %v3416 = vsel %vm37, %v3414, 0.0
  %v3417 = vsel %vm38, %v3415, 0.0
  %s3418 = scalar_lea.vmem %s1, 56
  %v3419 = vld [vmem:[%s3418] sm:$0xff]
  %v3421 = vsel %vm61, %v3419, 0
  %v3423 = vand.u32 %v3417, 4294901760
  %3424 = vmatprep.subr.mxu0 %v3423
  %v3425 = vand.u32 %v3416, 4294901760
  %3426 = vmatpush1.msra.mxu0 %v3425
  %3427 = vmatprep.subr.mxu0 0.0
  %3428 = vmatpush1.msra.mxu0 0.0
  %3429 = vmatprep.subr.mxu0 0.0
  %3430 = vmatpush1.msra.mxu0 0.0
  %3431 = vmatprep.subr.mxu0 0.0
  %3432 = vmatpush1.msra.mxu0 0.0
  %3433 = vmatprep.subr.mxu0 0.0
  %3434 = vmatpush1.msra.mxu0 0.0
  %3435 = vmatprep.subr.mxu0 0.0
  %3436 = vmatpush1.msra.mxu0 0.0
  %3437 = vmatprep.subr.mxu0 0.0
  %3438 = vmatpush1.msra.mxu0 0.0
  %3439 = vmatprep.subr.mxu0 0.0
  %3440 = vmatpush1.msra.mxu0 0.0
  %3441 = vmatprep.subr.mxu0 0.0
  %3442 = vmatpush1.msra.mxu0 0.0
  %3443 = vmatprep.subr.mxu0 0.0
  %3444 = vmatpush1.msra.mxu0 0.0
  %3445 = vmatprep.subr.mxu0 0.0
  %3446 = vmatpush1.msra.mxu0 0.0
  %3447 = vmatprep.subr.mxu0 0.0
  %3448 = vmatpush1.msra.mxu0 0.0
  %3449 = vmatprep.subr.mxu0 0.0
  %3450 = vmatpush1.msra.mxu0 0.0
  %3451 = vmatprep.subr.mxu0 0.0
  %3452 = vmatpush1.msra.mxu0 0.0
  %3453 = vmatprep.subr.mxu0 0.0
  %3454 = vmatpush1.msra.mxu0 0.0
  %3455 = vmatprep.subr.mxu0 0.0
  %3456 = vmatpush1.msra.mxu0 0.0
  %3457 = vmatprep.subr.mxu0 0.0
  %3458 = vmatpush1.msra.mxu0 0.0
  %3459 = vmatprep.subr.mxu0 0.0
  %3460 = vmatpush1.msra.mxu0 0.0
  %3461 = vmatprep.subr.mxu0 0.0
  %3462 = vmatpush1.msra.mxu0 0.0
  %3463 = vmatprep.subr.mxu0 0.0
  %3464 = vmatpush1.msra.mxu0 0.0
  %3465 = vmatprep.subr.mxu0 0.0
  %3466 = vmatpush1.msra.mxu0 0.0
  %3467 = vmatprep.subr.mxu0 0.0
  %3468 = vmatpush1.msra.mxu0 0.0
  %3469 = vmatprep.subr.mxu0 0.0
  %3470 = vmatpush1.msra.mxu0 0.0
  %3471 = vmatprep.subr.mxu0 0.0
  %3472 = vmatpush1.msra.mxu0 0.0
  %3473 = vmatprep.subr.mxu0 0.0
  %3474 = vmatpush1.msra.mxu0 0.0
  %3475 = vmatprep.subr.mxu0 0.0
  %3476 = vmatpush1.msra.mxu0 0.0
  %3477 = vmatprep.subr.mxu0 0.0
  %3478 = vmatpush1.msra.mxu0 0.0
  %3479 = vmatprep.subr.mxu0 0.0
  %3480 = vmatpush1.msra.mxu0 0.0
  %3481 = vmatprep.subr.mxu0 0.0
  %3482 = vmatpush1.msra.mxu0 0.0
  %3483 = vmatprep.subr.mxu0 0.0
  %3484 = vmatpush1.msra.mxu0 0.0
  %3485 = vmatprep.subr.mxu0 0.0
  %3486 = vmatpush1.msra.mxu0 0.0
  %3487 = vmatprep.subr.mxu0 0.0
  %3488 = vmatpush1.msra.mxu0 0.0
  %3489 = vmatprep.mubr.f32.mxu0 0.0
  %v3490 = vand.u32 %v3421, 4294901760
  %v3491 = vsub.f32 %v3421, %v3490
  %v3492 = vand.u32 %v3491, 4294901760
  %v3493 = vsub.f32 %v3491, %v3492
  %v3494 = vand.u32 %v3493, 4294901760
  %3495 = vmatmul.mubr.f32.gmra.mrb[0].mxu0 %v3494
  %v3496 = vpop.f32.mrb[0].mxu0
  %v3497 = vadd.f32 0.0, %v3496
  %v3498 = vpop.f32.mrb[0].mxu0
  %v3499 = vadd.f32 0.0, %v3498
  %3500 = vdwg.mxu0
  %v3501 = vand.u32 %v3417, 4294901760
  %v3502 = vsub.f32 %v3417, %v3501
  %v3503 = vand.u32 %v3502, 4294901760
  %v3504 = vsub.f32 %v3502, %v3503
  %v3505 = vand.u32 %v3504, 4294901760
  %3506 = vmatprep.subr.mxu0 %v3505
  %v3507 = vand.u32 %v3416, 4294901760
  %v3508 = vsub.f32 %v3416, %v3507
  %v3509 = vand.u32 %v3508, 4294901760
  %v3510 = vsub.f32 %v3508, %v3509
  %v3511 = vand.u32 %v3510, 4294901760
  %3512 = vmatpush1.msra.mxu0 %v3511
  %3513 = vmatprep.subr.mxu0 0.0
  %3514 = vmatpush1.msra.mxu0 0.0
  %3515 = vmatprep.subr.mxu0 0.0
  %3516 = vmatpush1.msra.mxu0 0.0
  %3517 = vmatprep.subr.mxu0 0.0
  %3518 = vmatpush1.msra.mxu0 0.0
  %3519 = vmatprep.subr.mxu0 0.0
  %3520 = vmatpush1.msra.mxu0 0.0
  %3521 = vmatprep.subr.mxu0 0.0
  %3522 = vmatpush1.msra.mxu0 0.0
  %3523 = vmatprep.subr.mxu0 0.0
  %3524 = vmatpush1.msra.mxu0 0.0
  %3525 = vmatprep.subr.mxu0 0.0
  %3526 = vmatpush1.msra.mxu0 0.0
  %3527 = vmatprep.subr.mxu0 0.0
  %3528 = vmatpush1.msra.mxu0 0.0
  %3529 = vmatprep.subr.mxu0 0.0
  %3530 = vmatpush1.msra.mxu0 0.0
  %3531 = vmatprep.subr.mxu0 0.0
  %3532 = vmatpush1.msra.mxu0 0.0
  %3533 = vmatprep.subr.mxu0 0.0
  %3534 = vmatpush1.msra.mxu0 0.0
  %3535 = vmatprep.subr.mxu0 0.0
  %3536 = vmatpush1.msra.mxu0 0.0
  %3537 = vmatprep.subr.mxu0 0.0
  %3538 = vmatpush1.msra.mxu0 0.0
  %3539 = vmatprep.subr.mxu0 0.0
  %3540 = vmatpush1.msra.mxu0 0.0
  %3541 = vmatprep.subr.mxu0 0.0
  %3542 = vmatpush1.msra.mxu0 0.0
  %3543 = vmatprep.subr.mxu0 0.0
  %3544 = vmatpush1.msra.mxu0 0.0
  %3545 = vmatprep.subr.mxu0 0.0
  %3546 = vmatpush1.msra.mxu0 0.0
  %3547 = vmatprep.subr.mxu0 0.0
  %3548 = vmatpush1.msra.mxu0 0.0
  %3549 = vmatprep.subr.mxu0 0.0
  %3550 = vmatpush1.msra.mxu0 0.0
  %3551 = vmatprep.subr.mxu0 0.0
  %3552 = vmatpush1.msra.mxu0 0.0
  %3553 = vmatprep.subr.mxu0 0.0
  %3554 = vmatpush1.msra.mxu0 0.0
  %3555 = vmatprep.subr.mxu0 0.0
  %3556 = vmatpush1.msra.mxu0 0.0
  %3557 = vmatprep.subr.mxu0 0.0
  %3558 = vmatpush1.msra.mxu0 0.0
  %3559 = vmatprep.subr.mxu0 0.0
  %3560 = vmatpush1.msra.mxu0 0.0
  %3561 = vmatprep.subr.mxu0 0.0
  %3562 = vmatpush1.msra.mxu0 0.0
  %3563 = vmatprep.subr.mxu0 0.0
  %3564 = vmatpush1.msra.mxu0 0.0
  %3565 = vmatprep.subr.mxu0 0.0
  %3566 = vmatpush1.msra.mxu0 0.0
  %3567 = vmatprep.subr.mxu0 0.0
  %3568 = vmatpush1.msra.mxu0 0.0
  %3569 = vmatprep.subr.mxu0 0.0
  %3570 = vmatpush1.msra.mxu0 0.0
  %3571 = vmatprep.subr.mxu0 0.0
  %3572 = vmatpush1.msra.mxu0 0.0
  %3573 = vmatprep.subr.mxu0 0.0
  %3574 = vmatpush1.msra.mxu0 0.0
  %3575 = vmatprep.mubr.f32.mxu0 0.0
  %v3576 = vand.u32 %v3421, 4294901760
  %3577 = vmatmul.mubr.f32.gmra.mrb[0].mxu0 %v3576
  %v3578 = vpop.f32.mrb[0].mxu0
  %v3579 = vadd.f32 %v3497, %v3578
  %v3580 = vpop.f32.mrb[0].mxu0
  %v3581 = vadd.f32 %v3499, %v3580
  %3582 = vdwg.mxu0
  %v3583 = vand.u32 %v3417, 4294901760
  %v3584 = vsub.f32 %v3417, %v3583
  %3585 = vmatprep.subr.mxu0 %v3584
  %v3586 = vand.u32 %v3416, 4294901760
  %v3587 = vsub.f32 %v3416, %v3586
  %3588 = vmatpush1.msra.mxu0 %v3587
  %3589 = vmatprep.subr.mxu0 0.0
  %3590 = vmatpush1.msra.mxu0 0.0
  %3591 = vmatprep.subr.mxu0 0.0
  %3592 = vmatpush1.msra.mxu0 0.0
  %3593 = vmatprep.subr.mxu0 0.0
  %3594 = vmatpush1.msra.mxu0 0.0
  %3595 = vmatprep.subr.mxu0 0.0
  %3596 = vmatpush1.msra.mxu0 0.0
  %3597 = vmatprep.subr.mxu0 0.0
  %3598 = vmatpush1.msra.mxu0 0.0
  %3599 = vmatprep.subr.mxu0 0.0
  %3600 = vmatpush1.msra.mxu0 0.0
  %3601 = vmatprep.subr.mxu0 0.0
  %3602 = vmatpush1.msra.mxu0 0.0
  %3603 = vmatprep.subr.mxu0 0.0
  %3604 = vmatpush1.msra.mxu0 0.0
  %3605 = vmatprep.subr.mxu0 0.0
  %3606 = vmatpush1.msra.mxu0 0.0
  %3607 = vmatprep.subr.mxu0 0.0
  %3608 = vmatpush1.msra.mxu0 0.0
  %3609 = vmatprep.subr.mxu0 0.0
  %3610 = vmatpush1.msra.mxu0 0.0
  %3611 = vmatprep.subr.mxu0 0.0
  %3612 = vmatpush1.msra.mxu0 0.0
  %3613 = vmatprep.subr.mxu0 0.0
  %3614 = vmatpush1.msra.mxu0 0.0
  %3615 = vmatprep.subr.mxu0 0.0
  %3616 = vmatpush1.msra.mxu0 0.0
  %3617 = vmatprep.subr.mxu0 0.0
  %3618 = vmatpush1.msra.mxu0 0.0
  %3619 = vmatprep.subr.mxu0 0.0
  %3620 = vmatpush1.msra.mxu0 0.0
  %3621 = vmatprep.subr.mxu0 0.0
  %3622 = vmatpush1.msra.mxu0 0.0
  %3623 = vmatprep.subr.mxu0 0.0
  %3624 = vmatpush1.msra.mxu0 0.0
  %3625 = vmatprep.subr.mxu0 0.0
  %3626 = vmatpush1.msra.mxu0 0.0
  %3627 = vmatprep.subr.mxu0 0.0
  %3628 = vmatpush1.msra.mxu0 0.0
  %3629 = vmatprep.subr.mxu0 0.0
  %3630 = vmatpush1.msra.mxu0 0.0
  %3631 = vmatprep.subr.mxu0 0.0
  %3632 = vmatpush1.msra.mxu0 0.0
  %3633 = vmatprep.subr.mxu0 0.0
  %3634 = vmatpush1.msra.mxu0 0.0
  %3635 = vmatprep.subr.mxu0 0.0
  %3636 = vmatpush1.msra.mxu0 0.0
  %3637 = vmatprep.subr.mxu0 0.0
  %3638 = vmatpush1.msra.mxu0 0.0
  %3639 = vmatprep.subr.mxu0 0.0
  %3640 = vmatpush1.msra.mxu0 0.0
  %3641 = vmatprep.subr.mxu0 0.0
  %3642 = vmatpush1.msra.mxu0 0.0
  %3643 = vmatprep.subr.mxu0 0.0
  %3644 = vmatpush1.msra.mxu0 0.0
  %3645 = vmatprep.subr.mxu0 0.0
  %3646 = vmatpush1.msra.mxu0 0.0
  %3647 = vmatprep.subr.mxu0 0.0
  %3648 = vmatpush1.msra.mxu0 0.0
  %3649 = vmatprep.subr.mxu0 0.0
  %3650 = vmatpush1.msra.mxu0 0.0
  %3651 = vmatprep.mubr.f32.mxu0 0.0
  %v3652 = vand.u32 %v3421, 4294901760
  %v3653 = vsub.f32 %v3421, %v3652
  %3654 = vmatmul.mubr.f32.gmra.mrb[0].mxu0 %v3653
  %v3655 = vpop.f32.mrb[0].mxu0
  %v3656 = vadd.f32 %v3579, %v3655
  %v3657 = vpop.f32.mrb[0].mxu0
  %v3658 = vadd.f32 %v3581, %v3657
  %3659 = vdwg.mxu0
  %v3660 = vand.u32 %v3417, 4294901760
  %3661 = vmatprep.subr.mxu0 %v3660
  %v3662 = vand.u32 %v3416, 4294901760
  %3663 = vmatpush1.msra.mxu0 %v3662
  %3664 = vmatprep.subr.mxu0 0.0
  %3665 = vmatpush1.msra.mxu0 0.0
  %3666 = vmatprep.subr.mxu0 0.0
  %3667 = vmatpush1.msra.mxu0 0.0
  %3668 = vmatprep.subr.mxu0 0.0
  %3669 = vmatpush1.msra.mxu0 0.0
  %3670 = vmatprep.subr.mxu0 0.0
  %3671 = vmatpush1.msra.mxu0 0.0
  %3672 = vmatprep.subr.mxu0 0.0
  %3673 = vmatpush1.msra.mxu0 0.0
  %3674 = vmatprep.subr.mxu0 0.0
  %3675 = vmatpush1.msra.mxu0 0.0
  %3676 = vmatprep.subr.mxu0 0.0
  %3677 = vmatpush1.msra.mxu0 0.0
  %3678 = vmatprep.subr.mxu0 0.0
  %3679 = vmatpush1.msra.mxu0 0.0
  %3680 = vmatprep.subr.mxu0 0.0
  %3681 = vmatpush1.msra.mxu0 0.0
  %3682 = vmatprep.subr.mxu0 0.0
  %3683 = vmatpush1.msra.mxu0 0.0
  %3684 = vmatprep.subr.mxu0 0.0
  %3685 = vmatpush1.msra.mxu0 0.0
  %3686 = vmatprep.subr.mxu0 0.0
  %3687 = vmatpush1.msra.mxu0 0.0
  %3688 = vmatprep.subr.mxu0 0.0
  %3689 = vmatpush1.msra.mxu0 0.0
  %3690 = vmatprep.subr.mxu0 0.0
  %3691 = vmatpush1.msra.mxu0 0.0
  %3692 = vmatprep.subr.mxu0 0.0
  %3693 = vmatpush1.msra.mxu0 0.0
  %3694 = vmatprep.subr.mxu0 0.0
  %3695 = vmatpush1.msra.mxu0 0.0
  %3696 = vmatprep.subr.mxu0 0.0
  %3697 = vmatpush1.msra.mxu0 0.0
  %3698 = vmatprep.subr.mxu0 0.0
  %3699 = vmatpush1.msra.mxu0 0.0
  %3700 = vmatprep.subr.mxu0 0.0
  %3701 = vmatpush1.msra.mxu0 0.0
  %3702 = vmatprep.subr.mxu0 0.0
  %3703 = vmatpush1.msra.mxu0 0.0
  %3704 = vmatprep.subr.mxu0 0.0
  %3705 = vmatpush1.msra.mxu0 0.0
  %3706 = vmatprep.subr.mxu0 0.0
  %3707 = vmatpush1.msra.mxu0 0.0
  %3708 = vmatprep.subr.mxu0 0.0
  %3709 = vmatpush1.msra.mxu0 0.0
  %3710 = vmatprep.subr.mxu0 0.0
  %3711 = vmatpush1.msra.mxu0 0.0
  %3712 = vmatprep.subr.mxu0 0.0
  %3713 = vmatpush1.msra.mxu0 0.0
  %3714 = vmatprep.subr.mxu0 0.0
  %3715 = vmatpush1.msra.mxu0 0.0
  %3716 = vmatprep.subr.mxu0 0.0
  %3717 = vmatpush1.msra.mxu0 0.0
  %3718 = vmatprep.subr.mxu0 0.0
  %3719 = vmatpush1.msra.mxu0 0.0
  %3720 = vmatprep.subr.mxu0 0.0
  %3721 = vmatpush1.msra.mxu0 0.0
  %3722 = vmatprep.subr.mxu0 0.0
  %3723 = vmatpush1.msra.mxu0 0.0
  %3724 = vmatprep.subr.mxu0 0.0
  %3725 = vmatpush1.msra.mxu0 0.0
  %3726 = vmatprep.mubr.f32.mxu0 0.0
  %v3727 = vand.u32 %v3421, 4294901760
  %v3728 = vsub.f32 %v3421, %v3727
  %v3729 = vand.u32 %v3728, 4294901760
  %3730 = vmatmul.mubr.f32.gmra.mrb[0].mxu0 %v3729
  %v3731 = vpop.f32.mrb[0].mxu0
  %v3732 = vadd.f32 %v3656, %v3731
  %v3733 = vpop.f32.mrb[0].mxu0
  %v3734 = vadd.f32 %v3658, %v3733
  %3735 = vdwg.mxu0
  %v3736 = vand.u32 %v3417, 4294901760
  %v3737 = vsub.f32 %v3417, %v3736
  %v3738 = vand.u32 %v3737, 4294901760
  %3739 = vmatprep.subr.mxu0 %v3738
  %v3740 = vand.u32 %v3416, 4294901760
  %v3741 = vsub.f32 %v3416, %v3740
  %v3742 = vand.u32 %v3741, 4294901760
  %3743 = vmatpush1.msra.mxu0 %v3742
  %3744 = vmatprep.subr.mxu0 0.0
  %3745 = vmatpush1.msra.mxu0 0.0
  %3746 = vmatprep.subr.mxu0 0.0
  %3747 = vmatpush1.msra.mxu0 0.0
  %3748 = vmatprep.subr.mxu0 0.0
  %3749 = vmatpush1.msra.mxu0 0.0
  %3750 = vmatprep.subr.mxu0 0.0
  %3751 = vmatpush1.msra.mxu0 0.0
  %3752 = vmatprep.subr.mxu0 0.0
  %3753 = vmatpush1.msra.mxu0 0.0
  %3754 = vmatprep.subr.mxu0 0.0
  %3755 = vmatpush1.msra.mxu0 0.0
  %3756 = vmatprep.subr.mxu0 0.0
  %3757 = vmatpush1.msra.mxu0 0.0
  %3758 = vmatprep.subr.mxu0 0.0
  %3759 = vmatpush1.msra.mxu0 0.0
  %3760 = vmatprep.subr.mxu0 0.0
  %3761 = vmatpush1.msra.mxu0 0.0
  %3762 = vmatprep.subr.mxu0 0.0
  %3763 = vmatpush1.msra.mxu0 0.0
  %3764 = vmatprep.subr.mxu0 0.0
  %3765 = vmatpush1.msra.mxu0 0.0
  %3766 = vmatprep.subr.mxu0 0.0
  %3767 = vmatpush1.msra.mxu0 0.0
  %3768 = vmatprep.subr.mxu0 0.0
  %3769 = vmatpush1.msra.mxu0 0.0
  %3770 = vmatprep.subr.mxu0 0.0
  %3771 = vmatpush1.msra.mxu0 0.0
  %3772 = vmatprep.subr.mxu0 0.0
  %3773 = vmatpush1.msra.mxu0 0.0
  %3774 = vmatprep.subr.mxu0 0.0
  %3775 = vmatpush1.msra.mxu0 0.0
  %3776 = vmatprep.subr.mxu0 0.0
  %3777 = vmatpush1.msra.mxu0 0.0
  %3778 = vmatprep.subr.mxu0 0.0
  %3779 = vmatpush1.msra.mxu0 0.0
  %3780 = vmatprep.subr.mxu0 0.0
  %3781 = vmatpush1.msra.mxu0 0.0
  %3782 = vmatprep.subr.mxu0 0.0
  %3783 = vmatpush1.msra.mxu0 0.0
  %3784 = vmatprep.subr.mxu0 0.0
  %3785 = vmatpush1.msra.mxu0 0.0
  %3786 = vmatprep.subr.mxu0 0.0
  %3787 = vmatpush1.msra.mxu0 0.0
  %3788 = vmatprep.subr.mxu0 0.0
  %3789 = vmatpush1.msra.mxu0 0.0
  %3790 = vmatprep.subr.mxu0 0.0
  %3791 = vmatpush1.msra.mxu0 0.0
  %3792 = vmatprep.subr.mxu0 0.0
  %3793 = vmatpush1.msra.mxu0 0.0
  %3794 = vmatprep.subr.mxu0 0.0
  %3795 = vmatpush1.msra.mxu0 0.0
  %3796 = vmatprep.subr.mxu0 0.0
  %3797 = vmatpush1.msra.mxu0 0.0
  %3798 = vmatprep.subr.mxu0 0.0
  %3799 = vmatpush1.msra.mxu0 0.0
  %3800 = vmatprep.subr.mxu0 0.0
  %3801 = vmatpush1.msra.mxu0 0.0
  %3802 = vmatprep.subr.mxu0 0.0
  %3803 = vmatpush1.msra.mxu0 0.0
  %3804 = vmatprep.subr.mxu0 0.0
  %3805 = vmatpush1.msra.mxu0 0.0
  %3806 = vmatprep.mubr.f32.mxu0 0.0
  %v3807 = vand.u32 %v3421, 4294901760
  %3808 = vmatmul.mubr.f32.gmra.mrb[0].mxu0 %v3807
  %v3809 = vpop.f32.mrb[0].mxu0
  %v3810 = vadd.f32 %v3732, %v3809
  %v3811 = vpop.f32.mrb[0].mxu0
  %v3812 = vadd.f32 %v3734, %v3811
  %3813 = vdwg.mxu0
  %v3814 = vand.u32 %v3417, 4294901760
  %3815 = vmatprep.subr.mxu0 %v3814
  %v3816 = vand.u32 %v3416, 4294901760
  %3817 = vmatpush1.msra.mxu0 %v3816
  %3818 = vmatprep.subr.mxu0 0.0
  %3819 = vmatpush1.msra.mxu0 0.0
  %3820 = vmatprep.subr.mxu0 0.0
  %3821 = vmatpush1.msra.mxu0 0.0
  %3822 = vmatprep.subr.mxu0 0.0
  %3823 = vmatpush1.msra.mxu0 0.0
  %3824 = vmatprep.subr.mxu0 0.0
  %3825 = vmatpush1.msra.mxu0 0.0
  %3826 = vmatprep.subr.mxu0 0.0
  %3827 = vmatpush1.msra.mxu0 0.0
  %3828 = vmatprep.subr.mxu0 0.0
  %3829 = vmatpush1.msra.mxu0 0.0
  %3830 = vmatprep.subr.mxu0 0.0
  %3831 = vmatpush1.msra.mxu0 0.0
  %3832 = vmatprep.subr.mxu0 0.0
  %3833 = vmatpush1.msra.mxu0 0.0
  %3834 = vmatprep.subr.mxu0 0.0
  %3835 = vmatpush1.msra.mxu0 0.0
  %3836 = vmatprep.subr.mxu0 0.0
  %3837 = vmatpush1.msra.mxu0 0.0
  %3838 = vmatprep.subr.mxu0 0.0
  %3839 = vmatpush1.msra.mxu0 0.0
  %3840 = vmatprep.subr.mxu0 0.0
  %3841 = vmatpush1.msra.mxu0 0.0
  %3842 = vmatprep.subr.mxu0 0.0
  %3843 = vmatpush1.msra.mxu0 0.0
  %3844 = vmatprep.subr.mxu0 0.0
  %3845 = vmatpush1.msra.mxu0 0.0
  %3846 = vmatprep.subr.mxu0 0.0
  %3847 = vmatpush1.msra.mxu0 0.0
  %3848 = vmatprep.subr.mxu0 0.0
  %3849 = vmatpush1.msra.mxu0 0.0
  %3850 = vmatprep.subr.mxu0 0.0
  %3851 = vmatpush1.msra.mxu0 0.0
  %3852 = vmatprep.subr.mxu0 0.0
  %3853 = vmatpush1.msra.mxu0 0.0
  %3854 = vmatprep.subr.mxu0 0.0
  %3855 = vmatpush1.msra.mxu0 0.0
  %3856 = vmatprep.subr.mxu0 0.0
  %3857 = vmatpush1.msra.mxu0 0.0
  %3858 = vmatprep.subr.mxu0 0.0
  %3859 = vmatpush1.msra.mxu0 0.0
  %3860 = vmatprep.subr.mxu0 0.0
  %3861 = vmatpush1.msra.mxu0 0.0
  %3862 = vmatprep.subr.mxu0 0.0
  %3863 = vmatpush1.msra.mxu0 0.0
  %3864 = vmatprep.subr.mxu0 0.0
  %3865 = vmatpush1.msra.mxu0 0.0
  %3866 = vmatprep.subr.mxu0 0.0
  %3867 = vmatpush1.msra.mxu0 0.0
  %3868 = vmatprep.subr.mxu0 0.0
  %3869 = vmatpush1.msra.mxu0 0.0
  %3870 = vmatprep.subr.mxu0 0.0
  %3871 = vmatpush1.msra.mxu0 0.0
  %3872 = vmatprep.subr.mxu0 0.0
  %3873 = vmatpush1.msra.mxu0 0.0
  %3874 = vmatprep.subr.mxu0 0.0
  %3875 = vmatpush1.msra.mxu0 0.0
  %3876 = vmatprep.subr.mxu0 0.0
  %3877 = vmatpush1.msra.mxu0 0.0
  %3878 = vmatprep.subr.mxu0 0.0
  %3879 = vmatpush1.msra.mxu0 0.0
  %3880 = vmatprep.mubr.f32.mxu0 0.0
  %v3881 = vand.u32 %v3421, 4294901760
  %3882 = vmatmul.mubr.f32.gmra.mrb[0].mxu0 %v3881
  %v3883 = vpop.f32.mrb[0].mxu0
  %v3884 = vadd.f32 %v3810, %v3883
  %v3885 = vpop.f32.mrb[0].mxu0
  %v3886 = vadd.f32 %v3812, %v3885
  %3887 = vdwg.mxu0
  %v3888 = vadd.f32 %v3407, %v3884
  %v3889 = vadd.f32 %v3408, %v3886
  %3890 = vrot.lane.b32.xlu0 %v43, 111
  %v3891 = vpop.permute.xlu0 %3890
  %3892 = vrot.lane.b32.xlu0 %v44, 111
  %v3893 = vpop.permute.xlu0 %3892
  %vm3894 = vcmp.lt.s32.totalorder %v21, 111
  %v3895 = vsel %vm3894, %v3891, %v3893
  %v3896 = vsel %vm3894, %v3893, %v3891
  %v3897 = vsel %vm41, %v3895, 0.0
  %v3898 = vsel %vm42, %v3896, 0.0
  %s3899 = scalar_lea.vmem %s1, 64
  %v3900 = vld [vmem:[%s3899] sm:$0xff]
  %v3902 = vsel %vm61, %v3900, 0
  %v3904 = vand.u32 %v3898, 4294901760
  %3905 = vmatprep.subr.mxu0 %v3904
  %v3906 = vand.u32 %v3897, 4294901760
  %3907 = vmatpush1.msra.mxu0 %v3906
  %3908 = vmatprep.subr.mxu0 0.0
  %3909 = vmatpush1.msra.mxu0 0.0
  %3910 = vmatprep.subr.mxu0 0.0
  %3911 = vmatpush1.msra.mxu0 0.0
  %3912 = vmatprep.subr.mxu0 0.0
  %3913 = vmatpush1.msra.mxu0 0.0
  %3914 = vmatprep.subr.mxu0 0.0
  %3915 = vmatpush1.msra.mxu0 0.0
  %3916 = vmatprep.subr.mxu0 0.0
  %3917 = vmatpush1.msra.mxu0 0.0
  %3918 = vmatprep.subr.mxu0 0.0
  %3919 = vmatpush1.msra.mxu0 0.0
  %3920 = vmatprep.subr.mxu0 0.0
  %3921 = vmatpush1.msra.mxu0 0.0
  %3922 = vmatprep.subr.mxu0 0.0
  %3923 = vmatpush1.msra.mxu0 0.0
  %3924 = vmatprep.subr.mxu0 0.0
  %3925 = vmatpush1.msra.mxu0 0.0
  %3926 = vmatprep.subr.mxu0 0.0
  %3927 = vmatpush1.msra.mxu0 0.0
  %3928 = vmatprep.subr.mxu0 0.0
  %3929 = vmatpush1.msra.mxu0 0.0
  %3930 = vmatprep.subr.mxu0 0.0
  %3931 = vmatpush1.msra.mxu0 0.0
  %3932 = vmatprep.subr.mxu0 0.0
  %3933 = vmatpush1.msra.mxu0 0.0
  %3934 = vmatprep.subr.mxu0 0.0
  %3935 = vmatpush1.msra.mxu0 0.0
  %3936 = vmatprep.subr.mxu0 0.0
  %3937 = vmatpush1.msra.mxu0 0.0
  %3938 = vmatprep.subr.mxu0 0.0
  %3939 = vmatpush1.msra.mxu0 0.0
  %3940 = vmatprep.subr.mxu0 0.0
  %3941 = vmatpush1.msra.mxu0 0.0
  %3942 = vmatprep.subr.mxu0 0.0
  %3943 = vmatpush1.msra.mxu0 0.0
  %3944 = vmatprep.subr.mxu0 0.0
  %3945 = vmatpush1.msra.mxu0 0.0
  %3946 = vmatprep.subr.mxu0 0.0
  %3947 = vmatpush1.msra.mxu0 0.0
  %3948 = vmatprep.subr.mxu0 0.0
  %3949 = vmatpush1.msra.mxu0 0.0
  %3950 = vmatprep.subr.mxu0 0.0
  %3951 = vmatpush1.msra.mxu0 0.0
  %3952 = vmatprep.subr.mxu0 0.0
  %3953 = vmatpush1.msra.mxu0 0.0
  %3954 = vmatprep.subr.mxu0 0.0
  %3955 = vmatpush1.msra.mxu0 0.0
  %3956 = vmatprep.subr.mxu0 0.0
  %3957 = vmatpush1.msra.mxu0 0.0
  %3958 = vmatprep.subr.mxu0 0.0
  %3959 = vmatpush1.msra.mxu0 0.0
  %3960 = vmatprep.subr.mxu0 0.0
  %3961 = vmatpush1.msra.mxu0 0.0
  %3962 = vmatprep.subr.mxu0 0.0
  %3963 = vmatpush1.msra.mxu0 0.0
  %3964 = vmatprep.subr.mxu0 0.0
  %3965 = vmatpush1.msra.mxu0 0.0
  %3966 = vmatprep.subr.mxu0 0.0
  %3967 = vmatpush1.msra.mxu0 0.0
  %3968 = vmatprep.subr.mxu0 0.0
  %3969 = vmatpush1.msra.mxu0 0.0
  %3970 = vmatprep.mubr.f32.mxu0 0.0
  %v3971 = vand.u32 %v3902, 4294901760
  %v3972 = vsub.f32 %v3902, %v3971
  %v3973 = vand.u32 %v3972, 4294901760
  %v3974 = vsub.f32 %v3972, %v3973
  %v3975 = vand.u32 %v3974, 4294901760
  %3976 = vmatmul.mubr.f32.gmra.mrb[0].mxu0 %v3975
  %v3977 = vpop.f32.mrb[0].mxu0
  %v3978 = vadd.f32 0.0, %v3977
  %v3979 = vpop.f32.mrb[0].mxu0
  %v3980 = vadd.f32 0.0, %v3979
  %3981 = vdwg.mxu0
  %v3982 = vand.u32 %v3898, 4294901760
  %v3983 = vsub.f32 %v3898, %v3982
  %v3984 = vand.u32 %v3983, 4294901760
  %v3985 = vsub.f32 %v3983, %v3984
  %v3986 = vand.u32 %v3985, 4294901760
  %3987 = vmatprep.subr.mxu0 %v3986
  %v3988 = vand.u32 %v3897, 4294901760
  %v3989 = vsub.f32 %v3897, %v3988
  %v3990 = vand.u32 %v3989, 4294901760
  %v3991 = vsub.f32 %v3989, %v3990
  %v3992 = vand.u32 %v3991, 4294901760
  %3993 = vmatpush1.msra.mxu0 %v3992
  %3994 = vmatprep.subr.mxu0 0.0
  %3995 = vmatpush1.msra.mxu0 0.0
  %3996 = vmatprep.subr.mxu0 0.0
  %3997 = vmatpush1.msra.mxu0 0.0
  %3998 = vmatprep.subr.mxu0 0.0
  %3999 = vmatpush1.msra.mxu0 0.0
  %4000 = vmatprep.subr.mxu0 0.0
  %4001 = vmatpush1.msra.mxu0 0.0
  %4002 = vmatprep.subr.mxu0 0.0
  %4003 = vmatpush1.msra.mxu0 0.0
  %4004 = vmatprep.subr.mxu0 0.0
  %4005 = vmatpush1.msra.mxu0 0.0
  %4006 = vmatprep.subr.mxu0 0.0
  %4007 = vmatpush1.msra.mxu0 0.0
  %4008 = vmatprep.subr.mxu0 0.0
  %4009 = vmatpush1.msra.mxu0 0.0
  %4010 = vmatprep.subr.mxu0 0.0
  %4011 = vmatpush1.msra.mxu0 0.0
  %4012 = vmatprep.subr.mxu0 0.0
  %4013 = vmatpush1.msra.mxu0 0.0
  %4014 = vmatprep.subr.mxu0 0.0
  %4015 = vmatpush1.msra.mxu0 0.0
  %4016 = vmatprep.subr.mxu0 0.0
  %4017 = vmatpush1.msra.mxu0 0.0
  %4018 = vmatprep.subr.mxu0 0.0
  %4019 = vmatpush1.msra.mxu0 0.0
  %4020 = vmatprep.subr.mxu0 0.0
  %4021 = vmatpush1.msra.mxu0 0.0
  %4022 = vmatprep.subr.mxu0 0.0
  %4023 = vmatpush1.msra.mxu0 0.0
  %4024 = vmatprep.subr.mxu0 0.0
  %4025 = vmatpush1.msra.mxu0 0.0
  %4026 = vmatprep.subr.mxu0 0.0
  %4027 = vmatpush1.msra.mxu0 0.0
  %4028 = vmatprep.subr.mxu0 0.0
  %4029 = vmatpush1.msra.mxu0 0.0
  %4030 = vmatprep.subr.mxu0 0.0
  %4031 = vmatpush1.msra.mxu0 0.0
  %4032 = vmatprep.subr.mxu0 0.0
  %4033 = vmatpush1.msra.mxu0 0.0
  %4034 = vmatprep.subr.mxu0 0.0
  %4035 = vmatpush1.msra.mxu0 0.0
  %4036 = vmatprep.subr.mxu0 0.0
  %4037 = vmatpush1.msra.mxu0 0.0
  %4038 = vmatprep.subr.mxu0 0.0
  %4039 = vmatpush1.msra.mxu0 0.0
  %4040 = vmatprep.subr.mxu0 0.0
  %4041 = vmatpush1.msra.mxu0 0.0
  %4042 = vmatprep.subr.mxu0 0.0
  %4043 = vmatpush1.msra.mxu0 0.0
  %4044 = vmatprep.subr.mxu0 0.0
  %4045 = vmatpush1.msra.mxu0 0.0
  %4046 = vmatprep.subr.mxu0 0.0
  %4047 = vmatpush1.msra.mxu0 0.0
  %4048 = vmatprep.subr.mxu0 0.0
  %4049 = vmatpush1.msra.mxu0 0.0
  %4050 = vmatprep.subr.mxu0 0.0
  %4051 = vmatpush1.msra.mxu0 0.0
  %4052 = vmatprep.subr.mxu0 0.0
  %4053 = vmatpush1.msra.mxu0 0.0
  %4054 = vmatprep.subr.mxu0 0.0
  %4055 = vmatpush1.msra.mxu0 0.0
  %4056 = vmatprep.mubr.f32.mxu0 0.0
  %v4057 = vand.u32 %v3902, 4294901760
  %4058 = vmatmul.mubr.f32.gmra.mrb[0].mxu0 %v4057
  %v4059 = vpop.f32.mrb[0].mxu0
  %v4060 = vadd.f32 %v3978, %v4059
  %v4061 = vpop.f32.mrb[0].mxu0
  %v4062 = vadd.f32 %v3980, %v4061
  %4063 = vdwg.mxu0
  %v4064 = vand.u32 %v3898, 4294901760
  %v4065 = vsub.f32 %v3898, %v4064
  %4066 = vmatprep.subr.mxu0 %v4065
  %v4067 = vand.u32 %v3897, 4294901760
  %v4068 = vsub.f32 %v3897, %v4067
  %4069 = vmatpush1.msra.mxu0 %v4068
  %4070 = vmatprep.subr.mxu0 0.0
  %4071 = vmatpush1.msra.mxu0 0.0
  %4072 = vmatprep.subr.mxu0 0.0
  %4073 = vmatpush1.msra.mxu0 0.0
  %4074 = vmatprep.subr.mxu0 0.0
  %4075 = vmatpush1.msra.mxu0 0.0
  %4076 = vmatprep.subr.mxu0 0.0
  %4077 = vmatpush1.msra.mxu0 0.0
  %4078 = vmatprep.subr.mxu0 0.0
  %4079 = vmatpush1.msra.mxu0 0.0
  %4080 = vmatprep.subr.mxu0 0.0
  %4081 = vmatpush1.msra.mxu0 0.0
  %4082 = vmatprep.subr.mxu0 0.0
  %4083 = vmatpush1.msra.mxu0 0.0
  %4084 = vmatprep.subr.mxu0 0.0
  %4085 = vmatpush1.msra.mxu0 0.0
  %4086 = vmatprep.subr.mxu0 0.0
  %4087 = vmatpush1.msra.mxu0 0.0
  %4088 = vmatprep.subr.mxu0 0.0
  %4089 = vmatpush1.msra.mxu0 0.0
  %4090 = vmatprep.subr.mxu0 0.0
  %4091 = vmatpush1.msra.mxu0 0.0
  %4092 = vmatprep.subr.mxu0 0.0
  %4093 = vmatpush1.msra.mxu0 0.0
  %4094 = vmatprep.subr.mxu0 0.0
  %4095 = vmatpush1.msra.mxu0 0.0
  %4096 = vmatprep.subr.mxu0 0.0
  %4097 = vmatpush1.msra.mxu0 0.0
  %4098 = vmatprep.subr.mxu0 0.0
  %4099 = vmatpush1.msra.mxu0 0.0
  %4100 = vmatprep.subr.mxu0 0.0
  %4101 = vmatpush1.msra.mxu0 0.0
  %4102 = vmatprep.subr.mxu0 0.0
  %4103 = vmatpush1.msra.mxu0 0.0
  %4104 = vmatprep.subr.mxu0 0.0
  %4105 = vmatpush1.msra.mxu0 0.0
  %4106 = vmatprep.subr.mxu0 0.0
  %4107 = vmatpush1.msra.mxu0 0.0
  %4108 = vmatprep.subr.mxu0 0.0
  %4109 = vmatpush1.msra.mxu0 0.0
  %4110 = vmatprep.subr.mxu0 0.0
  %4111 = vmatpush1.msra.mxu0 0.0
  %4112 = vmatprep.subr.mxu0 0.0
  %4113 = vmatpush1.msra.mxu0 0.0
  %4114 = vmatprep.subr.mxu0 0.0
  %4115 = vmatpush1.msra.mxu0 0.0
  %4116 = vmatprep.subr.mxu0 0.0
  %4117 = vmatpush1.msra.mxu0 0.0
  %4118 = vmatprep.subr.mxu0 0.0
  %4119 = vmatpush1.msra.mxu0 0.0
  %4120 = vmatprep.subr.mxu0 0.0
  %4121 = vmatpush1.msra.mxu0 0.0
  %4122 = vmatprep.subr.mxu0 0.0
  %4123 = vmatpush1.msra.mxu0 0.0
  %4124 = vmatprep.subr.mxu0 0.0
  %4125 = vmatpush1.msra.mxu0 0.0
  %4126 = vmatprep.subr.mxu0 0.0
  %4127 = vmatpush1.msra.mxu0 0.0
  %4128 = vmatprep.subr.mxu0 0.0
  %4129 = vmatpush1.msra.mxu0 0.0
  %4130 = vmatprep.subr.mxu0 0.0
  %4131 = vmatpush1.msra.mxu0 0.0
  %4132 = vmatprep.mubr.f32.mxu0 0.0
  %v4133 = vand.u32 %v3902, 4294901760
  %v4134 = vsub.f32 %v3902, %v4133
  %4135 = vmatmul.mubr.f32.gmra.mrb[0].mxu0 %v4134
  %v4136 = vpop.f32.mrb[0].mxu0
  %v4137 = vadd.f32 %v4060, %v4136
  %v4138 = vpop.f32.mrb[0].mxu0
  %v4139 = vadd.f32 %v4062, %v4138
  %4140 = vdwg.mxu0
  %v4141 = vand.u32 %v3898, 4294901760
  %4142 = vmatprep.subr.mxu0 %v4141
  %v4143 = vand.u32 %v3897, 4294901760
  %4144 = vmatpush1.msra.mxu0 %v4143
  %4145 = vmatprep.subr.mxu0 0.0
  %4146 = vmatpush1.msra.mxu0 0.0
  %4147 = vmatprep.subr.mxu0 0.0
  %4148 = vmatpush1.msra.mxu0 0.0
  %4149 = vmatprep.subr.mxu0 0.0
  %4150 = vmatpush1.msra.mxu0 0.0
  %4151 = vmatprep.subr.mxu0 0.0
  %4152 = vmatpush1.msra.mxu0 0.0
  %4153 = vmatprep.subr.mxu0 0.0
  %4154 = vmatpush1.msra.mxu0 0.0
  %4155 = vmatprep.subr.mxu0 0.0
  %4156 = vmatpush1.msra.mxu0 0.0
  %4157 = vmatprep.subr.mxu0 0.0
  %4158 = vmatpush1.msra.mxu0 0.0
  %4159 = vmatprep.subr.mxu0 0.0
  %4160 = vmatpush1.msra.mxu0 0.0
  %4161 = vmatprep.subr.mxu0 0.0
  %4162 = vmatpush1.msra.mxu0 0.0
  %4163 = vmatprep.subr.mxu0 0.0
  %4164 = vmatpush1.msra.mxu0 0.0
  %4165 = vmatprep.subr.mxu0 0.0
  %4166 = vmatpush1.msra.mxu0 0.0
  %4167 = vmatprep.subr.mxu0 0.0
  %4168 = vmatpush1.msra.mxu0 0.0
  %4169 = vmatprep.subr.mxu0 0.0
  %4170 = vmatpush1.msra.mxu0 0.0
  %4171 = vmatprep.subr.mxu0 0.0
  %4172 = vmatpush1.msra.mxu0 0.0
  %4173 = vmatprep.subr.mxu0 0.0
  %4174 = vmatpush1.msra.mxu0 0.0
  %4175 = vmatprep.subr.mxu0 0.0
  %4176 = vmatpush1.msra.mxu0 0.0
  %4177 = vmatprep.subr.mxu0 0.0
  %4178 = vmatpush1.msra.mxu0 0.0
  %4179 = vmatprep.subr.mxu0 0.0
  %4180 = vmatpush1.msra.mxu0 0.0
  %4181 = vmatprep.subr.mxu0 0.0
  %4182 = vmatpush1.msra.mxu0 0.0
  %4183 = vmatprep.subr.mxu0 0.0
  %4184 = vmatpush1.msra.mxu0 0.0
  %4185 = vmatprep.subr.mxu0 0.0
  %4186 = vmatpush1.msra.mxu0 0.0
  %4187 = vmatprep.subr.mxu0 0.0
  %4188 = vmatpush1.msra.mxu0 0.0
  %4189 = vmatprep.subr.mxu0 0.0
  %4190 = vmatpush1.msra.mxu0 0.0
  %4191 = vmatprep.subr.mxu0 0.0
  %4192 = vmatpush1.msra.mxu0 0.0
  %4193 = vmatprep.subr.mxu0 0.0
  %4194 = vmatpush1.msra.mxu0 0.0
  %4195 = vmatprep.subr.mxu0 0.0
  %4196 = vmatpush1.msra.mxu0 0.0
  %4197 = vmatprep.subr.mxu0 0.0
  %4198 = vmatpush1.msra.mxu0 0.0
  %4199 = vmatprep.subr.mxu0 0.0
  %4200 = vmatpush1.msra.mxu0 0.0
  %4201 = vmatprep.subr.mxu0 0.0
  %4202 = vmatpush1.msra.mxu0 0.0
  %4203 = vmatprep.subr.mxu0 0.0
  %4204 = vmatpush1.msra.mxu0 0.0
  %4205 = vmatprep.subr.mxu0 0.0
  %4206 = vmatpush1.msra.mxu0 0.0
  %4207 = vmatprep.mubr.f32.mxu0 0.0
  %v4208 = vand.u32 %v3902, 4294901760
  %v4209 = vsub.f32 %v3902, %v4208
  %v4210 = vand.u32 %v4209, 4294901760
  %4211 = vmatmul.mubr.f32.gmra.mrb[0].mxu0 %v4210
  %v4212 = vpop.f32.mrb[0].mxu0
  %v4213 = vadd.f32 %v4137, %v4212
  %v4214 = vpop.f32.mrb[0].mxu0
  %v4215 = vadd.f32 %v4139, %v4214
  %4216 = vdwg.mxu0
  %v4217 = vand.u32 %v3898, 4294901760
  %v4218 = vsub.f32 %v3898, %v4217
  %v4219 = vand.u32 %v4218, 4294901760
  %4220 = vmatprep.subr.mxu0 %v4219
  %v4221 = vand.u32 %v3897, 4294901760
  %v4222 = vsub.f32 %v3897, %v4221
  %v4223 = vand.u32 %v4222, 4294901760
  %4224 = vmatpush1.msra.mxu0 %v4223
  %4225 = vmatprep.subr.mxu0 0.0
  %4226 = vmatpush1.msra.mxu0 0.0
  %4227 = vmatprep.subr.mxu0 0.0
  %4228 = vmatpush1.msra.mxu0 0.0
  %4229 = vmatprep.subr.mxu0 0.0
  %4230 = vmatpush1.msra.mxu0 0.0
  %4231 = vmatprep.subr.mxu0 0.0
  %4232 = vmatpush1.msra.mxu0 0.0
  %4233 = vmatprep.subr.mxu0 0.0
  %4234 = vmatpush1.msra.mxu0 0.0
  %4235 = vmatprep.subr.mxu0 0.0
  %4236 = vmatpush1.msra.mxu0 0.0
  %4237 = vmatprep.subr.mxu0 0.0
  %4238 = vmatpush1.msra.mxu0 0.0
  %4239 = vmatprep.subr.mxu0 0.0
  %4240 = vmatpush1.msra.mxu0 0.0
  %4241 = vmatprep.subr.mxu0 0.0
  %4242 = vmatpush1.msra.mxu0 0.0
  %4243 = vmatprep.subr.mxu0 0.0
  %4244 = vmatpush1.msra.mxu0 0.0
  %4245 = vmatprep.subr.mxu0 0.0
  %4246 = vmatpush1.msra.mxu0 0.0
  %4247 = vmatprep.subr.mxu0 0.0
  %4248 = vmatpush1.msra.mxu0 0.0
  %4249 = vmatprep.subr.mxu0 0.0
  %4250 = vmatpush1.msra.mxu0 0.0
  %4251 = vmatprep.subr.mxu0 0.0
  %4252 = vmatpush1.msra.mxu0 0.0
  %4253 = vmatprep.subr.mxu0 0.0
  %4254 = vmatpush1.msra.mxu0 0.0
  %4255 = vmatprep.subr.mxu0 0.0
  %4256 = vmatpush1.msra.mxu0 0.0
  %4257 = vmatprep.subr.mxu0 0.0
  %4258 = vmatpush1.msra.mxu0 0.0
  %4259 = vmatprep.subr.mxu0 0.0
  %4260 = vmatpush1.msra.mxu0 0.0
  %4261 = vmatprep.subr.mxu0 0.0
  %4262 = vmatpush1.msra.mxu0 0.0
  %4263 = vmatprep.subr.mxu0 0.0
  %4264 = vmatpush1.msra.mxu0 0.0
  %4265 = vmatprep.subr.mxu0 0.0
  %4266 = vmatpush1.msra.mxu0 0.0
  %4267 = vmatprep.subr.mxu0 0.0
  %4268 = vmatpush1.msra.mxu0 0.0
  %4269 = vmatprep.subr.mxu0 0.0
  %4270 = vmatpush1.msra.mxu0 0.0
  %4271 = vmatprep.subr.mxu0 0.0
  %4272 = vmatpush1.msra.mxu0 0.0
  %4273 = vmatprep.subr.mxu0 0.0
  %4274 = vmatpush1.msra.mxu0 0.0
  %4275 = vmatprep.subr.mxu0 0.0
  %4276 = vmatpush1.msra.mxu0 0.0
  %4277 = vmatprep.subr.mxu0 0.0
  %4278 = vmatpush1.msra.mxu0 0.0
  %4279 = vmatprep.subr.mxu0 0.0
  %4280 = vmatpush1.msra.mxu0 0.0
  %4281 = vmatprep.subr.mxu0 0.0
  %4282 = vmatpush1.msra.mxu0 0.0
  %4283 = vmatprep.subr.mxu0 0.0
  %4284 = vmatpush1.msra.mxu0 0.0
  %4285 = vmatprep.subr.mxu0 0.0
  %4286 = vmatpush1.msra.mxu0 0.0
  %4287 = vmatprep.mubr.f32.mxu0 0.0
  %v4288 = vand.u32 %v3902, 4294901760
  %4289 = vmatmul.mubr.f32.gmra.mrb[0].mxu0 %v4288
  %v4290 = vpop.f32.mrb[0].mxu0
  %v4291 = vadd.f32 %v4213, %v4290
  %v4292 = vpop.f32.mrb[0].mxu0
  %v4293 = vadd.f32 %v4215, %v4292
  %4294 = vdwg.mxu0
  %v4295 = vand.u32 %v3898, 4294901760
  %4296 = vmatprep.subr.mxu0 %v4295
  %v4297 = vand.u32 %v3897, 4294901760
  %4298 = vmatpush1.msra.mxu0 %v4297
  %4299 = vmatprep.subr.mxu0 0.0
  %4300 = vmatpush1.msra.mxu0 0.0
  %4301 = vmatprep.subr.mxu0 0.0
  %4302 = vmatpush1.msra.mxu0 0.0
  %4303 = vmatprep.subr.mxu0 0.0
  %4304 = vmatpush1.msra.mxu0 0.0
  %4305 = vmatprep.subr.mxu0 0.0
  %4306 = vmatpush1.msra.mxu0 0.0
  %4307 = vmatprep.subr.mxu0 0.0
  %4308 = vmatpush1.msra.mxu0 0.0
  %4309 = vmatprep.subr.mxu0 0.0
  %4310 = vmatpush1.msra.mxu0 0.0
  %4311 = vmatprep.subr.mxu0 0.0
  %4312 = vmatpush1.msra.mxu0 0.0
  %4313 = vmatprep.subr.mxu0 0.0
  %4314 = vmatpush1.msra.mxu0 0.0
  %4315 = vmatprep.subr.mxu0 0.0
  %4316 = vmatpush1.msra.mxu0 0.0
  %4317 = vmatprep.subr.mxu0 0.0
  %4318 = vmatpush1.msra.mxu0 0.0
  %4319 = vmatprep.subr.mxu0 0.0
  %4320 = vmatpush1.msra.mxu0 0.0
  %4321 = vmatprep.subr.mxu0 0.0
  %4322 = vmatpush1.msra.mxu0 0.0
  %4323 = vmatprep.subr.mxu0 0.0
  %4324 = vmatpush1.msra.mxu0 0.0
  %4325 = vmatprep.subr.mxu0 0.0
  %4326 = vmatpush1.msra.mxu0 0.0
  %4327 = vmatprep.subr.mxu0 0.0
  %4328 = vmatpush1.msra.mxu0 0.0
  %4329 = vmatprep.subr.mxu0 0.0
  %4330 = vmatpush1.msra.mxu0 0.0
  %4331 = vmatprep.subr.mxu0 0.0
  %4332 = vmatpush1.msra.mxu0 0.0
  %4333 = vmatprep.subr.mxu0 0.0
  %4334 = vmatpush1.msra.mxu0 0.0
  %4335 = vmatprep.subr.mxu0 0.0
  %4336 = vmatpush1.msra.mxu0 0.0
  %4337 = vmatprep.subr.mxu0 0.0
  %4338 = vmatpush1.msra.mxu0 0.0
  %4339 = vmatprep.subr.mxu0 0.0
  %4340 = vmatpush1.msra.mxu0 0.0
  %4341 = vmatprep.subr.mxu0 0.0
  %4342 = vmatpush1.msra.mxu0 0.0
  %4343 = vmatprep.subr.mxu0 0.0
  %4344 = vmatpush1.msra.mxu0 0.0
  %4345 = vmatprep.subr.mxu0 0.0
  %4346 = vmatpush1.msra.mxu0 0.0
  %4347 = vmatprep.subr.mxu0 0.0
  %4348 = vmatpush1.msra.mxu0 0.0
  %4349 = vmatprep.subr.mxu0 0.0
  %4350 = vmatpush1.msra.mxu0 0.0
  %4351 = vmatprep.subr.mxu0 0.0
  %4352 = vmatpush1.msra.mxu0 0.0
  %4353 = vmatprep.subr.mxu0 0.0
  %4354 = vmatpush1.msra.mxu0 0.0
  %4355 = vmatprep.subr.mxu0 0.0
  %4356 = vmatpush1.msra.mxu0 0.0
  %4357 = vmatprep.subr.mxu0 0.0
  %4358 = vmatpush1.msra.mxu0 0.0
  %4359 = vmatprep.subr.mxu0 0.0
  %4360 = vmatpush1.msra.mxu0 0.0
  %4361 = vmatprep.mubr.f32.mxu0 0.0
  %v4362 = vand.u32 %v3902, 4294901760
  %4363 = vmatmul.mubr.f32.gmra.mrb[0].mxu0 %v4362
  %v4364 = vpop.f32.mrb[0].mxu0
  %v4365 = vadd.f32 %v4291, %v4364
  %v4366 = vpop.f32.mrb[0].mxu0
  %v4367 = vadd.f32 %v4293, %v4366
  %4368 = vdwg.mxu0
  %v4369 = vadd.f32 %v3888, %v4365
  %v4370 = vadd.f32 %v3889, %v4367
  %v4371 = vmax.f32 %v4369, 0.0
  %v4372 = vmax.f32 %v4370, 0.0
  %v4373 = vld [vmem:[%s4] sm:$0xff]
  %4375 = vset.pattern.permute.xlu0 0
  %4376 = vperm.xlu0 %4375, %v4373
  %v4377 = vpop.permute.xlu0 %4376
  %4379 = vrot.lane.b32.xlu0 %v4371, 17
  %v4380 = vpop.permute.xlu0 %4379
  %4381 = vrot.lane.b32.xlu0 %v4372, 17
  %v4382 = vpop.permute.xlu0 %4381
  %v4383 = vsel %vm55, %v4380, %v4382
  %v4384 = vsel %vm55, %v4382, %v4380
  %v4385 = vsel %vm31, %v4384, 0.0
  %v4386 = vsel %vm32, %v4383, 0.0
  %v4387 = vld [vmem:[%s3] sm:$0xff]
  %v4389 = vsel %vm61, %v4387, 0
  %v4391 = vand.u32 %v4386, 4294901760
  %4392 = vmatprep.subr.mxu0 %v4391
  %v4393 = vand.u32 %v4385, 4294901760
  %4394 = vmatpush1.msra.mxu0 %v4393
  %4395 = vmatprep.subr.mxu0 0.0
  %4396 = vmatpush1.msra.mxu0 0.0
  %4397 = vmatprep.subr.mxu0 0.0
  %4398 = vmatpush1.msra.mxu0 0.0
  %4399 = vmatprep.subr.mxu0 0.0
  %4400 = vmatpush1.msra.mxu0 0.0
  %4401 = vmatprep.subr.mxu0 0.0
  %4402 = vmatpush1.msra.mxu0 0.0
  %4403 = vmatprep.subr.mxu0 0.0
  %4404 = vmatpush1.msra.mxu0 0.0
  %4405 = vmatprep.subr.mxu0 0.0
  %4406 = vmatpush1.msra.mxu0 0.0
  %4407 = vmatprep.subr.mxu0 0.0
  %4408 = vmatpush1.msra.mxu0 0.0
  %4409 = vmatprep.subr.mxu0 0.0
  %4410 = vmatpush1.msra.mxu0 0.0
  %4411 = vmatprep.subr.mxu0 0.0
  %4412 = vmatpush1.msra.mxu0 0.0
  %4413 = vmatprep.subr.mxu0 0.0
  %4414 = vmatpush1.msra.mxu0 0.0
  %4415 = vmatprep.subr.mxu0 0.0
  %4416 = vmatpush1.msra.mxu0 0.0
  %4417 = vmatprep.subr.mxu0 0.0
  %4418 = vmatpush1.msra.mxu0 0.0
  %4419 = vmatprep.subr.mxu0 0.0
  %4420 = vmatpush1.msra.mxu0 0.0
  %4421 = vmatprep.subr.mxu0 0.0
  %4422 = vmatpush1.msra.mxu0 0.0
  %4423 = vmatprep.subr.mxu0 0.0
  %4424 = vmatpush1.msra.mxu0 0.0
  %4425 = vmatprep.subr.mxu0 0.0
  %4426 = vmatpush1.msra.mxu0 0.0
  %4427 = vmatprep.subr.mxu0 0.0
  %4428 = vmatpush1.msra.mxu0 0.0
  %4429 = vmatprep.subr.mxu0 0.0
  %4430 = vmatpush1.msra.mxu0 0.0
  %4431 = vmatprep.subr.mxu0 0.0
  %4432 = vmatpush1.msra.mxu0 0.0
  %4433 = vmatprep.subr.mxu0 0.0
  %4434 = vmatpush1.msra.mxu0 0.0
  %4435 = vmatprep.subr.mxu0 0.0
  %4436 = vmatpush1.msra.mxu0 0.0
  %4437 = vmatprep.subr.mxu0 0.0
  %4438 = vmatpush1.msra.mxu0 0.0
  %4439 = vmatprep.subr.mxu0 0.0
  %4440 = vmatpush1.msra.mxu0 0.0
  %4441 = vmatprep.subr.mxu0 0.0
  %4442 = vmatpush1.msra.mxu0 0.0
  %4443 = vmatprep.subr.mxu0 0.0
  %4444 = vmatpush1.msra.mxu0 0.0
  %4445 = vmatprep.subr.mxu0 0.0
  %4446 = vmatpush1.msra.mxu0 0.0
  %4447 = vmatprep.subr.mxu0 0.0
  %4448 = vmatpush1.msra.mxu0 0.0
  %4449 = vmatprep.subr.mxu0 0.0
  %4450 = vmatpush1.msra.mxu0 0.0
  %4451 = vmatprep.subr.mxu0 0.0
  %4452 = vmatpush1.msra.mxu0 0.0
  %4453 = vmatprep.subr.mxu0 0.0
  %4454 = vmatpush1.msra.mxu0 0.0
  %4455 = vmatprep.subr.mxu0 0.0
  %4456 = vmatpush1.msra.mxu0 0.0
  %4457 = vmatprep.mubr.f32.mxu0 0.0
  %v4458 = vand.u32 %v4389, 4294901760
  %v4459 = vsub.f32 %v4389, %v4458
  %v4460 = vand.u32 %v4459, 4294901760
  %v4461 = vsub.f32 %v4459, %v4460
  %v4462 = vand.u32 %v4461, 4294901760
  %4463 = vmatmul.mubr.f32.gmra.mrb[0].mxu0 %v4462
  %v4464 = vpop.f32.mrb[0].mxu0
  %v4465 = vadd.f32 0.0, %v4464
  %v4466 = vpop.f32.mrb[0].mxu0
  %v4467 = vadd.f32 0.0, %v4466
  %4468 = vdwg.mxu0
  %v4469 = vand.u32 %v4386, 4294901760
  %v4470 = vsub.f32 %v4386, %v4469
  %v4471 = vand.u32 %v4470, 4294901760
  %v4472 = vsub.f32 %v4470, %v4471
  %v4473 = vand.u32 %v4472, 4294901760
  %4474 = vmatprep.subr.mxu0 %v4473
  %v4475 = vand.u32 %v4385, 4294901760
  %v4476 = vsub.f32 %v4385, %v4475
  %v4477 = vand.u32 %v4476, 4294901760
  %v4478 = vsub.f32 %v4476, %v4477
  %v4479 = vand.u32 %v4478, 4294901760
  %4480 = vmatpush1.msra.mxu0 %v4479
  %4481 = vmatprep.subr.mxu0 0.0
  %4482 = vmatpush1.msra.mxu0 0.0
  %4483 = vmatprep.subr.mxu0 0.0
  %4484 = vmatpush1.msra.mxu0 0.0
  %4485 = vmatprep.subr.mxu0 0.0
  %4486 = vmatpush1.msra.mxu0 0.0
  %4487 = vmatprep.subr.mxu0 0.0
  %4488 = vmatpush1.msra.mxu0 0.0
  %4489 = vmatprep.subr.mxu0 0.0
  %4490 = vmatpush1.msra.mxu0 0.0
  %4491 = vmatprep.subr.mxu0 0.0
  %4492 = vmatpush1.msra.mxu0 0.0
  %4493 = vmatprep.subr.mxu0 0.0
  %4494 = vmatpush1.msra.mxu0 0.0
  %4495 = vmatprep.subr.mxu0 0.0
  %4496 = vmatpush1.msra.mxu0 0.0
  %4497 = vmatprep.subr.mxu0 0.0
  %4498 = vmatpush1.msra.mxu0 0.0
  %4499 = vmatprep.subr.mxu0 0.0
  %4500 = vmatpush1.msra.mxu0 0.0
  %4501 = vmatprep.subr.mxu0 0.0
  %4502 = vmatpush1.msra.mxu0 0.0
  %4503 = vmatprep.subr.mxu0 0.0
  %4504 = vmatpush1.msra.mxu0 0.0
  %4505 = vmatprep.subr.mxu0 0.0
  %4506 = vmatpush1.msra.mxu0 0.0
  %4507 = vmatprep.subr.mxu0 0.0
  %4508 = vmatpush1.msra.mxu0 0.0
  %4509 = vmatprep.subr.mxu0 0.0
  %4510 = vmatpush1.msra.mxu0 0.0
  %4511 = vmatprep.subr.mxu0 0.0
  %4512 = vmatpush1.msra.mxu0 0.0
  %4513 = vmatprep.subr.mxu0 0.0
  %4514 = vmatpush1.msra.mxu0 0.0
  %4515 = vmatprep.subr.mxu0 0.0
  %4516 = vmatpush1.msra.mxu0 0.0
  %4517 = vmatprep.subr.mxu0 0.0
  %4518 = vmatpush1.msra.mxu0 0.0
  %4519 = vmatprep.subr.mxu0 0.0
  %4520 = vmatpush1.msra.mxu0 0.0
  %4521 = vmatprep.subr.mxu0 0.0
  %4522 = vmatpush1.msra.mxu0 0.0
  %4523 = vmatprep.subr.mxu0 0.0
  %4524 = vmatpush1.msra.mxu0 0.0
  %4525 = vmatprep.subr.mxu0 0.0
  %4526 = vmatpush1.msra.mxu0 0.0
  %4527 = vmatprep.subr.mxu0 0.0
  %4528 = vmatpush1.msra.mxu0 0.0
  %4529 = vmatprep.subr.mxu0 0.0
  %4530 = vmatpush1.msra.mxu0 0.0
  %4531 = vmatprep.subr.mxu0 0.0
  %4532 = vmatpush1.msra.mxu0 0.0
  %4533 = vmatprep.subr.mxu0 0.0
  %4534 = vmatpush1.msra.mxu0 0.0
  %4535 = vmatprep.subr.mxu0 0.0
  %4536 = vmatpush1.msra.mxu0 0.0
  %4537 = vmatprep.subr.mxu0 0.0
  %4538 = vmatpush1.msra.mxu0 0.0
  %4539 = vmatprep.subr.mxu0 0.0
  %4540 = vmatpush1.msra.mxu0 0.0
  %4541 = vmatprep.subr.mxu0 0.0
  %4542 = vmatpush1.msra.mxu0 0.0
  %4543 = vmatprep.mubr.f32.mxu0 0.0
  %v4544 = vand.u32 %v4389, 4294901760
  %4545 = vmatmul.mubr.f32.gmra.mrb[0].mxu0 %v4544
  %v4546 = vpop.f32.mrb[0].mxu0
  %v4547 = vadd.f32 %v4465, %v4546
  %v4548 = vpop.f32.mrb[0].mxu0
  %v4549 = vadd.f32 %v4467, %v4548
  %4550 = vdwg.mxu0
  %v4551 = vand.u32 %v4386, 4294901760
  %v4552 = vsub.f32 %v4386, %v4551
  %4553 = vmatprep.subr.mxu0 %v4552
  %v4554 = vand.u32 %v4385, 4294901760
  %v4555 = vsub.f32 %v4385, %v4554
  %4556 = vmatpush1.msra.mxu0 %v4555
  %4557 = vmatprep.subr.mxu0 0.0
  %4558 = vmatpush1.msra.mxu0 0.0
  %4559 = vmatprep.subr.mxu0 0.0
  %4560 = vmatpush1.msra.mxu0 0.0
  %4561 = vmatprep.subr.mxu0 0.0
  %4562 = vmatpush1.msra.mxu0 0.0
  %4563 = vmatprep.subr.mxu0 0.0
  %4564 = vmatpush1.msra.mxu0 0.0
  %4565 = vmatprep.subr.mxu0 0.0
  %4566 = vmatpush1.msra.mxu0 0.0
  %4567 = vmatprep.subr.mxu0 0.0
  %4568 = vmatpush1.msra.mxu0 0.0
  %4569 = vmatprep.subr.mxu0 0.0
  %4570 = vmatpush1.msra.mxu0 0.0
  %4571 = vmatprep.subr.mxu0 0.0
  %4572 = vmatpush1.msra.mxu0 0.0
  %4573 = vmatprep.subr.mxu0 0.0
  %4574 = vmatpush1.msra.mxu0 0.0
  %4575 = vmatprep.subr.mxu0 0.0
  %4576 = vmatpush1.msra.mxu0 0.0
  %4577 = vmatprep.subr.mxu0 0.0
  %4578 = vmatpush1.msra.mxu0 0.0
  %4579 = vmatprep.subr.mxu0 0.0
  %4580 = vmatpush1.msra.mxu0 0.0
  %4581 = vmatprep.subr.mxu0 0.0
  %4582 = vmatpush1.msra.mxu0 0.0
  %4583 = vmatprep.subr.mxu0 0.0
  %4584 = vmatpush1.msra.mxu0 0.0
  %4585 = vmatprep.subr.mxu0 0.0
  %4586 = vmatpush1.msra.mxu0 0.0
  %4587 = vmatprep.subr.mxu0 0.0
  %4588 = vmatpush1.msra.mxu0 0.0
  %4589 = vmatprep.subr.mxu0 0.0
  %4590 = vmatpush1.msra.mxu0 0.0
  %4591 = vmatprep.subr.mxu0 0.0
  %4592 = vmatpush1.msra.mxu0 0.0
  %4593 = vmatprep.subr.mxu0 0.0
  %4594 = vmatpush1.msra.mxu0 0.0
  %4595 = vmatprep.subr.mxu0 0.0
  %4596 = vmatpush1.msra.mxu0 0.0
  %4597 = vmatprep.subr.mxu0 0.0
  %4598 = vmatpush1.msra.mxu0 0.0
  %4599 = vmatprep.subr.mxu0 0.0
  %4600 = vmatpush1.msra.mxu0 0.0
  %4601 = vmatprep.subr.mxu0 0.0
  %4602 = vmatpush1.msra.mxu0 0.0
  %4603 = vmatprep.subr.mxu0 0.0
  %4604 = vmatpush1.msra.mxu0 0.0
  %4605 = vmatprep.subr.mxu0 0.0
  %4606 = vmatpush1.msra.mxu0 0.0
  %4607 = vmatprep.subr.mxu0 0.0
  %4608 = vmatpush1.msra.mxu0 0.0
  %4609 = vmatprep.subr.mxu0 0.0
  %4610 = vmatpush1.msra.mxu0 0.0
  %4611 = vmatprep.subr.mxu0 0.0
  %4612 = vmatpush1.msra.mxu0 0.0
  %4613 = vmatprep.subr.mxu0 0.0
  %4614 = vmatpush1.msra.mxu0 0.0
  %4615 = vmatprep.subr.mxu0 0.0
  %4616 = vmatpush1.msra.mxu0 0.0
  %4617 = vmatprep.subr.mxu0 0.0
  %4618 = vmatpush1.msra.mxu0 0.0
  %4619 = vmatprep.mubr.f32.mxu0 0.0
  %v4620 = vand.u32 %v4389, 4294901760
  %v4621 = vsub.f32 %v4389, %v4620
  %4622 = vmatmul.mubr.f32.gmra.mrb[0].mxu0 %v4621
  %v4623 = vpop.f32.mrb[0].mxu0
  %v4624 = vadd.f32 %v4547, %v4623
  %v4625 = vpop.f32.mrb[0].mxu0
  %v4626 = vadd.f32 %v4549, %v4625
  %4627 = vdwg.mxu0
  %v4628 = vand.u32 %v4386, 4294901760
  %4629 = vmatprep.subr.mxu0 %v4628
  %v4630 = vand.u32 %v4385, 4294901760
  %4631 = vmatpush1.msra.mxu0 %v4630
  %4632 = vmatprep.subr.mxu0 0.0
  %4633 = vmatpush1.msra.mxu0 0.0
  %4634 = vmatprep.subr.mxu0 0.0
  %4635 = vmatpush1.msra.mxu0 0.0
  %4636 = vmatprep.subr.mxu0 0.0
  %4637 = vmatpush1.msra.mxu0 0.0
  %4638 = vmatprep.subr.mxu0 0.0
  %4639 = vmatpush1.msra.mxu0 0.0
  %4640 = vmatprep.subr.mxu0 0.0
  %4641 = vmatpush1.msra.mxu0 0.0
  %4642 = vmatprep.subr.mxu0 0.0
  %4643 = vmatpush1.msra.mxu0 0.0
  %4644 = vmatprep.subr.mxu0 0.0
  %4645 = vmatpush1.msra.mxu0 0.0
  %4646 = vmatprep.subr.mxu0 0.0
  %4647 = vmatpush1.msra.mxu0 0.0
  %4648 = vmatprep.subr.mxu0 0.0
  %4649 = vmatpush1.msra.mxu0 0.0
  %4650 = vmatprep.subr.mxu0 0.0
  %4651 = vmatpush1.msra.mxu0 0.0
  %4652 = vmatprep.subr.mxu0 0.0
  %4653 = vmatpush1.msra.mxu0 0.0
  %4654 = vmatprep.subr.mxu0 0.0
  %4655 = vmatpush1.msra.mxu0 0.0
  %4656 = vmatprep.subr.mxu0 0.0
  %4657 = vmatpush1.msra.mxu0 0.0
  %4658 = vmatprep.subr.mxu0 0.0
  %4659 = vmatpush1.msra.mxu0 0.0
  %4660 = vmatprep.subr.mxu0 0.0
  %4661 = vmatpush1.msra.mxu0 0.0
  %4662 = vmatprep.subr.mxu0 0.0
  %4663 = vmatpush1.msra.mxu0 0.0
  %4664 = vmatprep.subr.mxu0 0.0
  %4665 = vmatpush1.msra.mxu0 0.0
  %4666 = vmatprep.subr.mxu0 0.0
  %4667 = vmatpush1.msra.mxu0 0.0
  %4668 = vmatprep.subr.mxu0 0.0
  %4669 = vmatpush1.msra.mxu0 0.0
  %4670 = vmatprep.subr.mxu0 0.0
  %4671 = vmatpush1.msra.mxu0 0.0
  %4672 = vmatprep.subr.mxu0 0.0
  %4673 = vmatpush1.msra.mxu0 0.0
  %4674 = vmatprep.subr.mxu0 0.0
  %4675 = vmatpush1.msra.mxu0 0.0
  %4676 = vmatprep.subr.mxu0 0.0
  %4677 = vmatpush1.msra.mxu0 0.0
  %4678 = vmatprep.subr.mxu0 0.0
  %4679 = vmatpush1.msra.mxu0 0.0
  %4680 = vmatprep.subr.mxu0 0.0
  %4681 = vmatpush1.msra.mxu0 0.0
  %4682 = vmatprep.subr.mxu0 0.0
  %4683 = vmatpush1.msra.mxu0 0.0
  %4684 = vmatprep.subr.mxu0 0.0
  %4685 = vmatpush1.msra.mxu0 0.0
  %4686 = vmatprep.subr.mxu0 0.0
  %4687 = vmatpush1.msra.mxu0 0.0
  %4688 = vmatprep.subr.mxu0 0.0
  %4689 = vmatpush1.msra.mxu0 0.0
  %4690 = vmatprep.subr.mxu0 0.0
  %4691 = vmatpush1.msra.mxu0 0.0
  %4692 = vmatprep.subr.mxu0 0.0
  %4693 = vmatpush1.msra.mxu0 0.0
  %4694 = vmatprep.mubr.f32.mxu0 0.0
  %v4695 = vand.u32 %v4389, 4294901760
  %v4696 = vsub.f32 %v4389, %v4695
  %v4697 = vand.u32 %v4696, 4294901760
  %4698 = vmatmul.mubr.f32.gmra.mrb[0].mxu0 %v4697
  %v4699 = vpop.f32.mrb[0].mxu0
  %v4700 = vadd.f32 %v4624, %v4699
  %v4701 = vpop.f32.mrb[0].mxu0
  %v4702 = vadd.f32 %v4626, %v4701
  %4703 = vdwg.mxu0
  %v4704 = vand.u32 %v4386, 4294901760
  %v4705 = vsub.f32 %v4386, %v4704
  %v4706 = vand.u32 %v4705, 4294901760
  %4707 = vmatprep.subr.mxu0 %v4706
  %v4708 = vand.u32 %v4385, 4294901760
  %v4709 = vsub.f32 %v4385, %v4708
  %v4710 = vand.u32 %v4709, 4294901760
  %4711 = vmatpush1.msra.mxu0 %v4710
  %4712 = vmatprep.subr.mxu0 0.0
  %4713 = vmatpush1.msra.mxu0 0.0
  %4714 = vmatprep.subr.mxu0 0.0
  %4715 = vmatpush1.msra.mxu0 0.0
  %4716 = vmatprep.subr.mxu0 0.0
  %4717 = vmatpush1.msra.mxu0 0.0
  %4718 = vmatprep.subr.mxu0 0.0
  %4719 = vmatpush1.msra.mxu0 0.0
  %4720 = vmatprep.subr.mxu0 0.0
  %4721 = vmatpush1.msra.mxu0 0.0
  %4722 = vmatprep.subr.mxu0 0.0
  %4723 = vmatpush1.msra.mxu0 0.0
  %4724 = vmatprep.subr.mxu0 0.0
  %4725 = vmatpush1.msra.mxu0 0.0
  %4726 = vmatprep.subr.mxu0 0.0
  %4727 = vmatpush1.msra.mxu0 0.0
  %4728 = vmatprep.subr.mxu0 0.0
  %4729 = vmatpush1.msra.mxu0 0.0
  %4730 = vmatprep.subr.mxu0 0.0
  %4731 = vmatpush1.msra.mxu0 0.0
  %4732 = vmatprep.subr.mxu0 0.0
  %4733 = vmatpush1.msra.mxu0 0.0
  %4734 = vmatprep.subr.mxu0 0.0
  %4735 = vmatpush1.msra.mxu0 0.0
  %4736 = vmatprep.subr.mxu0 0.0
  %4737 = vmatpush1.msra.mxu0 0.0
  %4738 = vmatprep.subr.mxu0 0.0
  %4739 = vmatpush1.msra.mxu0 0.0
  %4740 = vmatprep.subr.mxu0 0.0
  %4741 = vmatpush1.msra.mxu0 0.0
  %4742 = vmatprep.subr.mxu0 0.0
  %4743 = vmatpush1.msra.mxu0 0.0
  %4744 = vmatprep.subr.mxu0 0.0
  %4745 = vmatpush1.msra.mxu0 0.0
  %4746 = vmatprep.subr.mxu0 0.0
  %4747 = vmatpush1.msra.mxu0 0.0
  %4748 = vmatprep.subr.mxu0 0.0
  %4749 = vmatpush1.msra.mxu0 0.0
  %4750 = vmatprep.subr.mxu0 0.0
  %4751 = vmatpush1.msra.mxu0 0.0
  %4752 = vmatprep.subr.mxu0 0.0
  %4753 = vmatpush1.msra.mxu0 0.0
  %4754 = vmatprep.subr.mxu0 0.0
  %4755 = vmatpush1.msra.mxu0 0.0
  %4756 = vmatprep.subr.mxu0 0.0
  %4757 = vmatpush1.msra.mxu0 0.0
  %4758 = vmatprep.subr.mxu0 0.0
  %4759 = vmatpush1.msra.mxu0 0.0
  %4760 = vmatprep.subr.mxu0 0.0
  %4761 = vmatpush1.msra.mxu0 0.0
  %4762 = vmatprep.subr.mxu0 0.0
  %4763 = vmatpush1.msra.mxu0 0.0
  %4764 = vmatprep.subr.mxu0 0.0
  %4765 = vmatpush1.msra.mxu0 0.0
  %4766 = vmatprep.subr.mxu0 0.0
  %4767 = vmatpush1.msra.mxu0 0.0
  %4768 = vmatprep.subr.mxu0 0.0
  %4769 = vmatpush1.msra.mxu0 0.0
  %4770 = vmatprep.subr.mxu0 0.0
  %4771 = vmatpush1.msra.mxu0 0.0
  %4772 = vmatprep.subr.mxu0 0.0
  %4773 = vmatpush1.msra.mxu0 0.0
  %4774 = vmatprep.mubr.f32.mxu0 0.0
  %v4775 = vand.u32 %v4389, 4294901760
  %4776 = vmatmul.mubr.f32.gmra.mrb[0].mxu0 %v4775
  %v4777 = vpop.f32.mrb[0].mxu0
  %v4778 = vadd.f32 %v4700, %v4777
  %v4779 = vpop.f32.mrb[0].mxu0
  %v4780 = vadd.f32 %v4702, %v4779
  %4781 = vdwg.mxu0
  %v4782 = vand.u32 %v4386, 4294901760
  %4783 = vmatprep.subr.mxu0 %v4782
  %v4784 = vand.u32 %v4385, 4294901760
  %4785 = vmatpush1.msra.mxu0 %v4784
  %4786 = vmatprep.subr.mxu0 0.0
  %4787 = vmatpush1.msra.mxu0 0.0
  %4788 = vmatprep.subr.mxu0 0.0
  %4789 = vmatpush1.msra.mxu0 0.0
  %4790 = vmatprep.subr.mxu0 0.0
  %4791 = vmatpush1.msra.mxu0 0.0
  %4792 = vmatprep.subr.mxu0 0.0
  %4793 = vmatpush1.msra.mxu0 0.0
  %4794 = vmatprep.subr.mxu0 0.0
  %4795 = vmatpush1.msra.mxu0 0.0
  %4796 = vmatprep.subr.mxu0 0.0
  %4797 = vmatpush1.msra.mxu0 0.0
  %4798 = vmatprep.subr.mxu0 0.0
  %4799 = vmatpush1.msra.mxu0 0.0
  %4800 = vmatprep.subr.mxu0 0.0
  %4801 = vmatpush1.msra.mxu0 0.0
  %4802 = vmatprep.subr.mxu0 0.0
  %4803 = vmatpush1.msra.mxu0 0.0
  %4804 = vmatprep.subr.mxu0 0.0
  %4805 = vmatpush1.msra.mxu0 0.0
  %4806 = vmatprep.subr.mxu0 0.0
  %4807 = vmatpush1.msra.mxu0 0.0
  %4808 = vmatprep.subr.mxu0 0.0
  %4809 = vmatpush1.msra.mxu0 0.0
  %4810 = vmatprep.subr.mxu0 0.0
  %4811 = vmatpush1.msra.mxu0 0.0
  %4812 = vmatprep.subr.mxu0 0.0
  %4813 = vmatpush1.msra.mxu0 0.0
  %4814 = vmatprep.subr.mxu0 0.0
  %4815 = vmatpush1.msra.mxu0 0.0
  %4816 = vmatprep.subr.mxu0 0.0
  %4817 = vmatpush1.msra.mxu0 0.0
  %4818 = vmatprep.subr.mxu0 0.0
  %4819 = vmatpush1.msra.mxu0 0.0
  %4820 = vmatprep.subr.mxu0 0.0
  %4821 = vmatpush1.msra.mxu0 0.0
  %4822 = vmatprep.subr.mxu0 0.0
  %4823 = vmatpush1.msra.mxu0 0.0
  %4824 = vmatprep.subr.mxu0 0.0
  %4825 = vmatpush1.msra.mxu0 0.0
  %4826 = vmatprep.subr.mxu0 0.0
  %4827 = vmatpush1.msra.mxu0 0.0
  %4828 = vmatprep.subr.mxu0 0.0
  %4829 = vmatpush1.msra.mxu0 0.0
  %4830 = vmatprep.subr.mxu0 0.0
  %4831 = vmatpush1.msra.mxu0 0.0
  %4832 = vmatprep.subr.mxu0 0.0
  %4833 = vmatpush1.msra.mxu0 0.0
  %4834 = vmatprep.subr.mxu0 0.0
  %4835 = vmatpush1.msra.mxu0 0.0
  %4836 = vmatprep.subr.mxu0 0.0
  %4837 = vmatpush1.msra.mxu0 0.0
  %4838 = vmatprep.subr.mxu0 0.0
  %4839 = vmatpush1.msra.mxu0 0.0
  %4840 = vmatprep.subr.mxu0 0.0
  %4841 = vmatpush1.msra.mxu0 0.0
  %4842 = vmatprep.subr.mxu0 0.0
  %4843 = vmatpush1.msra.mxu0 0.0
  %4844 = vmatprep.subr.mxu0 0.0
  %4845 = vmatpush1.msra.mxu0 0.0
  %4846 = vmatprep.subr.mxu0 0.0
  %4847 = vmatpush1.msra.mxu0 0.0
  %4848 = vmatprep.mubr.f32.mxu0 0.0
  %v4849 = vand.u32 %v4389, 4294901760
  %4850 = vmatmul.mubr.f32.gmra.mrb[0].mxu0 %v4849
  %v4851 = vpop.f32.mrb[0].mxu0
  %v4852 = vadd.f32 %v4778, %v4851
  %v4853 = vpop.f32.mrb[0].mxu0
  %v4854 = vadd.f32 %v4780, %v4853
  %4855 = vdwg.mxu0
  %v4856 = vadd.f32 %v4377, %v4852
  %v4857 = vadd.f32 %v4377, %v4854
  %4858 = vrot.lane.b32.xlu0 %v4371, 16
  %v4859 = vpop.permute.xlu0 %4858
  %4860 = vrot.lane.b32.xlu0 %v4372, 16
  %v4861 = vpop.permute.xlu0 %4860
  %v4862 = vsel %vm536, %v4859, %v4861
  %v4863 = vsel %vm536, %v4861, %v4859
  %v4864 = vsel %vm27, %v4863, 0.0
  %v4865 = vsel %vm28, %v4862, 0.0
  %s4866 = scalar_lea.vmem %s3, 8
  %v4867 = vld [vmem:[%s4866] sm:$0xff]
  %v4869 = vsel %vm61, %v4867, 0
  %v4871 = vand.u32 %v4865, 4294901760
  %4872 = vmatprep.subr.mxu0 %v4871
  %v4873 = vand.u32 %v4864, 4294901760
  %4874 = vmatpush1.msra.mxu0 %v4873
  %4875 = vmatprep.subr.mxu0 0.0
  %4876 = vmatpush1.msra.mxu0 0.0
  %4877 = vmatprep.subr.mxu0 0.0
  %4878 = vmatpush1.msra.mxu0 0.0
  %4879 = vmatprep.subr.mxu0 0.0
  %4880 = vmatpush1.msra.mxu0 0.0
  %4881 = vmatprep.subr.mxu0 0.0
  %4882 = vmatpush1.msra.mxu0 0.0
  %4883 = vmatprep.subr.mxu0 0.0
  %4884 = vmatpush1.msra.mxu0 0.0
  %4885 = vmatprep.subr.mxu0 0.0
  %4886 = vmatpush1.msra.mxu0 0.0
  %4887 = vmatprep.subr.mxu0 0.0
  %4888 = vmatpush1.msra.mxu0 0.0
  %4889 = vmatprep.subr.mxu0 0.0
  %4890 = vmatpush1.msra.mxu0 0.0
  %4891 = vmatprep.subr.mxu0 0.0
  %4892 = vmatpush1.msra.mxu0 0.0
  %4893 = vmatprep.subr.mxu0 0.0
  %4894 = vmatpush1.msra.mxu0 0.0
  %4895 = vmatprep.subr.mxu0 0.0
  %4896 = vmatpush1.msra.mxu0 0.0
  %4897 = vmatprep.subr.mxu0 0.0
  %4898 = vmatpush1.msra.mxu0 0.0
  %4899 = vmatprep.subr.mxu0 0.0
  %4900 = vmatpush1.msra.mxu0 0.0
  %4901 = vmatprep.subr.mxu0 0.0
  %4902 = vmatpush1.msra.mxu0 0.0
  %4903 = vmatprep.subr.mxu0 0.0
  %4904 = vmatpush1.msra.mxu0 0.0
  %4905 = vmatprep.subr.mxu0 0.0
  %4906 = vmatpush1.msra.mxu0 0.0
  %4907 = vmatprep.subr.mxu0 0.0
  %4908 = vmatpush1.msra.mxu0 0.0
  %4909 = vmatprep.subr.mxu0 0.0
  %4910 = vmatpush1.msra.mxu0 0.0
  %4911 = vmatprep.subr.mxu0 0.0
  %4912 = vmatpush1.msra.mxu0 0.0
  %4913 = vmatprep.subr.mxu0 0.0
  %4914 = vmatpush1.msra.mxu0 0.0
  %4915 = vmatprep.subr.mxu0 0.0
  %4916 = vmatpush1.msra.mxu0 0.0
  %4917 = vmatprep.subr.mxu0 0.0
  %4918 = vmatpush1.msra.mxu0 0.0
  %4919 = vmatprep.subr.mxu0 0.0
  %4920 = vmatpush1.msra.mxu0 0.0
  %4921 = vmatprep.subr.mxu0 0.0
  %4922 = vmatpush1.msra.mxu0 0.0
  %4923 = vmatprep.subr.mxu0 0.0
  %4924 = vmatpush1.msra.mxu0 0.0
  %4925 = vmatprep.subr.mxu0 0.0
  %4926 = vmatpush1.msra.mxu0 0.0
  %4927 = vmatprep.subr.mxu0 0.0
  %4928 = vmatpush1.msra.mxu0 0.0
  %4929 = vmatprep.subr.mxu0 0.0
  %4930 = vmatpush1.msra.mxu0 0.0
  %4931 = vmatprep.subr.mxu0 0.0
  %4932 = vmatpush1.msra.mxu0 0.0
  %4933 = vmatprep.subr.mxu0 0.0
  %4934 = vmatpush1.msra.mxu0 0.0
  %4935 = vmatprep.subr.mxu0 0.0
  %4936 = vmatpush1.msra.mxu0 0.0
  %4937 = vmatprep.mubr.f32.mxu0 0.0
  %v4938 = vand.u32 %v4869, 4294901760
  %v4939 = vsub.f32 %v4869, %v4938
  %v4940 = vand.u32 %v4939, 4294901760
  %v4941 = vsub.f32 %v4939, %v4940
  %v4942 = vand.u32 %v4941, 4294901760
  %4943 = vmatmul.mubr.f32.gmra.mrb[0].mxu0 %v4942
  %v4944 = vpop.f32.mrb[0].mxu0
  %v4945 = vadd.f32 0.0, %v4944
  %v4946 = vpop.f32.mrb[0].mxu0
  %v4947 = vadd.f32 0.0, %v4946
  %4948 = vdwg.mxu0
  %v4949 = vand.u32 %v4865, 4294901760
  %v4950 = vsub.f32 %v4865, %v4949
  %v4951 = vand.u32 %v4950, 4294901760
  %v4952 = vsub.f32 %v4950, %v4951
  %v4953 = vand.u32 %v4952, 4294901760
  %4954 = vmatprep.subr.mxu0 %v4953
  %v4955 = vand.u32 %v4864, 4294901760
  %v4956 = vsub.f32 %v4864, %v4955
  %v4957 = vand.u32 %v4956, 4294901760
  %v4958 = vsub.f32 %v4956, %v4957
  %v4959 = vand.u32 %v4958, 4294901760
  %4960 = vmatpush1.msra.mxu0 %v4959
  %4961 = vmatprep.subr.mxu0 0.0
  %4962 = vmatpush1.msra.mxu0 0.0
  %4963 = vmatprep.subr.mxu0 0.0
  %4964 = vmatpush1.msra.mxu0 0.0
  %4965 = vmatprep.subr.mxu0 0.0
  %4966 = vmatpush1.msra.mxu0 0.0
  %4967 = vmatprep.subr.mxu0 0.0
  %4968 = vmatpush1.msra.mxu0 0.0
  %4969 = vmatprep.subr.mxu0 0.0
  %4970 = vmatpush1.msra.mxu0 0.0
  %4971 = vmatprep.subr.mxu0 0.0
  %4972 = vmatpush1.msra.mxu0 0.0
  %4973 = vmatprep.subr.mxu0 0.0
  %4974 = vmatpush1.msra.mxu0 0.0
  %4975 = vmatprep.subr.mxu0 0.0
  %4976 = vmatpush1.msra.mxu0 0.0
  %4977 = vmatprep.subr.mxu0 0.0
  %4978 = vmatpush1.msra.mxu0 0.0
  %4979 = vmatprep.subr.mxu0 0.0
  %4980 = vmatpush1.msra.mxu0 0.0
  %4981 = vmatprep.subr.mxu0 0.0
  %4982 = vmatpush1.msra.mxu0 0.0
  %4983 = vmatprep.subr.mxu0 0.0
  %4984 = vmatpush1.msra.mxu0 0.0
  %4985 = vmatprep.subr.mxu0 0.0
  %4986 = vmatpush1.msra.mxu0 0.0
  %4987 = vmatprep.subr.mxu0 0.0
  %4988 = vmatpush1.msra.mxu0 0.0
  %4989 = vmatprep.subr.mxu0 0.0
  %4990 = vmatpush1.msra.mxu0 0.0
  %4991 = vmatprep.subr.mxu0 0.0
  %4992 = vmatpush1.msra.mxu0 0.0
  %4993 = vmatprep.subr.mxu0 0.0
  %4994 = vmatpush1.msra.mxu0 0.0
  %4995 = vmatprep.subr.mxu0 0.0
  %4996 = vmatpush1.msra.mxu0 0.0
  %4997 = vmatprep.subr.mxu0 0.0
  %4998 = vmatpush1.msra.mxu0 0.0
  %4999 = vmatprep.subr.mxu0 0.0
  %5000 = vmatpush1.msra.mxu0 0.0
  %5001 = vmatprep.subr.mxu0 0.0
  %5002 = vmatpush1.msra.mxu0 0.0
  %5003 = vmatprep.subr.mxu0 0.0
  %5004 = vmatpush1.msra.mxu0 0.0
  %5005 = vmatprep.subr.mxu0 0.0
  %5006 = vmatpush1.msra.mxu0 0.0
  %5007 = vmatprep.subr.mxu0 0.0
  %5008 = vmatpush1.msra.mxu0 0.0
  %5009 = vmatprep.subr.mxu0 0.0
  %5010 = vmatpush1.msra.mxu0 0.0
  %5011 = vmatprep.subr.mxu0 0.0
  %5012 = vmatpush1.msra.mxu0 0.0
  %5013 = vmatprep.subr.mxu0 0.0
  %5014 = vmatpush1.msra.mxu0 0.0
  %5015 = vmatprep.subr.mxu0 0.0
  %5016 = vmatpush1.msra.mxu0 0.0
  %5017 = vmatprep.subr.mxu0 0.0
  %5018 = vmatpush1.msra.mxu0 0.0
  %5019 = vmatprep.subr.mxu0 0.0
  %5020 = vmatpush1.msra.mxu0 0.0
  %5021 = vmatprep.subr.mxu0 0.0
  %5022 = vmatpush1.msra.mxu0 0.0
  %5023 = vmatprep.mubr.f32.mxu0 0.0
  %v5024 = vand.u32 %v4869, 4294901760
  %5025 = vmatmul.mubr.f32.gmra.mrb[0].mxu0 %v5024
  %v5026 = vpop.f32.mrb[0].mxu0
  %v5027 = vadd.f32 %v4945, %v5026
  %v5028 = vpop.f32.mrb[0].mxu0
  %v5029 = vadd.f32 %v4947, %v5028
  %5030 = vdwg.mxu0
  %v5031 = vand.u32 %v4865, 4294901760
  %v5032 = vsub.f32 %v4865, %v5031
  %5033 = vmatprep.subr.mxu0 %v5032
  %v5034 = vand.u32 %v4864, 4294901760
  %v5035 = vsub.f32 %v4864, %v5034
  %5036 = vmatpush1.msra.mxu0 %v5035
  %5037 = vmatprep.subr.mxu0 0.0
  %5038 = vmatpush1.msra.mxu0 0.0
  %5039 = vmatprep.subr.mxu0 0.0
  %5040 = vmatpush1.msra.mxu0 0.0
  %5041 = vmatprep.subr.mxu0 0.0
  %5042 = vmatpush1.msra.mxu0 0.0
  %5043 = vmatprep.subr.mxu0 0.0
  %5044 = vmatpush1.msra.mxu0 0.0
  %5045 = vmatprep.subr.mxu0 0.0
  %5046 = vmatpush1.msra.mxu0 0.0
  %5047 = vmatprep.subr.mxu0 0.0
  %5048 = vmatpush1.msra.mxu0 0.0
  %5049 = vmatprep.subr.mxu0 0.0
  %5050 = vmatpush1.msra.mxu0 0.0
  %5051 = vmatprep.subr.mxu0 0.0
  %5052 = vmatpush1.msra.mxu0 0.0
  %5053 = vmatprep.subr.mxu0 0.0
  %5054 = vmatpush1.msra.mxu0 0.0
  %5055 = vmatprep.subr.mxu0 0.0
  %5056 = vmatpush1.msra.mxu0 0.0
  %5057 = vmatprep.subr.mxu0 0.0
  %5058 = vmatpush1.msra.mxu0 0.0
  %5059 = vmatprep.subr.mxu0 0.0
  %5060 = vmatpush1.msra.mxu0 0.0
  %5061 = vmatprep.subr.mxu0 0.0
  %5062 = vmatpush1.msra.mxu0 0.0
  %5063 = vmatprep.subr.mxu0 0.0
  %5064 = vmatpush1.msra.mxu0 0.0
  %5065 = vmatprep.subr.mxu0 0.0
  %5066 = vmatpush1.msra.mxu0 0.0
  %5067 = vmatprep.subr.mxu0 0.0
  %5068 = vmatpush1.msra.mxu0 0.0
  %5069 = vmatprep.subr.mxu0 0.0
  %5070 = vmatpush1.msra.mxu0 0.0
  %5071 = vmatprep.subr.mxu0 0.0
  %5072 = vmatpush1.msra.mxu0 0.0
  %5073 = vmatprep.subr.mxu0 0.0
  %5074 = vmatpush1.msra.mxu0 0.0
  %5075 = vmatprep.subr.mxu0 0.0
  %5076 = vmatpush1.msra.mxu0 0.0
  %5077 = vmatprep.subr.mxu0 0.0
  %5078 = vmatpush1.msra.mxu0 0.0
  %5079 = vmatprep.subr.mxu0 0.0
  %5080 = vmatpush1.msra.mxu0 0.0
  %5081 = vmatprep.subr.mxu0 0.0
  %5082 = vmatpush1.msra.mxu0 0.0
  %5083 = vmatprep.subr.mxu0 0.0
  %5084 = vmatpush1.msra.mxu0 0.0
  %5085 = vmatprep.subr.mxu0 0.0
  %5086 = vmatpush1.msra.mxu0 0.0
  %5087 = vmatprep.subr.mxu0 0.0
  %5088 = vmatpush1.msra.mxu0 0.0
  %5089 = vmatprep.subr.mxu0 0.0
  %5090 = vmatpush1.msra.mxu0 0.0
  %5091 = vmatprep.subr.mxu0 0.0
  %5092 = vmatpush1.msra.mxu0 0.0
  %5093 = vmatprep.subr.mxu0 0.0
  %5094 = vmatpush1.msra.mxu0 0.0
  %5095 = vmatprep.subr.mxu0 0.0
  %5096 = vmatpush1.msra.mxu0 0.0
  %5097 = vmatprep.subr.mxu0 0.0
  %5098 = vmatpush1.msra.mxu0 0.0
  %5099 = vmatprep.mubr.f32.mxu0 0.0
  %v5100 = vand.u32 %v4869, 4294901760
  %v5101 = vsub.f32 %v4869, %v5100
  %5102 = vmatmul.mubr.f32.gmra.mrb[0].mxu0 %v5101
  %v5103 = vpop.f32.mrb[0].mxu0
  %v5104 = vadd.f32 %v5027, %v5103
  %v5105 = vpop.f32.mrb[0].mxu0
  %v5106 = vadd.f32 %v5029, %v5105
  %5107 = vdwg.mxu0
  %v5108 = vand.u32 %v4865, 4294901760
  %5109 = vmatprep.subr.mxu0 %v5108
  %v5110 = vand.u32 %v4864, 4294901760
  %5111 = vmatpush1.msra.mxu0 %v5110
  %5112 = vmatprep.subr.mxu0 0.0
  %5113 = vmatpush1.msra.mxu0 0.0
  %5114 = vmatprep.subr.mxu0 0.0
  %5115 = vmatpush1.msra.mxu0 0.0
  %5116 = vmatprep.subr.mxu0 0.0
  %5117 = vmatpush1.msra.mxu0 0.0
  %5118 = vmatprep.subr.mxu0 0.0
  %5119 = vmatpush1.msra.mxu0 0.0
  %5120 = vmatprep.subr.mxu0 0.0
  %5121 = vmatpush1.msra.mxu0 0.0
  %5122 = vmatprep.subr.mxu0 0.0
  %5123 = vmatpush1.msra.mxu0 0.0
  %5124 = vmatprep.subr.mxu0 0.0
  %5125 = vmatpush1.msra.mxu0 0.0
  %5126 = vmatprep.subr.mxu0 0.0
  %5127 = vmatpush1.msra.mxu0 0.0
  %5128 = vmatprep.subr.mxu0 0.0
  %5129 = vmatpush1.msra.mxu0 0.0
  %5130 = vmatprep.subr.mxu0 0.0
  %5131 = vmatpush1.msra.mxu0 0.0
  %5132 = vmatprep.subr.mxu0 0.0
  %5133 = vmatpush1.msra.mxu0 0.0
  %5134 = vmatprep.subr.mxu0 0.0
  %5135 = vmatpush1.msra.mxu0 0.0
  %5136 = vmatprep.subr.mxu0 0.0
  %5137 = vmatpush1.msra.mxu0 0.0
  %5138 = vmatprep.subr.mxu0 0.0
  %5139 = vmatpush1.msra.mxu0 0.0
  %5140 = vmatprep.subr.mxu0 0.0
  %5141 = vmatpush1.msra.mxu0 0.0
  %5142 = vmatprep.subr.mxu0 0.0
  %5143 = vmatpush1.msra.mxu0 0.0
  %5144 = vmatprep.subr.mxu0 0.0
  %5145 = vmatpush1.msra.mxu0 0.0
  %5146 = vmatprep.subr.mxu0 0.0
  %5147 = vmatpush1.msra.mxu0 0.0
  %5148 = vmatprep.subr.mxu0 0.0
  %5149 = vmatpush1.msra.mxu0 0.0
  %5150 = vmatprep.subr.mxu0 0.0
  %5151 = vmatpush1.msra.mxu0 0.0
  %5152 = vmatprep.subr.mxu0 0.0
  %5153 = vmatpush1.msra.mxu0 0.0
  %5154 = vmatprep.subr.mxu0 0.0
  %5155 = vmatpush1.msra.mxu0 0.0
  %5156 = vmatprep.subr.mxu0 0.0
  %5157 = vmatpush1.msra.mxu0 0.0
  %5158 = vmatprep.subr.mxu0 0.0
  %5159 = vmatpush1.msra.mxu0 0.0
  %5160 = vmatprep.subr.mxu0 0.0
  %5161 = vmatpush1.msra.mxu0 0.0
  %5162 = vmatprep.subr.mxu0 0.0
  %5163 = vmatpush1.msra.mxu0 0.0
  %5164 = vmatprep.subr.mxu0 0.0
  %5165 = vmatpush1.msra.mxu0 0.0
  %5166 = vmatprep.subr.mxu0 0.0
  %5167 = vmatpush1.msra.mxu0 0.0
  %5168 = vmatprep.subr.mxu0 0.0
  %5169 = vmatpush1.msra.mxu0 0.0
  %5170 = vmatprep.subr.mxu0 0.0
  %5171 = vmatpush1.msra.mxu0 0.0
  %5172 = vmatprep.subr.mxu0 0.0
  %5173 = vmatpush1.msra.mxu0 0.0
  %5174 = vmatprep.mubr.f32.mxu0 0.0
  %v5175 = vand.u32 %v4869, 4294901760
  %v5176 = vsub.f32 %v4869, %v5175
  %v5177 = vand.u32 %v5176, 4294901760
  %5178 = vmatmul.mubr.f32.gmra.mrb[0].mxu0 %v5177
  %v5179 = vpop.f32.mrb[0].mxu0
  %v5180 = vadd.f32 %v5104, %v5179
  %v5181 = vpop.f32.mrb[0].mxu0
  %v5182 = vadd.f32 %v5106, %v5181
  %5183 = vdwg.mxu0
  %v5184 = vand.u32 %v4865, 4294901760
  %v5185 = vsub.f32 %v4865, %v5184
  %v5186 = vand.u32 %v5185, 4294901760
  %5187 = vmatprep.subr.mxu0 %v5186
  %v5188 = vand.u32 %v4864, 4294901760
  %v5189 = vsub.f32 %v4864, %v5188
  %v5190 = vand.u32 %v5189, 4294901760
  %5191 = vmatpush1.msra.mxu0 %v5190
  %5192 = vmatprep.subr.mxu0 0.0
  %5193 = vmatpush1.msra.mxu0 0.0
  %5194 = vmatprep.subr.mxu0 0.0
  %5195 = vmatpush1.msra.mxu0 0.0
  %5196 = vmatprep.subr.mxu0 0.0
  %5197 = vmatpush1.msra.mxu0 0.0
  %5198 = vmatprep.subr.mxu0 0.0
  %5199 = vmatpush1.msra.mxu0 0.0
  %5200 = vmatprep.subr.mxu0 0.0
  %5201 = vmatpush1.msra.mxu0 0.0
  %5202 = vmatprep.subr.mxu0 0.0
  %5203 = vmatpush1.msra.mxu0 0.0
  %5204 = vmatprep.subr.mxu0 0.0
  %5205 = vmatpush1.msra.mxu0 0.0
  %5206 = vmatprep.subr.mxu0 0.0
  %5207 = vmatpush1.msra.mxu0 0.0
  %5208 = vmatprep.subr.mxu0 0.0
  %5209 = vmatpush1.msra.mxu0 0.0
  %5210 = vmatprep.subr.mxu0 0.0
  %5211 = vmatpush1.msra.mxu0 0.0
  %5212 = vmatprep.subr.mxu0 0.0
  %5213 = vmatpush1.msra.mxu0 0.0
  %5214 = vmatprep.subr.mxu0 0.0
  %5215 = vmatpush1.msra.mxu0 0.0
  %5216 = vmatprep.subr.mxu0 0.0
  %5217 = vmatpush1.msra.mxu0 0.0
  %5218 = vmatprep.subr.mxu0 0.0
  %5219 = vmatpush1.msra.mxu0 0.0
  %5220 = vmatprep.subr.mxu0 0.0
  %5221 = vmatpush1.msra.mxu0 0.0
  %5222 = vmatprep.subr.mxu0 0.0
  %5223 = vmatpush1.msra.mxu0 0.0
  %5224 = vmatprep.subr.mxu0 0.0
  %5225 = vmatpush1.msra.mxu0 0.0
  %5226 = vmatprep.subr.mxu0 0.0
  %5227 = vmatpush1.msra.mxu0 0.0
  %5228 = vmatprep.subr.mxu0 0.0
  %5229 = vmatpush1.msra.mxu0 0.0
  %5230 = vmatprep.subr.mxu0 0.0
  %5231 = vmatpush1.msra.mxu0 0.0
  %5232 = vmatprep.subr.mxu0 0.0
  %5233 = vmatpush1.msra.mxu0 0.0
  %5234 = vmatprep.subr.mxu0 0.0
  %5235 = vmatpush1.msra.mxu0 0.0
  %5236 = vmatprep.subr.mxu0 0.0
  %5237 = vmatpush1.msra.mxu0 0.0
  %5238 = vmatprep.subr.mxu0 0.0
  %5239 = vmatpush1.msra.mxu0 0.0
  %5240 = vmatprep.subr.mxu0 0.0
  %5241 = vmatpush1.msra.mxu0 0.0
  %5242 = vmatprep.subr.mxu0 0.0
  %5243 = vmatpush1.msra.mxu0 0.0
  %5244 = vmatprep.subr.mxu0 0.0
  %5245 = vmatpush1.msra.mxu0 0.0
  %5246 = vmatprep.subr.mxu0 0.0
  %5247 = vmatpush1.msra.mxu0 0.0
  %5248 = vmatprep.subr.mxu0 0.0
  %5249 = vmatpush1.msra.mxu0 0.0
  %5250 = vmatprep.subr.mxu0 0.0
  %5251 = vmatpush1.msra.mxu0 0.0
  %5252 = vmatprep.subr.mxu0 0.0
  %5253 = vmatpush1.msra.mxu0 0.0
  %5254 = vmatprep.mubr.f32.mxu0 0.0
  %v5255 = vand.u32 %v4869, 4294901760
  %5256 = vmatmul.mubr.f32.gmra.mrb[0].mxu0 %v5255
  %v5257 = vpop.f32.mrb[0].mxu0
  %v5258 = vadd.f32 %v5180, %v5257
  %v5259 = vpop.f32.mrb[0].mxu0
  %v5260 = vadd.f32 %v5182, %v5259
  %5261 = vdwg.mxu0
  %v5262 = vand.u32 %v4865, 4294901760
  %5263 = vmatprep.subr.mxu0 %v5262
  %v5264 = vand.u32 %v4864, 4294901760
  %5265 = vmatpush1.msra.mxu0 %v5264
  %5266 = vmatprep.subr.mxu0 0.0
  %5267 = vmatpush1.msra.mxu0 0.0
  %5268 = vmatprep.subr.mxu0 0.0
  %5269 = vmatpush1.msra.mxu0 0.0
  %5270 = vmatprep.subr.mxu0 0.0
  %5271 = vmatpush1.msra.mxu0 0.0
  %5272 = vmatprep.subr.mxu0 0.0
  %5273 = vmatpush1.msra.mxu0 0.0
  %5274 = vmatprep.subr.mxu0 0.0
  %5275 = vmatpush1.msra.mxu0 0.0
  %5276 = vmatprep.subr.mxu0 0.0
  %5277 = vmatpush1.msra.mxu0 0.0
  %5278 = vmatprep.subr.mxu0 0.0
  %5279 = vmatpush1.msra.mxu0 0.0
  %5280 = vmatprep.subr.mxu0 0.0
  %5281 = vmatpush1.msra.mxu0 0.0
  %5282 = vmatprep.subr.mxu0 0.0
  %5283 = vmatpush1.msra.mxu0 0.0
  %5284 = vmatprep.subr.mxu0 0.0
  %5285 = vmatpush1.msra.mxu0 0.0
  %5286 = vmatprep.subr.mxu0 0.0
  %5287 = vmatpush1.msra.mxu0 0.0
  %5288 = vmatprep.subr.mxu0 0.0
  %5289 = vmatpush1.msra.mxu0 0.0
  %5290 = vmatprep.subr.mxu0 0.0
  %5291 = vmatpush1.msra.mxu0 0.0
  %5292 = vmatprep.subr.mxu0 0.0
  %5293 = vmatpush1.msra.mxu0 0.0
  %5294 = vmatprep.subr.mxu0 0.0
  %5295 = vmatpush1.msra.mxu0 0.0
  %5296 = vmatprep.subr.mxu0 0.0
  %5297 = vmatpush1.msra.mxu0 0.0
  %5298 = vmatprep.subr.mxu0 0.0
  %5299 = vmatpush1.msra.mxu0 0.0
  %5300 = vmatprep.subr.mxu0 0.0
  %5301 = vmatpush1.msra.mxu0 0.0
  %5302 = vmatprep.subr.mxu0 0.0
  %5303 = vmatpush1.msra.mxu0 0.0
  %5304 = vmatprep.subr.mxu0 0.0
  %5305 = vmatpush1.msra.mxu0 0.0
  %5306 = vmatprep.subr.mxu0 0.0
  %5307 = vmatpush1.msra.mxu0 0.0
  %5308 = vmatprep.subr.mxu0 0.0
  %5309 = vmatpush1.msra.mxu0 0.0
  %5310 = vmatprep.subr.mxu0 0.0
  %5311 = vmatpush1.msra.mxu0 0.0
  %5312 = vmatprep.subr.mxu0 0.0
  %5313 = vmatpush1.msra.mxu0 0.0
  %5314 = vmatprep.subr.mxu0 0.0
  %5315 = vmatpush1.msra.mxu0 0.0
  %5316 = vmatprep.subr.mxu0 0.0
  %5317 = vmatpush1.msra.mxu0 0.0
  %5318 = vmatprep.subr.mxu0 0.0
  %5319 = vmatpush1.msra.mxu0 0.0
  %5320 = vmatprep.subr.mxu0 0.0
  %5321 = vmatpush1.msra.mxu0 0.0
  %5322 = vmatprep.subr.mxu0 0.0
  %5323 = vmatpush1.msra.mxu0 0.0
  %5324 = vmatprep.subr.mxu0 0.0
  %5325 = vmatpush1.msra.mxu0 0.0
  %5326 = vmatprep.subr.mxu0 0.0
  %5327 = vmatpush1.msra.mxu0 0.0
  %5328 = vmatprep.mubr.f32.mxu0 0.0
  %v5329 = vand.u32 %v4869, 4294901760
  %5330 = vmatmul.mubr.f32.gmra.mrb[0].mxu0 %v5329
  %v5331 = vpop.f32.mrb[0].mxu0
  %v5332 = vadd.f32 %v5258, %v5331
  %v5333 = vpop.f32.mrb[0].mxu0
  %v5334 = vadd.f32 %v5260, %v5333
  %5335 = vdwg.mxu0
  %v5336 = vadd.f32 %v4856, %v5332
  %v5337 = vadd.f32 %v4857, %v5334
  %5338 = vrot.lane.b32.xlu0 %v4371, 15
  %v5339 = vpop.permute.xlu0 %5338
  %5340 = vrot.lane.b32.xlu0 %v4372, 15
  %v5341 = vpop.permute.xlu0 %5340
  %v5342 = vsel %vm1017, %v5339, %v5341
  %v5343 = vsel %vm1017, %v5341, %v5339
  %v5344 = vsel %vm35, %v5343, 0.0
  %v5345 = vsel %vm36, %v5342, 0.0
  %s5346 = scalar_lea.vmem %s3, 16
  %v5347 = vld [vmem:[%s5346] sm:$0xff]
  %v5349 = vsel %vm61, %v5347, 0
  %v5351 = vand.u32 %v5345, 4294901760
  %5352 = vmatprep.subr.mxu0 %v5351
  %v5353 = vand.u32 %v5344, 4294901760
  %5354 = vmatpush1.msra.mxu0 %v5353
  %5355 = vmatprep.subr.mxu0 0.0
  %5356 = vmatpush1.msra.mxu0 0.0
  %5357 = vmatprep.subr.mxu0 0.0
  %5358 = vmatpush1.msra.mxu0 0.0
  %5359 = vmatprep.subr.mxu0 0.0
  %5360 = vmatpush1.msra.mxu0 0.0
  %5361 = vmatprep.subr.mxu0 0.0
  %5362 = vmatpush1.msra.mxu0 0.0
  %5363 = vmatprep.subr.mxu0 0.0
  %5364 = vmatpush1.msra.mxu0 0.0
  %5365 = vmatprep.subr.mxu0 0.0
  %5366 = vmatpush1.msra.mxu0 0.0
  %5367 = vmatprep.subr.mxu0 0.0
  %5368 = vmatpush1.msra.mxu0 0.0
  %5369 = vmatprep.subr.mxu0 0.0
  %5370 = vmatpush1.msra.mxu0 0.0
  %5371 = vmatprep.subr.mxu0 0.0
  %5372 = vmatpush1.msra.mxu0 0.0
  %5373 = vmatprep.subr.mxu0 0.0
  %5374 = vmatpush1.msra.mxu0 0.0
  %5375 = vmatprep.subr.mxu0 0.0
  %5376 = vmatpush1.msra.mxu0 0.0
  %5377 = vmatprep.subr.mxu0 0.0
  %5378 = vmatpush1.msra.mxu0 0.0
  %5379 = vmatprep.subr.mxu0 0.0
  %5380 = vmatpush1.msra.mxu0 0.0
  %5381 = vmatprep.subr.mxu0 0.0
  %5382 = vmatpush1.msra.mxu0 0.0
  %5383 = vmatprep.subr.mxu0 0.0
  %5384 = vmatpush1.msra.mxu0 0.0
  %5385 = vmatprep.subr.mxu0 0.0
  %5386 = vmatpush1.msra.mxu0 0.0
  %5387 = vmatprep.subr.mxu0 0.0
  %5388 = vmatpush1.msra.mxu0 0.0
  %5389 = vmatprep.subr.mxu0 0.0
  %5390 = vmatpush1.msra.mxu0 0.0
  %5391 = vmatprep.subr.mxu0 0.0
  %5392 = vmatpush1.msra.mxu0 0.0
  %5393 = vmatprep.subr.mxu0 0.0
  %5394 = vmatpush1.msra.mxu0 0.0
  %5395 = vmatprep.subr.mxu0 0.0
  %5396 = vmatpush1.msra.mxu0 0.0
  %5397 = vmatprep.subr.mxu0 0.0
  %5398 = vmatpush1.msra.mxu0 0.0
  %5399 = vmatprep.subr.mxu0 0.0
  %5400 = vmatpush1.msra.mxu0 0.0
  %5401 = vmatprep.subr.mxu0 0.0
  %5402 = vmatpush1.msra.mxu0 0.0
  %5403 = vmatprep.subr.mxu0 0.0
  %5404 = vmatpush1.msra.mxu0 0.0
  %5405 = vmatprep.subr.mxu0 0.0
  %5406 = vmatpush1.msra.mxu0 0.0
  %5407 = vmatprep.subr.mxu0 0.0
  %5408 = vmatpush1.msra.mxu0 0.0
  %5409 = vmatprep.subr.mxu0 0.0
  %5410 = vmatpush1.msra.mxu0 0.0
  %5411 = vmatprep.subr.mxu0 0.0
  %5412 = vmatpush1.msra.mxu0 0.0
  %5413 = vmatprep.subr.mxu0 0.0
  %5414 = vmatpush1.msra.mxu0 0.0
  %5415 = vmatprep.subr.mxu0 0.0
  %5416 = vmatpush1.msra.mxu0 0.0
  %5417 = vmatprep.mubr.f32.mxu0 0.0
  %v5418 = vand.u32 %v5349, 4294901760
  %v5419 = vsub.f32 %v5349, %v5418
  %v5420 = vand.u32 %v5419, 4294901760
  %v5421 = vsub.f32 %v5419, %v5420
  %v5422 = vand.u32 %v5421, 4294901760
  %5423 = vmatmul.mubr.f32.gmra.mrb[0].mxu0 %v5422
  %v5424 = vpop.f32.mrb[0].mxu0
  %v5425 = vadd.f32 0.0, %v5424
  %v5426 = vpop.f32.mrb[0].mxu0
  %v5427 = vadd.f32 0.0, %v5426
  %5428 = vdwg.mxu0
  %v5429 = vand.u32 %v5345, 4294901760
  %v5430 = vsub.f32 %v5345, %v5429
  %v5431 = vand.u32 %v5430, 4294901760
  %v5432 = vsub.f32 %v5430, %v5431
  %v5433 = vand.u32 %v5432, 4294901760
  %5434 = vmatprep.subr.mxu0 %v5433
  %v5435 = vand.u32 %v5344, 4294901760
  %v5436 = vsub.f32 %v5344, %v5435
  %v5437 = vand.u32 %v5436, 4294901760
  %v5438 = vsub.f32 %v5436, %v5437
  %v5439 = vand.u32 %v5438, 4294901760
  %5440 = vmatpush1.msra.mxu0 %v5439
  %5441 = vmatprep.subr.mxu0 0.0
  %5442 = vmatpush1.msra.mxu0 0.0
  %5443 = vmatprep.subr.mxu0 0.0
  %5444 = vmatpush1.msra.mxu0 0.0
  %5445 = vmatprep.subr.mxu0 0.0
  %5446 = vmatpush1.msra.mxu0 0.0
  %5447 = vmatprep.subr.mxu0 0.0
  %5448 = vmatpush1.msra.mxu0 0.0
  %5449 = vmatprep.subr.mxu0 0.0
  %5450 = vmatpush1.msra.mxu0 0.0
  %5451 = vmatprep.subr.mxu0 0.0
  %5452 = vmatpush1.msra.mxu0 0.0
  %5453 = vmatprep.subr.mxu0 0.0
  %5454 = vmatpush1.msra.mxu0 0.0
  %5455 = vmatprep.subr.mxu0 0.0
  %5456 = vmatpush1.msra.mxu0 0.0
  %5457 = vmatprep.subr.mxu0 0.0
  %5458 = vmatpush1.msra.mxu0 0.0
  %5459 = vmatprep.subr.mxu0 0.0
  %5460 = vmatpush1.msra.mxu0 0.0
  %5461 = vmatprep.subr.mxu0 0.0
  %5462 = vmatpush1.msra.mxu0 0.0
  %5463 = vmatprep.subr.mxu0 0.0
  %5464 = vmatpush1.msra.mxu0 0.0
  %5465 = vmatprep.subr.mxu0 0.0
  %5466 = vmatpush1.msra.mxu0 0.0
  %5467 = vmatprep.subr.mxu0 0.0
  %5468 = vmatpush1.msra.mxu0 0.0
  %5469 = vmatprep.subr.mxu0 0.0
  %5470 = vmatpush1.msra.mxu0 0.0
  %5471 = vmatprep.subr.mxu0 0.0
  %5472 = vmatpush1.msra.mxu0 0.0
  %5473 = vmatprep.subr.mxu0 0.0
  %5474 = vmatpush1.msra.mxu0 0.0
  %5475 = vmatprep.subr.mxu0 0.0
  %5476 = vmatpush1.msra.mxu0 0.0
  %5477 = vmatprep.subr.mxu0 0.0
  %5478 = vmatpush1.msra.mxu0 0.0
  %5479 = vmatprep.subr.mxu0 0.0
  %5480 = vmatpush1.msra.mxu0 0.0
  %5481 = vmatprep.subr.mxu0 0.0
  %5482 = vmatpush1.msra.mxu0 0.0
  %5483 = vmatprep.subr.mxu0 0.0
  %5484 = vmatpush1.msra.mxu0 0.0
  %5485 = vmatprep.subr.mxu0 0.0
  %5486 = vmatpush1.msra.mxu0 0.0
  %5487 = vmatprep.subr.mxu0 0.0
  %5488 = vmatpush1.msra.mxu0 0.0
  %5489 = vmatprep.subr.mxu0 0.0
  %5490 = vmatpush1.msra.mxu0 0.0
  %5491 = vmatprep.subr.mxu0 0.0
  %5492 = vmatpush1.msra.mxu0 0.0
  %5493 = vmatprep.subr.mxu0 0.0
  %5494 = vmatpush1.msra.mxu0 0.0
  %5495 = vmatprep.subr.mxu0 0.0
  %5496 = vmatpush1.msra.mxu0 0.0
  %5497 = vmatprep.subr.mxu0 0.0
  %5498 = vmatpush1.msra.mxu0 0.0
  %5499 = vmatprep.subr.mxu0 0.0
  %5500 = vmatpush1.msra.mxu0 0.0
  %5501 = vmatprep.subr.mxu0 0.0
  %5502 = vmatpush1.msra.mxu0 0.0
  %5503 = vmatprep.mubr.f32.mxu0 0.0
  %v5504 = vand.u32 %v5349, 4294901760
  %5505 = vmatmul.mubr.f32.gmra.mrb[0].mxu0 %v5504
  %v5506 = vpop.f32.mrb[0].mxu0
  %v5507 = vadd.f32 %v5425, %v5506
  %v5508 = vpop.f32.mrb[0].mxu0
  %v5509 = vadd.f32 %v5427, %v5508
  %5510 = vdwg.mxu0
  %v5511 = vand.u32 %v5345, 4294901760
  %v5512 = vsub.f32 %v5345, %v5511
  %5513 = vmatprep.subr.mxu0 %v5512
  %v5514 = vand.u32 %v5344, 4294901760
  %v5515 = vsub.f32 %v5344, %v5514
  %5516 = vmatpush1.msra.mxu0 %v5515
  %5517 = vmatprep.subr.mxu0 0.0
  %5518 = vmatpush1.msra.mxu0 0.0
  %5519 = vmatprep.subr.mxu0 0.0
  %5520 = vmatpush1.msra.mxu0 0.0
  %5521 = vmatprep.subr.mxu0 0.0
  %5522 = vmatpush1.msra.mxu0 0.0
  %5523 = vmatprep.subr.mxu0 0.0
  %5524 = vmatpush1.msra.mxu0 0.0
  %5525 = vmatprep.subr.mxu0 0.0
  %5526 = vmatpush1.msra.mxu0 0.0
  %5527 = vmatprep.subr.mxu0 0.0
  %5528 = vmatpush1.msra.mxu0 0.0
  %5529 = vmatprep.subr.mxu0 0.0
  %5530 = vmatpush1.msra.mxu0 0.0
  %5531 = vmatprep.subr.mxu0 0.0
  %5532 = vmatpush1.msra.mxu0 0.0
  %5533 = vmatprep.subr.mxu0 0.0
  %5534 = vmatpush1.msra.mxu0 0.0
  %5535 = vmatprep.subr.mxu0 0.0
  %5536 = vmatpush1.msra.mxu0 0.0
  %5537 = vmatprep.subr.mxu0 0.0
  %5538 = vmatpush1.msra.mxu0 0.0
  %5539 = vmatprep.subr.mxu0 0.0
  %5540 = vmatpush1.msra.mxu0 0.0
  %5541 = vmatprep.subr.mxu0 0.0
  %5542 = vmatpush1.msra.mxu0 0.0
  %5543 = vmatprep.subr.mxu0 0.0
  %5544 = vmatpush1.msra.mxu0 0.0
  %5545 = vmatprep.subr.mxu0 0.0
  %5546 = vmatpush1.msra.mxu0 0.0
  %5547 = vmatprep.subr.mxu0 0.0
  %5548 = vmatpush1.msra.mxu0 0.0
  %5549 = vmatprep.subr.mxu0 0.0
  %5550 = vmatpush1.msra.mxu0 0.0
  %5551 = vmatprep.subr.mxu0 0.0
  %5552 = vmatpush1.msra.mxu0 0.0
  %5553 = vmatprep.subr.mxu0 0.0
  %5554 = vmatpush1.msra.mxu0 0.0
  %5555 = vmatprep.subr.mxu0 0.0
  %5556 = vmatpush1.msra.mxu0 0.0
  %5557 = vmatprep.subr.mxu0 0.0
  %5558 = vmatpush1.msra.mxu0 0.0
  %5559 = vmatprep.subr.mxu0 0.0
  %5560 = vmatpush1.msra.mxu0 0.0
  %5561 = vmatprep.subr.mxu0 0.0
  %5562 = vmatpush1.msra.mxu0 0.0
  %5563 = vmatprep.subr.mxu0 0.0
  %5564 = vmatpush1.msra.mxu0 0.0
  %5565 = vmatprep.subr.mxu0 0.0
  %5566 = vmatpush1.msra.mxu0 0.0
  %5567 = vmatprep.subr.mxu0 0.0
  %5568 = vmatpush1.msra.mxu0 0.0
  %5569 = vmatprep.subr.mxu0 0.0
  %5570 = vmatpush1.msra.mxu0 0.0
  %5571 = vmatprep.subr.mxu0 0.0
  %5572 = vmatpush1.msra.mxu0 0.0
  %5573 = vmatprep.subr.mxu0 0.0
  %5574 = vmatpush1.msra.mxu0 0.0
  %5575 = vmatprep.subr.mxu0 0.0
  %5576 = vmatpush1.msra.mxu0 0.0
  %5577 = vmatprep.subr.mxu0 0.0
  %5578 = vmatpush1.msra.mxu0 0.0
  %5579 = vmatprep.mubr.f32.mxu0 0.0
  %v5580 = vand.u32 %v5349, 4294901760
  %v5581 = vsub.f32 %v5349, %v5580
  %5582 = vmatmul.mubr.f32.gmra.mrb[0].mxu0 %v5581
  %v5583 = vpop.f32.mrb[0].mxu0
  %v5584 = vadd.f32 %v5507, %v5583
  %v5585 = vpop.f32.mrb[0].mxu0
  %v5586 = vadd.f32 %v5509, %v5585
  %5587 = vdwg.mxu0
  %v5588 = vand.u32 %v5345, 4294901760
  %5589 = vmatprep.subr.mxu0 %v5588
  %v5590 = vand.u32 %v5344, 4294901760
  %5591 = vmatpush1.msra.mxu0 %v5590
  %5592 = vmatprep.subr.mxu0 0.0
  %5593 = vmatpush1.msra.mxu0 0.0
  %5594 = vmatprep.subr.mxu0 0.0
  %5595 = vmatpush1.msra.mxu0 0.0
  %5596 = vmatprep.subr.mxu0 0.0
  %5597 = vmatpush1.msra.mxu0 0.0
  %5598 = vmatprep.subr.mxu0 0.0
  %5599 = vmatpush1.msra.mxu0 0.0
  %5600 = vmatprep.subr.mxu0 0.0
  %5601 = vmatpush1.msra.mxu0 0.0
  %5602 = vmatprep.subr.mxu0 0.0
  %5603 = vmatpush1.msra.mxu0 0.0
  %5604 = vmatprep.subr.mxu0 0.0
  %5605 = vmatpush1.msra.mxu0 0.0
  %5606 = vmatprep.subr.mxu0 0.0
  %5607 = vmatpush1.msra.mxu0 0.0
  %5608 = vmatprep.subr.mxu0 0.0
  %5609 = vmatpush1.msra.mxu0 0.0
  %5610 = vmatprep.subr.mxu0 0.0
  %5611 = vmatpush1.msra.mxu0 0.0
  %5612 = vmatprep.subr.mxu0 0.0
  %5613 = vmatpush1.msra.mxu0 0.0
  %5614 = vmatprep.subr.mxu0 0.0
  %5615 = vmatpush1.msra.mxu0 0.0
  %5616 = vmatprep.subr.mxu0 0.0
  %5617 = vmatpush1.msra.mxu0 0.0
  %5618 = vmatprep.subr.mxu0 0.0
  %5619 = vmatpush1.msra.mxu0 0.0
  %5620 = vmatprep.subr.mxu0 0.0
  %5621 = vmatpush1.msra.mxu0 0.0
  %5622 = vmatprep.subr.mxu0 0.0
  %5623 = vmatpush1.msra.mxu0 0.0
  %5624 = vmatprep.subr.mxu0 0.0
  %5625 = vmatpush1.msra.mxu0 0.0
  %5626 = vmatprep.subr.mxu0 0.0
  %5627 = vmatpush1.msra.mxu0 0.0
  %5628 = vmatprep.subr.mxu0 0.0
  %5629 = vmatpush1.msra.mxu0 0.0
  %5630 = vmatprep.subr.mxu0 0.0
  %5631 = vmatpush1.msra.mxu0 0.0
  %5632 = vmatprep.subr.mxu0 0.0
  %5633 = vmatpush1.msra.mxu0 0.0
  %5634 = vmatprep.subr.mxu0 0.0
  %5635 = vmatpush1.msra.mxu0 0.0
  %5636 = vmatprep.subr.mxu0 0.0
  %5637 = vmatpush1.msra.mxu0 0.0
  %5638 = vmatprep.subr.mxu0 0.0
  %5639 = vmatpush1.msra.mxu0 0.0
  %5640 = vmatprep.subr.mxu0 0.0
  %5641 = vmatpush1.msra.mxu0 0.0
  %5642 = vmatprep.subr.mxu0 0.0
  %5643 = vmatpush1.msra.mxu0 0.0
  %5644 = vmatprep.subr.mxu0 0.0
  %5645 = vmatpush1.msra.mxu0 0.0
  %5646 = vmatprep.subr.mxu0 0.0
  %5647 = vmatpush1.msra.mxu0 0.0
  %5648 = vmatprep.subr.mxu0 0.0
  %5649 = vmatpush1.msra.mxu0 0.0
  %5650 = vmatprep.subr.mxu0 0.0
  %5651 = vmatpush1.msra.mxu0 0.0
  %5652 = vmatprep.subr.mxu0 0.0
  %5653 = vmatpush1.msra.mxu0 0.0
  %5654 = vmatprep.mubr.f32.mxu0 0.0
  %v5655 = vand.u32 %v5349, 4294901760
  %v5656 = vsub.f32 %v5349, %v5655
  %v5657 = vand.u32 %v5656, 4294901760
  %5658 = vmatmul.mubr.f32.gmra.mrb[0].mxu0 %v5657
  %v5659 = vpop.f32.mrb[0].mxu0
  %v5660 = vadd.f32 %v5584, %v5659
  %v5661 = vpop.f32.mrb[0].mxu0
  %v5662 = vadd.f32 %v5586, %v5661
  %5663 = vdwg.mxu0
  %v5664 = vand.u32 %v5345, 4294901760
  %v5665 = vsub.f32 %v5345, %v5664
  %v5666 = vand.u32 %v5665, 4294901760
  %5667 = vmatprep.subr.mxu0 %v5666
  %v5668 = vand.u32 %v5344, 4294901760
  %v5669 = vsub.f32 %v5344, %v5668
  %v5670 = vand.u32 %v5669, 4294901760
  %5671 = vmatpush1.msra.mxu0 %v5670
  %5672 = vmatprep.subr.mxu0 0.0
  %5673 = vmatpush1.msra.mxu0 0.0
  %5674 = vmatprep.subr.mxu0 0.0
  %5675 = vmatpush1.msra.mxu0 0.0
  %5676 = vmatprep.subr.mxu0 0.0
  %5677 = vmatpush1.msra.mxu0 0.0
  %5678 = vmatprep.subr.mxu0 0.0
  %5679 = vmatpush1.msra.mxu0 0.0
  %5680 = vmatprep.subr.mxu0 0.0
  %5681 = vmatpush1.msra.mxu0 0.0
  %5682 = vmatprep.subr.mxu0 0.0
  %5683 = vmatpush1.msra.mxu0 0.0
  %5684 = vmatprep.subr.mxu0 0.0
  %5685 = vmatpush1.msra.mxu0 0.0
  %5686 = vmatprep.subr.mxu0 0.0
  %5687 = vmatpush1.msra.mxu0 0.0
  %5688 = vmatprep.subr.mxu0 0.0
  %5689 = vmatpush1.msra.mxu0 0.0
  %5690 = vmatprep.subr.mxu0 0.0
  %5691 = vmatpush1.msra.mxu0 0.0
  %5692 = vmatprep.subr.mxu0 0.0
  %5693 = vmatpush1.msra.mxu0 0.0
  %5694 = vmatprep.subr.mxu0 0.0
  %5695 = vmatpush1.msra.mxu0 0.0
  %5696 = vmatprep.subr.mxu0 0.0
  %5697 = vmatpush1.msra.mxu0 0.0
  %5698 = vmatprep.subr.mxu0 0.0
  %5699 = vmatpush1.msra.mxu0 0.0
  %5700 = vmatprep.subr.mxu0 0.0
  %5701 = vmatpush1.msra.mxu0 0.0
  %5702 = vmatprep.subr.mxu0 0.0
  %5703 = vmatpush1.msra.mxu0 0.0
  %5704 = vmatprep.subr.mxu0 0.0
  %5705 = vmatpush1.msra.mxu0 0.0
  %5706 = vmatprep.subr.mxu0 0.0
  %5707 = vmatpush1.msra.mxu0 0.0
  %5708 = vmatprep.subr.mxu0 0.0
  %5709 = vmatpush1.msra.mxu0 0.0
  %5710 = vmatprep.subr.mxu0 0.0
  %5711 = vmatpush1.msra.mxu0 0.0
  %5712 = vmatprep.subr.mxu0 0.0
  %5713 = vmatpush1.msra.mxu0 0.0
  %5714 = vmatprep.subr.mxu0 0.0
  %5715 = vmatpush1.msra.mxu0 0.0
  %5716 = vmatprep.subr.mxu0 0.0
  %5717 = vmatpush1.msra.mxu0 0.0
  %5718 = vmatprep.subr.mxu0 0.0
  %5719 = vmatpush1.msra.mxu0 0.0
  %5720 = vmatprep.subr.mxu0 0.0
  %5721 = vmatpush1.msra.mxu0 0.0
  %5722 = vmatprep.subr.mxu0 0.0
  %5723 = vmatpush1.msra.mxu0 0.0
  %5724 = vmatprep.subr.mxu0 0.0
  %5725 = vmatpush1.msra.mxu0 0.0
  %5726 = vmatprep.subr.mxu0 0.0
  %5727 = vmatpush1.msra.mxu0 0.0
  %5728 = vmatprep.subr.mxu0 0.0
  %5729 = vmatpush1.msra.mxu0 0.0
  %5730 = vmatprep.subr.mxu0 0.0
  %5731 = vmatpush1.msra.mxu0 0.0
  %5732 = vmatprep.subr.mxu0 0.0
  %5733 = vmatpush1.msra.mxu0 0.0
  %5734 = vmatprep.mubr.f32.mxu0 0.0
  %v5735 = vand.u32 %v5349, 4294901760
  %5736 = vmatmul.mubr.f32.gmra.mrb[0].mxu0 %v5735
  %v5737 = vpop.f32.mrb[0].mxu0
  %v5738 = vadd.f32 %v5660, %v5737
  %v5739 = vpop.f32.mrb[0].mxu0
  %v5740 = vadd.f32 %v5662, %v5739
  %5741 = vdwg.mxu0
  %v5742 = vand.u32 %v5345, 4294901760
  %5743 = vmatprep.subr.mxu0 %v5742
  %v5744 = vand.u32 %v5344, 4294901760
  %5745 = vmatpush1.msra.mxu0 %v5744
  %5746 = vmatprep.subr.mxu0 0.0
  %5747 = vmatpush1.msra.mxu0 0.0
  %5748 = vmatprep.subr.mxu0 0.0
  %5749 = vmatpush1.msra.mxu0 0.0
  %5750 = vmatprep.subr.mxu0 0.0
  %5751 = vmatpush1.msra.mxu0 0.0
  %5752 = vmatprep.subr.mxu0 0.0
  %5753 = vmatpush1.msra.mxu0 0.0
  %5754 = vmatprep.subr.mxu0 0.0
  %5755 = vmatpush1.msra.mxu0 0.0
  %5756 = vmatprep.subr.mxu0 0.0
  %5757 = vmatpush1.msra.mxu0 0.0
  %5758 = vmatprep.subr.mxu0 0.0
  %5759 = vmatpush1.msra.mxu0 0.0
  %5760 = vmatprep.subr.mxu0 0.0
  %5761 = vmatpush1.msra.mxu0 0.0
  %5762 = vmatprep.subr.mxu0 0.0
  %5763 = vmatpush1.msra.mxu0 0.0
  %5764 = vmatprep.subr.mxu0 0.0
  %5765 = vmatpush1.msra.mxu0 0.0
  %5766 = vmatprep.subr.mxu0 0.0
  %5767 = vmatpush1.msra.mxu0 0.0
  %5768 = vmatprep.subr.mxu0 0.0
  %5769 = vmatpush1.msra.mxu0 0.0
  %5770 = vmatprep.subr.mxu0 0.0
  %5771 = vmatpush1.msra.mxu0 0.0
  %5772 = vmatprep.subr.mxu0 0.0
  %5773 = vmatpush1.msra.mxu0 0.0
  %5774 = vmatprep.subr.mxu0 0.0
  %5775 = vmatpush1.msra.mxu0 0.0
  %5776 = vmatprep.subr.mxu0 0.0
  %5777 = vmatpush1.msra.mxu0 0.0
  %5778 = vmatprep.subr.mxu0 0.0
  %5779 = vmatpush1.msra.mxu0 0.0
  %5780 = vmatprep.subr.mxu0 0.0
  %5781 = vmatpush1.msra.mxu0 0.0
  %5782 = vmatprep.subr.mxu0 0.0
  %5783 = vmatpush1.msra.mxu0 0.0
  %5784 = vmatprep.subr.mxu0 0.0
  %5785 = vmatpush1.msra.mxu0 0.0
  %5786 = vmatprep.subr.mxu0 0.0
  %5787 = vmatpush1.msra.mxu0 0.0
  %5788 = vmatprep.subr.mxu0 0.0
  %5789 = vmatpush1.msra.mxu0 0.0
  %5790 = vmatprep.subr.mxu0 0.0
  %5791 = vmatpush1.msra.mxu0 0.0
  %5792 = vmatprep.subr.mxu0 0.0
  %5793 = vmatpush1.msra.mxu0 0.0
  %5794 = vmatprep.subr.mxu0 0.0
  %5795 = vmatpush1.msra.mxu0 0.0
  %5796 = vmatprep.subr.mxu0 0.0
  %5797 = vmatpush1.msra.mxu0 0.0
  %5798 = vmatprep.subr.mxu0 0.0
  %5799 = vmatpush1.msra.mxu0 0.0
  %5800 = vmatprep.subr.mxu0 0.0
  %5801 = vmatpush1.msra.mxu0 0.0
  %5802 = vmatprep.subr.mxu0 0.0
  %5803 = vmatpush1.msra.mxu0 0.0
  %5804 = vmatprep.subr.mxu0 0.0
  %5805 = vmatpush1.msra.mxu0 0.0
  %5806 = vmatprep.subr.mxu0 0.0
  %5807 = vmatpush1.msra.mxu0 0.0
  %5808 = vmatprep.mubr.f32.mxu0 0.0
  %v5809 = vand.u32 %v5349, 4294901760
  %5810 = vmatmul.mubr.f32.gmra.mrb[0].mxu0 %v5809
  %v5811 = vpop.f32.mrb[0].mxu0
  %v5812 = vadd.f32 %v5738, %v5811
  %v5813 = vpop.f32.mrb[0].mxu0
  %v5814 = vadd.f32 %v5740, %v5813
  %5815 = vdwg.mxu0
  %v5816 = vadd.f32 %v5336, %v5812
  %v5817 = vadd.f32 %v5337, %v5814
  %5818 = vrot.lane.b32.xlu0 %v4371, 1
  %v5819 = vpop.permute.xlu0 %5818
  %5820 = vrot.lane.b32.xlu0 %v4372, 1
  %v5821 = vpop.permute.xlu0 %5820
  %v5822 = vsel %vm1498, %v5819, %v5821
  %v5823 = vsel %vm1498, %v5821, %v5819
  %v5824 = vsel %vm29, %v5823, 0.0
  %v5825 = vsel %vm30, %v5822, 0.0
  %s5826 = scalar_lea.vmem %s3, 24
  %v5827 = vld [vmem:[%s5826] sm:$0xff]
  %v5829 = vsel %vm61, %v5827, 0
  %v5831 = vand.u32 %v5825, 4294901760
  %5832 = vmatprep.subr.mxu0 %v5831
  %v5833 = vand.u32 %v5824, 4294901760
  %5834 = vmatpush1.msra.mxu0 %v5833
  %5835 = vmatprep.subr.mxu0 0.0
  %5836 = vmatpush1.msra.mxu0 0.0
  %5837 = vmatprep.subr.mxu0 0.0
  %5838 = vmatpush1.msra.mxu0 0.0
  %5839 = vmatprep.subr.mxu0 0.0
  %5840 = vmatpush1.msra.mxu0 0.0
  %5841 = vmatprep.subr.mxu0 0.0
  %5842 = vmatpush1.msra.mxu0 0.0
  %5843 = vmatprep.subr.mxu0 0.0
  %5844 = vmatpush1.msra.mxu0 0.0
  %5845 = vmatprep.subr.mxu0 0.0
  %5846 = vmatpush1.msra.mxu0 0.0
  %5847 = vmatprep.subr.mxu0 0.0
  %5848 = vmatpush1.msra.mxu0 0.0
  %5849 = vmatprep.subr.mxu0 0.0
  %5850 = vmatpush1.msra.mxu0 0.0
  %5851 = vmatprep.subr.mxu0 0.0
  %5852 = vmatpush1.msra.mxu0 0.0
  %5853 = vmatprep.subr.mxu0 0.0
  %5854 = vmatpush1.msra.mxu0 0.0
  %5855 = vmatprep.subr.mxu0 0.0
  %5856 = vmatpush1.msra.mxu0 0.0
  %5857 = vmatprep.subr.mxu0 0.0
  %5858 = vmatpush1.msra.mxu0 0.0
  %5859 = vmatprep.subr.mxu0 0.0
  %5860 = vmatpush1.msra.mxu0 0.0
  %5861 = vmatprep.subr.mxu0 0.0
  %5862 = vmatpush1.msra.mxu0 0.0
  %5863 = vmatprep.subr.mxu0 0.0
  %5864 = vmatpush1.msra.mxu0 0.0
  %5865 = vmatprep.subr.mxu0 0.0
  %5866 = vmatpush1.msra.mxu0 0.0
  %5867 = vmatprep.subr.mxu0 0.0
  %5868 = vmatpush1.msra.mxu0 0.0
  %5869 = vmatprep.subr.mxu0 0.0
  %5870 = vmatpush1.msra.mxu0 0.0
  %5871 = vmatprep.subr.mxu0 0.0
  %5872 = vmatpush1.msra.mxu0 0.0
  %5873 = vmatprep.subr.mxu0 0.0
  %5874 = vmatpush1.msra.mxu0 0.0
  %5875 = vmatprep.subr.mxu0 0.0
  %5876 = vmatpush1.msra.mxu0 0.0
  %5877 = vmatprep.subr.mxu0 0.0
  %5878 = vmatpush1.msra.mxu0 0.0
  %5879 = vmatprep.subr.mxu0 0.0
  %5880 = vmatpush1.msra.mxu0 0.0
  %5881 = vmatprep.subr.mxu0 0.0
  %5882 = vmatpush1.msra.mxu0 0.0
  %5883 = vmatprep.subr.mxu0 0.0
  %5884 = vmatpush1.msra.mxu0 0.0
  %5885 = vmatprep.subr.mxu0 0.0
  %5886 = vmatpush1.msra.mxu0 0.0
  %5887 = vmatprep.subr.mxu0 0.0
  %5888 = vmatpush1.msra.mxu0 0.0
  %5889 = vmatprep.subr.mxu0 0.0
  %5890 = vmatpush1.msra.mxu0 0.0
  %5891 = vmatprep.subr.mxu0 0.0
  %5892 = vmatpush1.msra.mxu0 0.0
  %5893 = vmatprep.subr.mxu0 0.0
  %5894 = vmatpush1.msra.mxu0 0.0
  %5895 = vmatprep.subr.mxu0 0.0
  %5896 = vmatpush1.msra.mxu0 0.0
  %5897 = vmatprep.mubr.f32.mxu0 0.0
  %v5898 = vand.u32 %v5829, 4294901760
  %v5899 = vsub.f32 %v5829, %v5898
  %v5900 = vand.u32 %v5899, 4294901760
  %v5901 = vsub.f32 %v5899, %v5900
  %v5902 = vand.u32 %v5901, 4294901760
  %5903 = vmatmul.mubr.f32.gmra.mrb[0].mxu0 %v5902
  %v5904 = vpop.f32.mrb[0].mxu0
  %v5905 = vadd.f32 0.0, %v5904
  %v5906 = vpop.f32.mrb[0].mxu0
  %v5907 = vadd.f32 0.0, %v5906
  %5908 = vdwg.mxu0
  %v5909 = vand.u32 %v5825, 4294901760
  %v5910 = vsub.f32 %v5825, %v5909
  %v5911 = vand.u32 %v5910, 4294901760
  %v5912 = vsub.f32 %v5910, %v5911
  %v5913 = vand.u32 %v5912, 4294901760
  %5914 = vmatprep.subr.mxu0 %v5913
  %v5915 = vand.u32 %v5824, 4294901760
  %v5916 = vsub.f32 %v5824, %v5915
  %v5917 = vand.u32 %v5916, 4294901760
  %v5918 = vsub.f32 %v5916, %v5917
  %v5919 = vand.u32 %v5918, 4294901760
  %5920 = vmatpush1.msra.mxu0 %v5919
  %5921 = vmatprep.subr.mxu0 0.0
  %5922 = vmatpush1.msra.mxu0 0.0
  %5923 = vmatprep.subr.mxu0 0.0
  %5924 = vmatpush1.msra.mxu0 0.0
  %5925 = vmatprep.subr.mxu0 0.0
  %5926 = vmatpush1.msra.mxu0 0.0
  %5927 = vmatprep.subr.mxu0 0.0
  %5928 = vmatpush1.msra.mxu0 0.0
  %5929 = vmatprep.subr.mxu0 0.0
  %5930 = vmatpush1.msra.mxu0 0.0
  %5931 = vmatprep.subr.mxu0 0.0
  %5932 = vmatpush1.msra.mxu0 0.0
  %5933 = vmatprep.subr.mxu0 0.0
  %5934 = vmatpush1.msra.mxu0 0.0
  %5935 = vmatprep.subr.mxu0 0.0
  %5936 = vmatpush1.msra.mxu0 0.0
  %5937 = vmatprep.subr.mxu0 0.0
  %5938 = vmatpush1.msra.mxu0 0.0
  %5939 = vmatprep.subr.mxu0 0.0
  %5940 = vmatpush1.msra.mxu0 0.0
  %5941 = vmatprep.subr.mxu0 0.0
  %5942 = vmatpush1.msra.mxu0 0.0
  %5943 = vmatprep.subr.mxu0 0.0
  %5944 = vmatpush1.msra.mxu0 0.0
  %5945 = vmatprep.subr.mxu0 0.0
  %5946 = vmatpush1.msra.mxu0 0.0
  %5947 = vmatprep.subr.mxu0 0.0
  %5948 = vmatpush1.msra.mxu0 0.0
  %5949 = vmatprep.subr.mxu0 0.0
  %5950 = vmatpush1.msra.mxu0 0.0
  %5951 = vmatprep.subr.mxu0 0.0
  %5952 = vmatpush1.msra.mxu0 0.0
  %5953 = vmatprep.subr.mxu0 0.0
  %5954 = vmatpush1.msra.mxu0 0.0
  %5955 = vmatprep.subr.mxu0 0.0
  %5956 = vmatpush1.msra.mxu0 0.0
  %5957 = vmatprep.subr.mxu0 0.0
  %5958 = vmatpush1.msra.mxu0 0.0
  %5959 = vmatprep.subr.mxu0 0.0
  %5960 = vmatpush1.msra.mxu0 0.0
  %5961 = vmatprep.subr.mxu0 0.0
  %5962 = vmatpush1.msra.mxu0 0.0
  %5963 = vmatprep.subr.mxu0 0.0
  %5964 = vmatpush1.msra.mxu0 0.0
  %5965 = vmatprep.subr.mxu0 0.0
  %5966 = vmatpush1.msra.mxu0 0.0
  %5967 = vmatprep.subr.mxu0 0.0
  %5968 = vmatpush1.msra.mxu0 0.0
  %5969 = vmatprep.subr.mxu0 0.0
  %5970 = vmatpush1.msra.mxu0 0.0
  %5971 = vmatprep.subr.mxu0 0.0
  %5972 = vmatpush1.msra.mxu0 0.0
  %5973 = vmatprep.subr.mxu0 0.0
  %5974 = vmatpush1.msra.mxu0 0.0
  %5975 = vmatprep.subr.mxu0 0.0
  %5976 = vmatpush1.msra.mxu0 0.0
  %5977 = vmatprep.subr.mxu0 0.0
  %5978 = vmatpush1.msra.mxu0 0.0
  %5979 = vmatprep.subr.mxu0 0.0
  %5980 = vmatpush1.msra.mxu0 0.0
  %5981 = vmatprep.subr.mxu0 0.0
  %5982 = vmatpush1.msra.mxu0 0.0
  %5983 = vmatprep.mubr.f32.mxu0 0.0
  %v5984 = vand.u32 %v5829, 4294901760
  %5985 = vmatmul.mubr.f32.gmra.mrb[0].mxu0 %v5984
  %v5986 = vpop.f32.mrb[0].mxu0
  %v5987 = vadd.f32 %v5905, %v5986
  %v5988 = vpop.f32.mrb[0].mxu0
  %v5989 = vadd.f32 %v5907, %v5988
  %5990 = vdwg.mxu0
  %v5991 = vand.u32 %v5825, 4294901760
  %v5992 = vsub.f32 %v5825, %v5991
  %5993 = vmatprep.subr.mxu0 %v5992
  %v5994 = vand.u32 %v5824, 4294901760
  %v5995 = vsub.f32 %v5824, %v5994
  %5996 = vmatpush1.msra.mxu0 %v5995
  %5997 = vmatprep.subr.mxu0 0.0
  %5998 = vmatpush1.msra.mxu0 0.0
  %5999 = vmatprep.subr.mxu0 0.0
  %6000 = vmatpush1.msra.mxu0 0.0
  %6001 = vmatprep.subr.mxu0 0.0
  %6002 = vmatpush1.msra.mxu0 0.0
  %6003 = vmatprep.subr.mxu0 0.0
  %6004 = vmatpush1.msra.mxu0 0.0
  %6005 = vmatprep.subr.mxu0 0.0
  %6006 = vmatpush1.msra.mxu0 0.0
  %6007 = vmatprep.subr.mxu0 0.0
  %6008 = vmatpush1.msra.mxu0 0.0
  %6009 = vmatprep.subr.mxu0 0.0
  %6010 = vmatpush1.msra.mxu0 0.0
  %6011 = vmatprep.subr.mxu0 0.0
  %6012 = vmatpush1.msra.mxu0 0.0
  %6013 = vmatprep.subr.mxu0 0.0
  %6014 = vmatpush1.msra.mxu0 0.0
  %6015 = vmatprep.subr.mxu0 0.0
  %6016 = vmatpush1.msra.mxu0 0.0
  %6017 = vmatprep.subr.mxu0 0.0
  %6018 = vmatpush1.msra.mxu0 0.0
  %6019 = vmatprep.subr.mxu0 0.0
  %6020 = vmatpush1.msra.mxu0 0.0
  %6021 = vmatprep.subr.mxu0 0.0
  %6022 = vmatpush1.msra.mxu0 0.0
  %6023 = vmatprep.subr.mxu0 0.0
  %6024 = vmatpush1.msra.mxu0 0.0
  %6025 = vmatprep.subr.mxu0 0.0
  %6026 = vmatpush1.msra.mxu0 0.0
  %6027 = vmatprep.subr.mxu0 0.0
  %6028 = vmatpush1.msra.mxu0 0.0
  %6029 = vmatprep.subr.mxu0 0.0
  %6030 = vmatpush1.msra.mxu0 0.0
  %6031 = vmatprep.subr.mxu0 0.0
  %6032 = vmatpush1.msra.mxu0 0.0
  %6033 = vmatprep.subr.mxu0 0.0
  %6034 = vmatpush1.msra.mxu0 0.0
  %6035 = vmatprep.subr.mxu0 0.0
  %6036 = vmatpush1.msra.mxu0 0.0
  %6037 = vmatprep.subr.mxu0 0.0
  %6038 = vmatpush1.msra.mxu0 0.0
  %6039 = vmatprep.subr.mxu0 0.0
  %6040 = vmatpush1.msra.mxu0 0.0
  %6041 = vmatprep.subr.mxu0 0.0
  %6042 = vmatpush1.msra.mxu0 0.0
  %6043 = vmatprep.subr.mxu0 0.0
  %6044 = vmatpush1.msra.mxu0 0.0
  %6045 = vmatprep.subr.mxu0 0.0
  %6046 = vmatpush1.msra.mxu0 0.0
  %6047 = vmatprep.subr.mxu0 0.0
  %6048 = vmatpush1.msra.mxu0 0.0
  %6049 = vmatprep.subr.mxu0 0.0
  %6050 = vmatpush1.msra.mxu0 0.0
  %6051 = vmatprep.subr.mxu0 0.0
  %6052 = vmatpush1.msra.mxu0 0.0
  %6053 = vmatprep.subr.mxu0 0.0
  %6054 = vmatpush1.msra.mxu0 0.0
  %6055 = vmatprep.subr.mxu0 0.0
  %6056 = vmatpush1.msra.mxu0 0.0
  %6057 = vmatprep.subr.mxu0 0.0
  %6058 = vmatpush1.msra.mxu0 0.0
  %6059 = vmatprep.mubr.f32.mxu0 0.0
  %v6060 = vand.u32 %v5829, 4294901760
  %v6061 = vsub.f32 %v5829, %v6060
  %6062 = vmatmul.mubr.f32.gmra.mrb[0].mxu0 %v6061
  %v6063 = vpop.f32.mrb[0].mxu0
  %v6064 = vadd.f32 %v5987, %v6063
  %v6065 = vpop.f32.mrb[0].mxu0
  %v6066 = vadd.f32 %v5989, %v6065
  %6067 = vdwg.mxu0
  %v6068 = vand.u32 %v5825, 4294901760
  %6069 = vmatprep.subr.mxu0 %v6068
  %v6070 = vand.u32 %v5824, 4294901760
  %6071 = vmatpush1.msra.mxu0 %v6070
  %6072 = vmatprep.subr.mxu0 0.0
  %6073 = vmatpush1.msra.mxu0 0.0
  %6074 = vmatprep.subr.mxu0 0.0
  %6075 = vmatpush1.msra.mxu0 0.0
  %6076 = vmatprep.subr.mxu0 0.0
  %6077 = vmatpush1.msra.mxu0 0.0
  %6078 = vmatprep.subr.mxu0 0.0
  %6079 = vmatpush1.msra.mxu0 0.0
  %6080 = vmatprep.subr.mxu0 0.0
  %6081 = vmatpush1.msra.mxu0 0.0
  %6082 = vmatprep.subr.mxu0 0.0
  %6083 = vmatpush1.msra.mxu0 0.0
  %6084 = vmatprep.subr.mxu0 0.0
  %6085 = vmatpush1.msra.mxu0 0.0
  %6086 = vmatprep.subr.mxu0 0.0
  %6087 = vmatpush1.msra.mxu0 0.0
  %6088 = vmatprep.subr.mxu0 0.0
  %6089 = vmatpush1.msra.mxu0 0.0
  %6090 = vmatprep.subr.mxu0 0.0
  %6091 = vmatpush1.msra.mxu0 0.0
  %6092 = vmatprep.subr.mxu0 0.0
  %6093 = vmatpush1.msra.mxu0 0.0
  %6094 = vmatprep.subr.mxu0 0.0
  %6095 = vmatpush1.msra.mxu0 0.0
  %6096 = vmatprep.subr.mxu0 0.0
  %6097 = vmatpush1.msra.mxu0 0.0
  %6098 = vmatprep.subr.mxu0 0.0
  %6099 = vmatpush1.msra.mxu0 0.0
  %6100 = vmatprep.subr.mxu0 0.0
  %6101 = vmatpush1.msra.mxu0 0.0
  %6102 = vmatprep.subr.mxu0 0.0
  %6103 = vmatpush1.msra.mxu0 0.0
  %6104 = vmatprep.subr.mxu0 0.0
  %6105 = vmatpush1.msra.mxu0 0.0
  %6106 = vmatprep.subr.mxu0 0.0
  %6107 = vmatpush1.msra.mxu0 0.0
  %6108 = vmatprep.subr.mxu0 0.0
  %6109 = vmatpush1.msra.mxu0 0.0
  %6110 = vmatprep.subr.mxu0 0.0
  %6111 = vmatpush1.msra.mxu0 0.0
  %6112 = vmatprep.subr.mxu0 0.0
  %6113 = vmatpush1.msra.mxu0 0.0
  %6114 = vmatprep.subr.mxu0 0.0
  %6115 = vmatpush1.msra.mxu0 0.0
  %6116 = vmatprep.subr.mxu0 0.0
  %6117 = vmatpush1.msra.mxu0 0.0
  %6118 = vmatprep.subr.mxu0 0.0
  %6119 = vmatpush1.msra.mxu0 0.0
  %6120 = vmatprep.subr.mxu0 0.0
  %6121 = vmatpush1.msra.mxu0 0.0
  %6122 = vmatprep.subr.mxu0 0.0
  %6123 = vmatpush1.msra.mxu0 0.0
  %6124 = vmatprep.subr.mxu0 0.0
  %6125 = vmatpush1.msra.mxu0 0.0
  %6126 = vmatprep.subr.mxu0 0.0
  %6127 = vmatpush1.msra.mxu0 0.0
  %6128 = vmatprep.subr.mxu0 0.0
  %6129 = vmatpush1.msra.mxu0 0.0
  %6130 = vmatprep.subr.mxu0 0.0
  %6131 = vmatpush1.msra.mxu0 0.0
  %6132 = vmatprep.subr.mxu0 0.0
  %6133 = vmatpush1.msra.mxu0 0.0
  %6134 = vmatprep.mubr.f32.mxu0 0.0
  %v6135 = vand.u32 %v5829, 4294901760
  %v6136 = vsub.f32 %v5829, %v6135
  %v6137 = vand.u32 %v6136, 4294901760
  %6138 = vmatmul.mubr.f32.gmra.mrb[0].mxu0 %v6137
  %v6139 = vpop.f32.mrb[0].mxu0
  %v6140 = vadd.f32 %v6064, %v6139
  %v6141 = vpop.f32.mrb[0].mxu0
  %v6142 = vadd.f32 %v6066, %v6141
  %6143 = vdwg.mxu0
  %v6144 = vand.u32 %v5825, 4294901760
  %v6145 = vsub.f32 %v5825, %v6144
  %v6146 = vand.u32 %v6145, 4294901760
  %6147 = vmatprep.subr.mxu0 %v6146
  %v6148 = vand.u32 %v5824, 4294901760
  %v6149 = vsub.f32 %v5824, %v6148
  %v6150 = vand.u32 %v6149, 4294901760
  %6151 = vmatpush1.msra.mxu0 %v6150
  %6152 = vmatprep.subr.mxu0 0.0
  %6153 = vmatpush1.msra.mxu0 0.0
  %6154 = vmatprep.subr.mxu0 0.0
  %6155 = vmatpush1.msra.mxu0 0.0
  %6156 = vmatprep.subr.mxu0 0.0
  %6157 = vmatpush1.msra.mxu0 0.0
  %6158 = vmatprep.subr.mxu0 0.0
  %6159 = vmatpush1.msra.mxu0 0.0
  %6160 = vmatprep.subr.mxu0 0.0
  %6161 = vmatpush1.msra.mxu0 0.0
  %6162 = vmatprep.subr.mxu0 0.0
  %6163 = vmatpush1.msra.mxu0 0.0
  %6164 = vmatprep.subr.mxu0 0.0
  %6165 = vmatpush1.msra.mxu0 0.0
  %6166 = vmatprep.subr.mxu0 0.0
  %6167 = vmatpush1.msra.mxu0 0.0
  %6168 = vmatprep.subr.mxu0 0.0
  %6169 = vmatpush1.msra.mxu0 0.0
  %6170 = vmatprep.subr.mxu0 0.0
  %6171 = vmatpush1.msra.mxu0 0.0
  %6172 = vmatprep.subr.mxu0 0.0
  %6173 = vmatpush1.msra.mxu0 0.0
  %6174 = vmatprep.subr.mxu0 0.0
  %6175 = vmatpush1.msra.mxu0 0.0
  %6176 = vmatprep.subr.mxu0 0.0
  %6177 = vmatpush1.msra.mxu0 0.0
  %6178 = vmatprep.subr.mxu0 0.0
  %6179 = vmatpush1.msra.mxu0 0.0
  %6180 = vmatprep.subr.mxu0 0.0
  %6181 = vmatpush1.msra.mxu0 0.0
  %6182 = vmatprep.subr.mxu0 0.0
  %6183 = vmatpush1.msra.mxu0 0.0
  %6184 = vmatprep.subr.mxu0 0.0
  %6185 = vmatpush1.msra.mxu0 0.0
  %6186 = vmatprep.subr.mxu0 0.0
  %6187 = vmatpush1.msra.mxu0 0.0
  %6188 = vmatprep.subr.mxu0 0.0
  %6189 = vmatpush1.msra.mxu0 0.0
  %6190 = vmatprep.subr.mxu0 0.0
  %6191 = vmatpush1.msra.mxu0 0.0
  %6192 = vmatprep.subr.mxu0 0.0
  %6193 = vmatpush1.msra.mxu0 0.0
  %6194 = vmatprep.subr.mxu0 0.0
  %6195 = vmatpush1.msra.mxu0 0.0
  %6196 = vmatprep.subr.mxu0 0.0
  %6197 = vmatpush1.msra.mxu0 0.0
  %6198 = vmatprep.subr.mxu0 0.0
  %6199 = vmatpush1.msra.mxu0 0.0
  %6200 = vmatprep.subr.mxu0 0.0
  %6201 = vmatpush1.msra.mxu0 0.0
  %6202 = vmatprep.subr.mxu0 0.0
  %6203 = vmatpush1.msra.mxu0 0.0
  %6204 = vmatprep.subr.mxu0 0.0
  %6205 = vmatpush1.msra.mxu0 0.0
  %6206 = vmatprep.subr.mxu0 0.0
  %6207 = vmatpush1.msra.mxu0 0.0
  %6208 = vmatprep.subr.mxu0 0.0
  %6209 = vmatpush1.msra.mxu0 0.0
  %6210 = vmatprep.subr.mxu0 0.0
  %6211 = vmatpush1.msra.mxu0 0.0
  %6212 = vmatprep.subr.mxu0 0.0
  %6213 = vmatpush1.msra.mxu0 0.0
  %6214 = vmatprep.mubr.f32.mxu0 0.0
  %v6215 = vand.u32 %v5829, 4294901760
  %6216 = vmatmul.mubr.f32.gmra.mrb[0].mxu0 %v6215
  %v6217 = vpop.f32.mrb[0].mxu0
  %v6218 = vadd.f32 %v6140, %v6217
  %v6219 = vpop.f32.mrb[0].mxu0
  %v6220 = vadd.f32 %v6142, %v6219
  %6221 = vdwg.mxu0
  %v6222 = vand.u32 %v5825, 4294901760
  %6223 = vmatprep.subr.mxu0 %v6222
  %v6224 = vand.u32 %v5824, 4294901760
  %6225 = vmatpush1.msra.mxu0 %v6224
  %6226 = vmatprep.subr.mxu0 0.0
  %6227 = vmatpush1.msra.mxu0 0.0
  %6228 = vmatprep.subr.mxu0 0.0
  %6229 = vmatpush1.msra.mxu0 0.0
  %6230 = vmatprep.subr.mxu0 0.0
  %6231 = vmatpush1.msra.mxu0 0.0
  %6232 = vmatprep.subr.mxu0 0.0
  %6233 = vmatpush1.msra.mxu0 0.0
  %6234 = vmatprep.subr.mxu0 0.0
  %6235 = vmatpush1.msra.mxu0 0.0
  %6236 = vmatprep.subr.mxu0 0.0
  %6237 = vmatpush1.msra.mxu0 0.0
  %6238 = vmatprep.subr.mxu0 0.0
  %6239 = vmatpush1.msra.mxu0 0.0
  %6240 = vmatprep.subr.mxu0 0.0
  %6241 = vmatpush1.msra.mxu0 0.0
  %6242 = vmatprep.subr.mxu0 0.0
  %6243 = vmatpush1.msra.mxu0 0.0
  %6244 = vmatprep.subr.mxu0 0.0
  %6245 = vmatpush1.msra.mxu0 0.0
  %6246 = vmatprep.subr.mxu0 0.0
  %6247 = vmatpush1.msra.mxu0 0.0
  %6248 = vmatprep.subr.mxu0 0.0
  %6249 = vmatpush1.msra.mxu0 0.0
  %6250 = vmatprep.subr.mxu0 0.0
  %6251 = vmatpush1.msra.mxu0 0.0
  %6252 = vmatprep.subr.mxu0 0.0
  %6253 = vmatpush1.msra.mxu0 0.0
  %6254 = vmatprep.subr.mxu0 0.0
  %6255 = vmatpush1.msra.mxu0 0.0
  %6256 = vmatprep.subr.mxu0 0.0
  %6257 = vmatpush1.msra.mxu0 0.0
  %6258 = vmatprep.subr.mxu0 0.0
  %6259 = vmatpush1.msra.mxu0 0.0
  %6260 = vmatprep.subr.mxu0 0.0
  %6261 = vmatpush1.msra.mxu0 0.0
  %6262 = vmatprep.subr.mxu0 0.0
  %6263 = vmatpush1.msra.mxu0 0.0
  %6264 = vmatprep.subr.mxu0 0.0
  %6265 = vmatpush1.msra.mxu0 0.0
  %6266 = vmatprep.subr.mxu0 0.0
  %6267 = vmatpush1.msra.mxu0 0.0
  %6268 = vmatprep.subr.mxu0 0.0
  %6269 = vmatpush1.msra.mxu0 0.0
  %6270 = vmatprep.subr.mxu0 0.0
  %6271 = vmatpush1.msra.mxu0 0.0
  %6272 = vmatprep.subr.mxu0 0.0
  %6273 = vmatpush1.msra.mxu0 0.0
  %6274 = vmatprep.subr.mxu0 0.0
  %6275 = vmatpush1.msra.mxu0 0.0
  %6276 = vmatprep.subr.mxu0 0.0
  %6277 = vmatpush1.msra.mxu0 0.0
  %6278 = vmatprep.subr.mxu0 0.0
  %6279 = vmatpush1.msra.mxu0 0.0
  %6280 = vmatprep.subr.mxu0 0.0
  %6281 = vmatpush1.msra.mxu0 0.0
  %6282 = vmatprep.subr.mxu0 0.0
  %6283 = vmatpush1.msra.mxu0 0.0
  %6284 = vmatprep.subr.mxu0 0.0
  %6285 = vmatpush1.msra.mxu0 0.0
  %6286 = vmatprep.subr.mxu0 0.0
  %6287 = vmatpush1.msra.mxu0 0.0
  %6288 = vmatprep.mubr.f32.mxu0 0.0
  %v6289 = vand.u32 %v5829, 4294901760
  %6290 = vmatmul.mubr.f32.gmra.mrb[0].mxu0 %v6289
  %v6291 = vpop.f32.mrb[0].mxu0
  %v6292 = vadd.f32 %v6218, %v6291
  %v6293 = vpop.f32.mrb[0].mxu0
  %v6294 = vadd.f32 %v6220, %v6293
  %6295 = vdwg.mxu0
  %v6296 = vadd.f32 %v5816, %v6292
  %v6297 = vadd.f32 %v5817, %v6294
  %s6298 = scalar_lea.vmem %s3, 32
  %v6299 = vld [vmem:[%s6298] sm:$0xff]
  %v6301 = vsel %vm61, %v6299, 0
  %v6303 = vand.u32 %v4372, 4294901760
  %6304 = vmatprep.subr.mxu0 %v6303
  %v6305 = vand.u32 %v4371, 4294901760
  %6306 = vmatpush1.msra.mxu0 %v6305
  %6307 = vmatprep.subr.mxu0 0.0
  %6308 = vmatpush1.msra.mxu0 0.0
  %6309 = vmatprep.subr.mxu0 0.0
  %6310 = vmatpush1.msra.mxu0 0.0
  %6311 = vmatprep.subr.mxu0 0.0
  %6312 = vmatpush1.msra.mxu0 0.0
  %6313 = vmatprep.subr.mxu0 0.0
  %6314 = vmatpush1.msra.mxu0 0.0
  %6315 = vmatprep.subr.mxu0 0.0
  %6316 = vmatpush1.msra.mxu0 0.0
  %6317 = vmatprep.subr.mxu0 0.0
  %6318 = vmatpush1.msra.mxu0 0.0
  %6319 = vmatprep.subr.mxu0 0.0
  %6320 = vmatpush1.msra.mxu0 0.0
  %6321 = vmatprep.subr.mxu0 0.0
  %6322 = vmatpush1.msra.mxu0 0.0
  %6323 = vmatprep.subr.mxu0 0.0
  %6324 = vmatpush1.msra.mxu0 0.0
  %6325 = vmatprep.subr.mxu0 0.0
  %6326 = vmatpush1.msra.mxu0 0.0
  %6327 = vmatprep.subr.mxu0 0.0
  %6328 = vmatpush1.msra.mxu0 0.0
  %6329 = vmatprep.subr.mxu0 0.0
  %6330 = vmatpush1.msra.mxu0 0.0
  %6331 = vmatprep.subr.mxu0 0.0
  %6332 = vmatpush1.msra.mxu0 0.0
  %6333 = vmatprep.subr.mxu0 0.0
  %6334 = vmatpush1.msra.mxu0 0.0
  %6335 = vmatprep.subr.mxu0 0.0
  %6336 = vmatpush1.msra.mxu0 0.0
  %6337 = vmatprep.subr.mxu0 0.0
  %6338 = vmatpush1.msra.mxu0 0.0
  %6339 = vmatprep.subr.mxu0 0.0
  %6340 = vmatpush1.msra.mxu0 0.0
  %6341 = vmatprep.subr.mxu0 0.0
  %6342 = vmatpush1.msra.mxu0 0.0
  %6343 = vmatprep.subr.mxu0 0.0
  %6344 = vmatpush1.msra.mxu0 0.0
  %6345 = vmatprep.subr.mxu0 0.0
  %6346 = vmatpush1.msra.mxu0 0.0
  %6347 = vmatprep.subr.mxu0 0.0
  %6348 = vmatpush1.msra.mxu0 0.0
  %6349 = vmatprep.subr.mxu0 0.0
  %6350 = vmatpush1.msra.mxu0 0.0
  %6351 = vmatprep.subr.mxu0 0.0
  %6352 = vmatpush1.msra.mxu0 0.0
  %6353 = vmatprep.subr.mxu0 0.0
  %6354 = vmatpush1.msra.mxu0 0.0
  %6355 = vmatprep.subr.mxu0 0.0
  %6356 = vmatpush1.msra.mxu0 0.0
  %6357 = vmatprep.subr.mxu0 0.0
  %6358 = vmatpush1.msra.mxu0 0.0
  %6359 = vmatprep.subr.mxu0 0.0
  %6360 = vmatpush1.msra.mxu0 0.0
  %6361 = vmatprep.subr.mxu0 0.0
  %6362 = vmatpush1.msra.mxu0 0.0
  %6363 = vmatprep.subr.mxu0 0.0
  %6364 = vmatpush1.msra.mxu0 0.0
  %6365 = vmatprep.subr.mxu0 0.0
  %6366 = vmatpush1.msra.mxu0 0.0
  %6367 = vmatprep.subr.mxu0 0.0
  %6368 = vmatpush1.msra.mxu0 0.0
  %6369 = vmatprep.mubr.f32.mxu0 0.0
  %v6370 = vand.u32 %v6301, 4294901760
  %v6371 = vsub.f32 %v6301, %v6370
  %v6372 = vand.u32 %v6371, 4294901760
  %v6373 = vsub.f32 %v6371, %v6372
  %v6374 = vand.u32 %v6373, 4294901760
  %6375 = vmatmul.mubr.f32.gmra.mrb[0].mxu0 %v6374
  %v6376 = vpop.f32.mrb[0].mxu0
  %v6377 = vadd.f32 0.0, %v6376
  %v6378 = vpop.f32.mrb[0].mxu0
  %v6379 = vadd.f32 0.0, %v6378
  %6380 = vdwg.mxu0
  %v6381 = vand.u32 %v4372, 4294901760
  %v6382 = vsub.f32 %v4372, %v6381
  %v6383 = vand.u32 %v6382, 4294901760
  %v6384 = vsub.f32 %v6382, %v6383
  %v6385 = vand.u32 %v6384, 4294901760
  %6386 = vmatprep.subr.mxu0 %v6385
  %v6387 = vand.u32 %v4371, 4294901760
  %v6388 = vsub.f32 %v4371, %v6387
  %v6389 = vand.u32 %v6388, 4294901760
  %v6390 = vsub.f32 %v6388, %v6389
  %v6391 = vand.u32 %v6390, 4294901760
  %6392 = vmatpush1.msra.mxu0 %v6391
  %6393 = vmatprep.subr.mxu0 0.0
  %6394 = vmatpush1.msra.mxu0 0.0
  %6395 = vmatprep.subr.mxu0 0.0
  %6396 = vmatpush1.msra.mxu0 0.0
  %6397 = vmatprep.subr.mxu0 0.0
  %6398 = vmatpush1.msra.mxu0 0.0
  %6399 = vmatprep.subr.mxu0 0.0
  %6400 = vmatpush1.msra.mxu0 0.0
  %6401 = vmatprep.subr.mxu0 0.0
  %6402 = vmatpush1.msra.mxu0 0.0
  %6403 = vmatprep.subr.mxu0 0.0
  %6404 = vmatpush1.msra.mxu0 0.0
  %6405 = vmatprep.subr.mxu0 0.0
  %6406 = vmatpush1.msra.mxu0 0.0
  %6407 = vmatprep.subr.mxu0 0.0
  %6408 = vmatpush1.msra.mxu0 0.0
  %6409 = vmatprep.subr.mxu0 0.0
  %6410 = vmatpush1.msra.mxu0 0.0
  %6411 = vmatprep.subr.mxu0 0.0
  %6412 = vmatpush1.msra.mxu0 0.0
  %6413 = vmatprep.subr.mxu0 0.0
  %6414 = vmatpush1.msra.mxu0 0.0
  %6415 = vmatprep.subr.mxu0 0.0
  %6416 = vmatpush1.msra.mxu0 0.0
  %6417 = vmatprep.subr.mxu0 0.0
  %6418 = vmatpush1.msra.mxu0 0.0
  %6419 = vmatprep.subr.mxu0 0.0
  %6420 = vmatpush1.msra.mxu0 0.0
  %6421 = vmatprep.subr.mxu0 0.0
  %6422 = vmatpush1.msra.mxu0 0.0
  %6423 = vmatprep.subr.mxu0 0.0
  %6424 = vmatpush1.msra.mxu0 0.0
  %6425 = vmatprep.subr.mxu0 0.0
  %6426 = vmatpush1.msra.mxu0 0.0
  %6427 = vmatprep.subr.mxu0 0.0
  %6428 = vmatpush1.msra.mxu0 0.0
  %6429 = vmatprep.subr.mxu0 0.0
  %6430 = vmatpush1.msra.mxu0 0.0
  %6431 = vmatprep.subr.mxu0 0.0
  %6432 = vmatpush1.msra.mxu0 0.0
  %6433 = vmatprep.subr.mxu0 0.0
  %6434 = vmatpush1.msra.mxu0 0.0
  %6435 = vmatprep.subr.mxu0 0.0
  %6436 = vmatpush1.msra.mxu0 0.0
  %6437 = vmatprep.subr.mxu0 0.0
  %6438 = vmatpush1.msra.mxu0 0.0
  %6439 = vmatprep.subr.mxu0 0.0
  %6440 = vmatpush1.msra.mxu0 0.0
  %6441 = vmatprep.subr.mxu0 0.0
  %6442 = vmatpush1.msra.mxu0 0.0
  %6443 = vmatprep.subr.mxu0 0.0
  %6444 = vmatpush1.msra.mxu0 0.0
  %6445 = vmatprep.subr.mxu0 0.0
  %6446 = vmatpush1.msra.mxu0 0.0
  %6447 = vmatprep.subr.mxu0 0.0
  %6448 = vmatpush1.msra.mxu0 0.0
  %6449 = vmatprep.subr.mxu0 0.0
  %6450 = vmatpush1.msra.mxu0 0.0
  %6451 = vmatprep.subr.mxu0 0.0
  %6452 = vmatpush1.msra.mxu0 0.0
  %6453 = vmatprep.subr.mxu0 0.0
  %6454 = vmatpush1.msra.mxu0 0.0
  %6455 = vmatprep.mubr.f32.mxu0 0.0
  %v6456 = vand.u32 %v6301, 4294901760
  %6457 = vmatmul.mubr.f32.gmra.mrb[0].mxu0 %v6456
  %v6458 = vpop.f32.mrb[0].mxu0
  %v6459 = vadd.f32 %v6377, %v6458
  %v6460 = vpop.f32.mrb[0].mxu0
  %v6461 = vadd.f32 %v6379, %v6460
  %6462 = vdwg.mxu0
  %v6463 = vand.u32 %v4372, 4294901760
  %v6464 = vsub.f32 %v4372, %v6463
  %6465 = vmatprep.subr.mxu0 %v6464
  %v6466 = vand.u32 %v4371, 4294901760
  %v6467 = vsub.f32 %v4371, %v6466
  %6468 = vmatpush1.msra.mxu0 %v6467
  %6469 = vmatprep.subr.mxu0 0.0
  %6470 = vmatpush1.msra.mxu0 0.0
  %6471 = vmatprep.subr.mxu0 0.0
  %6472 = vmatpush1.msra.mxu0 0.0
  %6473 = vmatprep.subr.mxu0 0.0
  %6474 = vmatpush1.msra.mxu0 0.0
  %6475 = vmatprep.subr.mxu0 0.0
  %6476 = vmatpush1.msra.mxu0 0.0
  %6477 = vmatprep.subr.mxu0 0.0
  %6478 = vmatpush1.msra.mxu0 0.0
  %6479 = vmatprep.subr.mxu0 0.0
  %6480 = vmatpush1.msra.mxu0 0.0
  %6481 = vmatprep.subr.mxu0 0.0
  %6482 = vmatpush1.msra.mxu0 0.0
  %6483 = vmatprep.subr.mxu0 0.0
  %6484 = vmatpush1.msra.mxu0 0.0
  %6485 = vmatprep.subr.mxu0 0.0
  %6486 = vmatpush1.msra.mxu0 0.0
  %6487 = vmatprep.subr.mxu0 0.0
  %6488 = vmatpush1.msra.mxu0 0.0
  %6489 = vmatprep.subr.mxu0 0.0
  %6490 = vmatpush1.msra.mxu0 0.0
  %6491 = vmatprep.subr.mxu0 0.0
  %6492 = vmatpush1.msra.mxu0 0.0
  %6493 = vmatprep.subr.mxu0 0.0
  %6494 = vmatpush1.msra.mxu0 0.0
  %6495 = vmatprep.subr.mxu0 0.0
  %6496 = vmatpush1.msra.mxu0 0.0
  %6497 = vmatprep.subr.mxu0 0.0
  %6498 = vmatpush1.msra.mxu0 0.0
  %6499 = vmatprep.subr.mxu0 0.0
  %6500 = vmatpush1.msra.mxu0 0.0
  %6501 = vmatprep.subr.mxu0 0.0
  %6502 = vmatpush1.msra.mxu0 0.0
  %6503 = vmatprep.subr.mxu0 0.0
  %6504 = vmatpush1.msra.mxu0 0.0
  %6505 = vmatprep.subr.mxu0 0.0
  %6506 = vmatpush1.msra.mxu0 0.0
  %6507 = vmatprep.subr.mxu0 0.0
  %6508 = vmatpush1.msra.mxu0 0.0
  %6509 = vmatprep.subr.mxu0 0.0
  %6510 = vmatpush1.msra.mxu0 0.0
  %6511 = vmatprep.subr.mxu0 0.0
  %6512 = vmatpush1.msra.mxu0 0.0
  %6513 = vmatprep.subr.mxu0 0.0
  %6514 = vmatpush1.msra.mxu0 0.0
  %6515 = vmatprep.subr.mxu0 0.0
  %6516 = vmatpush1.msra.mxu0 0.0
  %6517 = vmatprep.subr.mxu0 0.0
  %6518 = vmatpush1.msra.mxu0 0.0
  %6519 = vmatprep.subr.mxu0 0.0
  %6520 = vmatpush1.msra.mxu0 0.0
  %6521 = vmatprep.subr.mxu0 0.0
  %6522 = vmatpush1.msra.mxu0 0.0
  %6523 = vmatprep.subr.mxu0 0.0
  %6524 = vmatpush1.msra.mxu0 0.0
  %6525 = vmatprep.subr.mxu0 0.0
  %6526 = vmatpush1.msra.mxu0 0.0
  %6527 = vmatprep.subr.mxu0 0.0
  %6528 = vmatpush1.msra.mxu0 0.0
  %6529 = vmatprep.subr.mxu0 0.0
  %6530 = vmatpush1.msra.mxu0 0.0
  %6531 = vmatprep.mubr.f32.mxu0 0.0
  %v6532 = vand.u32 %v6301, 4294901760
  %v6533 = vsub.f32 %v6301, %v6532
  %6534 = vmatmul.mubr.f32.gmra.mrb[0].mxu0 %v6533
  %v6535 = vpop.f32.mrb[0].mxu0
  %v6536 = vadd.f32 %v6459, %v6535
  %v6537 = vpop.f32.mrb[0].mxu0
  %v6538 = vadd.f32 %v6461, %v6537
  %6539 = vdwg.mxu0
  %v6540 = vand.u32 %v4372, 4294901760
  %6541 = vmatprep.subr.mxu0 %v6540
  %v6542 = vand.u32 %v4371, 4294901760
  %6543 = vmatpush1.msra.mxu0 %v6542
  %6544 = vmatprep.subr.mxu0 0.0
  %6545 = vmatpush1.msra.mxu0 0.0
  %6546 = vmatprep.subr.mxu0 0.0
  %6547 = vmatpush1.msra.mxu0 0.0
  %6548 = vmatprep.subr.mxu0 0.0
  %6549 = vmatpush1.msra.mxu0 0.0
  %6550 = vmatprep.subr.mxu0 0.0
  %6551 = vmatpush1.msra.mxu0 0.0
  %6552 = vmatprep.subr.mxu0 0.0
  %6553 = vmatpush1.msra.mxu0 0.0
  %6554 = vmatprep.subr.mxu0 0.0
  %6555 = vmatpush1.msra.mxu0 0.0
  %6556 = vmatprep.subr.mxu0 0.0
  %6557 = vmatpush1.msra.mxu0 0.0
  %6558 = vmatprep.subr.mxu0 0.0
  %6559 = vmatpush1.msra.mxu0 0.0
  %6560 = vmatprep.subr.mxu0 0.0
  %6561 = vmatpush1.msra.mxu0 0.0
  %6562 = vmatprep.subr.mxu0 0.0
  %6563 = vmatpush1.msra.mxu0 0.0
  %6564 = vmatprep.subr.mxu0 0.0
  %6565 = vmatpush1.msra.mxu0 0.0
  %6566 = vmatprep.subr.mxu0 0.0
  %6567 = vmatpush1.msra.mxu0 0.0
  %6568 = vmatprep.subr.mxu0 0.0
  %6569 = vmatpush1.msra.mxu0 0.0
  %6570 = vmatprep.subr.mxu0 0.0
  %6571 = vmatpush1.msra.mxu0 0.0
  %6572 = vmatprep.subr.mxu0 0.0
  %6573 = vmatpush1.msra.mxu0 0.0
  %6574 = vmatprep.subr.mxu0 0.0
  %6575 = vmatpush1.msra.mxu0 0.0
  %6576 = vmatprep.subr.mxu0 0.0
  %6577 = vmatpush1.msra.mxu0 0.0
  %6578 = vmatprep.subr.mxu0 0.0
  %6579 = vmatpush1.msra.mxu0 0.0
  %6580 = vmatprep.subr.mxu0 0.0
  %6581 = vmatpush1.msra.mxu0 0.0
  %6582 = vmatprep.subr.mxu0 0.0
  %6583 = vmatpush1.msra.mxu0 0.0
  %6584 = vmatprep.subr.mxu0 0.0
  %6585 = vmatpush1.msra.mxu0 0.0
  %6586 = vmatprep.subr.mxu0 0.0
  %6587 = vmatpush1.msra.mxu0 0.0
  %6588 = vmatprep.subr.mxu0 0.0
  %6589 = vmatpush1.msra.mxu0 0.0
  %6590 = vmatprep.subr.mxu0 0.0
  %6591 = vmatpush1.msra.mxu0 0.0
  %6592 = vmatprep.subr.mxu0 0.0
  %6593 = vmatpush1.msra.mxu0 0.0
  %6594 = vmatprep.subr.mxu0 0.0
  %6595 = vmatpush1.msra.mxu0 0.0
  %6596 = vmatprep.subr.mxu0 0.0
  %6597 = vmatpush1.msra.mxu0 0.0
  %6598 = vmatprep.subr.mxu0 0.0
  %6599 = vmatpush1.msra.mxu0 0.0
  %6600 = vmatprep.subr.mxu0 0.0
  %6601 = vmatpush1.msra.mxu0 0.0
  %6602 = vmatprep.subr.mxu0 0.0
  %6603 = vmatpush1.msra.mxu0 0.0
  %6604 = vmatprep.subr.mxu0 0.0
  %6605 = vmatpush1.msra.mxu0 0.0
  %6606 = vmatprep.mubr.f32.mxu0 0.0
  %v6607 = vand.u32 %v6301, 4294901760
  %v6608 = vsub.f32 %v6301, %v6607
  %v6609 = vand.u32 %v6608, 4294901760
  %6610 = vmatmul.mubr.f32.gmra.mrb[0].mxu0 %v6609
  %v6611 = vpop.f32.mrb[0].mxu0
  %v6612 = vadd.f32 %v6536, %v6611
  %v6613 = vpop.f32.mrb[0].mxu0
  %v6614 = vadd.f32 %v6538, %v6613
  %6615 = vdwg.mxu0
  %v6616 = vand.u32 %v4372, 4294901760
  %v6617 = vsub.f32 %v4372, %v6616
  %v6618 = vand.u32 %v6617, 4294901760
  %6619 = vmatprep.subr.mxu0 %v6618
  %v6620 = vand.u32 %v4371, 4294901760
  %v6621 = vsub.f32 %v4371, %v6620
  %v6622 = vand.u32 %v6621, 4294901760
  %6623 = vmatpush1.msra.mxu0 %v6622
  %6624 = vmatprep.subr.mxu0 0.0
  %6625 = vmatpush1.msra.mxu0 0.0
  %6626 = vmatprep.subr.mxu0 0.0
  %6627 = vmatpush1.msra.mxu0 0.0
  %6628 = vmatprep.subr.mxu0 0.0
  %6629 = vmatpush1.msra.mxu0 0.0
  %6630 = vmatprep.subr.mxu0 0.0
  %6631 = vmatpush1.msra.mxu0 0.0
  %6632 = vmatprep.subr.mxu0 0.0
  %6633 = vmatpush1.msra.mxu0 0.0
  %6634 = vmatprep.subr.mxu0 0.0
  %6635 = vmatpush1.msra.mxu0 0.0
  %6636 = vmatprep.subr.mxu0 0.0
  %6637 = vmatpush1.msra.mxu0 0.0
  %6638 = vmatprep.subr.mxu0 0.0
  %6639 = vmatpush1.msra.mxu0 0.0
  %6640 = vmatprep.subr.mxu0 0.0
  %6641 = vmatpush1.msra.mxu0 0.0
  %6642 = vmatprep.subr.mxu0 0.0
  %6643 = vmatpush1.msra.mxu0 0.0
  %6644 = vmatprep.subr.mxu0 0.0
  %6645 = vmatpush1.msra.mxu0 0.0
  %6646 = vmatprep.subr.mxu0 0.0
  %6647 = vmatpush1.msra.mxu0 0.0
  %6648 = vmatprep.subr.mxu0 0.0
  %6649 = vmatpush1.msra.mxu0 0.0
  %6650 = vmatprep.subr.mxu0 0.0
  %6651 = vmatpush1.msra.mxu0 0.0
  %6652 = vmatprep.subr.mxu0 0.0
  %6653 = vmatpush1.msra.mxu0 0.0
  %6654 = vmatprep.subr.mxu0 0.0
  %6655 = vmatpush1.msra.mxu0 0.0
  %6656 = vmatprep.subr.mxu0 0.0
  %6657 = vmatpush1.msra.mxu0 0.0
  %6658 = vmatprep.subr.mxu0 0.0
  %6659 = vmatpush1.msra.mxu0 0.0
  %6660 = vmatprep.subr.mxu0 0.0
  %6661 = vmatpush1.msra.mxu0 0.0
  %6662 = vmatprep.subr.mxu0 0.0
  %6663 = vmatpush1.msra.mxu0 0.0
  %6664 = vmatprep.subr.mxu0 0.0
  %6665 = vmatpush1.msra.mxu0 0.0
  %6666 = vmatprep.subr.mxu0 0.0
  %6667 = vmatpush1.msra.mxu0 0.0
  %6668 = vmatprep.subr.mxu0 0.0
  %6669 = vmatpush1.msra.mxu0 0.0
  %6670 = vmatprep.subr.mxu0 0.0
  %6671 = vmatpush1.msra.mxu0 0.0
  %6672 = vmatprep.subr.mxu0 0.0
  %6673 = vmatpush1.msra.mxu0 0.0
  %6674 = vmatprep.subr.mxu0 0.0
  %6675 = vmatpush1.msra.mxu0 0.0
  %6676 = vmatprep.subr.mxu0 0.0
  %6677 = vmatpush1.msra.mxu0 0.0
  %6678 = vmatprep.subr.mxu0 0.0
  %6679 = vmatpush1.msra.mxu0 0.0
  %6680 = vmatprep.subr.mxu0 0.0
  %6681 = vmatpush1.msra.mxu0 0.0
  %6682 = vmatprep.subr.mxu0 0.0
  %6683 = vmatpush1.msra.mxu0 0.0
  %6684 = vmatprep.subr.mxu0 0.0
  %6685 = vmatpush1.msra.mxu0 0.0
  %6686 = vmatprep.mubr.f32.mxu0 0.0
  %v6687 = vand.u32 %v6301, 4294901760
  %6688 = vmatmul.mubr.f32.gmra.mrb[0].mxu0 %v6687
  %v6689 = vpop.f32.mrb[0].mxu0
  %v6690 = vadd.f32 %v6612, %v6689
  %v6691 = vpop.f32.mrb[0].mxu0
  %v6692 = vadd.f32 %v6614, %v6691
  %6693 = vdwg.mxu0
  %v6694 = vand.u32 %v4372, 4294901760
  %6695 = vmatprep.subr.mxu0 %v6694
  %v6696 = vand.u32 %v4371, 4294901760
  %6697 = vmatpush1.msra.mxu0 %v6696
  %6698 = vmatprep.subr.mxu0 0.0
  %6699 = vmatpush1.msra.mxu0 0.0
  %6700 = vmatprep.subr.mxu0 0.0
  %6701 = vmatpush1.msra.mxu0 0.0
  %6702 = vmatprep.subr.mxu0 0.0
  %6703 = vmatpush1.msra.mxu0 0.0
  %6704 = vmatprep.subr.mxu0 0.0
  %6705 = vmatpush1.msra.mxu0 0.0
  %6706 = vmatprep.subr.mxu0 0.0
  %6707 = vmatpush1.msra.mxu0 0.0
  %6708 = vmatprep.subr.mxu0 0.0
  %6709 = vmatpush1.msra.mxu0 0.0
  %6710 = vmatprep.subr.mxu0 0.0
  %6711 = vmatpush1.msra.mxu0 0.0
  %6712 = vmatprep.subr.mxu0 0.0
  %6713 = vmatpush1.msra.mxu0 0.0
  %6714 = vmatprep.subr.mxu0 0.0
  %6715 = vmatpush1.msra.mxu0 0.0
  %6716 = vmatprep.subr.mxu0 0.0
  %6717 = vmatpush1.msra.mxu0 0.0
  %6718 = vmatprep.subr.mxu0 0.0
  %6719 = vmatpush1.msra.mxu0 0.0
  %6720 = vmatprep.subr.mxu0 0.0
  %6721 = vmatpush1.msra.mxu0 0.0
  %6722 = vmatprep.subr.mxu0 0.0
  %6723 = vmatpush1.msra.mxu0 0.0
  %6724 = vmatprep.subr.mxu0 0.0
  %6725 = vmatpush1.msra.mxu0 0.0
  %6726 = vmatprep.subr.mxu0 0.0
  %6727 = vmatpush1.msra.mxu0 0.0
  %6728 = vmatprep.subr.mxu0 0.0
  %6729 = vmatpush1.msra.mxu0 0.0
  %6730 = vmatprep.subr.mxu0 0.0
  %6731 = vmatpush1.msra.mxu0 0.0
  %6732 = vmatprep.subr.mxu0 0.0
  %6733 = vmatpush1.msra.mxu0 0.0
  %6734 = vmatprep.subr.mxu0 0.0
  %6735 = vmatpush1.msra.mxu0 0.0
  %6736 = vmatprep.subr.mxu0 0.0
  %6737 = vmatpush1.msra.mxu0 0.0
  %6738 = vmatprep.subr.mxu0 0.0
  %6739 = vmatpush1.msra.mxu0 0.0
  %6740 = vmatprep.subr.mxu0 0.0
  %6741 = vmatpush1.msra.mxu0 0.0
  %6742 = vmatprep.subr.mxu0 0.0
  %6743 = vmatpush1.msra.mxu0 0.0
  %6744 = vmatprep.subr.mxu0 0.0
  %6745 = vmatpush1.msra.mxu0 0.0
  %6746 = vmatprep.subr.mxu0 0.0
  %6747 = vmatpush1.msra.mxu0 0.0
  %6748 = vmatprep.subr.mxu0 0.0
  %6749 = vmatpush1.msra.mxu0 0.0
  %6750 = vmatprep.subr.mxu0 0.0
  %6751 = vmatpush1.msra.mxu0 0.0
  %6752 = vmatprep.subr.mxu0 0.0
  %6753 = vmatpush1.msra.mxu0 0.0
  %6754 = vmatprep.subr.mxu0 0.0
  %6755 = vmatpush1.msra.mxu0 0.0
  %6756 = vmatprep.subr.mxu0 0.0
  %6757 = vmatpush1.msra.mxu0 0.0
  %6758 = vmatprep.subr.mxu0 0.0
  %6759 = vmatpush1.msra.mxu0 0.0
  %6760 = vmatprep.mubr.f32.mxu0 0.0
  %v6761 = vand.u32 %v6301, 4294901760
  %6762 = vmatmul.mubr.f32.gmra.mrb[0].mxu0 %v6761
  %v6763 = vpop.f32.mrb[0].mxu0
  %v6764 = vadd.f32 %v6690, %v6763
  %v6765 = vpop.f32.mrb[0].mxu0
  %v6766 = vadd.f32 %v6692, %v6765
  %6767 = vdwg.mxu0
  %v6768 = vadd.f32 %v6296, %v6764
  %v6769 = vadd.f32 %v6297, %v6766
  %6770 = vrot.lane.b32.xlu0 %v4371, 127
  %v6771 = vpop.permute.xlu0 %6770
  %6772 = vrot.lane.b32.xlu0 %v4372, 127
  %v6773 = vpop.permute.xlu0 %6772
  %v6774 = vsel %vm2451, %v6771, %v6773
  %v6775 = vsel %vm2451, %v6773, %v6771
  %v6776 = vsel %vm33, %v6774, 0.0
  %v6777 = vsel %vm34, %v6775, 0.0
  %s6778 = scalar_lea.vmem %s3, 40
  %v6779 = vld [vmem:[%s6778] sm:$0xff]
  %v6781 = vsel %vm61, %v6779, 0
  %v6783 = vand.u32 %v6777, 4294901760
  %6784 = vmatprep.subr.mxu0 %v6783
  %v6785 = vand.u32 %v6776, 4294901760
  %6786 = vmatpush1.msra.mxu0 %v6785
  %6787 = vmatprep.subr.mxu0 0.0
  %6788 = vmatpush1.msra.mxu0 0.0
  %6789 = vmatprep.subr.mxu0 0.0
  %6790 = vmatpush1.msra.mxu0 0.0
  %6791 = vmatprep.subr.mxu0 0.0
  %6792 = vmatpush1.msra.mxu0 0.0
  %6793 = vmatprep.subr.mxu0 0.0
  %6794 = vmatpush1.msra.mxu0 0.0
  %6795 = vmatprep.subr.mxu0 0.0
  %6796 = vmatpush1.msra.mxu0 0.0
  %6797 = vmatprep.subr.mxu0 0.0
  %6798 = vmatpush1.msra.mxu0 0.0
  %6799 = vmatprep.subr.mxu0 0.0
  %6800 = vmatpush1.msra.mxu0 0.0
  %6801 = vmatprep.subr.mxu0 0.0
  %6802 = vmatpush1.msra.mxu0 0.0
  %6803 = vmatprep.subr.mxu0 0.0
  %6804 = vmatpush1.msra.mxu0 0.0
  %6805 = vmatprep.subr.mxu0 0.0
  %6806 = vmatpush1.msra.mxu0 0.0
  %6807 = vmatprep.subr.mxu0 0.0
  %6808 = vmatpush1.msra.mxu0 0.0
  %6809 = vmatprep.subr.mxu0 0.0
  %6810 = vmatpush1.msra.mxu0 0.0
  %6811 = vmatprep.subr.mxu0 0.0
  %6812 = vmatpush1.msra.mxu0 0.0
  %6813 = vmatprep.subr.mxu0 0.0
  %6814 = vmatpush1.msra.mxu0 0.0
  %6815 = vmatprep.subr.mxu0 0.0
  %6816 = vmatpush1.msra.mxu0 0.0
  %6817 = vmatprep.subr.mxu0 0.0
  %6818 = vmatpush1.msra.mxu0 0.0
  %6819 = vmatprep.subr.mxu0 0.0
  %6820 = vmatpush1.msra.mxu0 0.0
  %6821 = vmatprep.subr.mxu0 0.0
  %6822 = vmatpush1.msra.mxu0 0.0
  %6823 = vmatprep.subr.mxu0 0.0
  %6824 = vmatpush1.msra.mxu0 0.0
  %6825 = vmatprep.subr.mxu0 0.0
  %6826 = vmatpush1.msra.mxu0 0.0
  %6827 = vmatprep.subr.mxu0 0.0
  %6828 = vmatpush1.msra.mxu0 0.0
  %6829 = vmatprep.subr.mxu0 0.0
  %6830 = vmatpush1.msra.mxu0 0.0
  %6831 = vmatprep.subr.mxu0 0.0
  %6832 = vmatpush1.msra.mxu0 0.0
  %6833 = vmatprep.subr.mxu0 0.0
  %6834 = vmatpush1.msra.mxu0 0.0
  %6835 = vmatprep.subr.mxu0 0.0
  %6836 = vmatpush1.msra.mxu0 0.0
  %6837 = vmatprep.subr.mxu0 0.0
  %6838 = vmatpush1.msra.mxu0 0.0
  %6839 = vmatprep.subr.mxu0 0.0
  %6840 = vmatpush1.msra.mxu0 0.0
  %6841 = vmatprep.subr.mxu0 0.0
  %6842 = vmatpush1.msra.mxu0 0.0
  %6843 = vmatprep.subr.mxu0 0.0
  %6844 = vmatpush1.msra.mxu0 0.0
  %6845 = vmatprep.subr.mxu0 0.0
  %6846 = vmatpush1.msra.mxu0 0.0
  %6847 = vmatprep.subr.mxu0 0.0
  %6848 = vmatpush1.msra.mxu0 0.0
  %6849 = vmatprep.mubr.f32.mxu0 0.0
  %v6850 = vand.u32 %v6781, 4294901760
  %v6851 = vsub.f32 %v6781, %v6850
  %v6852 = vand.u32 %v6851, 4294901760
  %v6853 = vsub.f32 %v6851, %v6852
  %v6854 = vand.u32 %v6853, 4294901760
  %6855 = vmatmul.mubr.f32.gmra.mrb[0].mxu0 %v6854
  %v6856 = vpop.f32.mrb[0].mxu0
  %v6857 = vadd.f32 0.0, %v6856
  %v6858 = vpop.f32.mrb[0].mxu0
  %v6859 = vadd.f32 0.0, %v6858
  %6860 = vdwg.mxu0
  %v6861 = vand.u32 %v6777, 4294901760
  %v6862 = vsub.f32 %v6777, %v6861
  %v6863 = vand.u32 %v6862, 4294901760
  %v6864 = vsub.f32 %v6862, %v6863
  %v6865 = vand.u32 %v6864, 4294901760
  %6866 = vmatprep.subr.mxu0 %v6865
  %v6867 = vand.u32 %v6776, 4294901760
  %v6868 = vsub.f32 %v6776, %v6867
  %v6869 = vand.u32 %v6868, 4294901760
  %v6870 = vsub.f32 %v6868, %v6869
  %v6871 = vand.u32 %v6870, 4294901760
  %6872 = vmatpush1.msra.mxu0 %v6871
  %6873 = vmatprep.subr.mxu0 0.0
  %6874 = vmatpush1.msra.mxu0 0.0
  %6875 = vmatprep.subr.mxu0 0.0
  %6876 = vmatpush1.msra.mxu0 0.0
  %6877 = vmatprep.subr.mxu0 0.0
  %6878 = vmatpush1.msra.mxu0 0.0
  %6879 = vmatprep.subr.mxu0 0.0
  %6880 = vmatpush1.msra.mxu0 0.0
  %6881 = vmatprep.subr.mxu0 0.0
  %6882 = vmatpush1.msra.mxu0 0.0
  %6883 = vmatprep.subr.mxu0 0.0
  %6884 = vmatpush1.msra.mxu0 0.0
  %6885 = vmatprep.subr.mxu0 0.0
  %6886 = vmatpush1.msra.mxu0 0.0
  %6887 = vmatprep.subr.mxu0 0.0
  %6888 = vmatpush1.msra.mxu0 0.0
  %6889 = vmatprep.subr.mxu0 0.0
  %6890 = vmatpush1.msra.mxu0 0.0
  %6891 = vmatprep.subr.mxu0 0.0
  %6892 = vmatpush1.msra.mxu0 0.0
  %6893 = vmatprep.subr.mxu0 0.0
  %6894 = vmatpush1.msra.mxu0 0.0
  %6895 = vmatprep.subr.mxu0 0.0
  %6896 = vmatpush1.msra.mxu0 0.0
  %6897 = vmatprep.subr.mxu0 0.0
  %6898 = vmatpush1.msra.mxu0 0.0
  %6899 = vmatprep.subr.mxu0 0.0
  %6900 = vmatpush1.msra.mxu0 0.0
  %6901 = vmatprep.subr.mxu0 0.0
  %6902 = vmatpush1.msra.mxu0 0.0
  %6903 = vmatprep.subr.mxu0 0.0
  %6904 = vmatpush1.msra.mxu0 0.0
  %6905 = vmatprep.subr.mxu0 0.0
  %6906 = vmatpush1.msra.mxu0 0.0
  %6907 = vmatprep.subr.mxu0 0.0
  %6908 = vmatpush1.msra.mxu0 0.0
  %6909 = vmatprep.subr.mxu0 0.0
  %6910 = vmatpush1.msra.mxu0 0.0
  %6911 = vmatprep.subr.mxu0 0.0
  %6912 = vmatpush1.msra.mxu0 0.0
  %6913 = vmatprep.subr.mxu0 0.0
  %6914 = vmatpush1.msra.mxu0 0.0
  %6915 = vmatprep.subr.mxu0 0.0
  %6916 = vmatpush1.msra.mxu0 0.0
  %6917 = vmatprep.subr.mxu0 0.0
  %6918 = vmatpush1.msra.mxu0 0.0
  %6919 = vmatprep.subr.mxu0 0.0
  %6920 = vmatpush1.msra.mxu0 0.0
  %6921 = vmatprep.subr.mxu0 0.0
  %6922 = vmatpush1.msra.mxu0 0.0
  %6923 = vmatprep.subr.mxu0 0.0
  %6924 = vmatpush1.msra.mxu0 0.0
  %6925 = vmatprep.subr.mxu0 0.0
  %6926 = vmatpush1.msra.mxu0 0.0
  %6927 = vmatprep.subr.mxu0 0.0
  %6928 = vmatpush1.msra.mxu0 0.0
  %6929 = vmatprep.subr.mxu0 0.0
  %6930 = vmatpush1.msra.mxu0 0.0
  %6931 = vmatprep.subr.mxu0 0.0
  %6932 = vmatpush1.msra.mxu0 0.0
  %6933 = vmatprep.subr.mxu0 0.0
  %6934 = vmatpush1.msra.mxu0 0.0
  %6935 = vmatprep.mubr.f32.mxu0 0.0
  %v6936 = vand.u32 %v6781, 4294901760
  %6937 = vmatmul.mubr.f32.gmra.mrb[0].mxu0 %v6936
  %v6938 = vpop.f32.mrb[0].mxu0
  %v6939 = vadd.f32 %v6857, %v6938
  %v6940 = vpop.f32.mrb[0].mxu0
  %v6941 = vadd.f32 %v6859, %v6940
  %6942 = vdwg.mxu0
  %v6943 = vand.u32 %v6777, 4294901760
  %v6944 = vsub.f32 %v6777, %v6943
  %6945 = vmatprep.subr.mxu0 %v6944
  %v6946 = vand.u32 %v6776, 4294901760
  %v6947 = vsub.f32 %v6776, %v6946
  %6948 = vmatpush1.msra.mxu0 %v6947
  %6949 = vmatprep.subr.mxu0 0.0
  %6950 = vmatpush1.msra.mxu0 0.0
  %6951 = vmatprep.subr.mxu0 0.0
  %6952 = vmatpush1.msra.mxu0 0.0
  %6953 = vmatprep.subr.mxu0 0.0
  %6954 = vmatpush1.msra.mxu0 0.0
  %6955 = vmatprep.subr.mxu0 0.0
  %6956 = vmatpush1.msra.mxu0 0.0
  %6957 = vmatprep.subr.mxu0 0.0
  %6958 = vmatpush1.msra.mxu0 0.0
  %6959 = vmatprep.subr.mxu0 0.0
  %6960 = vmatpush1.msra.mxu0 0.0
  %6961 = vmatprep.subr.mxu0 0.0
  %6962 = vmatpush1.msra.mxu0 0.0
  %6963 = vmatprep.subr.mxu0 0.0
  %6964 = vmatpush1.msra.mxu0 0.0
  %6965 = vmatprep.subr.mxu0 0.0
  %6966 = vmatpush1.msra.mxu0 0.0
  %6967 = vmatprep.subr.mxu0 0.0
  %6968 = vmatpush1.msra.mxu0 0.0
  %6969 = vmatprep.subr.mxu0 0.0
  %6970 = vmatpush1.msra.mxu0 0.0
  %6971 = vmatprep.subr.mxu0 0.0
  %6972 = vmatpush1.msra.mxu0 0.0
  %6973 = vmatprep.subr.mxu0 0.0
  %6974 = vmatpush1.msra.mxu0 0.0
  %6975 = vmatprep.subr.mxu0 0.0
  %6976 = vmatpush1.msra.mxu0 0.0
  %6977 = vmatprep.subr.mxu0 0.0
  %6978 = vmatpush1.msra.mxu0 0.0
  %6979 = vmatprep.subr.mxu0 0.0
  %6980 = vmatpush1.msra.mxu0 0.0
  %6981 = vmatprep.subr.mxu0 0.0
  %6982 = vmatpush1.msra.mxu0 0.0
  %6983 = vmatprep.subr.mxu0 0.0
  %6984 = vmatpush1.msra.mxu0 0.0
  %6985 = vmatprep.subr.mxu0 0.0
  %6986 = vmatpush1.msra.mxu0 0.0
  %6987 = vmatprep.subr.mxu0 0.0
  %6988 = vmatpush1.msra.mxu0 0.0
  %6989 = vmatprep.subr.mxu0 0.0
  %6990 = vmatpush1.msra.mxu0 0.0
  %6991 = vmatprep.subr.mxu0 0.0
  %6992 = vmatpush1.msra.mxu0 0.0
  %6993 = vmatprep.subr.mxu0 0.0
  %6994 = vmatpush1.msra.mxu0 0.0
  %6995 = vmatprep.subr.mxu0 0.0
  %6996 = vmatpush1.msra.mxu0 0.0
  %6997 = vmatprep.subr.mxu0 0.0
  %6998 = vmatpush1.msra.mxu0 0.0
  %6999 = vmatprep.subr.mxu0 0.0
  %7000 = vmatpush1.msra.mxu0 0.0
  %7001 = vmatprep.subr.mxu0 0.0
  %7002 = vmatpush1.msra.mxu0 0.0
  %7003 = vmatprep.subr.mxu0 0.0
  %7004 = vmatpush1.msra.mxu0 0.0
  %7005 = vmatprep.subr.mxu0 0.0
  %7006 = vmatpush1.msra.mxu0 0.0
  %7007 = vmatprep.subr.mxu0 0.0
  %7008 = vmatpush1.msra.mxu0 0.0
  %7009 = vmatprep.subr.mxu0 0.0
  %7010 = vmatpush1.msra.mxu0 0.0
  %7011 = vmatprep.mubr.f32.mxu0 0.0
  %v7012 = vand.u32 %v6781, 4294901760
  %v7013 = vsub.f32 %v6781, %v7012
  %7014 = vmatmul.mubr.f32.gmra.mrb[0].mxu0 %v7013
  %v7015 = vpop.f32.mrb[0].mxu0
  %v7016 = vadd.f32 %v6939, %v7015
  %v7017 = vpop.f32.mrb[0].mxu0
  %v7018 = vadd.f32 %v6941, %v7017
  %7019 = vdwg.mxu0
  %v7020 = vand.u32 %v6777, 4294901760
  %7021 = vmatprep.subr.mxu0 %v7020
  %v7022 = vand.u32 %v6776, 4294901760
  %7023 = vmatpush1.msra.mxu0 %v7022
  %7024 = vmatprep.subr.mxu0 0.0
  %7025 = vmatpush1.msra.mxu0 0.0
  %7026 = vmatprep.subr.mxu0 0.0
  %7027 = vmatpush1.msra.mxu0 0.0
  %7028 = vmatprep.subr.mxu0 0.0
  %7029 = vmatpush1.msra.mxu0 0.0
  %7030 = vmatprep.subr.mxu0 0.0
  %7031 = vmatpush1.msra.mxu0 0.0
  %7032 = vmatprep.subr.mxu0 0.0
  %7033 = vmatpush1.msra.mxu0 0.0
  %7034 = vmatprep.subr.mxu0 0.0
  %7035 = vmatpush1.msra.mxu0 0.0
  %7036 = vmatprep.subr.mxu0 0.0
  %7037 = vmatpush1.msra.mxu0 0.0
  %7038 = vmatprep.subr.mxu0 0.0
  %7039 = vmatpush1.msra.mxu0 0.0
  %7040 = vmatprep.subr.mxu0 0.0
  %7041 = vmatpush1.msra.mxu0 0.0
  %7042 = vmatprep.subr.mxu0 0.0
  %7043 = vmatpush1.msra.mxu0 0.0
  %7044 = vmatprep.subr.mxu0 0.0
  %7045 = vmatpush1.msra.mxu0 0.0
  %7046 = vmatprep.subr.mxu0 0.0
  %7047 = vmatpush1.msra.mxu0 0.0
  %7048 = vmatprep.subr.mxu0 0.0
  %7049 = vmatpush1.msra.mxu0 0.0
  %7050 = vmatprep.subr.mxu0 0.0
  %7051 = vmatpush1.msra.mxu0 0.0
  %7052 = vmatprep.subr.mxu0 0.0
  %7053 = vmatpush1.msra.mxu0 0.0
  %7054 = vmatprep.subr.mxu0 0.0
  %7055 = vmatpush1.msra.mxu0 0.0
  %7056 = vmatprep.subr.mxu0 0.0
  %7057 = vmatpush1.msra.mxu0 0.0
  %7058 = vmatprep.subr.mxu0 0.0
  %7059 = vmatpush1.msra.mxu0 0.0
  %7060 = vmatprep.subr.mxu0 0.0
  %7061 = vmatpush1.msra.mxu0 0.0
  %7062 = vmatprep.subr.mxu0 0.0
  %7063 = vmatpush1.msra.mxu0 0.0
  %7064 = vmatprep.subr.mxu0 0.0
  %7065 = vmatpush1.msra.mxu0 0.0
  %7066 = vmatprep.subr.mxu0 0.0
  %7067 = vmatpush1.msra.mxu0 0.0
  %7068 = vmatprep.subr.mxu0 0.0
  %7069 = vmatpush1.msra.mxu0 0.0
  %7070 = vmatprep.subr.mxu0 0.0
  %7071 = vmatpush1.msra.mxu0 0.0
  %7072 = vmatprep.subr.mxu0 0.0
  %7073 = vmatpush1.msra.mxu0 0.0
  %7074 = vmatprep.subr.mxu0 0.0
  %7075 = vmatpush1.msra.mxu0 0.0
  %7076 = vmatprep.subr.mxu0 0.0
  %7077 = vmatpush1.msra.mxu0 0.0
  %7078 = vmatprep.subr.mxu0 0.0
  %7079 = vmatpush1.msra.mxu0 0.0
  %7080 = vmatprep.subr.mxu0 0.0
  %7081 = vmatpush1.msra.mxu0 0.0
  %7082 = vmatprep.subr.mxu0 0.0
  %7083 = vmatpush1.msra.mxu0 0.0
  %7084 = vmatprep.subr.mxu0 0.0
  %7085 = vmatpush1.msra.mxu0 0.0
  %7086 = vmatprep.mubr.f32.mxu0 0.0
  %v7087 = vand.u32 %v6781, 4294901760
  %v7088 = vsub.f32 %v6781, %v7087
  %v7089 = vand.u32 %v7088, 4294901760
  %7090 = vmatmul.mubr.f32.gmra.mrb[0].mxu0 %v7089
  %v7091 = vpop.f32.mrb[0].mxu0
  %v7092 = vadd.f32 %v7016, %v7091
  %v7093 = vpop.f32.mrb[0].mxu0
  %v7094 = vadd.f32 %v7018, %v7093
  %7095 = vdwg.mxu0
  %v7096 = vand.u32 %v6777, 4294901760
  %v7097 = vsub.f32 %v6777, %v7096
  %v7098 = vand.u32 %v7097, 4294901760
  %7099 = vmatprep.subr.mxu0 %v7098
  %v7100 = vand.u32 %v6776, 4294901760
  %v7101 = vsub.f32 %v6776, %v7100
  %v7102 = vand.u32 %v7101, 4294901760
  %7103 = vmatpush1.msra.mxu0 %v7102
  %7104 = vmatprep.subr.mxu0 0.0
  %7105 = vmatpush1.msra.mxu0 0.0
  %7106 = vmatprep.subr.mxu0 0.0
  %7107 = vmatpush1.msra.mxu0 0.0
  %7108 = vmatprep.subr.mxu0 0.0
  %7109 = vmatpush1.msra.mxu0 0.0
  %7110 = vmatprep.subr.mxu0 0.0
  %7111 = vmatpush1.msra.mxu0 0.0
  %7112 = vmatprep.subr.mxu0 0.0
  %7113 = vmatpush1.msra.mxu0 0.0
  %7114 = vmatprep.subr.mxu0 0.0
  %7115 = vmatpush1.msra.mxu0 0.0
  %7116 = vmatprep.subr.mxu0 0.0
  %7117 = vmatpush1.msra.mxu0 0.0
  %7118 = vmatprep.subr.mxu0 0.0
  %7119 = vmatpush1.msra.mxu0 0.0
  %7120 = vmatprep.subr.mxu0 0.0
  %7121 = vmatpush1.msra.mxu0 0.0
  %7122 = vmatprep.subr.mxu0 0.0
  %7123 = vmatpush1.msra.mxu0 0.0
  %7124 = vmatprep.subr.mxu0 0.0
  %7125 = vmatpush1.msra.mxu0 0.0
  %7126 = vmatprep.subr.mxu0 0.0
  %7127 = vmatpush1.msra.mxu0 0.0
  %7128 = vmatprep.subr.mxu0 0.0
  %7129 = vmatpush1.msra.mxu0 0.0
  %7130 = vmatprep.subr.mxu0 0.0
  %7131 = vmatpush1.msra.mxu0 0.0
  %7132 = vmatprep.subr.mxu0 0.0
  %7133 = vmatpush1.msra.mxu0 0.0
  %7134 = vmatprep.subr.mxu0 0.0
  %7135 = vmatpush1.msra.mxu0 0.0
  %7136 = vmatprep.subr.mxu0 0.0
  %7137 = vmatpush1.msra.mxu0 0.0
  %7138 = vmatprep.subr.mxu0 0.0
  %7139 = vmatpush1.msra.mxu0 0.0
  %7140 = vmatprep.subr.mxu0 0.0
  %7141 = vmatpush1.msra.mxu0 0.0
  %7142 = vmatprep.subr.mxu0 0.0
  %7143 = vmatpush1.msra.mxu0 0.0
  %7144 = vmatprep.subr.mxu0 0.0
  %7145 = vmatpush1.msra.mxu0 0.0
  %7146 = vmatprep.subr.mxu0 0.0
  %7147 = vmatpush1.msra.mxu0 0.0
  %7148 = vmatprep.subr.mxu0 0.0
  %7149 = vmatpush1.msra.mxu0 0.0
  %7150 = vmatprep.subr.mxu0 0.0
  %7151 = vmatpush1.msra.mxu0 0.0
  %7152 = vmatprep.subr.mxu0 0.0
  %7153 = vmatpush1.msra.mxu0 0.0
  %7154 = vmatprep.subr.mxu0 0.0
  %7155 = vmatpush1.msra.mxu0 0.0
  %7156 = vmatprep.subr.mxu0 0.0
  %7157 = vmatpush1.msra.mxu0 0.0
  %7158 = vmatprep.subr.mxu0 0.0
  %7159 = vmatpush1.msra.mxu0 0.0
  %7160 = vmatprep.subr.mxu0 0.0
  %7161 = vmatpush1.msra.mxu0 0.0
  %7162 = vmatprep.subr.mxu0 0.0
  %7163 = vmatpush1.msra.mxu0 0.0
  %7164 = vmatprep.subr.mxu0 0.0
  %7165 = vmatpush1.msra.mxu0 0.0
  %7166 = vmatprep.mubr.f32.mxu0 0.0
  %v7167 = vand.u32 %v6781, 4294901760
  %7168 = vmatmul.mubr.f32.gmra.mrb[0].mxu0 %v7167
  %v7169 = vpop.f32.mrb[0].mxu0
  %v7170 = vadd.f32 %v7092, %v7169
  %v7171 = vpop.f32.mrb[0].mxu0
  %v7172 = vadd.f32 %v7094, %v7171
  %7173 = vdwg.mxu0
  %v7174 = vand.u32 %v6777, 4294901760
  %7175 = vmatprep.subr.mxu0 %v7174
  %v7176 = vand.u32 %v6776, 4294901760
  %7177 = vmatpush1.msra.mxu0 %v7176
  %7178 = vmatprep.subr.mxu0 0.0
  %7179 = vmatpush1.msra.mxu0 0.0
  %7180 = vmatprep.subr.mxu0 0.0
  %7181 = vmatpush1.msra.mxu0 0.0
  %7182 = vmatprep.subr.mxu0 0.0
  %7183 = vmatpush1.msra.mxu0 0.0
  %7184 = vmatprep.subr.mxu0 0.0
  %7185 = vmatpush1.msra.mxu0 0.0
  %7186 = vmatprep.subr.mxu0 0.0
  %7187 = vmatpush1.msra.mxu0 0.0
  %7188 = vmatprep.subr.mxu0 0.0
  %7189 = vmatpush1.msra.mxu0 0.0
  %7190 = vmatprep.subr.mxu0 0.0
  %7191 = vmatpush1.msra.mxu0 0.0
  %7192 = vmatprep.subr.mxu0 0.0
  %7193 = vmatpush1.msra.mxu0 0.0
  %7194 = vmatprep.subr.mxu0 0.0
  %7195 = vmatpush1.msra.mxu0 0.0
  %7196 = vmatprep.subr.mxu0 0.0
  %7197 = vmatpush1.msra.mxu0 0.0
  %7198 = vmatprep.subr.mxu0 0.0
  %7199 = vmatpush1.msra.mxu0 0.0
  %7200 = vmatprep.subr.mxu0 0.0
  %7201 = vmatpush1.msra.mxu0 0.0
  %7202 = vmatprep.subr.mxu0 0.0
  %7203 = vmatpush1.msra.mxu0 0.0
  %7204 = vmatprep.subr.mxu0 0.0
  %7205 = vmatpush1.msra.mxu0 0.0
  %7206 = vmatprep.subr.mxu0 0.0
  %7207 = vmatpush1.msra.mxu0 0.0
  %7208 = vmatprep.subr.mxu0 0.0
  %7209 = vmatpush1.msra.mxu0 0.0
  %7210 = vmatprep.subr.mxu0 0.0
  %7211 = vmatpush1.msra.mxu0 0.0
  %7212 = vmatprep.subr.mxu0 0.0
  %7213 = vmatpush1.msra.mxu0 0.0
  %7214 = vmatprep.subr.mxu0 0.0
  %7215 = vmatpush1.msra.mxu0 0.0
  %7216 = vmatprep.subr.mxu0 0.0
  %7217 = vmatpush1.msra.mxu0 0.0
  %7218 = vmatprep.subr.mxu0 0.0
  %7219 = vmatpush1.msra.mxu0 0.0
  %7220 = vmatprep.subr.mxu0 0.0
  %7221 = vmatpush1.msra.mxu0 0.0
  %7222 = vmatprep.subr.mxu0 0.0
  %7223 = vmatpush1.msra.mxu0 0.0
  %7224 = vmatprep.subr.mxu0 0.0
  %7225 = vmatpush1.msra.mxu0 0.0
  %7226 = vmatprep.subr.mxu0 0.0
  %7227 = vmatpush1.msra.mxu0 0.0
  %7228 = vmatprep.subr.mxu0 0.0
  %7229 = vmatpush1.msra.mxu0 0.0
  %7230 = vmatprep.subr.mxu0 0.0
  %7231 = vmatpush1.msra.mxu0 0.0
  %7232 = vmatprep.subr.mxu0 0.0
  %7233 = vmatpush1.msra.mxu0 0.0
  %7234 = vmatprep.subr.mxu0 0.0
  %7235 = vmatpush1.msra.mxu0 0.0
  %7236 = vmatprep.subr.mxu0 0.0
  %7237 = vmatpush1.msra.mxu0 0.0
  %7238 = vmatprep.subr.mxu0 0.0
  %7239 = vmatpush1.msra.mxu0 0.0
  %7240 = vmatprep.mubr.f32.mxu0 0.0
  %v7241 = vand.u32 %v6781, 4294901760
  %7242 = vmatmul.mubr.f32.gmra.mrb[0].mxu0 %v7241
  %v7243 = vpop.f32.mrb[0].mxu0
  %v7244 = vadd.f32 %v7170, %v7243
  %v7245 = vpop.f32.mrb[0].mxu0
  %v7246 = vadd.f32 %v7172, %v7245
  %7247 = vdwg.mxu0
  %v7248 = vadd.f32 %v6768, %v7244
  %v7249 = vadd.f32 %v6769, %v7246
  %7250 = vrot.lane.b32.xlu0 %v4371, 113
  %v7251 = vpop.permute.xlu0 %7250
  %7252 = vrot.lane.b32.xlu0 %v4372, 113
  %v7253 = vpop.permute.xlu0 %7252
  %v7254 = vsel %vm2932, %v7251, %v7253
  %v7255 = vsel %vm2932, %v7253, %v7251
  %v7256 = vsel %vm39, %v7254, 0.0
  %v7257 = vsel %vm40, %v7255, 0.0
  %s7258 = scalar_lea.vmem %s3, 48
  %v7259 = vld [vmem:[%s7258] sm:$0xff]
  %v7261 = vsel %vm61, %v7259, 0
  %v7263 = vand.u32 %v7257, 4294901760
  %7264 = vmatprep.subr.mxu0 %v7263
  %v7265 = vand.u32 %v7256, 4294901760
  %7266 = vmatpush1.msra.mxu0 %v7265
  %7267 = vmatprep.subr.mxu0 0.0
  %7268 = vmatpush1.msra.mxu0 0.0
  %7269 = vmatprep.subr.mxu0 0.0
  %7270 = vmatpush1.msra.mxu0 0.0
  %7271 = vmatprep.subr.mxu0 0.0
  %7272 = vmatpush1.msra.mxu0 0.0
  %7273 = vmatprep.subr.mxu0 0.0
  %7274 = vmatpush1.msra.mxu0 0.0
  %7275 = vmatprep.subr.mxu0 0.0
  %7276 = vmatpush1.msra.mxu0 0.0
  %7277 = vmatprep.subr.mxu0 0.0
  %7278 = vmatpush1.msra.mxu0 0.0
  %7279 = vmatprep.subr.mxu0 0.0
  %7280 = vmatpush1.msra.mxu0 0.0
  %7281 = vmatprep.subr.mxu0 0.0
  %7282 = vmatpush1.msra.mxu0 0.0
  %7283 = vmatprep.subr.mxu0 0.0
  %7284 = vmatpush1.msra.mxu0 0.0
  %7285 = vmatprep.subr.mxu0 0.0
  %7286 = vmatpush1.msra.mxu0 0.0
  %7287 = vmatprep.subr.mxu0 0.0
  %7288 = vmatpush1.msra.mxu0 0.0
  %7289 = vmatprep.subr.mxu0 0.0
  %7290 = vmatpush1.msra.mxu0 0.0
  %7291 = vmatprep.subr.mxu0 0.0
  %7292 = vmatpush1.msra.mxu0 0.0
  %7293 = vmatprep.subr.mxu0 0.0
  %7294 = vmatpush1.msra.mxu0 0.0
  %7295 = vmatprep.subr.mxu0 0.0
  %7296 = vmatpush1.msra.mxu0 0.0
  %7297 = vmatprep.subr.mxu0 0.0
  %7298 = vmatpush1.msra.mxu0 0.0
  %7299 = vmatprep.subr.mxu0 0.0
  %7300 = vmatpush1.msra.mxu0 0.0
  %7301 = vmatprep.subr.mxu0 0.0
  %7302 = vmatpush1.msra.mxu0 0.0
  %7303 = vmatprep.subr.mxu0 0.0
  %7304 = vmatpush1.msra.mxu0 0.0
  %7305 = vmatprep.subr.mxu0 0.0
  %7306 = vmatpush1.msra.mxu0 0.0
  %7307 = vmatprep.subr.mxu0 0.0
  %7308 = vmatpush1.msra.mxu0 0.0
  %7309 = vmatprep.subr.mxu0 0.0
  %7310 = vmatpush1.msra.mxu0 0.0
  %7311 = vmatprep.subr.mxu0 0.0
  %7312 = vmatpush1.msra.mxu0 0.0
  %7313 = vmatprep.subr.mxu0 0.0
  %7314 = vmatpush1.msra.mxu0 0.0
  %7315 = vmatprep.subr.mxu0 0.0
  %7316 = vmatpush1.msra.mxu0 0.0
  %7317 = vmatprep.subr.mxu0 0.0
  %7318 = vmatpush1.msra.mxu0 0.0
  %7319 = vmatprep.subr.mxu0 0.0
  %7320 = vmatpush1.msra.mxu0 0.0
  %7321 = vmatprep.subr.mxu0 0.0
  %7322 = vmatpush1.msra.mxu0 0.0
  %7323 = vmatprep.subr.mxu0 0.0
  %7324 = vmatpush1.msra.mxu0 0.0
  %7325 = vmatprep.subr.mxu0 0.0
  %7326 = vmatpush1.msra.mxu0 0.0
  %7327 = vmatprep.subr.mxu0 0.0
  %7328 = vmatpush1.msra.mxu0 0.0
  %7329 = vmatprep.mubr.f32.mxu0 0.0
  %v7330 = vand.u32 %v7261, 4294901760
  %v7331 = vsub.f32 %v7261, %v7330
  %v7332 = vand.u32 %v7331, 4294901760
  %v7333 = vsub.f32 %v7331, %v7332
  %v7334 = vand.u32 %v7333, 4294901760
  %7335 = vmatmul.mubr.f32.gmra.mrb[0].mxu0 %v7334
  %v7336 = vpop.f32.mrb[0].mxu0
  %v7337 = vadd.f32 0.0, %v7336
  %v7338 = vpop.f32.mrb[0].mxu0
  %v7339 = vadd.f32 0.0, %v7338
  %7340 = vdwg.mxu0
  %v7341 = vand.u32 %v7257, 4294901760
  %v7342 = vsub.f32 %v7257, %v7341
  %v7343 = vand.u32 %v7342, 4294901760
  %v7344 = vsub.f32 %v7342, %v7343
  %v7345 = vand.u32 %v7344, 4294901760
  %7346 = vmatprep.subr.mxu0 %v7345
  %v7347 = vand.u32 %v7256, 4294901760
  %v7348 = vsub.f32 %v7256, %v7347
  %v7349 = vand.u32 %v7348, 4294901760
  %v7350 = vsub.f32 %v7348, %v7349
  %v7351 = vand.u32 %v7350, 4294901760
  %7352 = vmatpush1.msra.mxu0 %v7351
  %7353 = vmatprep.subr.mxu0 0.0
  %7354 = vmatpush1.msra.mxu0 0.0
  %7355 = vmatprep.subr.mxu0 0.0
  %7356 = vmatpush1.msra.mxu0 0.0
  %7357 = vmatprep.subr.mxu0 0.0
  %7358 = vmatpush1.msra.mxu0 0.0
  %7359 = vmatprep.subr.mxu0 0.0
  %7360 = vmatpush1.msra.mxu0 0.0
  %7361 = vmatprep.subr.mxu0 0.0
  %7362 = vmatpush1.msra.mxu0 0.0
  %7363 = vmatprep.subr.mxu0 0.0
  %7364 = vmatpush1.msra.mxu0 0.0
  %7365 = vmatprep.subr.mxu0 0.0
  %7366 = vmatpush1.msra.mxu0 0.0
  %7367 = vmatprep.subr.mxu0 0.0
  %7368 = vmatpush1.msra.mxu0 0.0
  %7369 = vmatprep.subr.mxu0 0.0
  %7370 = vmatpush1.msra.mxu0 0.0
  %7371 = vmatprep.subr.mxu0 0.0
  %7372 = vmatpush1.msra.mxu0 0.0
  %7373 = vmatprep.subr.mxu0 0.0
  %7374 = vmatpush1.msra.mxu0 0.0
  %7375 = vmatprep.subr.mxu0 0.0
  %7376 = vmatpush1.msra.mxu0 0.0
  %7377 = vmatprep.subr.mxu0 0.0
  %7378 = vmatpush1.msra.mxu0 0.0
  %7379 = vmatprep.subr.mxu0 0.0
  %7380 = vmatpush1.msra.mxu0 0.0
  %7381 = vmatprep.subr.mxu0 0.0
  %7382 = vmatpush1.msra.mxu0 0.0
  %7383 = vmatprep.subr.mxu0 0.0
  %7384 = vmatpush1.msra.mxu0 0.0
  %7385 = vmatprep.subr.mxu0 0.0
  %7386 = vmatpush1.msra.mxu0 0.0
  %7387 = vmatprep.subr.mxu0 0.0
  %7388 = vmatpush1.msra.mxu0 0.0
  %7389 = vmatprep.subr.mxu0 0.0
  %7390 = vmatpush1.msra.mxu0 0.0
  %7391 = vmatprep.subr.mxu0 0.0
  %7392 = vmatpush1.msra.mxu0 0.0
  %7393 = vmatprep.subr.mxu0 0.0
  %7394 = vmatpush1.msra.mxu0 0.0
  %7395 = vmatprep.subr.mxu0 0.0
  %7396 = vmatpush1.msra.mxu0 0.0
  %7397 = vmatprep.subr.mxu0 0.0
  %7398 = vmatpush1.msra.mxu0 0.0
  %7399 = vmatprep.subr.mxu0 0.0
  %7400 = vmatpush1.msra.mxu0 0.0
  %7401 = vmatprep.subr.mxu0 0.0
  %7402 = vmatpush1.msra.mxu0 0.0
  %7403 = vmatprep.subr.mxu0 0.0
  %7404 = vmatpush1.msra.mxu0 0.0
  %7405 = vmatprep.subr.mxu0 0.0
  %7406 = vmatpush1.msra.mxu0 0.0
  %7407 = vmatprep.subr.mxu0 0.0
  %7408 = vmatpush1.msra.mxu0 0.0
  %7409 = vmatprep.subr.mxu0 0.0
  %7410 = vmatpush1.msra.mxu0 0.0
  %7411 = vmatprep.subr.mxu0 0.0
  %7412 = vmatpush1.msra.mxu0 0.0
  %7413 = vmatprep.subr.mxu0 0.0
  %7414 = vmatpush1.msra.mxu0 0.0
  %7415 = vmatprep.mubr.f32.mxu0 0.0
  %v7416 = vand.u32 %v7261, 4294901760
  %7417 = vmatmul.mubr.f32.gmra.mrb[0].mxu0 %v7416
  %v7418 = vpop.f32.mrb[0].mxu0
  %v7419 = vadd.f32 %v7337, %v7418
  %v7420 = vpop.f32.mrb[0].mxu0
  %v7421 = vadd.f32 %v7339, %v7420
  %7422 = vdwg.mxu0
  %v7423 = vand.u32 %v7257, 4294901760
  %v7424 = vsub.f32 %v7257, %v7423
  %7425 = vmatprep.subr.mxu0 %v7424
  %v7426 = vand.u32 %v7256, 4294901760
  %v7427 = vsub.f32 %v7256, %v7426
  %7428 = vmatpush1.msra.mxu0 %v7427
  %7429 = vmatprep.subr.mxu0 0.0
  %7430 = vmatpush1.msra.mxu0 0.0
  %7431 = vmatprep.subr.mxu0 0.0
  %7432 = vmatpush1.msra.mxu0 0.0
  %7433 = vmatprep.subr.mxu0 0.0
  %7434 = vmatpush1.msra.mxu0 0.0
  %7435 = vmatprep.subr.mxu0 0.0
  %7436 = vmatpush1.msra.mxu0 0.0
  %7437 = vmatprep.subr.mxu0 0.0
  %7438 = vmatpush1.msra.mxu0 0.0
  %7439 = vmatprep.subr.mxu0 0.0
  %7440 = vmatpush1.msra.mxu0 0.0
  %7441 = vmatprep.subr.mxu0 0.0
  %7442 = vmatpush1.msra.mxu0 0.0
  %7443 = vmatprep.subr.mxu0 0.0
  %7444 = vmatpush1.msra.mxu0 0.0
  %7445 = vmatprep.subr.mxu0 0.0
  %7446 = vmatpush1.msra.mxu0 0.0
  %7447 = vmatprep.subr.mxu0 0.0
  %7448 = vmatpush1.msra.mxu0 0.0
  %7449 = vmatprep.subr.mxu0 0.0
  %7450 = vmatpush1.msra.mxu0 0.0
  %7451 = vmatprep.subr.mxu0 0.0
  %7452 = vmatpush1.msra.mxu0 0.0
  %7453 = vmatprep.subr.mxu0 0.0
  %7454 = vmatpush1.msra.mxu0 0.0
  %7455 = vmatprep.subr.mxu0 0.0
  %7456 = vmatpush1.msra.mxu0 0.0
  %7457 = vmatprep.subr.mxu0 0.0
  %7458 = vmatpush1.msra.mxu0 0.0
  %7459 = vmatprep.subr.mxu0 0.0
  %7460 = vmatpush1.msra.mxu0 0.0
  %7461 = vmatprep.subr.mxu0 0.0
  %7462 = vmatpush1.msra.mxu0 0.0
  %7463 = vmatprep.subr.mxu0 0.0
  %7464 = vmatpush1.msra.mxu0 0.0
  %7465 = vmatprep.subr.mxu0 0.0
  %7466 = vmatpush1.msra.mxu0 0.0
  %7467 = vmatprep.subr.mxu0 0.0
  %7468 = vmatpush1.msra.mxu0 0.0
  %7469 = vmatprep.subr.mxu0 0.0
  %7470 = vmatpush1.msra.mxu0 0.0
  %7471 = vmatprep.subr.mxu0 0.0
  %7472 = vmatpush1.msra.mxu0 0.0
  %7473 = vmatprep.subr.mxu0 0.0
  %7474 = vmatpush1.msra.mxu0 0.0
  %7475 = vmatprep.subr.mxu0 0.0
  %7476 = vmatpush1.msra.mxu0 0.0
  %7477 = vmatprep.subr.mxu0 0.0
  %7478 = vmatpush1.msra.mxu0 0.0
  %7479 = vmatprep.subr.mxu0 0.0
  %7480 = vmatpush1.msra.mxu0 0.0
  %7481 = vmatprep.subr.mxu0 0.0
  %7482 = vmatpush1.msra.mxu0 0.0
  %7483 = vmatprep.subr.mxu0 0.0
  %7484 = vmatpush1.msra.mxu0 0.0
  %7485 = vmatprep.subr.mxu0 0.0
  %7486 = vmatpush1.msra.mxu0 0.0
  %7487 = vmatprep.subr.mxu0 0.0
  %7488 = vmatpush1.msra.mxu0 0.0
  %7489 = vmatprep.subr.mxu0 0.0
  %7490 = vmatpush1.msra.mxu0 0.0
  %7491 = vmatprep.mubr.f32.mxu0 0.0
  %v7492 = vand.u32 %v7261, 4294901760
  %v7493 = vsub.f32 %v7261, %v7492
  %7494 = vmatmul.mubr.f32.gmra.mrb[0].mxu0 %v7493
  %v7495 = vpop.f32.mrb[0].mxu0
  %v7496 = vadd.f32 %v7419, %v7495
  %v7497 = vpop.f32.mrb[0].mxu0
  %v7498 = vadd.f32 %v7421, %v7497
  %7499 = vdwg.mxu0
  %v7500 = vand.u32 %v7257, 4294901760
  %7501 = vmatprep.subr.mxu0 %v7500
  %v7502 = vand.u32 %v7256, 4294901760
  %7503 = vmatpush1.msra.mxu0 %v7502
  %7504 = vmatprep.subr.mxu0 0.0
  %7505 = vmatpush1.msra.mxu0 0.0
  %7506 = vmatprep.subr.mxu0 0.0
  %7507 = vmatpush1.msra.mxu0 0.0
  %7508 = vmatprep.subr.mxu0 0.0
  %7509 = vmatpush1.msra.mxu0 0.0
  %7510 = vmatprep.subr.mxu0 0.0
  %7511 = vmatpush1.msra.mxu0 0.0
  %7512 = vmatprep.subr.mxu0 0.0
  %7513 = vmatpush1.msra.mxu0 0.0
  %7514 = vmatprep.subr.mxu0 0.0
  %7515 = vmatpush1.msra.mxu0 0.0
  %7516 = vmatprep.subr.mxu0 0.0
  %7517 = vmatpush1.msra.mxu0 0.0
  %7518 = vmatprep.subr.mxu0 0.0
  %7519 = vmatpush1.msra.mxu0 0.0
  %7520 = vmatprep.subr.mxu0 0.0
  %7521 = vmatpush1.msra.mxu0 0.0
  %7522 = vmatprep.subr.mxu0 0.0
  %7523 = vmatpush1.msra.mxu0 0.0
  %7524 = vmatprep.subr.mxu0 0.0
  %7525 = vmatpush1.msra.mxu0 0.0
  %7526 = vmatprep.subr.mxu0 0.0
  %7527 = vmatpush1.msra.mxu0 0.0
  %7528 = vmatprep.subr.mxu0 0.0
  %7529 = vmatpush1.msra.mxu0 0.0
  %7530 = vmatprep.subr.mxu0 0.0
  %7531 = vmatpush1.msra.mxu0 0.0
  %7532 = vmatprep.subr.mxu0 0.0
  %7533 = vmatpush1.msra.mxu0 0.0
  %7534 = vmatprep.subr.mxu0 0.0
  %7535 = vmatpush1.msra.mxu0 0.0
  %7536 = vmatprep.subr.mxu0 0.0
  %7537 = vmatpush1.msra.mxu0 0.0
  %7538 = vmatprep.subr.mxu0 0.0
  %7539 = vmatpush1.msra.mxu0 0.0
  %7540 = vmatprep.subr.mxu0 0.0
  %7541 = vmatpush1.msra.mxu0 0.0
  %7542 = vmatprep.subr.mxu0 0.0
  %7543 = vmatpush1.msra.mxu0 0.0
  %7544 = vmatprep.subr.mxu0 0.0
  %7545 = vmatpush1.msra.mxu0 0.0
  %7546 = vmatprep.subr.mxu0 0.0
  %7547 = vmatpush1.msra.mxu0 0.0
  %7548 = vmatprep.subr.mxu0 0.0
  %7549 = vmatpush1.msra.mxu0 0.0
  %7550 = vmatprep.subr.mxu0 0.0
  %7551 = vmatpush1.msra.mxu0 0.0
  %7552 = vmatprep.subr.mxu0 0.0
  %7553 = vmatpush1.msra.mxu0 0.0
  %7554 = vmatprep.subr.mxu0 0.0
  %7555 = vmatpush1.msra.mxu0 0.0
  %7556 = vmatprep.subr.mxu0 0.0
  %7557 = vmatpush1.msra.mxu0 0.0
  %7558 = vmatprep.subr.mxu0 0.0
  %7559 = vmatpush1.msra.mxu0 0.0
  %7560 = vmatprep.subr.mxu0 0.0
  %7561 = vmatpush1.msra.mxu0 0.0
  %7562 = vmatprep.subr.mxu0 0.0
  %7563 = vmatpush1.msra.mxu0 0.0
  %7564 = vmatprep.subr.mxu0 0.0
  %7565 = vmatpush1.msra.mxu0 0.0
  %7566 = vmatprep.mubr.f32.mxu0 0.0
  %v7567 = vand.u32 %v7261, 4294901760
  %v7568 = vsub.f32 %v7261, %v7567
  %v7569 = vand.u32 %v7568, 4294901760
  %7570 = vmatmul.mubr.f32.gmra.mrb[0].mxu0 %v7569
  %v7571 = vpop.f32.mrb[0].mxu0
  %v7572 = vadd.f32 %v7496, %v7571
  %v7573 = vpop.f32.mrb[0].mxu0
  %v7574 = vadd.f32 %v7498, %v7573
  %7575 = vdwg.mxu0
  %v7576 = vand.u32 %v7257, 4294901760
  %v7577 = vsub.f32 %v7257, %v7576
  %v7578 = vand.u32 %v7577, 4294901760
  %7579 = vmatprep.subr.mxu0 %v7578
  %v7580 = vand.u32 %v7256, 4294901760
  %v7581 = vsub.f32 %v7256, %v7580
  %v7582 = vand.u32 %v7581, 4294901760
  %7583 = vmatpush1.msra.mxu0 %v7582
  %7584 = vmatprep.subr.mxu0 0.0
  %7585 = vmatpush1.msra.mxu0 0.0
  %7586 = vmatprep.subr.mxu0 0.0
  %7587 = vmatpush1.msra.mxu0 0.0
  %7588 = vmatprep.subr.mxu0 0.0
  %7589 = vmatpush1.msra.mxu0 0.0
  %7590 = vmatprep.subr.mxu0 0.0
  %7591 = vmatpush1.msra.mxu0 0.0
  %7592 = vmatprep.subr.mxu0 0.0
  %7593 = vmatpush1.msra.mxu0 0.0
  %7594 = vmatprep.subr.mxu0 0.0
  %7595 = vmatpush1.msra.mxu0 0.0
  %7596 = vmatprep.subr.mxu0 0.0
  %7597 = vmatpush1.msra.mxu0 0.0
  %7598 = vmatprep.subr.mxu0 0.0
  %7599 = vmatpush1.msra.mxu0 0.0
  %7600 = vmatprep.subr.mxu0 0.0
  %7601 = vmatpush1.msra.mxu0 0.0
  %7602 = vmatprep.subr.mxu0 0.0
  %7603 = vmatpush1.msra.mxu0 0.0
  %7604 = vmatprep.subr.mxu0 0.0
  %7605 = vmatpush1.msra.mxu0 0.0
  %7606 = vmatprep.subr.mxu0 0.0
  %7607 = vmatpush1.msra.mxu0 0.0
  %7608 = vmatprep.subr.mxu0 0.0
  %7609 = vmatpush1.msra.mxu0 0.0
  %7610 = vmatprep.subr.mxu0 0.0
  %7611 = vmatpush1.msra.mxu0 0.0
  %7612 = vmatprep.subr.mxu0 0.0
  %7613 = vmatpush1.msra.mxu0 0.0
  %7614 = vmatprep.subr.mxu0 0.0
  %7615 = vmatpush1.msra.mxu0 0.0
  %7616 = vmatprep.subr.mxu0 0.0
  %7617 = vmatpush1.msra.mxu0 0.0
  %7618 = vmatprep.subr.mxu0 0.0
  %7619 = vmatpush1.msra.mxu0 0.0
  %7620 = vmatprep.subr.mxu0 0.0
  %7621 = vmatpush1.msra.mxu0 0.0
  %7622 = vmatprep.subr.mxu0 0.0
  %7623 = vmatpush1.msra.mxu0 0.0
  %7624 = vmatprep.subr.mxu0 0.0
  %7625 = vmatpush1.msra.mxu0 0.0
  %7626 = vmatprep.subr.mxu0 0.0
  %7627 = vmatpush1.msra.mxu0 0.0
  %7628 = vmatprep.subr.mxu0 0.0
  %7629 = vmatpush1.msra.mxu0 0.0
  %7630 = vmatprep.subr.mxu0 0.0
  %7631 = vmatpush1.msra.mxu0 0.0
  %7632 = vmatprep.subr.mxu0 0.0
  %7633 = vmatpush1.msra.mxu0 0.0
  %7634 = vmatprep.subr.mxu0 0.0
  %7635 = vmatpush1.msra.mxu0 0.0
  %7636 = vmatprep.subr.mxu0 0.0
  %7637 = vmatpush1.msra.mxu0 0.0
  %7638 = vmatprep.subr.mxu0 0.0
  %7639 = vmatpush1.msra.mxu0 0.0
  %7640 = vmatprep.subr.mxu0 0.0
  %7641 = vmatpush1.msra.mxu0 0.0
  %7642 = vmatprep.subr.mxu0 0.0
  %7643 = vmatpush1.msra.mxu0 0.0
  %7644 = vmatprep.subr.mxu0 0.0
  %7645 = vmatpush1.msra.mxu0 0.0
  %7646 = vmatprep.mubr.f32.mxu0 0.0
  %v7647 = vand.u32 %v7261, 4294901760
  %7648 = vmatmul.mubr.f32.gmra.mrb[0].mxu0 %v7647
  %v7649 = vpop.f32.mrb[0].mxu0
  %v7650 = vadd.f32 %v7572, %v7649
  %v7651 = vpop.f32.mrb[0].mxu0
  %v7652 = vadd.f32 %v7574, %v7651
  %7653 = vdwg.mxu0
  %v7654 = vand.u32 %v7257, 4294901760
  %7655 = vmatprep.subr.mxu0 %v7654
  %v7656 = vand.u32 %v7256, 4294901760
  %7657 = vmatpush1.msra.mxu0 %v7656
  %7658 = vmatprep.subr.mxu0 0.0
  %7659 = vmatpush1.msra.mxu0 0.0
  %7660 = vmatprep.subr.mxu0 0.0
  %7661 = vmatpush1.msra.mxu0 0.0
  %7662 = vmatprep.subr.mxu0 0.0
  %7663 = vmatpush1.msra.mxu0 0.0
  %7664 = vmatprep.subr.mxu0 0.0
  %7665 = vmatpush1.msra.mxu0 0.0
  %7666 = vmatprep.subr.mxu0 0.0
  %7667 = vmatpush1.msra.mxu0 0.0
  %7668 = vmatprep.subr.mxu0 0.0
  %7669 = vmatpush1.msra.mxu0 0.0
  %7670 = vmatprep.subr.mxu0 0.0
  %7671 = vmatpush1.msra.mxu0 0.0
  %7672 = vmatprep.subr.mxu0 0.0
  %7673 = vmatpush1.msra.mxu0 0.0
  %7674 = vmatprep.subr.mxu0 0.0
  %7675 = vmatpush1.msra.mxu0 0.0
  %7676 = vmatprep.subr.mxu0 0.0
  %7677 = vmatpush1.msra.mxu0 0.0
  %7678 = vmatprep.subr.mxu0 0.0
  %7679 = vmatpush1.msra.mxu0 0.0
  %7680 = vmatprep.subr.mxu0 0.0
  %7681 = vmatpush1.msra.mxu0 0.0
  %7682 = vmatprep.subr.mxu0 0.0
  %7683 = vmatpush1.msra.mxu0 0.0
  %7684 = vmatprep.subr.mxu0 0.0
  %7685 = vmatpush1.msra.mxu0 0.0
  %7686 = vmatprep.subr.mxu0 0.0
  %7687 = vmatpush1.msra.mxu0 0.0
  %7688 = vmatprep.subr.mxu0 0.0
  %7689 = vmatpush1.msra.mxu0 0.0
  %7690 = vmatprep.subr.mxu0 0.0
  %7691 = vmatpush1.msra.mxu0 0.0
  %7692 = vmatprep.subr.mxu0 0.0
  %7693 = vmatpush1.msra.mxu0 0.0
  %7694 = vmatprep.subr.mxu0 0.0
  %7695 = vmatpush1.msra.mxu0 0.0
  %7696 = vmatprep.subr.mxu0 0.0
  %7697 = vmatpush1.msra.mxu0 0.0
  %7698 = vmatprep.subr.mxu0 0.0
  %7699 = vmatpush1.msra.mxu0 0.0
  %7700 = vmatprep.subr.mxu0 0.0
  %7701 = vmatpush1.msra.mxu0 0.0
  %7702 = vmatprep.subr.mxu0 0.0
  %7703 = vmatpush1.msra.mxu0 0.0
  %7704 = vmatprep.subr.mxu0 0.0
  %7705 = vmatpush1.msra.mxu0 0.0
  %7706 = vmatprep.subr.mxu0 0.0
  %7707 = vmatpush1.msra.mxu0 0.0
  %7708 = vmatprep.subr.mxu0 0.0
  %7709 = vmatpush1.msra.mxu0 0.0
  %7710 = vmatprep.subr.mxu0 0.0
  %7711 = vmatpush1.msra.mxu0 0.0
  %7712 = vmatprep.subr.mxu0 0.0
  %7713 = vmatpush1.msra.mxu0 0.0
  %7714 = vmatprep.subr.mxu0 0.0
  %7715 = vmatpush1.msra.mxu0 0.0
  %7716 = vmatprep.subr.mxu0 0.0
  %7717 = vmatpush1.msra.mxu0 0.0
  %7718 = vmatprep.subr.mxu0 0.0
  %7719 = vmatpush1.msra.mxu0 0.0
  %7720 = vmatprep.mubr.f32.mxu0 0.0
  %v7721 = vand.u32 %v7261, 4294901760
  %7722 = vmatmul.mubr.f32.gmra.mrb[0].mxu0 %v7721
  %v7723 = vpop.f32.mrb[0].mxu0
  %v7724 = vadd.f32 %v7650, %v7723
  %v7725 = vpop.f32.mrb[0].mxu0
  %v7726 = vadd.f32 %v7652, %v7725
  %7727 = vdwg.mxu0
  %v7728 = vadd.f32 %v7248, %v7724
  %v7729 = vadd.f32 %v7249, %v7726
  %7730 = vrot.lane.b32.xlu0 %v4371, 112
  %v7731 = vpop.permute.xlu0 %7730
  %7732 = vrot.lane.b32.xlu0 %v4372, 112
  %v7733 = vpop.permute.xlu0 %7732
  %v7734 = vsel %vm3413, %v7731, %v7733
  %v7735 = vsel %vm3413, %v7733, %v7731
  %v7736 = vsel %vm37, %v7734, 0.0
  %v7737 = vsel %vm38, %v7735, 0.0
  %s7738 = scalar_lea.vmem %s3, 56
  %v7739 = vld [vmem:[%s7738] sm:$0xff]
  %v7741 = vsel %vm61, %v7739, 0
  %v7743 = vand.u32 %v7737, 4294901760
  %7744 = vmatprep.subr.mxu0 %v7743
  %v7745 = vand.u32 %v7736, 4294901760
  %7746 = vmatpush1.msra.mxu0 %v7745
  %7747 = vmatprep.subr.mxu0 0.0
  %7748 = vmatpush1.msra.mxu0 0.0
  %7749 = vmatprep.subr.mxu0 0.0
  %7750 = vmatpush1.msra.mxu0 0.0
  %7751 = vmatprep.subr.mxu0 0.0
  %7752 = vmatpush1.msra.mxu0 0.0
  %7753 = vmatprep.subr.mxu0 0.0
  %7754 = vmatpush1.msra.mxu0 0.0
  %7755 = vmatprep.subr.mxu0 0.0
  %7756 = vmatpush1.msra.mxu0 0.0
  %7757 = vmatprep.subr.mxu0 0.0
  %7758 = vmatpush1.msra.mxu0 0.0
  %7759 = vmatprep.subr.mxu0 0.0
  %7760 = vmatpush1.msra.mxu0 0.0
  %7761 = vmatprep.subr.mxu0 0.0
  %7762 = vmatpush1.msra.mxu0 0.0
  %7763 = vmatprep.subr.mxu0 0.0
  %7764 = vmatpush1.msra.mxu0 0.0
  %7765 = vmatprep.subr.mxu0 0.0
  %7766 = vmatpush1.msra.mxu0 0.0
  %7767 = vmatprep.subr.mxu0 0.0
  %7768 = vmatpush1.msra.mxu0 0.0
  %7769 = vmatprep.subr.mxu0 0.0
  %7770 = vmatpush1.msra.mxu0 0.0
  %7771 = vmatprep.subr.mxu0 0.0
  %7772 = vmatpush1.msra.mxu0 0.0
  %7773 = vmatprep.subr.mxu0 0.0
  %7774 = vmatpush1.msra.mxu0 0.0
  %7775 = vmatprep.subr.mxu0 0.0
  %7776 = vmatpush1.msra.mxu0 0.0
  %7777 = vmatprep.subr.mxu0 0.0
  %7778 = vmatpush1.msra.mxu0 0.0
  %7779 = vmatprep.subr.mxu0 0.0
  %7780 = vmatpush1.msra.mxu0 0.0
  %7781 = vmatprep.subr.mxu0 0.0
  %7782 = vmatpush1.msra.mxu0 0.0
  %7783 = vmatprep.subr.mxu0 0.0
  %7784 = vmatpush1.msra.mxu0 0.0
  %7785 = vmatprep.subr.mxu0 0.0
  %7786 = vmatpush1.msra.mxu0 0.0
  %7787 = vmatprep.subr.mxu0 0.0
  %7788 = vmatpush1.msra.mxu0 0.0
  %7789 = vmatprep.subr.mxu0 0.0
  %7790 = vmatpush1.msra.mxu0 0.0
  %7791 = vmatprep.subr.mxu0 0.0
  %7792 = vmatpush1.msra.mxu0 0.0
  %7793 = vmatprep.subr.mxu0 0.0
  %7794 = vmatpush1.msra.mxu0 0.0
  %7795 = vmatprep.subr.mxu0 0.0
  %7796 = vmatpush1.msra.mxu0 0.0
  %7797 = vmatprep.subr.mxu0 0.0
  %7798 = vmatpush1.msra.mxu0 0.0
  %7799 = vmatprep.subr.mxu0 0.0
  %7800 = vmatpush1.msra.mxu0 0.0
  %7801 = vmatprep.subr.mxu0 0.0
  %7802 = vmatpush1.msra.mxu0 0.0
  %7803 = vmatprep.subr.mxu0 0.0
  %7804 = vmatpush1.msra.mxu0 0.0
  %7805 = vmatprep.subr.mxu0 0.0
  %7806 = vmatpush1.msra.mxu0 0.0
  %7807 = vmatprep.subr.mxu0 0.0
  %7808 = vmatpush1.msra.mxu0 0.0
  %7809 = vmatprep.mubr.f32.mxu0 0.0
  %v7810 = vand.u32 %v7741, 4294901760
  %v7811 = vsub.f32 %v7741, %v7810
  %v7812 = vand.u32 %v7811, 4294901760
  %v7813 = vsub.f32 %v7811, %v7812
  %v7814 = vand.u32 %v7813, 4294901760
  %7815 = vmatmul.mubr.f32.gmra.mrb[0].mxu0 %v7814
  %v7816 = vpop.f32.mrb[0].mxu0
  %v7817 = vadd.f32 0.0, %v7816
  %v7818 = vpop.f32.mrb[0].mxu0
  %v7819 = vadd.f32 0.0, %v7818
  %7820 = vdwg.mxu0
  %v7821 = vand.u32 %v7737, 4294901760
  %v7822 = vsub.f32 %v7737, %v7821
  %v7823 = vand.u32 %v7822, 4294901760
  %v7824 = vsub.f32 %v7822, %v7823
  %v7825 = vand.u32 %v7824, 4294901760
  %7826 = vmatprep.subr.mxu0 %v7825
  %v7827 = vand.u32 %v7736, 4294901760
  %v7828 = vsub.f32 %v7736, %v7827
  %v7829 = vand.u32 %v7828, 4294901760
  %v7830 = vsub.f32 %v7828, %v7829
  %v7831 = vand.u32 %v7830, 4294901760
  %7832 = vmatpush1.msra.mxu0 %v7831
  %7833 = vmatprep.subr.mxu0 0.0
  %7834 = vmatpush1.msra.mxu0 0.0
  %7835 = vmatprep.subr.mxu0 0.0
  %7836 = vmatpush1.msra.mxu0 0.0
  %7837 = vmatprep.subr.mxu0 0.0
  %7838 = vmatpush1.msra.mxu0 0.0
  %7839 = vmatprep.subr.mxu0 0.0
  %7840 = vmatpush1.msra.mxu0 0.0
  %7841 = vmatprep.subr.mxu0 0.0
  %7842 = vmatpush1.msra.mxu0 0.0
  %7843 = vmatprep.subr.mxu0 0.0
  %7844 = vmatpush1.msra.mxu0 0.0
  %7845 = vmatprep.subr.mxu0 0.0
  %7846 = vmatpush1.msra.mxu0 0.0
  %7847 = vmatprep.subr.mxu0 0.0
  %7848 = vmatpush1.msra.mxu0 0.0
  %7849 = vmatprep.subr.mxu0 0.0
  %7850 = vmatpush1.msra.mxu0 0.0
  %7851 = vmatprep.subr.mxu0 0.0
  %7852 = vmatpush1.msra.mxu0 0.0
  %7853 = vmatprep.subr.mxu0 0.0
  %7854 = vmatpush1.msra.mxu0 0.0
  %7855 = vmatprep.subr.mxu0 0.0
  %7856 = vmatpush1.msra.mxu0 0.0
  %7857 = vmatprep.subr.mxu0 0.0
  %7858 = vmatpush1.msra.mxu0 0.0
  %7859 = vmatprep.subr.mxu0 0.0
  %7860 = vmatpush1.msra.mxu0 0.0
  %7861 = vmatprep.subr.mxu0 0.0
  %7862 = vmatpush1.msra.mxu0 0.0
  %7863 = vmatprep.subr.mxu0 0.0
  %7864 = vmatpush1.msra.mxu0 0.0
  %7865 = vmatprep.subr.mxu0 0.0
  %7866 = vmatpush1.msra.mxu0 0.0
  %7867 = vmatprep.subr.mxu0 0.0
  %7868 = vmatpush1.msra.mxu0 0.0
  %7869 = vmatprep.subr.mxu0 0.0
  %7870 = vmatpush1.msra.mxu0 0.0
  %7871 = vmatprep.subr.mxu0 0.0
  %7872 = vmatpush1.msra.mxu0 0.0
  %7873 = vmatprep.subr.mxu0 0.0
  %7874 = vmatpush1.msra.mxu0 0.0
  %7875 = vmatprep.subr.mxu0 0.0
  %7876 = vmatpush1.msra.mxu0 0.0
  %7877 = vmatprep.subr.mxu0 0.0
  %7878 = vmatpush1.msra.mxu0 0.0
  %7879 = vmatprep.subr.mxu0 0.0
  %7880 = vmatpush1.msra.mxu0 0.0
  %7881 = vmatprep.subr.mxu0 0.0
  %7882 = vmatpush1.msra.mxu0 0.0
  %7883 = vmatprep.subr.mxu0 0.0
  %7884 = vmatpush1.msra.mxu0 0.0
  %7885 = vmatprep.subr.mxu0 0.0
  %7886 = vmatpush1.msra.mxu0 0.0
  %7887 = vmatprep.subr.mxu0 0.0
  %7888 = vmatpush1.msra.mxu0 0.0
  %7889 = vmatprep.subr.mxu0 0.0
  %7890 = vmatpush1.msra.mxu0 0.0
  %7891 = vmatprep.subr.mxu0 0.0
  %7892 = vmatpush1.msra.mxu0 0.0
  %7893 = vmatprep.subr.mxu0 0.0
  %7894 = vmatpush1.msra.mxu0 0.0
  %7895 = vmatprep.mubr.f32.mxu0 0.0
  %v7896 = vand.u32 %v7741, 4294901760
  %7897 = vmatmul.mubr.f32.gmra.mrb[0].mxu0 %v7896
  %v7898 = vpop.f32.mrb[0].mxu0
  %v7899 = vadd.f32 %v7817, %v7898
  %v7900 = vpop.f32.mrb[0].mxu0
  %v7901 = vadd.f32 %v7819, %v7900
  %7902 = vdwg.mxu0
  %v7903 = vand.u32 %v7737, 4294901760
  %v7904 = vsub.f32 %v7737, %v7903
  %7905 = vmatprep.subr.mxu0 %v7904
  %v7906 = vand.u32 %v7736, 4294901760
  %v7907 = vsub.f32 %v7736, %v7906
  %7908 = vmatpush1.msra.mxu0 %v7907
  %7909 = vmatprep.subr.mxu0 0.0
  %7910 = vmatpush1.msra.mxu0 0.0
  %7911 = vmatprep.subr.mxu0 0.0
  %7912 = vmatpush1.msra.mxu0 0.0
  %7913 = vmatprep.subr.mxu0 0.0
  %7914 = vmatpush1.msra.mxu0 0.0
  %7915 = vmatprep.subr.mxu0 0.0
  %7916 = vmatpush1.msra.mxu0 0.0
  %7917 = vmatprep.subr.mxu0 0.0
  %7918 = vmatpush1.msra.mxu0 0.0
  %7919 = vmatprep.subr.mxu0 0.0
  %7920 = vmatpush1.msra.mxu0 0.0
  %7921 = vmatprep.subr.mxu0 0.0
  %7922 = vmatpush1.msra.mxu0 0.0
  %7923 = vmatprep.subr.mxu0 0.0
  %7924 = vmatpush1.msra.mxu0 0.0
  %7925 = vmatprep.subr.mxu0 0.0
  %7926 = vmatpush1.msra.mxu0 0.0
  %7927 = vmatprep.subr.mxu0 0.0
  %7928 = vmatpush1.msra.mxu0 0.0
  %7929 = vmatprep.subr.mxu0 0.0
  %7930 = vmatpush1.msra.mxu0 0.0
  %7931 = vmatprep.subr.mxu0 0.0
  %7932 = vmatpush1.msra.mxu0 0.0
  %7933 = vmatprep.subr.mxu0 0.0
  %7934 = vmatpush1.msra.mxu0 0.0
  %7935 = vmatprep.subr.mxu0 0.0
  %7936 = vmatpush1.msra.mxu0 0.0
  %7937 = vmatprep.subr.mxu0 0.0
  %7938 = vmatpush1.msra.mxu0 0.0
  %7939 = vmatprep.subr.mxu0 0.0
  %7940 = vmatpush1.msra.mxu0 0.0
  %7941 = vmatprep.subr.mxu0 0.0
  %7942 = vmatpush1.msra.mxu0 0.0
  %7943 = vmatprep.subr.mxu0 0.0
  %7944 = vmatpush1.msra.mxu0 0.0
  %7945 = vmatprep.subr.mxu0 0.0
  %7946 = vmatpush1.msra.mxu0 0.0
  %7947 = vmatprep.subr.mxu0 0.0
  %7948 = vmatpush1.msra.mxu0 0.0
  %7949 = vmatprep.subr.mxu0 0.0
  %7950 = vmatpush1.msra.mxu0 0.0
  %7951 = vmatprep.subr.mxu0 0.0
  %7952 = vmatpush1.msra.mxu0 0.0
  %7953 = vmatprep.subr.mxu0 0.0
  %7954 = vmatpush1.msra.mxu0 0.0
  %7955 = vmatprep.subr.mxu0 0.0
  %7956 = vmatpush1.msra.mxu0 0.0
  %7957 = vmatprep.subr.mxu0 0.0
  %7958 = vmatpush1.msra.mxu0 0.0
  %7959 = vmatprep.subr.mxu0 0.0
  %7960 = vmatpush1.msra.mxu0 0.0
  %7961 = vmatprep.subr.mxu0 0.0
  %7962 = vmatpush1.msra.mxu0 0.0
  %7963 = vmatprep.subr.mxu0 0.0
  %7964 = vmatpush1.msra.mxu0 0.0
  %7965 = vmatprep.subr.mxu0 0.0
  %7966 = vmatpush1.msra.mxu0 0.0
  %7967 = vmatprep.subr.mxu0 0.0
  %7968 = vmatpush1.msra.mxu0 0.0
  %7969 = vmatprep.subr.mxu0 0.0
  %7970 = vmatpush1.msra.mxu0 0.0
  %7971 = vmatprep.mubr.f32.mxu0 0.0
  %v7972 = vand.u32 %v7741, 4294901760
  %v7973 = vsub.f32 %v7741, %v7972
  %7974 = vmatmul.mubr.f32.gmra.mrb[0].mxu0 %v7973
  %v7975 = vpop.f32.mrb[0].mxu0
  %v7976 = vadd.f32 %v7899, %v7975
  %v7977 = vpop.f32.mrb[0].mxu0
  %v7978 = vadd.f32 %v7901, %v7977
  %7979 = vdwg.mxu0
  %v7980 = vand.u32 %v7737, 4294901760
  %7981 = vmatprep.subr.mxu0 %v7980
  %v7982 = vand.u32 %v7736, 4294901760
  %7983 = vmatpush1.msra.mxu0 %v7982
  %7984 = vmatprep.subr.mxu0 0.0
  %7985 = vmatpush1.msra.mxu0 0.0
  %7986 = vmatprep.subr.mxu0 0.0
  %7987 = vmatpush1.msra.mxu0 0.0
  %7988 = vmatprep.subr.mxu0 0.0
  %7989 = vmatpush1.msra.mxu0 0.0
  %7990 = vmatprep.subr.mxu0 0.0
  %7991 = vmatpush1.msra.mxu0 0.0
  %7992 = vmatprep.subr.mxu0 0.0
  %7993 = vmatpush1.msra.mxu0 0.0
  %7994 = vmatprep.subr.mxu0 0.0
  %7995 = vmatpush1.msra.mxu0 0.0
  %7996 = vmatprep.subr.mxu0 0.0
  %7997 = vmatpush1.msra.mxu0 0.0
  %7998 = vmatprep.subr.mxu0 0.0
  %7999 = vmatpush1.msra.mxu0 0.0
  %8000 = vmatprep.subr.mxu0 0.0
  %8001 = vmatpush1.msra.mxu0 0.0
  %8002 = vmatprep.subr.mxu0 0.0
  %8003 = vmatpush1.msra.mxu0 0.0
  %8004 = vmatprep.subr.mxu0 0.0
  %8005 = vmatpush1.msra.mxu0 0.0
  %8006 = vmatprep.subr.mxu0 0.0
  %8007 = vmatpush1.msra.mxu0 0.0
  %8008 = vmatprep.subr.mxu0 0.0
  %8009 = vmatpush1.msra.mxu0 0.0
  %8010 = vmatprep.subr.mxu0 0.0
  %8011 = vmatpush1.msra.mxu0 0.0
  %8012 = vmatprep.subr.mxu0 0.0
  %8013 = vmatpush1.msra.mxu0 0.0
  %8014 = vmatprep.subr.mxu0 0.0
  %8015 = vmatpush1.msra.mxu0 0.0
  %8016 = vmatprep.subr.mxu0 0.0
  %8017 = vmatpush1.msra.mxu0 0.0
  %8018 = vmatprep.subr.mxu0 0.0
  %8019 = vmatpush1.msra.mxu0 0.0
  %8020 = vmatprep.subr.mxu0 0.0
  %8021 = vmatpush1.msra.mxu0 0.0
  %8022 = vmatprep.subr.mxu0 0.0
  %8023 = vmatpush1.msra.mxu0 0.0
  %8024 = vmatprep.subr.mxu0 0.0
  %8025 = vmatpush1.msra.mxu0 0.0
  %8026 = vmatprep.subr.mxu0 0.0
  %8027 = vmatpush1.msra.mxu0 0.0
  %8028 = vmatprep.subr.mxu0 0.0
  %8029 = vmatpush1.msra.mxu0 0.0
  %8030 = vmatprep.subr.mxu0 0.0
  %8031 = vmatpush1.msra.mxu0 0.0
  %8032 = vmatprep.subr.mxu0 0.0
  %8033 = vmatpush1.msra.mxu0 0.0
  %8034 = vmatprep.subr.mxu0 0.0
  %8035 = vmatpush1.msra.mxu0 0.0
  %8036 = vmatprep.subr.mxu0 0.0
  %8037 = vmatpush1.msra.mxu0 0.0
  %8038 = vmatprep.subr.mxu0 0.0
  %8039 = vmatpush1.msra.mxu0 0.0
  %8040 = vmatprep.subr.mxu0 0.0
  %8041 = vmatpush1.msra.mxu0 0.0
  %8042 = vmatprep.subr.mxu0 0.0
  %8043 = vmatpush1.msra.mxu0 0.0
  %8044 = vmatprep.subr.mxu0 0.0
  %8045 = vmatpush1.msra.mxu0 0.0
  %8046 = vmatprep.mubr.f32.mxu0 0.0
  %v8047 = vand.u32 %v7741, 4294901760
  %v8048 = vsub.f32 %v7741, %v8047
  %v8049 = vand.u32 %v8048, 4294901760
  %8050 = vmatmul.mubr.f32.gmra.mrb[0].mxu0 %v8049
  %v8051 = vpop.f32.mrb[0].mxu0
  %v8052 = vadd.f32 %v7976, %v8051
  %v8053 = vpop.f32.mrb[0].mxu0
  %v8054 = vadd.f32 %v7978, %v8053
  %8055 = vdwg.mxu0
  %v8056 = vand.u32 %v7737, 4294901760
  %v8057 = vsub.f32 %v7737, %v8056
  %v8058 = vand.u32 %v8057, 4294901760
  %8059 = vmatprep.subr.mxu0 %v8058
  %v8060 = vand.u32 %v7736, 4294901760
  %v8061 = vsub.f32 %v7736, %v8060
  %v8062 = vand.u32 %v8061, 4294901760
  %8063 = vmatpush1.msra.mxu0 %v8062
  %8064 = vmatprep.subr.mxu0 0.0
  %8065 = vmatpush1.msra.mxu0 0.0
  %8066 = vmatprep.subr.mxu0 0.0
  %8067 = vmatpush1.msra.mxu0 0.0
  %8068 = vmatprep.subr.mxu0 0.0
  %8069 = vmatpush1.msra.mxu0 0.0
  %8070 = vmatprep.subr.mxu0 0.0
  %8071 = vmatpush1.msra.mxu0 0.0
  %8072 = vmatprep.subr.mxu0 0.0
  %8073 = vmatpush1.msra.mxu0 0.0
  %8074 = vmatprep.subr.mxu0 0.0
  %8075 = vmatpush1.msra.mxu0 0.0
  %8076 = vmatprep.subr.mxu0 0.0
  %8077 = vmatpush1.msra.mxu0 0.0
  %8078 = vmatprep.subr.mxu0 0.0
  %8079 = vmatpush1.msra.mxu0 0.0
  %8080 = vmatprep.subr.mxu0 0.0
  %8081 = vmatpush1.msra.mxu0 0.0
  %8082 = vmatprep.subr.mxu0 0.0
  %8083 = vmatpush1.msra.mxu0 0.0
  %8084 = vmatprep.subr.mxu0 0.0
  %8085 = vmatpush1.msra.mxu0 0.0
  %8086 = vmatprep.subr.mxu0 0.0
  %8087 = vmatpush1.msra.mxu0 0.0
  %8088 = vmatprep.subr.mxu0 0.0
  %8089 = vmatpush1.msra.mxu0 0.0
  %8090 = vmatprep.subr.mxu0 0.0
  %8091 = vmatpush1.msra.mxu0 0.0
  %8092 = vmatprep.subr.mxu0 0.0
  %8093 = vmatpush1.msra.mxu0 0.0
  %8094 = vmatprep.subr.mxu0 0.0
  %8095 = vmatpush1.msra.mxu0 0.0
  %8096 = vmatprep.subr.mxu0 0.0
  %8097 = vmatpush1.msra.mxu0 0.0
  %8098 = vmatprep.subr.mxu0 0.0
  %8099 = vmatpush1.msra.mxu0 0.0
  %8100 = vmatprep.subr.mxu0 0.0
  %8101 = vmatpush1.msra.mxu0 0.0
  %8102 = vmatprep.subr.mxu0 0.0
  %8103 = vmatpush1.msra.mxu0 0.0
  %8104 = vmatprep.subr.mxu0 0.0
  %8105 = vmatpush1.msra.mxu0 0.0
  %8106 = vmatprep.subr.mxu0 0.0
  %8107 = vmatpush1.msra.mxu0 0.0
  %8108 = vmatprep.subr.mxu0 0.0
  %8109 = vmatpush1.msra.mxu0 0.0
  %8110 = vmatprep.subr.mxu0 0.0
  %8111 = vmatpush1.msra.mxu0 0.0
  %8112 = vmatprep.subr.mxu0 0.0
  %8113 = vmatpush1.msra.mxu0 0.0
  %8114 = vmatprep.subr.mxu0 0.0
  %8115 = vmatpush1.msra.mxu0 0.0
  %8116 = vmatprep.subr.mxu0 0.0
  %8117 = vmatpush1.msra.mxu0 0.0
  %8118 = vmatprep.subr.mxu0 0.0
  %8119 = vmatpush1.msra.mxu0 0.0
  %8120 = vmatprep.subr.mxu0 0.0
  %8121 = vmatpush1.msra.mxu0 0.0
  %8122 = vmatprep.subr.mxu0 0.0
  %8123 = vmatpush1.msra.mxu0 0.0
  %8124 = vmatprep.subr.mxu0 0.0
  %8125 = vmatpush1.msra.mxu0 0.0
  %8126 = vmatprep.mubr.f32.mxu0 0.0
  %v8127 = vand.u32 %v7741, 4294901760
  %8128 = vmatmul.mubr.f32.gmra.mrb[0].mxu0 %v8127
  %v8129 = vpop.f32.mrb[0].mxu0
  %v8130 = vadd.f32 %v8052, %v8129
  %v8131 = vpop.f32.mrb[0].mxu0
  %v8132 = vadd.f32 %v8054, %v8131
  %8133 = vdwg.mxu0
  %v8134 = vand.u32 %v7737, 4294901760
  %8135 = vmatprep.subr.mxu0 %v8134
  %v8136 = vand.u32 %v7736, 4294901760
  %8137 = vmatpush1.msra.mxu0 %v8136
  %8138 = vmatprep.subr.mxu0 0.0
  %8139 = vmatpush1.msra.mxu0 0.0
  %8140 = vmatprep.subr.mxu0 0.0
  %8141 = vmatpush1.msra.mxu0 0.0
  %8142 = vmatprep.subr.mxu0 0.0
  %8143 = vmatpush1.msra.mxu0 0.0
  %8144 = vmatprep.subr.mxu0 0.0
  %8145 = vmatpush1.msra.mxu0 0.0
  %8146 = vmatprep.subr.mxu0 0.0
  %8147 = vmatpush1.msra.mxu0 0.0
  %8148 = vmatprep.subr.mxu0 0.0
  %8149 = vmatpush1.msra.mxu0 0.0
  %8150 = vmatprep.subr.mxu0 0.0
  %8151 = vmatpush1.msra.mxu0 0.0
  %8152 = vmatprep.subr.mxu0 0.0
  %8153 = vmatpush1.msra.mxu0 0.0
  %8154 = vmatprep.subr.mxu0 0.0
  %8155 = vmatpush1.msra.mxu0 0.0
  %8156 = vmatprep.subr.mxu0 0.0
  %8157 = vmatpush1.msra.mxu0 0.0
  %8158 = vmatprep.subr.mxu0 0.0
  %8159 = vmatpush1.msra.mxu0 0.0
  %8160 = vmatprep.subr.mxu0 0.0
  %8161 = vmatpush1.msra.mxu0 0.0
  %8162 = vmatprep.subr.mxu0 0.0
  %8163 = vmatpush1.msra.mxu0 0.0
  %8164 = vmatprep.subr.mxu0 0.0
  %8165 = vmatpush1.msra.mxu0 0.0
  %8166 = vmatprep.subr.mxu0 0.0
  %8167 = vmatpush1.msra.mxu0 0.0
  %8168 = vmatprep.subr.mxu0 0.0
  %8169 = vmatpush1.msra.mxu0 0.0
  %8170 = vmatprep.subr.mxu0 0.0
  %8171 = vmatpush1.msra.mxu0 0.0
  %8172 = vmatprep.subr.mxu0 0.0
  %8173 = vmatpush1.msra.mxu0 0.0
  %8174 = vmatprep.subr.mxu0 0.0
  %8175 = vmatpush1.msra.mxu0 0.0
  %8176 = vmatprep.subr.mxu0 0.0
  %8177 = vmatpush1.msra.mxu0 0.0
  %8178 = vmatprep.subr.mxu0 0.0
  %8179 = vmatpush1.msra.mxu0 0.0
  %8180 = vmatprep.subr.mxu0 0.0
  %8181 = vmatpush1.msra.mxu0 0.0
  %8182 = vmatprep.subr.mxu0 0.0
  %8183 = vmatpush1.msra.mxu0 0.0
  %8184 = vmatprep.subr.mxu0 0.0
  %8185 = vmatpush1.msra.mxu0 0.0
  %8186 = vmatprep.subr.mxu0 0.0
  %8187 = vmatpush1.msra.mxu0 0.0
  %8188 = vmatprep.subr.mxu0 0.0
  %8189 = vmatpush1.msra.mxu0 0.0
  %8190 = vmatprep.subr.mxu0 0.0
  %8191 = vmatpush1.msra.mxu0 0.0
  %8192 = vmatprep.subr.mxu0 0.0
  %8193 = vmatpush1.msra.mxu0 0.0
  %8194 = vmatprep.subr.mxu0 0.0
  %8195 = vmatpush1.msra.mxu0 0.0
  %8196 = vmatprep.subr.mxu0 0.0
  %8197 = vmatpush1.msra.mxu0 0.0
  %8198 = vmatprep.subr.mxu0 0.0
  %8199 = vmatpush1.msra.mxu0 0.0
  %8200 = vmatprep.mubr.f32.mxu0 0.0
  %v8201 = vand.u32 %v7741, 4294901760
  %8202 = vmatmul.mubr.f32.gmra.mrb[0].mxu0 %v8201
  %v8203 = vpop.f32.mrb[0].mxu0
  %v8204 = vadd.f32 %v8130, %v8203
  %v8205 = vpop.f32.mrb[0].mxu0
  %v8206 = vadd.f32 %v8132, %v8205
  %8207 = vdwg.mxu0
  %v8208 = vadd.f32 %v7728, %v8204
  %v8209 = vadd.f32 %v7729, %v8206
  %8210 = vrot.lane.b32.xlu0 %v4371, 111
  %v8211 = vpop.permute.xlu0 %8210
  %8212 = vrot.lane.b32.xlu0 %v4372, 111
  %v8213 = vpop.permute.xlu0 %8212
  %v8214 = vsel %vm3894, %v8211, %v8213
  %v8215 = vsel %vm3894, %v8213, %v8211
  %v8216 = vsel %vm41, %v8214, 0.0
  %v8217 = vsel %vm42, %v8215, 0.0
  %s8218 = scalar_lea.vmem %s3, 64
  %v8219 = vld [vmem:[%s8218] sm:$0xff]
  %v8221 = vsel %vm61, %v8219, 0
  %v8223 = vand.u32 %v8217, 4294901760
  %8224 = vmatprep.subr.mxu0 %v8223
  %v8225 = vand.u32 %v8216, 4294901760
  %8226 = vmatpush1.msra.mxu0 %v8225
  %8227 = vmatprep.subr.mxu0 0.0
  %8228 = vmatpush1.msra.mxu0 0.0
  %8229 = vmatprep.subr.mxu0 0.0
  %8230 = vmatpush1.msra.mxu0 0.0
  %8231 = vmatprep.subr.mxu0 0.0
  %8232 = vmatpush1.msra.mxu0 0.0
  %8233 = vmatprep.subr.mxu0 0.0
  %8234 = vmatpush1.msra.mxu0 0.0
  %8235 = vmatprep.subr.mxu0 0.0
  %8236 = vmatpush1.msra.mxu0 0.0
  %8237 = vmatprep.subr.mxu0 0.0
  %8238 = vmatpush1.msra.mxu0 0.0
  %8239 = vmatprep.subr.mxu0 0.0
  %8240 = vmatpush1.msra.mxu0 0.0
  %8241 = vmatprep.subr.mxu0 0.0
  %8242 = vmatpush1.msra.mxu0 0.0
  %8243 = vmatprep.subr.mxu0 0.0
  %8244 = vmatpush1.msra.mxu0 0.0
  %8245 = vmatprep.subr.mxu0 0.0
  %8246 = vmatpush1.msra.mxu0 0.0
  %8247 = vmatprep.subr.mxu0 0.0
  %8248 = vmatpush1.msra.mxu0 0.0
  %8249 = vmatprep.subr.mxu0 0.0
  %8250 = vmatpush1.msra.mxu0 0.0
  %8251 = vmatprep.subr.mxu0 0.0
  %8252 = vmatpush1.msra.mxu0 0.0
  %8253 = vmatprep.subr.mxu0 0.0
  %8254 = vmatpush1.msra.mxu0 0.0
  %8255 = vmatprep.subr.mxu0 0.0
  %8256 = vmatpush1.msra.mxu0 0.0
  %8257 = vmatprep.subr.mxu0 0.0
  %8258 = vmatpush1.msra.mxu0 0.0
  %8259 = vmatprep.subr.mxu0 0.0
  %8260 = vmatpush1.msra.mxu0 0.0
  %8261 = vmatprep.subr.mxu0 0.0
  %8262 = vmatpush1.msra.mxu0 0.0
  %8263 = vmatprep.subr.mxu0 0.0
  %8264 = vmatpush1.msra.mxu0 0.0
  %8265 = vmatprep.subr.mxu0 0.0
  %8266 = vmatpush1.msra.mxu0 0.0
  %8267 = vmatprep.subr.mxu0 0.0
  %8268 = vmatpush1.msra.mxu0 0.0
  %8269 = vmatprep.subr.mxu0 0.0
  %8270 = vmatpush1.msra.mxu0 0.0
  %8271 = vmatprep.subr.mxu0 0.0
  %8272 = vmatpush1.msra.mxu0 0.0
  %8273 = vmatprep.subr.mxu0 0.0
  %8274 = vmatpush1.msra.mxu0 0.0
  %8275 = vmatprep.subr.mxu0 0.0
  %8276 = vmatpush1.msra.mxu0 0.0
  %8277 = vmatprep.subr.mxu0 0.0
  %8278 = vmatpush1.msra.mxu0 0.0
  %8279 = vmatprep.subr.mxu0 0.0
  %8280 = vmatpush1.msra.mxu0 0.0
  %8281 = vmatprep.subr.mxu0 0.0
  %8282 = vmatpush1.msra.mxu0 0.0
  %8283 = vmatprep.subr.mxu0 0.0
  %8284 = vmatpush1.msra.mxu0 0.0
  %8285 = vmatprep.subr.mxu0 0.0
  %8286 = vmatpush1.msra.mxu0 0.0
  %8287 = vmatprep.subr.mxu0 0.0
  %8288 = vmatpush1.msra.mxu0 0.0
  %8289 = vmatprep.mubr.f32.mxu0 0.0
  %v8290 = vand.u32 %v8221, 4294901760
  %v8291 = vsub.f32 %v8221, %v8290
  %v8292 = vand.u32 %v8291, 4294901760
  %v8293 = vsub.f32 %v8291, %v8292
  %v8294 = vand.u32 %v8293, 4294901760
  %8295 = vmatmul.mubr.f32.gmra.mrb[0].mxu0 %v8294
  %v8296 = vpop.f32.mrb[0].mxu0
  %v8297 = vadd.f32 0.0, %v8296
  %v8298 = vpop.f32.mrb[0].mxu0
  %v8299 = vadd.f32 0.0, %v8298
  %8300 = vdwg.mxu0
  %v8301 = vand.u32 %v8217, 4294901760
  %v8302 = vsub.f32 %v8217, %v8301
  %v8303 = vand.u32 %v8302, 4294901760
  %v8304 = vsub.f32 %v8302, %v8303
  %v8305 = vand.u32 %v8304, 4294901760
  %8306 = vmatprep.subr.mxu0 %v8305
  %v8307 = vand.u32 %v8216, 4294901760
  %v8308 = vsub.f32 %v8216, %v8307
  %v8309 = vand.u32 %v8308, 4294901760
  %v8310 = vsub.f32 %v8308, %v8309
  %v8311 = vand.u32 %v8310, 4294901760
  %8312 = vmatpush1.msra.mxu0 %v8311
  %8313 = vmatprep.subr.mxu0 0.0
  %8314 = vmatpush1.msra.mxu0 0.0
  %8315 = vmatprep.subr.mxu0 0.0
  %8316 = vmatpush1.msra.mxu0 0.0
  %8317 = vmatprep.subr.mxu0 0.0
  %8318 = vmatpush1.msra.mxu0 0.0
  %8319 = vmatprep.subr.mxu0 0.0
  %8320 = vmatpush1.msra.mxu0 0.0
  %8321 = vmatprep.subr.mxu0 0.0
  %8322 = vmatpush1.msra.mxu0 0.0
  %8323 = vmatprep.subr.mxu0 0.0
  %8324 = vmatpush1.msra.mxu0 0.0
  %8325 = vmatprep.subr.mxu0 0.0
  %8326 = vmatpush1.msra.mxu0 0.0
  %8327 = vmatprep.subr.mxu0 0.0
  %8328 = vmatpush1.msra.mxu0 0.0
  %8329 = vmatprep.subr.mxu0 0.0
  %8330 = vmatpush1.msra.mxu0 0.0
  %8331 = vmatprep.subr.mxu0 0.0
  %8332 = vmatpush1.msra.mxu0 0.0
  %8333 = vmatprep.subr.mxu0 0.0
  %8334 = vmatpush1.msra.mxu0 0.0
  %8335 = vmatprep.subr.mxu0 0.0
  %8336 = vmatpush1.msra.mxu0 0.0
  %8337 = vmatprep.subr.mxu0 0.0
  %8338 = vmatpush1.msra.mxu0 0.0
  %8339 = vmatprep.subr.mxu0 0.0
  %8340 = vmatpush1.msra.mxu0 0.0
  %8341 = vmatprep.subr.mxu0 0.0
  %8342 = vmatpush1.msra.mxu0 0.0
  %8343 = vmatprep.subr.mxu0 0.0
  %8344 = vmatpush1.msra.mxu0 0.0
  %8345 = vmatprep.subr.mxu0 0.0
  %8346 = vmatpush1.msra.mxu0 0.0
  %8347 = vmatprep.subr.mxu0 0.0
  %8348 = vmatpush1.msra.mxu0 0.0
  %8349 = vmatprep.subr.mxu0 0.0
  %8350 = vmatpush1.msra.mxu0 0.0
  %8351 = vmatprep.subr.mxu0 0.0
  %8352 = vmatpush1.msra.mxu0 0.0
  %8353 = vmatprep.subr.mxu0 0.0
  %8354 = vmatpush1.msra.mxu0 0.0
  %8355 = vmatprep.subr.mxu0 0.0
  %8356 = vmatpush1.msra.mxu0 0.0
  %8357 = vmatprep.subr.mxu0 0.0
  %8358 = vmatpush1.msra.mxu0 0.0
  %8359 = vmatprep.subr.mxu0 0.0
  %8360 = vmatpush1.msra.mxu0 0.0
  %8361 = vmatprep.subr.mxu0 0.0
  %8362 = vmatpush1.msra.mxu0 0.0
  %8363 = vmatprep.subr.mxu0 0.0
  %8364 = vmatpush1.msra.mxu0 0.0
  %8365 = vmatprep.subr.mxu0 0.0
  %8366 = vmatpush1.msra.mxu0 0.0
  %8367 = vmatprep.subr.mxu0 0.0
  %8368 = vmatpush1.msra.mxu0 0.0
  %8369 = vmatprep.subr.mxu0 0.0
  %8370 = vmatpush1.msra.mxu0 0.0
  %8371 = vmatprep.subr.mxu0 0.0
  %8372 = vmatpush1.msra.mxu0 0.0
  %8373 = vmatprep.subr.mxu0 0.0
  %8374 = vmatpush1.msra.mxu0 0.0
  %8375 = vmatprep.mubr.f32.mxu0 0.0
  %v8376 = vand.u32 %v8221, 4294901760
  %8377 = vmatmul.mubr.f32.gmra.mrb[0].mxu0 %v8376
  %v8378 = vpop.f32.mrb[0].mxu0
  %v8379 = vadd.f32 %v8297, %v8378
  %v8380 = vpop.f32.mrb[0].mxu0
  %v8381 = vadd.f32 %v8299, %v8380
  %8382 = vdwg.mxu0
  %v8383 = vand.u32 %v8217, 4294901760
  %v8384 = vsub.f32 %v8217, %v8383
  %8385 = vmatprep.subr.mxu0 %v8384
  %v8386 = vand.u32 %v8216, 4294901760
  %v8387 = vsub.f32 %v8216, %v8386
  %8388 = vmatpush1.msra.mxu0 %v8387
  %8389 = vmatprep.subr.mxu0 0.0
  %8390 = vmatpush1.msra.mxu0 0.0
  %8391 = vmatprep.subr.mxu0 0.0
  %8392 = vmatpush1.msra.mxu0 0.0
  %8393 = vmatprep.subr.mxu0 0.0
  %8394 = vmatpush1.msra.mxu0 0.0
  %8395 = vmatprep.subr.mxu0 0.0
  %8396 = vmatpush1.msra.mxu0 0.0
  %8397 = vmatprep.subr.mxu0 0.0
  %8398 = vmatpush1.msra.mxu0 0.0
  %8399 = vmatprep.subr.mxu0 0.0
  %8400 = vmatpush1.msra.mxu0 0.0
  %8401 = vmatprep.subr.mxu0 0.0
  %8402 = vmatpush1.msra.mxu0 0.0
  %8403 = vmatprep.subr.mxu0 0.0
  %8404 = vmatpush1.msra.mxu0 0.0
  %8405 = vmatprep.subr.mxu0 0.0
  %8406 = vmatpush1.msra.mxu0 0.0
  %8407 = vmatprep.subr.mxu0 0.0
  %8408 = vmatpush1.msra.mxu0 0.0
  %8409 = vmatprep.subr.mxu0 0.0
  %8410 = vmatpush1.msra.mxu0 0.0
  %8411 = vmatprep.subr.mxu0 0.0
  %8412 = vmatpush1.msra.mxu0 0.0
  %8413 = vmatprep.subr.mxu0 0.0
  %8414 = vmatpush1.msra.mxu0 0.0
  %8415 = vmatprep.subr.mxu0 0.0
  %8416 = vmatpush1.msra.mxu0 0.0
  %8417 = vmatprep.subr.mxu0 0.0
  %8418 = vmatpush1.msra.mxu0 0.0
  %8419 = vmatprep.subr.mxu0 0.0
  %8420 = vmatpush1.msra.mxu0 0.0
  %8421 = vmatprep.subr.mxu0 0.0
  %8422 = vmatpush1.msra.mxu0 0.0
  %8423 = vmatprep.subr.mxu0 0.0
  %8424 = vmatpush1.msra.mxu0 0.0
  %8425 = vmatprep.subr.mxu0 0.0
  %8426 = vmatpush1.msra.mxu0 0.0
  %8427 = vmatprep.subr.mxu0 0.0
  %8428 = vmatpush1.msra.mxu0 0.0
  %8429 = vmatprep.subr.mxu0 0.0
  %8430 = vmatpush1.msra.mxu0 0.0
  %8431 = vmatprep.subr.mxu0 0.0
  %8432 = vmatpush1.msra.mxu0 0.0
  %8433 = vmatprep.subr.mxu0 0.0
  %8434 = vmatpush1.msra.mxu0 0.0
  %8435 = vmatprep.subr.mxu0 0.0
  %8436 = vmatpush1.msra.mxu0 0.0
  %8437 = vmatprep.subr.mxu0 0.0
  %8438 = vmatpush1.msra.mxu0 0.0
  %8439 = vmatprep.subr.mxu0 0.0
  %8440 = vmatpush1.msra.mxu0 0.0
  %8441 = vmatprep.subr.mxu0 0.0
  %8442 = vmatpush1.msra.mxu0 0.0
  %8443 = vmatprep.subr.mxu0 0.0
  %8444 = vmatpush1.msra.mxu0 0.0
  %8445 = vmatprep.subr.mxu0 0.0
  %8446 = vmatpush1.msra.mxu0 0.0
  %8447 = vmatprep.subr.mxu0 0.0
  %8448 = vmatpush1.msra.mxu0 0.0
  %8449 = vmatprep.subr.mxu0 0.0
  %8450 = vmatpush1.msra.mxu0 0.0
  %8451 = vmatprep.mubr.f32.mxu0 0.0
  %v8452 = vand.u32 %v8221, 4294901760
  %v8453 = vsub.f32 %v8221, %v8452
  %8454 = vmatmul.mubr.f32.gmra.mrb[0].mxu0 %v8453
  %v8455 = vpop.f32.mrb[0].mxu0
  %v8456 = vadd.f32 %v8379, %v8455
  %v8457 = vpop.f32.mrb[0].mxu0
  %v8458 = vadd.f32 %v8381, %v8457
  %8459 = vdwg.mxu0
  %v8460 = vand.u32 %v8217, 4294901760
  %8461 = vmatprep.subr.mxu0 %v8460
  %v8462 = vand.u32 %v8216, 4294901760
  %8463 = vmatpush1.msra.mxu0 %v8462
  %8464 = vmatprep.subr.mxu0 0.0
  %8465 = vmatpush1.msra.mxu0 0.0
  %8466 = vmatprep.subr.mxu0 0.0
  %8467 = vmatpush1.msra.mxu0 0.0
  %8468 = vmatprep.subr.mxu0 0.0
  %8469 = vmatpush1.msra.mxu0 0.0
  %8470 = vmatprep.subr.mxu0 0.0
  %8471 = vmatpush1.msra.mxu0 0.0
  %8472 = vmatprep.subr.mxu0 0.0
  %8473 = vmatpush1.msra.mxu0 0.0
  %8474 = vmatprep.subr.mxu0 0.0
  %8475 = vmatpush1.msra.mxu0 0.0
  %8476 = vmatprep.subr.mxu0 0.0
  %8477 = vmatpush1.msra.mxu0 0.0
  %8478 = vmatprep.subr.mxu0 0.0
  %8479 = vmatpush1.msra.mxu0 0.0
  %8480 = vmatprep.subr.mxu0 0.0
  %8481 = vmatpush1.msra.mxu0 0.0
  %8482 = vmatprep.subr.mxu0 0.0
  %8483 = vmatpush1.msra.mxu0 0.0
  %8484 = vmatprep.subr.mxu0 0.0
  %8485 = vmatpush1.msra.mxu0 0.0
  %8486 = vmatprep.subr.mxu0 0.0
  %8487 = vmatpush1.msra.mxu0 0.0
  %8488 = vmatprep.subr.mxu0 0.0
  %8489 = vmatpush1.msra.mxu0 0.0
  %8490 = vmatprep.subr.mxu0 0.0
  %8491 = vmatpush1.msra.mxu0 0.0
  %8492 = vmatprep.subr.mxu0 0.0
  %8493 = vmatpush1.msra.mxu0 0.0
  %8494 = vmatprep.subr.mxu0 0.0
  %8495 = vmatpush1.msra.mxu0 0.0
  %8496 = vmatprep.subr.mxu0 0.0
  %8497 = vmatpush1.msra.mxu0 0.0
  %8498 = vmatprep.subr.mxu0 0.0
  %8499 = vmatpush1.msra.mxu0 0.0
  %8500 = vmatprep.subr.mxu0 0.0
  %8501 = vmatpush1.msra.mxu0 0.0
  %8502 = vmatprep.subr.mxu0 0.0
  %8503 = vmatpush1.msra.mxu0 0.0
  %8504 = vmatprep.subr.mxu0 0.0
  %8505 = vmatpush1.msra.mxu0 0.0
  %8506 = vmatprep.subr.mxu0 0.0
  %8507 = vmatpush1.msra.mxu0 0.0
  %8508 = vmatprep.subr.mxu0 0.0
  %8509 = vmatpush1.msra.mxu0 0.0
  %8510 = vmatprep.subr.mxu0 0.0
  %8511 = vmatpush1.msra.mxu0 0.0
  %8512 = vmatprep.subr.mxu0 0.0
  %8513 = vmatpush1.msra.mxu0 0.0
  %8514 = vmatprep.subr.mxu0 0.0
  %8515 = vmatpush1.msra.mxu0 0.0
  %8516 = vmatprep.subr.mxu0 0.0
  %8517 = vmatpush1.msra.mxu0 0.0
  %8518 = vmatprep.subr.mxu0 0.0
  %8519 = vmatpush1.msra.mxu0 0.0
  %8520 = vmatprep.subr.mxu0 0.0
  %8521 = vmatpush1.msra.mxu0 0.0
  %8522 = vmatprep.subr.mxu0 0.0
  %8523 = vmatpush1.msra.mxu0 0.0
  %8524 = vmatprep.subr.mxu0 0.0
  %8525 = vmatpush1.msra.mxu0 0.0
  %8526 = vmatprep.mubr.f32.mxu0 0.0
  %v8527 = vand.u32 %v8221, 4294901760
  %v8528 = vsub.f32 %v8221, %v8527
  %v8529 = vand.u32 %v8528, 4294901760
  %8530 = vmatmul.mubr.f32.gmra.mrb[0].mxu0 %v8529
  %v8531 = vpop.f32.mrb[0].mxu0
  %v8532 = vadd.f32 %v8456, %v8531
  %v8533 = vpop.f32.mrb[0].mxu0
  %v8534 = vadd.f32 %v8458, %v8533
  %8535 = vdwg.mxu0
  %v8536 = vand.u32 %v8217, 4294901760
  %v8537 = vsub.f32 %v8217, %v8536
  %v8538 = vand.u32 %v8537, 4294901760
  %8539 = vmatprep.subr.mxu0 %v8538
  %v8540 = vand.u32 %v8216, 4294901760
  %v8541 = vsub.f32 %v8216, %v8540
  %v8542 = vand.u32 %v8541, 4294901760
  %8543 = vmatpush1.msra.mxu0 %v8542
  %8544 = vmatprep.subr.mxu0 0.0
  %8545 = vmatpush1.msra.mxu0 0.0
  %8546 = vmatprep.subr.mxu0 0.0
  %8547 = vmatpush1.msra.mxu0 0.0
  %8548 = vmatprep.subr.mxu0 0.0
  %8549 = vmatpush1.msra.mxu0 0.0
  %8550 = vmatprep.subr.mxu0 0.0
  %8551 = vmatpush1.msra.mxu0 0.0
  %8552 = vmatprep.subr.mxu0 0.0
  %8553 = vmatpush1.msra.mxu0 0.0
  %8554 = vmatprep.subr.mxu0 0.0
  %8555 = vmatpush1.msra.mxu0 0.0
  %8556 = vmatprep.subr.mxu0 0.0
  %8557 = vmatpush1.msra.mxu0 0.0
  %8558 = vmatprep.subr.mxu0 0.0
  %8559 = vmatpush1.msra.mxu0 0.0
  %8560 = vmatprep.subr.mxu0 0.0
  %8561 = vmatpush1.msra.mxu0 0.0
  %8562 = vmatprep.subr.mxu0 0.0
  %8563 = vmatpush1.msra.mxu0 0.0
  %8564 = vmatprep.subr.mxu0 0.0
  %8565 = vmatpush1.msra.mxu0 0.0
  %8566 = vmatprep.subr.mxu0 0.0
  %8567 = vmatpush1.msra.mxu0 0.0
  %8568 = vmatprep.subr.mxu0 0.0
  %8569 = vmatpush1.msra.mxu0 0.0
  %8570 = vmatprep.subr.mxu0 0.0
  %8571 = vmatpush1.msra.mxu0 0.0
  %8572 = vmatprep.subr.mxu0 0.0
  %8573 = vmatpush1.msra.mxu0 0.0
  %8574 = vmatprep.subr.mxu0 0.0
  %8575 = vmatpush1.msra.mxu0 0.0
  %8576 = vmatprep.subr.mxu0 0.0
  %8577 = vmatpush1.msra.mxu0 0.0
  %8578 = vmatprep.subr.mxu0 0.0
  %8579 = vmatpush1.msra.mxu0 0.0
  %8580 = vmatprep.subr.mxu0 0.0
  %8581 = vmatpush1.msra.mxu0 0.0
  %8582 = vmatprep.subr.mxu0 0.0
  %8583 = vmatpush1.msra.mxu0 0.0
  %8584 = vmatprep.subr.mxu0 0.0
  %8585 = vmatpush1.msra.mxu0 0.0
  %8586 = vmatprep.subr.mxu0 0.0
  %8587 = vmatpush1.msra.mxu0 0.0
  %8588 = vmatprep.subr.mxu0 0.0
  %8589 = vmatpush1.msra.mxu0 0.0
  %8590 = vmatprep.subr.mxu0 0.0
  %8591 = vmatpush1.msra.mxu0 0.0
  %8592 = vmatprep.subr.mxu0 0.0
  %8593 = vmatpush1.msra.mxu0 0.0
  %8594 = vmatprep.subr.mxu0 0.0
  %8595 = vmatpush1.msra.mxu0 0.0
  %8596 = vmatprep.subr.mxu0 0.0
  %8597 = vmatpush1.msra.mxu0 0.0
  %8598 = vmatprep.subr.mxu0 0.0
  %8599 = vmatpush1.msra.mxu0 0.0
  %8600 = vmatprep.subr.mxu0 0.0
  %8601 = vmatpush1.msra.mxu0 0.0
  %8602 = vmatprep.subr.mxu0 0.0
  %8603 = vmatpush1.msra.mxu0 0.0
  %8604 = vmatprep.subr.mxu0 0.0
  %8605 = vmatpush1.msra.mxu0 0.0
  %8606 = vmatprep.mubr.f32.mxu0 0.0
  %v8607 = vand.u32 %v8221, 4294901760
  %8608 = vmatmul.mubr.f32.gmra.mrb[0].mxu0 %v8607
  %v8609 = vpop.f32.mrb[0].mxu0
  %v8610 = vadd.f32 %v8532, %v8609
  %v8611 = vpop.f32.mrb[0].mxu0
  %v8612 = vadd.f32 %v8534, %v8611
  %8613 = vdwg.mxu0
  %v8614 = vand.u32 %v8217, 4294901760
  %8615 = vmatprep.subr.mxu0 %v8614
  %v8616 = vand.u32 %v8216, 4294901760
  %8617 = vmatpush1.msra.mxu0 %v8616
  %8618 = vmatprep.subr.mxu0 0.0
  %8619 = vmatpush1.msra.mxu0 0.0
  %8620 = vmatprep.subr.mxu0 0.0
  %8621 = vmatpush1.msra.mxu0 0.0
  %8622 = vmatprep.subr.mxu0 0.0
  %8623 = vmatpush1.msra.mxu0 0.0
  %8624 = vmatprep.subr.mxu0 0.0
  %8625 = vmatpush1.msra.mxu0 0.0
  %8626 = vmatprep.subr.mxu0 0.0
  %8627 = vmatpush1.msra.mxu0 0.0
  %8628 = vmatprep.subr.mxu0 0.0
  %8629 = vmatpush1.msra.mxu0 0.0
  %8630 = vmatprep.subr.mxu0 0.0
  %8631 = vmatpush1.msra.mxu0 0.0
  %8632 = vmatprep.subr.mxu0 0.0
  %8633 = vmatpush1.msra.mxu0 0.0
  %8634 = vmatprep.subr.mxu0 0.0
  %8635 = vmatpush1.msra.mxu0 0.0
  %8636 = vmatprep.subr.mxu0 0.0
  %8637 = vmatpush1.msra.mxu0 0.0
  %8638 = vmatprep.subr.mxu0 0.0
  %8639 = vmatpush1.msra.mxu0 0.0
  %8640 = vmatprep.subr.mxu0 0.0
  %8641 = vmatpush1.msra.mxu0 0.0
  %8642 = vmatprep.subr.mxu0 0.0
  %8643 = vmatpush1.msra.mxu0 0.0
  %8644 = vmatprep.subr.mxu0 0.0
  %8645 = vmatpush1.msra.mxu0 0.0
  %8646 = vmatprep.subr.mxu0 0.0
  %8647 = vmatpush1.msra.mxu0 0.0
  %8648 = vmatprep.subr.mxu0 0.0
  %8649 = vmatpush1.msra.mxu0 0.0
  %8650 = vmatprep.subr.mxu0 0.0
  %8651 = vmatpush1.msra.mxu0 0.0
  %8652 = vmatprep.subr.mxu0 0.0
  %8653 = vmatpush1.msra.mxu0 0.0
  %8654 = vmatprep.subr.mxu0 0.0
  %8655 = vmatpush1.msra.mxu0 0.0
  %8656 = vmatprep.subr.mxu0 0.0
  %8657 = vmatpush1.msra.mxu0 0.0
  %8658 = vmatprep.subr.mxu0 0.0
  %8659 = vmatpush1.msra.mxu0 0.0
  %8660 = vmatprep.subr.mxu0 0.0
  %8661 = vmatpush1.msra.mxu0 0.0
  %8662 = vmatprep.subr.mxu0 0.0
  %8663 = vmatpush1.msra.mxu0 0.0
  %8664 = vmatprep.subr.mxu0 0.0
  %8665 = vmatpush1.msra.mxu0 0.0
  %8666 = vmatprep.subr.mxu0 0.0
  %8667 = vmatpush1.msra.mxu0 0.0
  %8668 = vmatprep.subr.mxu0 0.0
  %8669 = vmatpush1.msra.mxu0 0.0
  %8670 = vmatprep.subr.mxu0 0.0
  %8671 = vmatpush1.msra.mxu0 0.0
  %8672 = vmatprep.subr.mxu0 0.0
  %8673 = vmatpush1.msra.mxu0 0.0
  %8674 = vmatprep.subr.mxu0 0.0
  %8675 = vmatpush1.msra.mxu0 0.0
  %8676 = vmatprep.subr.mxu0 0.0
  %8677 = vmatpush1.msra.mxu0 0.0
  %8678 = vmatprep.subr.mxu0 0.0
  %8679 = vmatpush1.msra.mxu0 0.0
  %8680 = vmatprep.mubr.f32.mxu0 0.0
  %v8681 = vand.u32 %v8221, 4294901760
  %8682 = vmatmul.mubr.f32.gmra.mrb[0].mxu0 %v8681
  %v8683 = vpop.f32.mrb[0].mxu0
  %v8684 = vadd.f32 %v8610, %v8683
  %v8685 = vpop.f32.mrb[0].mxu0
  %v8686 = vadd.f32 %v8612, %v8685
  %8687 = vdwg.mxu0
  %v8688 = vadd.f32 %v8208, %v8684
  %v8689 = vadd.f32 %v8209, %v8686
  %v8690 = vadd.f32 %v8688, %v43
  %v8691 = vadd.f32 %v8689, %v44
  %v8692 = vmax.f32 %v8690, 0.0
  %v8693 = vmax.f32 %v8691, 0.0
  %8694 = vst [vmem:[%s5] sm:$0xff] %v8692
  %8695 = vst [vmem:[%s5 + $0x8] sm:$0xff] %v8693
  // Predicated region
  $region22: #{resblock_forward.1} parent=0 // pred_check
    _
  $region23: #{resblock_forward.1} parent=0 // pred_check_branch
    %8697 = sbr.rel (0) target = $region25
  $region24: #{resblock_forward.1} parent=0 // pred_region
    _
  $region25: #{resblock_forward.1} parent=0 // pred_fallthru
    _
  // Predicated region
  $region26: #{resblock_forward.1} parent=0 // pred_check
    _
  $region27: #{resblock_forward.1} parent=0 // pred_check_branch
    %8699 = sbr.rel (0) target = $region29
  $region28: #{resblock_forward.1} parent=0 // pred_region
    _
  $region29: #{resblock_forward.1} parent=0 // pred_fallthru
    _

</llo_original>
